<compile_context>
chip_gen: v5e
topology: v5e:2x2
jax: 0.10.0
libtpu: 0.0.40
codegen_flags: <defaults>
</compile_context>

<pallas_src>
import functools
import math

import jax
import jax.numpy as jnp
from jax.experimental import pallas as pl
from jax.experimental.pallas import tpu as pltpu

# ----------------------------- model hyper-params (small synthetic) ------------
D_MODEL = 32
N_HEAD = 4
HEAD_DIM = D_MODEL // N_HEAD
DIM_FF = 64
N_LAYERS = 2
LN_EPS = 1e-5


def _ceil_to(v, m):
    return (v + m - 1) // m * m


# ----------------------------- conv3x3 + ReLU (in-kernel im2col) ----------------
def _conv3x3_relu_kernel(xp_ref, w_ref, b_ref, o_ref, *, H, W, C):
    # xp_ref: (1, H+2, W+2, C) f32  | w_ref: (9, C, Cout) bf16 | b_ref: (1, Cout) f32
    acc = None
    for di in range(3):
        for dj in range(3):
            patch = xp_ref[0, di:di + H, dj:dj + W, :]            # (H, W, C)
            patch = patch.reshape(H * W, C).astype(jnp.bfloat16)  # im2col in VMEM
            part = jnp.dot(patch, w_ref[di * 3 + dj],
                           preferred_element_type=jnp.float32)    # (H*W, Cout)
            acc = part if acc is None else acc + part
    y = jnp.maximum(acc + b_ref[...], 0.0)
    o_ref[0] = y.astype(o_ref.dtype)


def pallas_conv3x3_relu(x, w, b):
    """x: (N,H,W,C) f32.  w: (9*C, Cout), kernel-position major.  3x3, pad=1, ReLU."""
    N, H, W, C = x.shape
    Cout = w.shape[-1]
    xp = jnp.pad(x, ((0, 0), (1, 1), (1, 1), (0, 0)))     # halo pad only (not 9x)
    w9 = w.reshape(9, C, Cout).astype(jnp.bfloat16)
    kern = functools.partial(_conv3x3_relu_kernel, H=H, W=W, C=C)
    out = pl.pallas_call(
        kern,
        out_shape=jax.ShapeDtypeStruct((N, H * W, Cout), jnp.float32),
        grid=(N,),
        in_specs=[
            pl.BlockSpec((1, H + 2, W + 2, C), lambda n: (n, 0, 0, 0)),
            pl.BlockSpec((9, C, Cout), lambda n: (0, 0, 0)),
            pl.BlockSpec((1, Cout), lambda n: (0, 0)),
        ],
        out_specs=pl.BlockSpec((1, H * W, Cout), lambda n: (n, 0, 0)),
        compiler_params=pltpu.CompilerParams(dimension_semantics=("parallel",)),
        cost_estimate=pl.CostEstimate(
            flops=2 * N * H * W * 9 * C * Cout,
            transcendentals=0,
            bytes_accessed=4 * (N * (H + 2) * (W + 2) * C + N * H * W * Cout)
                           + 2 * 9 * C * Cout),
    )(xp, w9, b.reshape(1, Cout).astype(jnp.float32))
    return out.reshape(N, H, W, Cout)


# ----------------------------- tiled matmul + bias (+act / +post epilogue) ------
def _matmul_kernel(x_ref, w_ref, b_ref, *rest, act, post_scale):
    has_post = len(rest) == 3
    if has_post:
        post_ref, o_ref, acc_ref = rest
    else:
        post_ref = None
        o_ref, acc_ref = rest

    @pl.when(pl.program_id(2) == 0)
    def _init():
        acc_ref[...] = jnp.zeros_like(acc_ref)

    acc_ref[...] += jnp.dot(x_ref[...], w_ref[...],
                            preferred_element_type=jnp.float32)

    @pl.when(pl.program_id(2) == pl.num_programs(2) - 1)
    def _finalize():
        y = acc_ref[...] + b_ref[...]
        if act == "relu":
            y = jnp.maximum(y, 0.0)
        if has_post:
            y = y * post_scale + post_ref[...]
        o_ref[...] = y.astype(o_ref.dtype)


def pallas_matmul_bias(x, w, b, act="none", post_add=None, post_scale=1.0):
    """y = act(x @ w + b); optionally y = y * post_scale + post_add (fused epilogue)."""
    M, K = x.shape
    K2, N = w.shape
    assert K == K2
    TM = 128 if M >= 256 else 64          # >=2 M-tiles when possible (megacore)
    TN = 128 if N > 128 else N
    TK = 128 if K > 128 else K
    Mp, Np, Kp = _ceil_to(M, TM), _ceil_to(N, TN), _ceil_to(K, TK)

    xb = x.astype(jnp.bfloat16)
    wb = w.astype(jnp.bfloat16)
    if (Mp, Kp) != (M, K):
        xb = jnp.pad(xb, ((0, Mp - M), (0, Kp - K)))
    if (Kp, Np) != (K, N):
        wb = jnp.pad(wb, ((0, Kp - K), (0, Np - N)))
    bp = b.reshape(1, N).astype(jnp.float32)
    if Np != N:
        bp = jnp.pad(bp, ((0, 0), (0, Np - N)))

    in_specs = [
        pl.BlockSpec((TM, TK), lambda i, j, k: (i, k)),
        pl.BlockSpec((TK, TN), lambda i, j, k: (k, j)),
        pl.BlockSpec((1, TN), lambda i, j, k: (0, j)),
    ]
    args = [xb, wb, bp]
    if post_add is not None:
        pa = post_add.astype(jnp.float32)
        if (Mp, Np) != (M, N):
            pa = jnp.pad(pa, ((0, Mp - M), (0, Np - N)))
        in_specs.append(pl.BlockSpec((TM, TN), lambda i, j, k: (i, j)))
        args.append(pa)

    out = pl.pallas_call(
        functools.partial(_matmul_kernel, act=act, post_scale=post_scale),
        out_shape=jax.ShapeDtypeStruct((Mp, Np), jnp.float32),
        grid=(Mp // TM, Np // TN, Kp // TK),
        in_specs=in_specs,
        out_specs=pl.BlockSpec((TM, TN), lambda i, j, k: (i, j)),
        scratch_shapes=[pltpu.VMEM((TM, TN), jnp.float32)],
        compiler_params=pltpu.CompilerParams(
            dimension_semantics=("parallel", "parallel", "arbitrary"),
            vmem_limit_bytes=32 * 1024 * 1024),
        cost_estimate=pl.CostEstimate(
            flops=2 * Mp * Np * Kp,
            transcendentals=0,
            bytes_accessed=2 * (Mp * Kp + Kp * Np) + 4 * Mp * Np),
    )(*args)
    if (Mp, Np) != (M, N):
        out = out[:M, :N]
    return out


# -------------------- fully fused transformer encoder layer ---------------------
# QKV proj + MHA + out-proj + residual + LN1 + FF1(ReLU) + FF2 + residual + LN2,
# one grid step per batch element (intermediates never leave VMEM).
def _encoder_layer_kernel(x_ref, win_ref, bin_ref, wo_ref, bo_ref,
                          g1_ref, be1_ref, w1_ref, bf1_ref, w2_ref, bf2_ref,
                          g2_ref, be2_ref, o_ref, *, n_head, head_dim, eps):
    x = x_ref[0]                                               # (S, D) f32
    d = n_head * head_dim
    scale = 1.0 / math.sqrt(head_dim)

    # QKV projection (MXU, bf16 operands, f32 accumulation)
    qkv = jnp.dot(x.astype(jnp.bfloat16), win_ref[...],
                  preferred_element_type=jnp.float32) + bin_ref[...]   # (S, 3D)

    # per-head attention; concat-free head merge: attn @ Wo == sum_h head_h @ Wo[h]
    proj = jnp.zeros_like(x)
    for h in range(n_head):
        lo = h * head_dim
        qh = qkv[:, lo:lo + head_dim].astype(jnp.bfloat16)
        kh = qkv[:, d + lo:d + lo + head_dim].astype(jnp.bfloat16)
        vh = qkv[:, 2 * d + lo:2 * d + lo + head_dim].astype(jnp.bfloat16)
        s = jax.lax.dot_general(qh, kh, (((1,), (1,)), ((), ())),
                                preferred_element_type=jnp.float32) * scale  # (S,S)
        m = jnp.max(s, axis=-1, keepdims=True)
        p = jnp.exp(s - m)
        denom = jnp.sum(p, axis=-1, keepdims=True)
        p = p * pl.reciprocal(denom, approx=True)
        oh = jnp.dot(p.astype(jnp.bfloat16), vh,
                     preferred_element_type=jnp.float32)                      # (S,HD)
        proj = proj + jnp.dot(oh.astype(jnp.bfloat16), wo_ref[h],
                              preferred_element_type=jnp.float32)

    # residual + LayerNorm1 (post-norm)
    y = x + proj + bo_ref[...]
    mean = jnp.mean(y, axis=-1, keepdims=True)
    var = jnp.mean((y - mean) ** 2, axis=-1, keepdims=True)
    y1 = (y - mean) * jax.lax.rsqrt(var + eps) * g1_ref[...] + be1_ref[...]

    # feed-forward + residual + LayerNorm2
    h1 = jnp.dot(y1.astype(jnp.bfloat16), w1_ref[...],
                 preferred_element_type=jnp.float32) + bf1_ref[...]
    h1 = jnp.maximum(h1, 0.0)
    ff = jnp.dot(h1.astype(jnp.bfloat16), w2_ref[...],
                 preferred_element_type=jnp.float32) + bf2_ref[...]
    y2 = y1 + ff
    mean2 = jnp.mean(y2, axis=-1, keepdims=True)
    var2 = jnp.mean((y2 - mean2) ** 2, axis=-1, keepdims=True)
    o_ref[0] = ((y2 - mean2) * jax.lax.rsqrt(var2 + eps) * g2_ref[...]
                + be2_ref[...]).astype(o_ref.dtype)


def pallas_encoder_layer(x, lp):
    B, S, D = x.shape
    F = DIM_FF
    wo = lp["out_w"].reshape(N_HEAD, HEAD_DIM, D).astype(jnp.bfloat16)
    kern = functools.partial(_encoder_layer_kernel, n_head=N_HEAD,
                             head_dim=HEAD_DIM, eps=LN_EPS)
    return pl.pallas_call(
        kern,
        out_shape=jax.ShapeDtypeStruct((B, S, D), jnp.float32),
        grid=(B,),
        in_specs=[
            pl.BlockSpec((1, S, D), lambda bi: (bi, 0, 0)),
            pl.BlockSpec((D, 3 * D), lambda bi: (0, 0)),
            pl.BlockSpec((1, 3 * D), lambda bi: (0, 0)),
            pl.BlockSpec((N_HEAD, HEAD_DIM, D), lambda bi: (0, 0, 0)),
            pl.BlockSpec((1, D), lambda bi: (0, 0)),
            pl.BlockSpec((1, D), lambda bi: (0, 0)),
            pl.BlockSpec((1, D), lambda bi: (0, 0)),
            pl.BlockSpec((D, F), lambda bi: (0, 0)),
            pl.BlockSpec((1, F), lambda bi: (0, 0)),
            pl.BlockSpec((F, D), lambda bi: (0, 0)),
            pl.BlockSpec((1, D), lambda bi: (0, 0)),
            pl.BlockSpec((1, D), lambda bi: (0, 0)),
            pl.BlockSpec((1, D), lambda bi: (0, 0)),
        ],
        out_specs=pl.BlockSpec((1, S, D), lambda bi: (bi, 0, 0)),
        compiler_params=pltpu.CompilerParams(dimension_semantics=("parallel",)),
    )(x,
      lp["in_w"].astype(jnp.bfloat16), lp["in_b"].reshape(1, 3 * D).astype(jnp.float32),
      wo, lp["out_b"].reshape(1, D).astype(jnp.float32),
      lp["ln1_g"].reshape(1, D), lp["ln1_b"].reshape(1, D),
      lp["ff1_w"].astype(jnp.bfloat16), lp["ff1_b"].reshape(1, F).astype(jnp.float32),
      lp["ff2_w"].astype(jnp.bfloat16), lp["ff2_b"].reshape(1, D).astype(jnp.float32),
      lp["ln2_g"].reshape(1, D), lp["ln2_b"].reshape(1, D))


# ----------------------------- final LayerNorm (no residual) --------------------
def _ln_kernel(x_ref, g_ref, beta_ref, o_ref, *, eps):
    x = x_ref[...]
    mean = jnp.mean(x, axis=-1, keepdims=True)
    var = jnp.mean((x - mean) ** 2, axis=-1, keepdims=True)
    y = (x - mean) * jax.lax.rsqrt(var + eps)
    o_ref[...] = (y * g_ref[...] + beta_ref[...]).astype(o_ref.dtype)


def pallas_layernorm(x2d, ln_g, ln_b):
    M, D = x2d.shape
    TM = 64 if M % 64 == 0 else M
    kern = functools.partial(_ln_kernel, eps=LN_EPS)
    return pl.pallas_call(
        kern,
        out_shape=jax.ShapeDtypeStruct((M, D), jnp.float32),
        grid=(M // TM,),
        in_specs=[
            pl.BlockSpec((TM, D), lambda i: (i, 0)),
            pl.BlockSpec((1, D), lambda i: (0, 0)),
            pl.BlockSpec((1, D), lambda i: (0, 0)),
        ],
        out_specs=pl.BlockSpec((TM, D), lambda i: (i, 0)),
        compiler_params=pltpu.CompilerParams(dimension_semantics=("parallel",)),
    )(x2d, ln_g.reshape(1, D), ln_b.reshape(1, D))


# ----------------------------- JAX glue ------------------------------------------
def maxpool(x, sh, sw):
    # TODO(synk): pooling is a trivial reshape-max reduction; kept in plain JAX glue.
    N, H, W, C = x.shape
    if sw == 1:
        return x.reshape(N, H // sh, sh, W, C).max(axis=2)
    return x.reshape(N, H // sh, sh, W // sw, sw, C).max(axis=(2, 4))


def positional_encoding(seq_len, d_model):
    pos = jnp.arange(seq_len, dtype=jnp.float32)[:, None]
    div = jnp.exp(jnp.arange(0, d_model, 2, dtype=jnp.float32)
                  * (-math.log(10000.0) / d_model))
    pe = jnp.zeros((seq_len, d_model), jnp.float32)
    pe = pe.at[:, 0::2].set(jnp.sin(pos * div))
    pe = pe.at[:, 1::2].set(jnp.cos(pos * div))
    return pe


# ----------------------------- parameter init ------------------------------------
def init_params(key):
    p = {}
    ks = iter(jax.random.split(key, 64))

    def w(shape, scale=0.05):
        return scale * jax.random.normal(next(ks), shape, jnp.float32)

    # CNN (scaled-down VGG-style stand-in): conv3x3(3->16), conv3x3(16->32), 1x1(32->D)
    p["c1_w"] = w((3 * 3 * 3, 16)); p["c1_b"] = w((16,), 0.01)
    p["c2_w"] = w((3 * 3 * 16, 32)); p["c2_b"] = w((32,), 0.01)
    p["cp_w"] = w((32, D_MODEL));    p["cp_b"] = w((D_MODEL,), 0.01)

    layers = []
    for _ in range(N_LAYERS):
        lp = {
            "in_w": w((D_MODEL, 3 * D_MODEL)), "in_b": w((3 * D_MODEL,), 0.01),
            "out_w": w((D_MODEL, D_MODEL)),    "out_b": w((D_MODEL,), 0.01),
            "ln1_g": jnp.ones((D_MODEL,), jnp.float32),
            "ln1_b": jnp.zeros((D_MODEL,), jnp.float32),
            "ff1_w": w((D_MODEL, DIM_FF)),     "ff1_b": w((DIM_FF,), 0.01),
            "ff2_w": w((DIM_FF, D_MODEL)),     "ff2_b": w((D_MODEL,), 0.01),
            "ln2_g": jnp.ones((D_MODEL,), jnp.float32),
            "ln2_b": jnp.zeros((D_MODEL,), jnp.float32),
        }
        layers.append(lp)
    p["layers"] = layers
    p["lnf_g"] = jnp.ones((D_MODEL,), jnp.float32)
    p["lnf_b"] = jnp.zeros((D_MODEL,), jnp.float32)
    return p


# ----------------------------- forward pass ---------------------------------------
def cnn_forward(img_nchw, p):
    x = jnp.transpose(img_nchw, (0, 2, 3, 1))                  # NCHW -> NHWC
    y = pallas_conv3x3_relu(x, p["c1_w"], p["c1_b"])
    y = maxpool(y, 2, 2)                                       # H/2, W/2
    z = pallas_conv3x3_relu(y, p["c2_w"], p["c2_b"])
    z = maxpool(z, 2, 1)                                       # H/2, W

    N, H, W, C = z.shape
    S = W * H
    # vietocr embedding (sqrt(d)*src + PE) folded into the 1x1-conv epilogue.
    # PE is pre-permuted to conv-row order (n, h, w); seq index = w*H + h.
    pe = positional_encoding(S, D_MODEL)
    pe_rows = jnp.transpose(pe.reshape(W, H, D_MODEL), (1, 0, 2))        # (H, W, D)
    pe_rows = jnp.broadcast_to(pe_rows[None], (N, H, W, D_MODEL))
    pe_rows = pe_rows.reshape(N * H * W, D_MODEL)

    f = pallas_matmul_bias(z.reshape(N * H * W, C), p["cp_w"], p["cp_b"],
                           post_add=pe_rows, post_scale=math.sqrt(D_MODEL))
    f = f.reshape(N, H, W, D_MODEL)
    # vietocr (B,C,H,W)->(W*H,B,C) reordering, kept batch-major (B, S, D) internally.
    src = jnp.transpose(f, (0, 2, 1, 3)).reshape(N, S, D_MODEL)
    return src


def ocr_encoder_forward(img, p):
    x = cnn_forward(img, p)                       # (B, S, D), already sqrt(d)*src + PE
    B, S, D = x.shape
    for lp in p["layers"]:
        # PyTorch post-norm TransformerEncoderLayer semantics (dropout = identity
        # in eval), fully fused into one Pallas kernel per layer.
        x = pallas_encoder_layer(x, lp)
    # nn.Transformer's encoder applies a final LayerNorm after the layer stack.
    xn = pallas_layernorm(x.reshape(B * S, D), p["lnf_g"], p["lnf_b"])
    return jnp.transpose(xn.reshape(B, S, D), (1, 0, 2))       # memory: (seq, batch, d)


# ----------------------------- main ------------------------------------------------
if __name__ == "__main__":
    key = jax.random.PRNGKey(0)
    k_img, k_par = jax.random.split(key)

    img = jax.random.normal(k_img, (2, 3, 16, 32), jnp.float32)  # NCHW like PyTorch
    params = init_params(k_par)

    memory = jax.jit(ocr_encoder_forward)(img, params)
    memory = jax.block_until_ready(memory)

    # (W*H, B, D) = (16*4, 2, 32)
    assert memory.shape == (64, 2, D_MODEL), memory.shape
    assert bool(jnp.all(jnp.isfinite(memory)))
    print("KERNEL_OK")
</pallas_src>

<mosaic_0001>
module attributes {stable_mosaic.version = 11 : i64} {
  func.func @_conv3x3_relu_kernel(%arg0: i32, %arg1: memref<1x18x34x3xf32, #tpu.memory_space<vmem>>, %arg2: memref<9x3x16xbf16, #tpu.memory_space<vmem>>, %arg3: memref<1x16xf32, #tpu.memory_space<vmem>>, %arg4: memref<1x512x16xf32, #tpu.memory_space<vmem>>) attributes {dimension_semantics = [#tpu.dimension_semantics<parallel>], iteration_bounds = array<i64: 2>, scalar_prefetch = 0 : i64, scratch_operands = 0 : i64, tpu.core_type = #tpu.core_type<tc>, window_params = [{transform_indices = @transform_0, window_bounds = array<i64: 1, 18, 34, 3>}, {pipeline_mode = #tpu.pipeline_mode<synchronous>, transform_indices = @transform_1, window_bounds = array<i64: 9, 3, 16>}, {pipeline_mode = #tpu.pipeline_mode<synchronous>, transform_indices = @transform_2, window_bounds = array<i64: 1, 16>}, {transform_indices = @transform_3, window_bounds = array<i64: 1, 512, 16>}]} {
    %c0 = arith.constant 0 : index
    %c0_0 = arith.constant 0 : index
    %c0_1 = arith.constant 0 : index
    %c0_2 = arith.constant 0 : index
    %0 = vector.load %arg1[%c0, %c0_0, %c0_1, %c0_2] : memref<1x18x34x3xf32, #tpu.memory_space<vmem>>, vector<1x16x32x3xf32>
    %1 = vector.shape_cast %0 : vector<1x16x32x3xf32> to vector<16x32x3xf32>
    %2 = vector.shape_cast %1 : vector<16x32x3xf32> to vector<512x3xf32>
    %3 = arith.truncf %2 : vector<512x3xf32> to vector<512x3xbf16>
    %c0_3 = arith.constant 0 : index
    %c0_4 = arith.constant 0 : index
    %c0_5 = arith.constant 0 : index
    %4 = vector.load %arg2[%c0_3, %c0_4, %c0_5] : memref<9x3x16xbf16, #tpu.memory_space<vmem>>, vector<1x3x16xbf16>
    %5 = vector.shape_cast %4 : vector<1x3x16xbf16> to vector<3x16xbf16>
    %cst = arith.constant dense<0.000000e+00> : vector<512x16xf32>
    %6 = tpu.matmul %3, %5, %cst {dimension_numbers = #tpu.dot_dimension_numbers<[1], [0], [0], [1], [0, 0, 1, 1], [], []>} : vector<512x3xbf16>, vector<3x16xbf16>, vector<512x16xf32> -> vector<512x16xf32>
    %c0_6 = arith.constant 0 : index
    %c0_7 = arith.constant 0 : index
    %c1 = arith.constant 1 : index
    %c0_8 = arith.constant 0 : index
    %7 = vector.load %arg1[%c0_6, %c0_7, %c1, %c0_8] : memref<1x18x34x3xf32, #tpu.memory_space<vmem>>, vector<1x16x32x3xf32>
    %8 = vector.shape_cast %7 : vector<1x16x32x3xf32> to vector<16x32x3xf32>
    %9 = vector.shape_cast %8 : vector<16x32x3xf32> to vector<512x3xf32>
    %10 = arith.truncf %9 : vector<512x3xf32> to vector<512x3xbf16>
    %c1_9 = arith.constant 1 : index
    %c0_10 = arith.constant 0 : index
    %c0_11 = arith.constant 0 : index
    %11 = vector.load %arg2[%c1_9, %c0_10, %c0_11] : memref<9x3x16xbf16, #tpu.memory_space<vmem>>, vector<1x3x16xbf16>
    %12 = vector.shape_cast %11 : vector<1x3x16xbf16> to vector<3x16xbf16>
    %cst_12 = arith.constant dense<0.000000e+00> : vector<512x16xf32>
    %13 = tpu.matmul %10, %12, %cst_12 {dimension_numbers = #tpu.dot_dimension_numbers<[1], [0], [0], [1], [0, 0, 1, 1], [], []>} : vector<512x3xbf16>, vector<3x16xbf16>, vector<512x16xf32> -> vector<512x16xf32>
    %14 = arith.addf %6, %13 : vector<512x16xf32>
    %c0_13 = arith.constant 0 : index
    %c0_14 = arith.constant 0 : index
    %c2 = arith.constant 2 : index
    %c0_15 = arith.constant 0 : index
    %15 = vector.load %arg1[%c0_13, %c0_14, %c2, %c0_15] : memref<1x18x34x3xf32, #tpu.memory_space<vmem>>, vector<1x16x32x3xf32>
    %16 = vector.shape_cast %15 : vector<1x16x32x3xf32> to vector<16x32x3xf32>
    %17 = vector.shape_cast %16 : vector<16x32x3xf32> to vector<512x3xf32>
    %18 = arith.truncf %17 : vector<512x3xf32> to vector<512x3xbf16>
    %c2_16 = arith.constant 2 : index
    %c0_17 = arith.constant 0 : index
    %c0_18 = arith.constant 0 : index
    %19 = vector.load %arg2[%c2_16, %c0_17, %c0_18] : memref<9x3x16xbf16, #tpu.memory_space<vmem>>, vector<1x3x16xbf16>
    %20 = vector.shape_cast %19 : vector<1x3x16xbf16> to vector<3x16xbf16>
    %cst_19 = arith.constant dense<0.000000e+00> : vector<512x16xf32>
    %21 = tpu.matmul %18, %20, %cst_19 {dimension_numbers = #tpu.dot_dimension_numbers<[1], [0], [0], [1], [0, 0, 1, 1], [], []>} : vector<512x3xbf16>, vector<3x16xbf16>, vector<512x16xf32> -> vector<512x16xf32>
    %22 = arith.addf %14, %21 : vector<512x16xf32>
    %c0_20 = arith.constant 0 : index
    %c1_21 = arith.constant 1 : index
    %c0_22 = arith.constant 0 : index
    %c0_23 = arith.constant 0 : index
    %23 = vector.load %arg1[%c0_20, %c1_21, %c0_22, %c0_23] : memref<1x18x34x3xf32, #tpu.memory_space<vmem>>, vector<1x16x32x3xf32>
    %24 = vector.shape_cast %23 : vector<1x16x32x3xf32> to vector<16x32x3xf32>
    %25 = vector.shape_cast %24 : vector<16x32x3xf32> to vector<512x3xf32>
    %26 = arith.truncf %25 : vector<512x3xf32> to vector<512x3xbf16>
    %c3 = arith.constant 3 : index
    %c0_24 = arith.constant 0 : index
    %c0_25 = arith.constant 0 : index
    %27 = vector.load %arg2[%c3, %c0_24, %c0_25] : memref<9x3x16xbf16, #tpu.memory_space<vmem>>, vector<1x3x16xbf16>
    %28 = vector.shape_cast %27 : vector<1x3x16xbf16> to vector<3x16xbf16>
    %cst_26 = arith.constant dense<0.000000e+00> : vector<512x16xf32>
    %29 = tpu.matmul %26, %28, %cst_26 {dimension_numbers = #tpu.dot_dimension_numbers<[1], [0], [0], [1], [0, 0, 1, 1], [], []>} : vector<512x3xbf16>, vector<3x16xbf16>, vector<512x16xf32> -> vector<512x16xf32>
    %30 = arith.addf %22, %29 : vector<512x16xf32>
    %c0_27 = arith.constant 0 : index
    %c1_28 = arith.constant 1 : index
    %c1_29 = arith.constant 1 : index
    %c0_30 = arith.constant 0 : index
    %31 = vector.load %arg1[%c0_27, %c1_28, %c1_29, %c0_30] : memref<1x18x34x3xf32, #tpu.memory_space<vmem>>, vector<1x16x32x3xf32>
    %32 = vector.shape_cast %31 : vector<1x16x32x3xf32> to vector<16x32x3xf32>
    %33 = vector.shape_cast %32 : vector<16x32x3xf32> to vector<512x3xf32>
    %34 = arith.truncf %33 : vector<512x3xf32> to vector<512x3xbf16>
    %c4 = arith.constant 4 : index
    %c0_31 = arith.constant 0 : index
    %c0_32 = arith.constant 0 : index
    %35 = vector.load %arg2[%c4, %c0_31, %c0_32] : memref<9x3x16xbf16, #tpu.memory_space<vmem>>, vector<1x3x16xbf16>
    %36 = vector.shape_cast %35 : vector<1x3x16xbf16> to vector<3x16xbf16>
    %cst_33 = arith.constant dense<0.000000e+00> : vector<512x16xf32>
    %37 = tpu.matmul %34, %36, %cst_33 {dimension_numbers = #tpu.dot_dimension_numbers<[1], [0], [0], [1], [0, 0, 1, 1], [], []>} : vector<512x3xbf16>, vector<3x16xbf16>, vector<512x16xf32> -> vector<512x16xf32>
    %38 = arith.addf %30, %37 : vector<512x16xf32>
    %c0_34 = arith.constant 0 : index
    %c1_35 = arith.constant 1 : index
    %c2_36 = arith.constant 2 : index
    %c0_37 = arith.constant 0 : index
    %39 = vector.load %arg1[%c0_34, %c1_35, %c2_36, %c0_37] : memref<1x18x34x3xf32, #tpu.memory_space<vmem>>, vector<1x16x32x3xf32>
    %40 = vector.shape_cast %39 : vector<1x16x32x3xf32> to vector<16x32x3xf32>
    %41 = vector.shape_cast %40 : vector<16x32x3xf32> to vector<512x3xf32>
    %42 = arith.truncf %41 : vector<512x3xf32> to vector<512x3xbf16>
    %c5 = arith.constant 5 : index
    %c0_38 = arith.constant 0 : index
    %c0_39 = arith.constant 0 : index
    %43 = vector.load %arg2[%c5, %c0_38, %c0_39] : memref<9x3x16xbf16, #tpu.memory_space<vmem>>, vector<1x3x16xbf16>
    %44 = vector.shape_cast %43 : vector<1x3x16xbf16> to vector<3x16xbf16>
    %cst_40 = arith.constant dense<0.000000e+00> : vector<512x16xf32>
    %45 = tpu.matmul %42, %44, %cst_40 {dimension_numbers = #tpu.dot_dimension_numbers<[1], [0], [0], [1], [0, 0, 1, 1], [], []>} : vector<512x3xbf16>, vector<3x16xbf16>, vector<512x16xf32> -> vector<512x16xf32>
    %46 = arith.addf %38, %45 : vector<512x16xf32>
    %c0_41 = arith.constant 0 : index
    %c2_42 = arith.constant 2 : index
    %c0_43 = arith.constant 0 : index
    %c0_44 = arith.constant 0 : index
    %47 = vector.load %arg1[%c0_41, %c2_42, %c0_43, %c0_44] : memref<1x18x34x3xf32, #tpu.memory_space<vmem>>, vector<1x16x32x3xf32>
    %48 = vector.shape_cast %47 : vector<1x16x32x3xf32> to vector<16x32x3xf32>
    %49 = vector.shape_cast %48 : vector<16x32x3xf32> to vector<512x3xf32>
    %50 = arith.truncf %49 : vector<512x3xf32> to vector<512x3xbf16>
    %c6 = arith.constant 6 : index
    %c0_45 = arith.constant 0 : index
    %c0_46 = arith.constant 0 : index
    %51 = vector.load %arg2[%c6, %c0_45, %c0_46] : memref<9x3x16xbf16, #tpu.memory_space<vmem>>, vector<1x3x16xbf16>
    %52 = vector.shape_cast %51 : vector<1x3x16xbf16> to vector<3x16xbf16>
    %cst_47 = arith.constant dense<0.000000e+00> : vector<512x16xf32>
    %53 = tpu.matmul %50, %52, %cst_47 {dimension_numbers = #tpu.dot_dimension_numbers<[1], [0], [0], [1], [0, 0, 1, 1], [], []>} : vector<512x3xbf16>, vector<3x16xbf16>, vector<512x16xf32> -> vector<512x16xf32>
    %54 = arith.addf %46, %53 : vector<512x16xf32>
    %c0_48 = arith.constant 0 : index
    %c2_49 = arith.constant 2 : index
    %c1_50 = arith.constant 1 : index
    %c0_51 = arith.constant 0 : index
    %55 = vector.load %arg1[%c0_48, %c2_49, %c1_50, %c0_51] : memref<1x18x34x3xf32, #tpu.memory_space<vmem>>, vector<1x16x32x3xf32>
    %56 = vector.shape_cast %55 : vector<1x16x32x3xf32> to vector<16x32x3xf32>
    %57 = vector.shape_cast %56 : vector<16x32x3xf32> to vector<512x3xf32>
    %58 = arith.truncf %57 : vector<512x3xf32> to vector<512x3xbf16>
    %c7 = arith.constant 7 : index
    %c0_52 = arith.constant 0 : index
    %c0_53 = arith.constant 0 : index
    %59 = vector.load %arg2[%c7, %c0_52, %c0_53] : memref<9x3x16xbf16, #tpu.memory_space<vmem>>, vector<1x3x16xbf16>
    %60 = vector.shape_cast %59 : vector<1x3x16xbf16> to vector<3x16xbf16>
    %cst_54 = arith.constant dense<0.000000e+00> : vector<512x16xf32>
    %61 = tpu.matmul %58, %60, %cst_54 {dimension_numbers = #tpu.dot_dimension_numbers<[1], [0], [0], [1], [0, 0, 1, 1], [], []>} : vector<512x3xbf16>, vector<3x16xbf16>, vector<512x16xf32> -> vector<512x16xf32>
    %62 = arith.addf %54, %61 : vector<512x16xf32>
    %c0_55 = arith.constant 0 : index
    %c2_56 = arith.constant 2 : index
    %c2_57 = arith.constant 2 : index
    %c0_58 = arith.constant 0 : index
    %63 = vector.load %arg1[%c0_55, %c2_56, %c2_57, %c0_58] : memref<1x18x34x3xf32, #tpu.memory_space<vmem>>, vector<1x16x32x3xf32>
    %64 = vector.shape_cast %63 : vector<1x16x32x3xf32> to vector<16x32x3xf32>
    %65 = vector.shape_cast %64 : vector<16x32x3xf32> to vector<512x3xf32>
    %66 = arith.truncf %65 : vector<512x3xf32> to vector<512x3xbf16>
    %c8 = arith.constant 8 : index
    %c0_59 = arith.constant 0 : index
    %c0_60 = arith.constant 0 : index
    %67 = vector.load %arg2[%c8, %c0_59, %c0_60] : memref<9x3x16xbf16, #tpu.memory_space<vmem>>, vector<1x3x16xbf16>
    %68 = vector.shape_cast %67 : vector<1x3x16xbf16> to vector<3x16xbf16>
    %cst_61 = arith.constant dense<0.000000e+00> : vector<512x16xf32>
    %69 = tpu.matmul %66, %68, %cst_61 {dimension_numbers = #tpu.dot_dimension_numbers<[1], [0], [0], [1], [0, 0, 1, 1], [], []>} : vector<512x3xbf16>, vector<3x16xbf16>, vector<512x16xf32> -> vector<512x16xf32>
    %70 = arith.addf %62, %69 : vector<512x16xf32>
    %c0_62 = arith.constant 0 : index
    %c0_63 = arith.constant 0 : index
    %71 = vector.load %arg3[%c0_62, %c0_63] : memref<1x16xf32, #tpu.memory_space<vmem>>, vector<1x16xf32>
    %72 = vector.broadcast %71 : vector<1x16xf32> to vector<512x16xf32>
    %73 = arith.addf %70, %72 : vector<512x16xf32>
    %cst_64 = arith.constant 0.000000e+00 : f32
    %74 = vector.broadcast %cst_64 : f32 to vector<512x16xf32>
    %75 = arith.maximumf %73, %74 : vector<512x16xf32>
    %c0_65 = arith.constant 0 : index
    %c0_66 = arith.constant 0 : index
    %c0_67 = arith.constant 0 : index
    %76 = vector.load %arg4[%c0_65, %c0_66, %c0_67] : memref<1x512x16xf32, #tpu.memory_space<vmem>>, vector<1x512x16xf32>
    %77 = vector.shape_cast %76 : vector<1x512x16xf32> to vector<512x16xf32>
    %78 = vector.shape_cast %75 : vector<512x16xf32> to vector<1x512x16xf32>
    tpu.vector_store %arg4[%c0_65, %c0_66, %c0_67], %78 {strides = array<i32>} : memref<1x512x16xf32, #tpu.memory_space<vmem>>, vector<1x512x16xf32>,
    return
  }
  func.func @transform_0(%arg0: i32) -> (i32, i32, i32, i32) {
    %c0_i32 = arith.constant 0 : i32
    %c0_i32_0 = arith.constant 0 : i32
    %c0_i32_1 = arith.constant 0 : i32
    %c0_i32_2 = arith.constant 0 : i32
    return %arg0, %c0_i32, %c0_i32_0, %c0_i32_1 : i32, i32, i32, i32
  }
  func.func @transform_1(%arg0: i32) -> (i32, i32, i32) {
    %c0_i32 = arith.constant 0 : i32
    %c0_i32_0 = arith.constant 0 : i32
    %c0_i32_1 = arith.constant 0 : i32
    %c0_i32_2 = arith.constant 0 : i32
    return %c0_i32, %c0_i32_0, %c0_i32_1 : i32, i32, i32
  }
  func.func @transform_2(%arg0: i32) -> (i32, i32) {
    %c0_i32 = arith.constant 0 : i32
    %c0_i32_0 = arith.constant 0 : i32
    %c0_i32_1 = arith.constant 0 : i32
    return %c0_i32, %c0_i32_0 : i32, i32
  }
  func.func @transform_3(%arg0: i32) -> (i32, i32, i32) {
    %c0_i32 = arith.constant 0 : i32
    %c0_i32_0 = arith.constant 0 : i32
    %c0_i32_1 = arith.constant 0 : i32
    return %arg0, %c0_i32, %c0_i32_0 : i32, i32, i32
  }
}

module attributes {stable_mosaic.version = 11 : i64} {
  func.func @_conv3x3_relu_kernel(%arg0: i32, %arg1: memref<1x10x18x16xf32, #tpu.memory_space<vmem>>, %arg2: memref<9x16x32xbf16, #tpu.memory_space<vmem>>, %arg3: memref<1x32xf32, #tpu.memory_space<vmem>>, %arg4: memref<1x128x32xf32, #tpu.memory_space<vmem>>) attributes {dimension_semantics = [#tpu.dimension_semantics<parallel>], iteration_bounds = array<i64: 2>, scalar_prefetch = 0 : i64, scratch_operands = 0 : i64, tpu.core_type = #tpu.core_type<tc>, window_params = [{transform_indices = @transform_0, window_bounds = array<i64: 1, 10, 18, 16>}, {pipeline_mode = #tpu.pipeline_mode<synchronous>, transform_indices = @transform_1, window_bounds = array<i64: 9, 16, 32>}, {pipeline_mode = #tpu.pipeline_mode<synchronous>, transform_indices = @transform_2, window_bounds = array<i64: 1, 32>}, {transform_indices = @transform_3, window_bounds = array<i64: 1, 128, 32>}]} {
    %c0 = arith.constant 0 : index
    %c0_0 = arith.constant 0 : index
    %c0_1 = arith.constant 0 : index
    %c0_2 = arith.constant 0 : index
    %0 = vector.load %arg1[%c0, %c0_0, %c0_1, %c0_2] : memref<1x10x18x16xf32, #tpu.memory_space<vmem>>, vector<1x8x16x16xf32>
    %1 = vector.shape_cast %0 : vector<1x8x16x16xf32> to vector<8x16x16xf32>
    %2 = vector.shape_cast %1 : vector<8x16x16xf32> to vector<128x16xf32>
    %3 = arith.truncf %2 : vector<128x16xf32> to vector<128x16xbf16>
    %c0_3 = arith.constant 0 : index
    %c0_4 = arith.constant 0 : index
    %c0_5 = arith.constant 0 : index
    %4 = vector.load %arg2[%c0_3, %c0_4, %c0_5] : memref<9x16x32xbf16, #tpu.memory_space<vmem>>, vector<1x16x32xbf16>
    %5 = vector.shape_cast %4 : vector<1x16x32xbf16> to vector<16x32xbf16>
    %cst = arith.constant dense<0.000000e+00> : vector<128x32xf32>
    %6 = tpu.matmul %3, %5, %cst {dimension_numbers = #tpu.dot_dimension_numbers<[1], [0], [0], [1], [0, 0, 1, 1], [], []>} : vector<128x16xbf16>, vector<16x32xbf16>, vector<128x32xf32> -> vector<128x32xf32>
    %c0_6 = arith.constant 0 : index
    %c0_7 = arith.constant 0 : index
    %c1 = arith.constant 1 : index
    %c0_8 = arith.constant 0 : index
    %7 = vector.load %arg1[%c0_6, %c0_7, %c1, %c0_8] : memref<1x10x18x16xf32, #tpu.memory_space<vmem>>, vector<1x8x16x16xf32>
    %8 = vector.shape_cast %7 : vector<1x8x16x16xf32> to vector<8x16x16xf32>
    %9 = vector.shape_cast %8 : vector<8x16x16xf32> to vector<128x16xf32>
    %10 = arith.truncf %9 : vector<128x16xf32> to vector<128x16xbf16>
    %c1_9 = arith.constant 1 : index
    %c0_10 = arith.constant 0 : index
    %c0_11 = arith.constant 0 : index
    %11 = vector.load %arg2[%c1_9, %c0_10, %c0_11] : memref<9x16x32xbf16, #tpu.memory_space<vmem>>, vector<1x16x32xbf16>
    %12 = vector.shape_cast %11 : vector<1x16x32xbf16> to vector<16x32xbf16>
    %cst_12 = arith.constant dense<0.000000e+00> : vector<128x32xf32>
    %13 = tpu.matmul %10, %12, %cst_12 {dimension_numbers = #tpu.dot_dimension_numbers<[1], [0], [0], [1], [0, 0, 1, 1], [], []>} : vector<128x16xbf16>, vector<16x32xbf16>, vector<128x32xf32> -> vector<128x32xf32>
    %14 = arith.addf %6, %13 : vector<128x32xf32>
    %c0_13 = arith.constant 0 : index
    %c0_14 = arith.constant 0 : index
    %c2 = arith.constant 2 : index
    %c0_15 = arith.constant 0 : index
    %15 = vector.load %arg1[%c0_13, %c0_14, %c2, %c0_15] : memref<1x10x18x16xf32, #tpu.memory_space<vmem>>, vector<1x8x16x16xf32>
    %16 = vector.shape_cast %15 : vector<1x8x16x16xf32> to vector<8x16x16xf32>
    %17 = vector.shape_cast %16 : vector<8x16x16xf32> to vector<128x16xf32>
    %18 = arith.truncf %17 : vector<128x16xf32> to vector<128x16xbf16>
    %c2_16 = arith.constant 2 : index
    %c0_17 = arith.constant 0 : index
    %c0_18 = arith.constant 0 : index
    %19 = vector.load %arg2[%c2_16, %c0_17, %c0_18] : memref<9x16x32xbf16, #tpu.memory_space<vmem>>, vector<1x16x32xbf16>
    %20 = vector.shape_cast %19 : vector<1x16x32xbf16> to vector<16x32xbf16>
    %cst_19 = arith.constant dense<0.000000e+00> : vector<128x32xf32>
    %21 = tpu.matmul %18, %20, %cst_19 {dimension_numbers = #tpu.dot_dimension_numbers<[1], [0], [0], [1], [0, 0, 1, 1], [], []>} : vector<128x16xbf16>, vector<16x32xbf16>, vector<128x32xf32> -> vector<128x32xf32>
    %22 = arith.addf %14, %21 : vector<128x32xf32>
    %c0_20 = arith.constant 0 : index
    %c1_21 = arith.constant 1 : index
    %c0_22 = arith.constant 0 : index
    %c0_23 = arith.constant 0 : index
    %23 = vector.load %arg1[%c0_20, %c1_21, %c0_22, %c0_23] : memref<1x10x18x16xf32, #tpu.memory_space<vmem>>, vector<1x8x16x16xf32>
    %24 = vector.shape_cast %23 : vector<1x8x16x16xf32> to vector<8x16x16xf32>
    %25 = vector.shape_cast %24 : vector<8x16x16xf32> to vector<128x16xf32>
    %26 = arith.truncf %25 : vector<128x16xf32> to vector<128x16xbf16>
    %c3 = arith.constant 3 : index
    %c0_24 = arith.constant 0 : index
    %c0_25 = arith.constant 0 : index
    %27 = vector.load %arg2[%c3, %c0_24, %c0_25] : memref<9x16x32xbf16, #tpu.memory_space<vmem>>, vector<1x16x32xbf16>
    %28 = vector.shape_cast %27 : vector<1x16x32xbf16> to vector<16x32xbf16>
    %cst_26 = arith.constant dense<0.000000e+00> : vector<128x32xf32>
    %29 = tpu.matmul %26, %28, %cst_26 {dimension_numbers = #tpu.dot_dimension_numbers<[1], [0], [0], [1], [0, 0, 1, 1], [], []>} : vector<128x16xbf16>, vector<16x32xbf16>, vector<128x32xf32> -> vector<128x32xf32>
    %30 = arith.addf %22, %29 : vector<128x32xf32>
    %c0_27 = arith.constant 0 : index
    %c1_28 = arith.constant 1 : index
    %c1_29 = arith.constant 1 : index
    %c0_30 = arith.constant 0 : index
    %31 = vector.load %arg1[%c0_27, %c1_28, %c1_29, %c0_30] : memref<1x10x18x16xf32, #tpu.memory_space<vmem>>, vector<1x8x16x16xf32>
    %32 = vector.shape_cast %31 : vector<1x8x16x16xf32> to vector<8x16x16xf32>
    %33 = vector.shape_cast %32 : vector<8x16x16xf32> to vector<128x16xf32>
    %34 = arith.truncf %33 : vector<128x16xf32> to vector<128x16xbf16>
    %c4 = arith.constant 4 : index
    %c0_31 = arith.constant 0 : index
    %c0_32 = arith.constant 0 : index
    %35 = vector.load %arg2[%c4, %c0_31, %c0_32] : memref<9x16x32xbf16, #tpu.memory_space<vmem>>, vector<1x16x32xbf16>
    %36 = vector.shape_cast %35 : vector<1x16x32xbf16> to vector<16x32xbf16>
    %cst_33 = arith.constant dense<0.000000e+00> : vector<128x32xf32>
    %37 = tpu.matmul %34, %36, %cst_33 {dimension_numbers = #tpu.dot_dimension_numbers<[1], [0], [0], [1], [0, 0, 1, 1], [], []>} : vector<128x16xbf16>, vector<16x32xbf16>, vector<128x32xf32> -> vector<128x32xf32>
    %38 = arith.addf %30, %37 : vector<128x32xf32>
    %c0_34 = arith.constant 0 : index
    %c1_35 = arith.constant 1 : index
    %c2_36 = arith.constant 2 : index
    %c0_37 = arith.constant 0 : index
    %39 = vector.load %arg1[%c0_34, %c1_35, %c2_36, %c0_37] : memref<1x10x18x16xf32, #tpu.memory_space<vmem>>, vector<1x8x16x16xf32>
    %40 = vector.shape_cast %39 : vector<1x8x16x16xf32> to vector<8x16x16xf32>
    %41 = vector.shape_cast %40 : vector<8x16x16xf32> to vector<128x16xf32>
    %42 = arith.truncf %41 : vector<128x16xf32> to vector<128x16xbf16>
    %c5 = arith.constant 5 : index
    %c0_38 = arith.constant 0 : index
    %c0_39 = arith.constant 0 : index
    %43 = vector.load %arg2[%c5, %c0_38, %c0_39] : memref<9x16x32xbf16, #tpu.memory_space<vmem>>, vector<1x16x32xbf16>
    %44 = vector.shape_cast %43 : vector<1x16x32xbf16> to vector<16x32xbf16>
    %cst_40 = arith.constant dense<0.000000e+00> : vector<128x32xf32>
    %45 = tpu.matmul %42, %44, %cst_40 {dimension_numbers = #tpu.dot_dimension_numbers<[1], [0], [0], [1], [0, 0, 1, 1], [], []>} : vector<128x16xbf16>, vector<16x32xbf16>, vector<128x32xf32> -> vector<128x32xf32>
    %46 = arith.addf %38, %45 : vector<128x32xf32>
    %c0_41 = arith.constant 0 : index
    %c2_42 = arith.constant 2 : index
    %c0_43 = arith.constant 0 : index
    %c0_44 = arith.constant 0 : index
    %47 = vector.load %arg1[%c0_41, %c2_42, %c0_43, %c0_44] : memref<1x10x18x16xf32, #tpu.memory_space<vmem>>, vector<1x8x16x16xf32>
    %48 = vector.shape_cast %47 : vector<1x8x16x16xf32> to vector<8x16x16xf32>
    %49 = vector.shape_cast %48 : vector<8x16x16xf32> to vector<128x16xf32>
    %50 = arith.truncf %49 : vector<128x16xf32> to vector<128x16xbf16>
    %c6 = arith.constant 6 : index
    %c0_45 = arith.constant 0 : index
    %c0_46 = arith.constant 0 : index
    %51 = vector.load %arg2[%c6, %c0_45, %c0_46] : memref<9x16x32xbf16, #tpu.memory_space<vmem>>, vector<1x16x32xbf16>
    %52 = vector.shape_cast %51 : vector<1x16x32xbf16> to vector<16x32xbf16>
    %cst_47 = arith.constant dense<0.000000e+00> : vector<128x32xf32>
    %53 = tpu.matmul %50, %52, %cst_47 {dimension_numbers = #tpu.dot_dimension_numbers<[1], [0], [0], [1], [0, 0, 1, 1], [], []>} : vector<128x16xbf16>, vector<16x32xbf16>, vector<128x32xf32> -> vector<128x32xf32>
    %54 = arith.addf %46, %53 : vector<128x32xf32>
    %c0_48 = arith.constant 0 : index
    %c2_49 = arith.constant 2 : index
    %c1_50 = arith.constant 1 : index
    %c0_51 = arith.constant 0 : index
    %55 = vector.load %arg1[%c0_48, %c2_49, %c1_50, %c0_51] : memref<1x10x18x16xf32, #tpu.memory_space<vmem>>, vector<1x8x16x16xf32>
    %56 = vector.shape_cast %55 : vector<1x8x16x16xf32> to vector<8x16x16xf32>
    %57 = vector.shape_cast %56 : vector<8x16x16xf32> to vector<128x16xf32>
    %58 = arith.truncf %57 : vector<128x16xf32> to vector<128x16xbf16>
    %c7 = arith.constant 7 : index
    %c0_52 = arith.constant 0 : index
    %c0_53 = arith.constant 0 : index
    %59 = vector.load %arg2[%c7, %c0_52, %c0_53] : memref<9x16x32xbf16, #tpu.memory_space<vmem>>, vector<1x16x32xbf16>
    %60 = vector.shape_cast %59 : vector<1x16x32xbf16> to vector<16x32xbf16>
    %cst_54 = arith.constant dense<0.000000e+00> : vector<128x32xf32>
    %61 = tpu.matmul %58, %60, %cst_54 {dimension_numbers = #tpu.dot_dimension_numbers<[1], [0], [0], [1], [0, 0, 1, 1], [], []>} : vector<128x16xbf16>, vector<16x32xbf16>, vector<128x32xf32> -> vector<128x32xf32>
    %62 = arith.addf %54, %61 : vector<128x32xf32>
    %c0_55 = arith.constant 0 : index
    %c2_56 = arith.constant 2 : index
    %c2_57 = arith.constant 2 : index
    %c0_58 = arith.constant 0 : index
    %63 = vector.load %arg1[%c0_55, %c2_56, %c2_57, %c0_58] : memref<1x10x18x16xf32, #tpu.memory_space<vmem>>, vector<1x8x16x16xf32>
    %64 = vector.shape_cast %63 : vector<1x8x16x16xf32> to vector<8x16x16xf32>
    %65 = vector.shape_cast %64 : vector<8x16x16xf32> to vector<128x16xf32>
    %66 = arith.truncf %65 : vector<128x16xf32> to vector<128x16xbf16>
    %c8 = arith.constant 8 : index
    %c0_59 = arith.constant 0 : index
    %c0_60 = arith.constant 0 : index
    %67 = vector.load %arg2[%c8, %c0_59, %c0_60] : memref<9x16x32xbf16, #tpu.memory_space<vmem>>, vector<1x16x32xbf16>
    %68 = vector.shape_cast %67 : vector<1x16x32xbf16> to vector<16x32xbf16>
    %cst_61 = arith.constant dense<0.000000e+00> : vector<128x32xf32>
    %69 = tpu.matmul %66, %68, %cst_61 {dimension_numbers = #tpu.dot_dimension_numbers<[1], [0], [0], [1], [0, 0, 1, 1], [], []>} : vector<128x16xbf16>, vector<16x32xbf16>, vector<128x32xf32> -> vector<128x32xf32>
    %70 = arith.addf %62, %69 : vector<128x32xf32>
    %c0_62 = arith.constant 0 : index
    %c0_63 = arith.constant 0 : index
    %71 = vector.load %arg3[%c0_62, %c0_63] : memref<1x32xf32, #tpu.memory_space<vmem>>, vector<1x32xf32>
    %72 = vector.broadcast %71 : vector<1x32xf32> to vector<128x32xf32>
    %73 = arith.addf %70, %72 : vector<128x32xf32>
    %cst_64 = arith.constant 0.000000e+00 : f32
    %74 = vector.broadcast %cst_64 : f32 to vector<128x32xf32>
    %75 = arith.maximumf %73, %74 : vector<128x32xf32>
    %c0_65 = arith.constant 0 : index
    %c0_66 = arith.constant 0 : index
    %c0_67 = arith.constant 0 : index
    %76 = vector.load %arg4[%c0_65, %c0_66, %c0_67] : memref<1x128x32xf32, #tpu.memory_space<vmem>>, vector<1x128x32xf32>
    %77 = vector.shape_cast %76 : vector<1x128x32xf32> to vector<128x32xf32>
    %78 = vector.shape_cast %75 : vector<128x32xf32> to vector<1x128x32xf32>
    tpu.vector_store %arg4[%c0_65, %c0_66, %c0_67], %78 {strides = array<i32>} : memref<1x128x32xf32, #tpu.memory_space<vmem>>, vector<1x128x32xf32>,
    return
  }
  func.func @transform_0(%arg0: i32) -> (i32, i32, i32, i32) {
    %c0_i32 = arith.constant 0 : i32
    %c0_i32_0 = arith.constant 0 : i32
    %c0_i32_1 = arith.constant 0 : i32
    %c0_i32_2 = arith.constant 0 : i32
    return %arg0, %c0_i32, %c0_i32_0, %c0_i32_1 : i32, i32, i32, i32
  }
  func.func @transform_1(%arg0: i32) -> (i32, i32, i32) {
    %c0_i32 = arith.constant 0 : i32
    %c0_i32_0 = arith.constant 0 : i32
    %c0_i32_1 = arith.constant 0 : i32
    %c0_i32_2 = arith.constant 0 : i32
    return %c0_i32, %c0_i32_0, %c0_i32_1 : i32, i32, i32
  }
  func.func @transform_2(%arg0: i32) -> (i32, i32) {
    %c0_i32 = arith.constant 0 : i32
    %c0_i32_0 = arith.constant 0 : i32
    %c0_i32_1 = arith.constant 0 : i32
    return %c0_i32, %c0_i32_0 : i32, i32
  }
  func.func @transform_3(%arg0: i32) -> (i32, i32, i32) {
    %c0_i32 = arith.constant 0 : i32
    %c0_i32_0 = arith.constant 0 : i32
    %c0_i32_1 = arith.constant 0 : i32
    return %arg0, %c0_i32, %c0_i32_0 : i32, i32, i32
  }
}

module attributes {stable_mosaic.version = 11 : i64} {
  func.func @_matmul_kernel(%arg0: i32, %arg1: i32, %arg2: i32, %arg3: memref<64x32xbf16, #tpu.memory_space<vmem>>, %arg4: memref<32x32xbf16, #tpu.memory_space<vmem>>, %arg5: memref<1x32xf32, #tpu.memory_space<vmem>>, %arg6: memref<64x32xf32, #tpu.memory_space<vmem>>, %arg7: memref<64x32xf32, #tpu.memory_space<vmem>>, %arg8: memref<64x32xf32, #tpu.memory_space<vmem>>) attributes {dimension_semantics = [#tpu.dimension_semantics<parallel>, #tpu.dimension_semantics<parallel>, #tpu.dimension_semantics<arbitrary>], iteration_bounds = array<i64: 2, 1, 1>, scalar_prefetch = 0 : i64, scratch_operands = 1 : i64, tpu.core_type = #tpu.core_type<tc>, window_params = [{transform_indices = @transform_0, window_bounds = array<i64: 64, 32>}, {transform_indices = @transform_1, window_bounds = array<i64: 32, 32>}, {transform_indices = @transform_2, window_bounds = array<i64: 1, 32>}, {transform_indices = @transform_3, window_bounds = array<i64: 64, 32>}, {transform_indices = @transform_4, window_bounds = array<i64: 64, 32>}]} {
    %c0_i32 = arith.constant 0 : i32
    %0 = arith.cmpi eq, %arg2, %c0_i32 : i32
    %1 = arith.extui %0 : i1 to i32
    %c0_i32_0 = arith.constant 0 : i32
    %2 = arith.cmpi ne, %1, %c0_i32_0 : i32
    scf.if %2 {
      %cst_10 = arith.constant 0.000000e+00 : f32
      %12 = vector.broadcast %cst_10 : f32 to vector<64x32xf32>
      %c0_11 = arith.constant 0 : index
      %c0_12 = arith.constant 0 : index
      %13 = vector.load %arg8[%c0_11, %c0_12] : memref<64x32xf32, #tpu.memory_space<vmem>>, vector<64x32xf32>
      tpu.vector_store %arg8[%c0_11, %c0_12], %12 {strides = array<i32>} : memref<64x32xf32, #tpu.memory_space<vmem>>, vector<64x32xf32>,
    } else {
    }
    %c0 = arith.constant 0 : index
    %c0_1 = arith.constant 0 : index
    %3 = vector.load %arg8[%c0, %c0_1] : memref<64x32xf32, #tpu.memory_space<vmem>>, vector<64x32xf32>
    %c0_2 = arith.constant 0 : index
    %c0_3 = arith.constant 0 : index
    %4 = vector.load %arg3[%c0_2, %c0_3] : memref<64x32xbf16, #tpu.memory_space<vmem>>, vector<64x32xbf16>
    %c0_4 = arith.constant 0 : index
    %c0_5 = arith.constant 0 : index
    %5 = vector.load %arg4[%c0_4, %c0_5] : memref<32x32xbf16, #tpu.memory_space<vmem>>, vector<32x32xbf16>
    %cst = arith.constant dense<0.000000e+00> : vector<64x32xf32>
    %6 = tpu.matmul %4, %5, %cst {dimension_numbers = #tpu.dot_dimension_numbers<[1], [0], [0], [1], [0, 0, 1, 1], [], []>} : vector<64x32xbf16>, vector<32x32xbf16>, vector<64x32xf32> -> vector<64x32xf32>
    %7 = arith.addf %3, %6 : vector<64x32xf32>
    %c0_6 = arith.constant 0 : index
    %c0_7 = arith.constant 0 : index
    %8 = vector.load %arg8[%c0_6, %c0_7] : memref<64x32xf32, #tpu.memory_space<vmem>>, vector<64x32xf32>
    tpu.vector_store %arg8[%c0_6, %c0_7], %7 {strides = array<i32>} : memref<64x32xf32, #tpu.memory_space<vmem>>, vector<64x32xf32>,
    %c0_i32_8 = arith.constant 0 : i32
    %9 = arith.cmpi eq, %arg2, %c0_i32_8 : i32
    %10 = arith.extui %9 : i1 to i32
    %c0_i32_9 = arith.constant 0 : i32
    %11 = arith.cmpi ne, %10, %c0_i32_9 : i32
    scf.if %11 {
      %c0_10 = arith.constant 0 : index
      %c0_11 = arith.constant 0 : index
      %12 = vector.load %arg8[%c0_10, %c0_11] : memref<64x32xf32, #tpu.memory_space<vmem>>, vector<64x32xf32>
      %c0_12 = arith.constant 0 : index
      %c0_13 = arith.constant 0 : index
      %13 = vector.load %arg5[%c0_12, %c0_13] : memref<1x32xf32, #tpu.memory_space<vmem>>, vector<1x32xf32>
      %14 = vector.broadcast %13 : vector<1x32xf32> to vector<64x32xf32>
      %15 = arith.addf %12, %14 : vector<64x32xf32>
      %cst_14 = arith.constant 5.65685415 : f32
      %16 = vector.broadcast %cst_14 : f32 to vector<64x32xf32>
      %17 = arith.mulf %15, %16 : vector<64x32xf32>
      %c0_15 = arith.constant 0 : index
      %c0_16 = arith.constant 0 : index
      %18 = vector.load %arg6[%c0_15, %c0_16] : memref<64x32xf32, #tpu.memory_space<vmem>>, vector<64x32xf32>
      %19 = arith.addf %17, %18 : vector<64x32xf32>
      %c0_17 = arith.constant 0 : index
      %c0_18 = arith.constant 0 : index
      %20 = vector.load %arg7[%c0_17, %c0_18] : memref<64x32xf32, #tpu.memory_space<vmem>>, vector<64x32xf32>
      tpu.vector_store %arg7[%c0_17, %c0_18], %19 {strides = array<i32>} : memref<64x32xf32, #tpu.memory_space<vmem>>, vector<64x32xf32>,
    } else {
    }
    return
  }
  func.func @transform_0(%arg0: i32, %arg1: i32, %arg2: i32) -> (i32, i32) {
    %c0_i32 = arith.constant 0 : i32
    return %arg0, %arg2 : i32, i32
  }
  func.func @transform_1(%arg0: i32, %arg1: i32, %arg2: i32) -> (i32, i32) {
    %c0_i32 = arith.constant 0 : i32
    return %arg2, %arg1 : i32, i32
  }
  func.func @transform_2(%arg0: i32, %arg1: i32, %arg2: i32) -> (i32, i32) {
    %c0_i32 = arith.constant 0 : i32
    %c0_i32_0 = arith.constant 0 : i32
    return %c0_i32, %arg1 : i32, i32
  }
  func.func @transform_3(%arg0: i32, %arg1: i32, %arg2: i32) -> (i32, i32) {
    %c0_i32 = arith.constant 0 : i32
    return %arg0, %arg1 : i32, i32
  }
  func.func @transform_4(%arg0: i32, %arg1: i32, %arg2: i32) -> (i32, i32) {
    %c0_i32 = arith.constant 0 : i32
    return %arg0, %arg1 : i32, i32
  }
}

module attributes {stable_mosaic.version = 11 : i64} {
  func.func @_encoder_layer_kernel(%arg0: i32, %arg1: memref<1x64x32xf32, #tpu.memory_space<vmem>>, %arg2: memref<32x96xbf16, #tpu.memory_space<vmem>>, %arg3: memref<1x96xf32, #tpu.memory_space<vmem>>, %arg4: memref<4x8x32xbf16, #tpu.memory_space<vmem>>, %arg5: memref<1x32xf32, #tpu.memory_space<vmem>>, %arg6: memref<1x32xf32, #tpu.memory_space<vmem>>, %arg7: memref<1x32xf32, #tpu.memory_space<vmem>>, %arg8: memref<32x64xbf16, #tpu.memory_space<vmem>>, %arg9: memref<1x64xf32, #tpu.memory_space<vmem>>, %arg10: memref<64x32xbf16, #tpu.memory_space<vmem>>, %arg11: memref<1x32xf32, #tpu.memory_space<vmem>>, %arg12: memref<1x32xf32, #tpu.memory_space<vmem>>, %arg13: memref<1x32xf32, #tpu.memory_space<vmem>>, %arg14: memref<1x64x32xf32, #tpu.memory_space<vmem>>) attributes {dimension_semantics = [#tpu.dimension_semantics<parallel>], iteration_bounds = array<i64: 2>, scalar_prefetch = 0 : i64, scratch_operands = 0 : i64, tpu.core_type = #tpu.core_type<tc>, window_params = [{transform_indices = @transform_0, window_bounds = array<i64: 1, 64, 32>}, {pipeline_mode = #tpu.pipeline_mode<synchronous>, transform_indices = @transform_1, window_bounds = array<i64: 32, 96>}, {pipeline_mode = #tpu.pipeline_mode<synchronous>, transform_indices = @transform_2, window_bounds = array<i64: 1, 96>}, {pipeline_mode = #tpu.pipeline_mode<synchronous>, transform_indices = @transform_3, window_bounds = array<i64: 4, 8, 32>}, {pipeline_mode = #tpu.pipeline_mode<synchronous>, transform_indices = @transform_4, window_bounds = array<i64: 1, 32>}, {pipeline_mode = #tpu.pipeline_mode<synchronous>, transform_indices = @transform_5, window_bounds = array<i64: 1, 32>}, {pipeline_mode = #tpu.pipeline_mode<synchronous>, transform_indices = @transform_6, window_bounds = array<i64: 1, 32>}, {pipeline_mode = #tpu.pipeline_mode<synchronous>, transform_indices = @transform_7, window_bounds = array<i64: 32, 64>}, {pipeline_mode = #tpu.pipeline_mode<synchronous>, transform_indices = @transform_8, window_bounds = array<i64: 1, 64>}, {pipeline_mode = #tpu.pipeline_mode<synchronous>, transform_indices = @transform_9, window_bounds = array<i64: 64, 32>}, {pipeline_mode = #tpu.pipeline_mode<synchronous>, transform_indices = @transform_10, window_bounds = array<i64: 1, 32>}, {pipeline_mode = #tpu.pipeline_mode<synchronous>, transform_indices = @transform_11, window_bounds = array<i64: 1, 32>}, {pipeline_mode = #tpu.pipeline_mode<synchronous>, transform_indices = @transform_12, window_bounds = array<i64: 1, 32>}, {transform_indices = @transform_13, window_bounds = array<i64: 1, 64, 32>}]} {
    %c0 = arith.constant 0 : index
    %c0_0 = arith.constant 0 : index
    %c0_1 = arith.constant 0 : index
    %0 = vector.load %arg1[%c0, %c0_0, %c0_1] : memref<1x64x32xf32, #tpu.memory_space<vmem>>, vector<1x64x32xf32>
    %1 = vector.shape_cast %0 : vector<1x64x32xf32> to vector<64x32xf32>
    %2 = arith.truncf %1 : vector<64x32xf32> to vector<64x32xbf16>
    %c0_2 = arith.constant 0 : index
    %c0_3 = arith.constant 0 : index
    %3 = vector.load %arg2[%c0_2, %c0_3] : memref<32x96xbf16, #tpu.memory_space<vmem>>, vector<32x96xbf16>
    %cst = arith.constant dense<0.000000e+00> : vector<64x96xf32>
    %4 = tpu.matmul %2, %3, %cst {dimension_numbers = #tpu.dot_dimension_numbers<[1], [0], [0], [1], [0, 0, 1, 1], [], []>} : vector<64x32xbf16>, vector<32x96xbf16>, vector<64x96xf32> -> vector<64x96xf32>
    %c0_4 = arith.constant 0 : index
    %c0_5 = arith.constant 0 : index
    %5 = vector.load %arg3[%c0_4, %c0_5] : memref<1x96xf32, #tpu.memory_space<vmem>>, vector<1x96xf32>
    %6 = vector.broadcast %5 : vector<1x96xf32> to vector<64x96xf32>
    %7 = arith.addf %4, %6 : vector<64x96xf32>
    %cst_6 = arith.constant 0.000000e+00 : f32
    %8 = vector.broadcast %cst_6 : f32 to vector<64x32xf32>
    %9 = vector.extract_strided_slice %7 {offsets = [0, 0], sizes = [64, 8], strides = [1, 1]} : vector<64x96xf32> to vector<64x8xf32>
    %10 = arith.truncf %9 : vector<64x8xf32> to vector<64x8xbf16>
    %11 = vector.extract_strided_slice %7 {offsets = [0, 32], sizes = [64, 8], strides = [1, 1]} : vector<64x96xf32> to vector<64x8xf32>
    %12 = arith.truncf %11 : vector<64x8xf32> to vector<64x8xbf16>
    %13 = vector.extract_strided_slice %7 {offsets = [0, 64], sizes = [64, 8], strides = [1, 1]} : vector<64x96xf32> to vector<64x8xf32>
    %14 = arith.truncf %13 : vector<64x8xf32> to vector<64x8xbf16>
    %cst_7 = arith.constant dense<0.000000e+00> : vector<64x64xf32>
    %15 = tpu.matmul %10, %12, %cst_7 {dimension_numbers = #tpu.dot_dimension_numbers<[1], [1], [0], [0], [0, 0, 1, 0], [], []>} : vector<64x8xbf16>, vector<64x8xbf16>, vector<64x64xf32> -> vector<64x64xf32>
    %cst_8 = arith.constant 0.353553385 : f32
    %16 = vector.broadcast %cst_8 : f32 to vector<64x64xf32>
    %17 = arith.mulf %15, %16 : vector<64x64xf32>
    %cst_9 = arith.constant dense<0xFF800000> : vector<64xf32>
    %18 = vector.multi_reduction <maximumf>, %17, %cst_9 [1] : vector<64x64xf32> to vector<64xf32>
    %19 = vector.shape_cast %18 : vector<64xf32> to vector<64x1xf32>
    %20 = vector.broadcast %19 : vector<64x1xf32> to vector<64x64xf32>
    %21 = arith.subf %17, %20 : vector<64x64xf32>
    %22 = math.exp %21 : vector<64x64xf32>
    %cst_10 = arith.constant dense<0.000000e+00> : vector<64xf32>
    %23 = vector.multi_reduction <add>, %22, %cst_10 [1] : vector<64x64xf32> to vector<64xf32>
    %24 = vector.shape_cast %23 : vector<64xf32> to vector<64x1xf32>
    %25 = tpu.reciprocal %24 {approx = true} : vector<64x1xf32> -> vector<64x1xf32>
    %26 = vector.broadcast %25 : vector<64x1xf32> to vector<64x64xf32>
    %27 = arith.mulf %22, %26 : vector<64x64xf32>
    %28 = arith.truncf %27 : vector<64x64xf32> to vector<64x64xbf16>
    %cst_11 = arith.constant dense<0.000000e+00> : vector<64x8xf32>
    %29 = tpu.matmul %28, %14, %cst_11 {dimension_numbers = #tpu.dot_dimension_numbers<[1], [0], [0], [1], [0, 0, 1, 1], [], []>} : vector<64x64xbf16>, vector<64x8xbf16>, vector<64x8xf32> -> vector<64x8xf32>
    %30 = arith.truncf %29 : vector<64x8xf32> to vector<64x8xbf16>
    %c0_12 = arith.constant 0 : index
    %c0_13 = arith.constant 0 : index
    %c0_14 = arith.constant 0 : index
    %31 = vector.load %arg4[%c0_12, %c0_13, %c0_14] : memref<4x8x32xbf16, #tpu.memory_space<vmem>>, vector<1x8x32xbf16>
    %32 = vector.shape_cast %31 : vector<1x8x32xbf16> to vector<8x32xbf16>
    %cst_15 = arith.constant dense<0.000000e+00> : vector<64x32xf32>
    %33 = tpu.matmul %30, %32, %cst_15 {dimension_numbers = #tpu.dot_dimension_numbers<[1], [0], [0], [1], [0, 0, 1, 1], [], []>} : vector<64x8xbf16>, vector<8x32xbf16>, vector<64x32xf32> -> vector<64x32xf32>
    %34 = arith.addf %8, %33 : vector<64x32xf32>
    %35 = vector.extract_strided_slice %7 {offsets = [0, 8], sizes = [64, 8], strides = [1, 1]} : vector<64x96xf32> to vector<64x8xf32>
    %36 = arith.truncf %35 : vector<64x8xf32> to vector<64x8xbf16>
    %37 = vector.extract_strided_slice %7 {offsets = [0, 40], sizes = [64, 8], strides = [1, 1]} : vector<64x96xf32> to vector<64x8xf32>
    %38 = arith.truncf %37 : vector<64x8xf32> to vector<64x8xbf16>
    %39 = vector.extract_strided_slice %7 {offsets = [0, 72], sizes = [64, 8], strides = [1, 1]} : vector<64x96xf32> to vector<64x8xf32>
    %40 = arith.truncf %39 : vector<64x8xf32> to vector<64x8xbf16>
    %cst_16 = arith.constant dense<0.000000e+00> : vector<64x64xf32>
    %41 = tpu.matmul %36, %38, %cst_16 {dimension_numbers = #tpu.dot_dimension_numbers<[1], [1], [0], [0], [0, 0, 1, 0], [], []>} : vector<64x8xbf16>, vector<64x8xbf16>, vector<64x64xf32> -> vector<64x64xf32>
    %cst_17 = arith.constant 0.353553385 : f32
    %42 = vector.broadcast %cst_17 : f32 to vector<64x64xf32>
    %43 = arith.mulf %41, %42 : vector<64x64xf32>
    %cst_18 = arith.constant dense<0xFF800000> : vector<64xf32>
    %44 = vector.multi_reduction <maximumf>, %43, %cst_18 [1] : vector<64x64xf32> to vector<64xf32>
    %45 = vector.shape_cast %44 : vector<64xf32> to vector<64x1xf32>
    %46 = vector.broadcast %45 : vector<64x1xf32> to vector<64x64xf32>
    %47 = arith.subf %43, %46 : vector<64x64xf32>
    %48 = math.exp %47 : vector<64x64xf32>
    %cst_19 = arith.constant dense<0.000000e+00> : vector<64xf32>
    %49 = vector.multi_reduction <add>, %48, %cst_19 [1] : vector<64x64xf32> to vector<64xf32>
    %50 = vector.shape_cast %49 : vector<64xf32> to vector<64x1xf32>
    %51 = tpu.reciprocal %50 {approx = true} : vector<64x1xf32> -> vector<64x1xf32>
    %52 = vector.broadcast %51 : vector<64x1xf32> to vector<64x64xf32>
    %53 = arith.mulf %48, %52 : vector<64x64xf32>
    %54 = arith.truncf %53 : vector<64x64xf32> to vector<64x64xbf16>
    %cst_20 = arith.constant dense<0.000000e+00> : vector<64x8xf32>
    %55 = tpu.matmul %54, %40, %cst_20 {dimension_numbers = #tpu.dot_dimension_numbers<[1], [0], [0], [1], [0, 0, 1, 1], [], []>} : vector<64x64xbf16>, vector<64x8xbf16>, vector<64x8xf32> -> vector<64x8xf32>
    %56 = arith.truncf %55 : vector<64x8xf32> to vector<64x8xbf16>
    %c1 = arith.constant 1 : index
    %c0_21 = arith.constant 0 : index
    %c0_22 = arith.constant 0 : index
    %57 = vector.load %arg4[%c1, %c0_21, %c0_22] : memref<4x8x32xbf16, #tpu.memory_space<vmem>>, vector<1x8x32xbf16>
    %58 = vector.shape_cast %57 : vector<1x8x32xbf16> to vector<8x32xbf16>
    %cst_23 = arith.constant dense<0.000000e+00> : vector<64x32xf32>
    %59 = tpu.matmul %56, %58, %cst_23 {dimension_numbers = #tpu.dot_dimension_numbers<[1], [0], [0], [1], [0, 0, 1, 1], [], []>} : vector<64x8xbf16>, vector<8x32xbf16>, vector<64x32xf32> -> vector<64x32xf32>
    %60 = arith.addf %34, %59 : vector<64x32xf32>
    %61 = vector.extract_strided_slice %7 {offsets = [0, 16], sizes = [64, 8], strides = [1, 1]} : vector<64x96xf32> to vector<64x8xf32>
    %62 = arith.truncf %61 : vector<64x8xf32> to vector<64x8xbf16>
    %63 = vector.extract_strided_slice %7 {offsets = [0, 48], sizes = [64, 8], strides = [1, 1]} : vector<64x96xf32> to vector<64x8xf32>
    %64 = arith.truncf %63 : vector<64x8xf32> to vector<64x8xbf16>
    %65 = vector.extract_strided_slice %7 {offsets = [0, 80], sizes = [64, 8], strides = [1, 1]} : vector<64x96xf32> to vector<64x8xf32>
    %66 = arith.truncf %65 : vector<64x8xf32> to vector<64x8xbf16>
    %cst_24 = arith.constant dense<0.000000e+00> : vector<64x64xf32>
    %67 = tpu.matmul %62, %64, %cst_24 {dimension_numbers = #tpu.dot_dimension_numbers<[1], [1], [0], [0], [0, 0, 1, 0], [], []>} : vector<64x8xbf16>, vector<64x8xbf16>, vector<64x64xf32> -> vector<64x64xf32>
    %cst_25 = arith.constant 0.353553385 : f32
    %68 = vector.broadcast %cst_25 : f32 to vector<64x64xf32>
    %69 = arith.mulf %67, %68 : vector<64x64xf32>
    %cst_26 = arith.constant dense<0xFF800000> : vector<64xf32>
    %70 = vector.multi_reduction <maximumf>, %69, %cst_26 [1] : vector<64x64xf32> to vector<64xf32>
    %71 = vector.shape_cast %70 : vector<64xf32> to vector<64x1xf32>
    %72 = vector.broadcast %71 : vector<64x1xf32> to vector<64x64xf32>
    %73 = arith.subf %69, %72 : vector<64x64xf32>
    %74 = math.exp %73 : vector<64x64xf32>
    %cst_27 = arith.constant dense<0.000000e+00> : vector<64xf32>
    %75 = vector.multi_reduction <add>, %74, %cst_27 [1] : vector<64x64xf32> to vector<64xf32>
    %76 = vector.shape_cast %75 : vector<64xf32> to vector<64x1xf32>
    %77 = tpu.reciprocal %76 {approx = true} : vector<64x1xf32> -> vector<64x1xf32>
    %78 = vector.broadcast %77 : vector<64x1xf32> to vector<64x64xf32>
    %79 = arith.mulf %74, %78 : vector<64x64xf32>
    %80 = arith.truncf %79 : vector<64x64xf32> to vector<64x64xbf16>
    %cst_28 = arith.constant dense<0.000000e+00> : vector<64x8xf32>
    %81 = tpu.matmul %80, %66, %cst_28 {dimension_numbers = #tpu.dot_dimension_numbers<[1], [0], [0], [1], [0, 0, 1, 1], [], []>} : vector<64x64xbf16>, vector<64x8xbf16>, vector<64x8xf32> -> vector<64x8xf32>
    %82 = arith.truncf %81 : vector<64x8xf32> to vector<64x8xbf16>
    %c2 = arith.constant 2 : index
    %c0_29 = arith.constant 0 : index
    %c0_30 = arith.constant 0 : index
    %83 = vector.load %arg4[%c2, %c0_29, %c0_30] : memref<4x8x32xbf16, #tpu.memory_space<vmem>>, vector<1x8x32xbf16>
    %84 = vector.shape_cast %83 : vector<1x8x32xbf16> to vector<8x32xbf16>
    %cst_31 = arith.constant dense<0.000000e+00> : vector<64x32xf32>
    %85 = tpu.matmul %82, %84, %cst_31 {dimension_numbers = #tpu.dot_dimension_numbers<[1], [0], [0], [1], [0, 0, 1, 1], [], []>} : vector<64x8xbf16>, vector<8x32xbf16>, vector<64x32xf32> -> vector<64x32xf32>
    %86 = arith.addf %60, %85 : vector<64x32xf32>
    %87 = vector.extract_strided_slice %7 {offsets = [0, 24], sizes = [64, 8], strides = [1, 1]} : vector<64x96xf32> to vector<64x8xf32>
    %88 = arith.truncf %87 : vector<64x8xf32> to vector<64x8xbf16>
    %89 = vector.extract_strided_slice %7 {offsets = [0, 56], sizes = [64, 8], strides = [1, 1]} : vector<64x96xf32> to vector<64x8xf32>
    %90 = arith.truncf %89 : vector<64x8xf32> to vector<64x8xbf16>
    %91 = vector.extract_strided_slice %7 {offsets = [0, 88], sizes = [64, 8], strides = [1, 1]} : vector<64x96xf32> to vector<64x8xf32>
    %92 = arith.truncf %91 : vector<64x8xf32> to vector<64x8xbf16>
    %cst_32 = arith.constant dense<0.000000e+00> : vector<64x64xf32>
    %93 = tpu.matmul %88, %90, %cst_32 {dimension_numbers = #tpu.dot_dimension_numbers<[1], [1], [0], [0], [0, 0, 1, 0], [], []>} : vector<64x8xbf16>, vector<64x8xbf16>, vector<64x64xf32> -> vector<64x64xf32>
    %cst_33 = arith.constant 0.353553385 : f32
    %94 = vector.broadcast %cst_33 : f32 to vector<64x64xf32>
    %95 = arith.mulf %93, %94 : vector<64x64xf32>
    %cst_34 = arith.constant dense<0xFF800000> : vector<64xf32>
    %96 = vector.multi_reduction <maximumf>, %95, %cst_34 [1] : vector<64x64xf32> to vector<64xf32>
    %97 = vector.shape_cast %96 : vector<64xf32> to vector<64x1xf32>
    %98 = vector.broadcast %97 : vector<64x1xf32> to vector<64x64xf32>
    %99 = arith.subf %95, %98 : vector<64x64xf32>
    %100 = math.exp %99 : vector<64x64xf32>
    %cst_35 = arith.constant dense<0.000000e+00> : vector<64xf32>
    %101 = vector.multi_reduction <add>, %100, %cst_35 [1] : vector<64x64xf32> to vector<64xf32>
    %102 = vector.shape_cast %101 : vector<64xf32> to vector<64x1xf32>
    %103 = tpu.reciprocal %102 {approx = true} : vector<64x1xf32> -> vector<64x1xf32>
    %104 = vector.broadcast %103 : vector<64x1xf32> to vector<64x64xf32>
    %105 = arith.mulf %100, %104 : vector<64x64xf32>
    %106 = arith.truncf %105 : vector<64x64xf32> to vector<64x64xbf16>
    %cst_36 = arith.constant dense<0.000000e+00> : vector<64x8xf32>
    %107 = tpu.matmul %106, %92, %cst_36 {dimension_numbers = #tpu.dot_dimension_numbers<[1], [0], [0], [1], [0, 0, 1, 1], [], []>} : vector<64x64xbf16>, vector<64x8xbf16>, vector<64x8xf32> -> vector<64x8xf32>
    %108 = arith.truncf %107 : vector<64x8xf32> to vector<64x8xbf16>
    %c3 = arith.constant 3 : index
    %c0_37 = arith.constant 0 : index
    %c0_38 = arith.constant 0 : index
    %109 = vector.load %arg4[%c3, %c0_37, %c0_38] : memref<4x8x32xbf16, #tpu.memory_space<vmem>>, vector<1x8x32xbf16>
    %110 = vector.shape_cast %109 : vector<1x8x32xbf16> to vector<8x32xbf16>
    %cst_39 = arith.constant dense<0.000000e+00> : vector<64x32xf32>
    %111 = tpu.matmul %108, %110, %cst_39 {dimension_numbers = #tpu.dot_dimension_numbers<[1], [0], [0], [1], [0, 0, 1, 1], [], []>} : vector<64x8xbf16>, vector<8x32xbf16>, vector<64x32xf32> -> vector<64x32xf32>
    %112 = arith.addf %86, %111 : vector<64x32xf32>
    %113 = arith.addf %1, %112 : vector<64x32xf32>
    %c0_40 = arith.constant 0 : index
    %c0_41 = arith.constant 0 : index
    %114 = vector.load %arg5[%c0_40, %c0_41] : memref<1x32xf32, #tpu.memory_space<vmem>>, vector<1x32xf32>
    %115 = vector.broadcast %114 : vector<1x32xf32> to vector<64x32xf32>
    %116 = arith.addf %113, %115 : vector<64x32xf32>
    %cst_42 = arith.constant dense<0.000000e+00> : vector<64xf32>
    %117 = vector.multi_reduction <add>, %116, %cst_42 [1] : vector<64x32xf32> to vector<64xf32>
    %118 = vector.shape_cast %117 : vector<64xf32> to vector<64x1xf32>
    %cst_43 = arith.constant 3.200000e+01 : f32
    %119 = vector.broadcast %cst_43 : f32 to vector<64x1xf32>
    %120 = arith.divf %118, %119 : vector<64x1xf32>
    %121 = vector.broadcast %120 : vector<64x1xf32> to vector<64x32xf32>
    %122 = arith.subf %116, %121 : vector<64x32xf32>
    %123 = arith.mulf %122, %122 : vector<64x32xf32>
    %cst_44 = arith.constant dense<0.000000e+00> : vector<64xf32>
    %124 = vector.multi_reduction <add>, %123, %cst_44 [1] : vector<64x32xf32> to vector<64xf32>
    %125 = vector.shape_cast %124 : vector<64xf32> to vector<64x1xf32>
    %cst_45 = arith.constant 3.200000e+01 : f32
    %126 = vector.broadcast %cst_45 : f32 to vector<64x1xf32>
    %127 = arith.divf %125, %126 : vector<64x1xf32>
    %128 = vector.broadcast %120 : vector<64x1xf32> to vector<64x32xf32>
    %129 = arith.subf %116, %128 : vector<64x32xf32>
    %cst_46 = arith.constant 9.99999974E-6 : f32
    %130 = vector.broadcast %cst_46 : f32 to vector<64x1xf32>
    %131 = arith.addf %127, %130 : vector<64x1xf32>
    %132 = math.rsqrt %131 : vector<64x1xf32>
    %133 = vector.broadcast %132 : vector<64x1xf32> to vector<64x32xf32>
    %134 = arith.mulf %129, %133 : vector<64x32xf32>
    %c0_47 = arith.constant 0 : index
    %c0_48 = arith.constant 0 : index
    %135 = vector.load %arg6[%c0_47, %c0_48] : memref<1x32xf32, #tpu.memory_space<vmem>>, vector<1x32xf32>
    %136 = vector.broadcast %135 : vector<1x32xf32> to vector<64x32xf32>
    %137 = arith.mulf %134, %136 : vector<64x32xf32>
    %c0_49 = arith.constant 0 : index
    %c0_50 = arith.constant 0 : index
    %138 = vector.load %arg7[%c0_49, %c0_50] : memref<1x32xf32, #tpu.memory_space<vmem>>, vector<1x32xf32>
    %139 = vector.broadcast %138 : vector<1x32xf32> to vector<64x32xf32>
    %140 = arith.addf %137, %139 : vector<64x32xf32>
    %141 = arith.truncf %140 : vector<64x32xf32> to vector<64x32xbf16>
    %c0_51 = arith.constant 0 : index
    %c0_52 = arith.constant 0 : index
    %142 = vector.load %arg8[%c0_51, %c0_52] : memref<32x64xbf16, #tpu.memory_space<vmem>>, vector<32x64xbf16>
    %cst_53 = arith.constant dense<0.000000e+00> : vector<64x64xf32>
    %143 = tpu.matmul %141, %142, %cst_53 {dimension_numbers = #tpu.dot_dimension_numbers<[1], [0], [0], [1], [0, 0, 1, 1], [], []>} : vector<64x32xbf16>, vector<32x64xbf16>, vector<64x64xf32> -> vector<64x64xf32>
    %c0_54 = arith.constant 0 : index
    %c0_55 = arith.constant 0 : index
    %144 = vector.load %arg9[%c0_54, %c0_55] : memref<1x64xf32, #tpu.memory_space<vmem>>, vector<1x64xf32>
    %145 = vector.broadcast %144 : vector<1x64xf32> to vector<64x64xf32>
    %146 = arith.addf %143, %145 : vector<64x64xf32>
    %cst_56 = arith.constant 0.000000e+00 : f32
    %147 = vector.broadcast %cst_56 : f32 to vector<64x64xf32>
    %148 = arith.maximumf %146, %147 : vector<64x64xf32>
    %149 = arith.truncf %148 : vector<64x64xf32> to vector<64x64xbf16>
    %c0_57 = arith.constant 0 : index
    %c0_58 = arith.constant 0 : index
    %150 = vector.load %arg10[%c0_57, %c0_58] : memref<64x32xbf16, #tpu.memory_space<vmem>>, vector<64x32xbf16>
    %cst_59 = arith.constant dense<0.000000e+00> : vector<64x32xf32>
    %151 = tpu.matmul %149, %150, %cst_59 {dimension_numbers = #tpu.dot_dimension_numbers<[1], [0], [0], [1], [0, 0, 1, 1], [], []>} : vector<64x64xbf16>, vector<64x32xbf16>, vector<64x32xf32> -> vector<64x32xf32>
    %c0_60 = arith.constant 0 : index
    %c0_61 = arith.constant 0 : index
    %152 = vector.load %arg11[%c0_60, %c0_61] : memref<1x32xf32, #tpu.memory_space<vmem>>, vector<1x32xf32>
    %153 = vector.broadcast %152 : vector<1x32xf32> to vector<64x32xf32>
    %154 = arith.addf %151, %153 : vector<64x32xf32>
    %155 = arith.addf %140, %154 : vector<64x32xf32>
    %cst_62 = arith.constant dense<0.000000e+00> : vector<64xf32>
    %156 = vector.multi_reduction <add>, %155, %cst_62 [1] : vector<64x32xf32> to vector<64xf32>
    %157 = vector.shape_cast %156 : vector<64xf32> to vector<64x1xf32>
    %cst_63 = arith.constant 3.200000e+01 : f32
    %158 = vector.broadcast %cst_63 : f32 to vector<64x1xf32>
    %159 = arith.divf %157, %158 : vector<64x1xf32>
    %160 = vector.broadcast %159 : vector<64x1xf32> to vector<64x32xf32>
    %161 = arith.subf %155, %160 : vector<64x32xf32>
    %162 = arith.mulf %161, %161 : vector<64x32xf32>
    %cst_64 = arith.constant dense<0.000000e+00> : vector<64xf32>
    %163 = vector.multi_reduction <add>, %162, %cst_64 [1] : vector<64x32xf32> to vector<64xf32>
    %164 = vector.shape_cast %163 : vector<64xf32> to vector<64x1xf32>
    %cst_65 = arith.constant 3.200000e+01 : f32
    %165 = vector.broadcast %cst_65 : f32 to vector<64x1xf32>
    %166 = arith.divf %164, %165 : vector<64x1xf32>
    %167 = vector.broadcast %159 : vector<64x1xf32> to vector<64x32xf32>
    %168 = arith.subf %155, %167 : vector<64x32xf32>
    %cst_66 = arith.constant 9.99999974E-6 : f32
    %169 = vector.broadcast %cst_66 : f32 to vector<64x1xf32>
    %170 = arith.addf %166, %169 : vector<64x1xf32>
    %171 = math.rsqrt %170 : vector<64x1xf32>
    %172 = vector.broadcast %171 : vector<64x1xf32> to vector<64x32xf32>
    %173 = arith.mulf %168, %172 : vector<64x32xf32>
    %c0_67 = arith.constant 0 : index
    %c0_68 = arith.constant 0 : index
    %174 = vector.load %arg12[%c0_67, %c0_68] : memref<1x32xf32, #tpu.memory_space<vmem>>, vector<1x32xf32>
    %175 = vector.broadcast %174 : vector<1x32xf32> to vector<64x32xf32>
    %176 = arith.mulf %173, %175 : vector<64x32xf32>
    %c0_69 = arith.constant 0 : index
    %c0_70 = arith.constant 0 : index
    %177 = vector.load %arg13[%c0_69, %c0_70] : memref<1x32xf32, #tpu.memory_space<vmem>>, vector<1x32xf32>
    %178 = vector.broadcast %177 : vector<1x32xf32> to vector<64x32xf32>
    %179 = arith.addf %176, %178 : vector<64x32xf32>
    %c0_71 = arith.constant 0 : index
    %c0_72 = arith.constant 0 : index
    %c0_73 = arith.constant 0 : index
    %180 = vector.load %arg14[%c0_71, %c0_72, %c0_73] : memref<1x64x32xf32, #tpu.memory_space<vmem>>, vector<1x64x32xf32>
    %181 = vector.shape_cast %180 : vector<1x64x32xf32> to vector<64x32xf32>
    %182 = vector.shape_cast %179 : vector<64x32xf32> to vector<1x64x32xf32>
    tpu.vector_store %arg14[%c0_71, %c0_72, %c0_73], %182 {strides = array<i32>} : memref<1x64x32xf32, #tpu.memory_space<vmem>>, vector<1x64x32xf32>,
    return
  }
  func.func @transform_0(%arg0: i32) -> (i32, i32, i32) {
    %c0_i32 = arith.constant 0 : i32
    %c0_i32_0 = arith.constant 0 : i32
    %c0_i32_1 = arith.constant 0 : i32
    return %arg0, %c0_i32, %c0_i32_0 : i32, i32, i32
  }
  func.func @transform_1(%arg0: i32) -> (i32, i32) {
    %c0_i32 = arith.constant 0 : i32
    %c0_i32_0 = arith.constant 0 : i32
    %c0_i32_1 = arith.constant 0 : i32
    return %c0_i32, %c0_i32_0 : i32, i32
  }
  func.func @transform_2(%arg0: i32) -> (i32, i32) {
    %c0_i32 = arith.constant 0 : i32
    %c0_i32_0 = arith.constant 0 : i32
    %c0_i32_1 = arith.constant 0 : i32
    return %c0_i32, %c0_i32_0 : i32, i32
  }
  func.func @transform_3(%arg0: i32) -> (i32, i32, i32) {
    %c0_i32 = arith.constant 0 : i32
    %c0_i32_0 = arith.constant 0 : i32
    %c0_i32_1 = arith.constant 0 : i32
    %c0_i32_2 = arith.constant 0 : i32
    return %c0_i32, %c0_i32_0, %c0_i32_1 : i32, i32, i32
  }
  func.func @transform_4(%arg0: i32) -> (i32, i32) {
    %c0_i32 = arith.constant 0 : i32
    %c0_i32_0 = arith.constant 0 : i32
    %c0_i32_1 = arith.constant 0 : i32
    return %c0_i32, %c0_i32_0 : i32, i32
  }
  func.func @transform_5(%arg0: i32) -> (i32, i32) {
    %c0_i32 = arith.constant 0 : i32
    %c0_i32_0 = arith.constant 0 : i32
    %c0_i32_1 = arith.constant 0 : i32
    return %c0_i32, %c0_i32_0 : i32, i32
  }
  func.func @transform_6(%arg0: i32) -> (i32, i32) {
    %c0_i32 = arith.constant 0 : i32
    %c0_i32_0 = arith.constant 0 : i32
    %c0_i32_1 = arith.constant 0 : i32
    return %c0_i32, %c0_i32_0 : i32, i32
  }
  func.func @transform_7(%arg0: i32) -> (i32, i32) {
    %c0_i32 = arith.constant 0 : i32
    %c0_i32_0 = arith.constant 0 : i32
    %c0_i32_1 = arith.constant 0 : i32
    return %c0_i32, %c0_i32_0 : i32, i32
  }
  func.func @transform_8(%arg0: i32) -> (i32, i32) {
    %c0_i32 = arith.constant 0 : i32
    %c0_i32_0 = arith.constant 0 : i32
    %c0_i32_1 = arith.constant 0 : i32
    return %c0_i32, %c0_i32_0 : i32, i32
  }
  func.func @transform_9(%arg0: i32) -> (i32, i32) {
    %c0_i32 = arith.constant 0 : i32
    %c0_i32_0 = arith.constant 0 : i32
    %c0_i32_1 = arith.constant 0 : i32
    return %c0_i32, %c0_i32_0 : i32, i32
  }
  func.func @transform_10(%arg0: i32) -> (i32, i32) {
    %c0_i32 = arith.constant 0 : i32
    %c0_i32_0 = arith.constant 0 : i32
    %c0_i32_1 = arith.constant 0 : i32
    return %c0_i32, %c0_i32_0 : i32, i32
  }
  func.func @transform_11(%arg0: i32) -> (i32, i32) {
    %c0_i32 = arith.constant 0 : i32
    %c0_i32_0 = arith.constant 0 : i32
    %c0_i32_1 = arith.constant 0 : i32
    return %c0_i32, %c0_i32_0 : i32, i32
  }
  func.func @transform_12(%arg0: i32) -> (i32, i32) {
    %c0_i32 = arith.constant 0 : i32
    %c0_i32_0 = arith.constant 0 : i32
    %c0_i32_1 = arith.constant 0 : i32
    return %c0_i32, %c0_i32_0 : i32, i32
  }
  func.func @transform_13(%arg0: i32) -> (i32, i32, i32) {
    %c0_i32 = arith.constant 0 : i32
    %c0_i32_0 = arith.constant 0 : i32
    %c0_i32_1 = arith.constant 0 : i32
    return %arg0, %c0_i32, %c0_i32_0 : i32, i32, i32
  }
}

module attributes {stable_mosaic.version = 11 : i64} {
  func.func @_ln_kernel(%arg0: i32, %arg1: memref<64x32xf32, #tpu.memory_space<vmem>>, %arg2: memref<1x32xf32, #tpu.memory_space<vmem>>, %arg3: memref<1x32xf32, #tpu.memory_space<vmem>>, %arg4: memref<64x32xf32, #tpu.memory_space<vmem>>) attributes {dimension_semantics = [#tpu.dimension_semantics<parallel>], iteration_bounds = array<i64: 2>, scalar_prefetch = 0 : i64, scratch_operands = 0 : i64, tpu.core_type = #tpu.core_type<tc>, window_params = [{transform_indices = @transform_0, window_bounds = array<i64: 64, 32>}, {pipeline_mode = #tpu.pipeline_mode<synchronous>, transform_indices = @transform_1, window_bounds = array<i64: 1, 32>}, {pipeline_mode = #tpu.pipeline_mode<synchronous>, transform_indices = @transform_2, window_bounds = array<i64: 1, 32>}, {transform_indices = @transform_3, window_bounds = array<i64: 64, 32>}]} {
    %c0 = arith.constant 0 : index
    %c0_0 = arith.constant 0 : index
    %0 = vector.load %arg1[%c0, %c0_0] : memref<64x32xf32, #tpu.memory_space<vmem>>, vector<64x32xf32>
    %cst = arith.constant dense<0.000000e+00> : vector<64xf32>
    %1 = vector.multi_reduction <add>, %0, %cst [1] : vector<64x32xf32> to vector<64xf32>
    %2 = vector.shape_cast %1 : vector<64xf32> to vector<64x1xf32>
    %cst_1 = arith.constant 3.200000e+01 : f32
    %3 = vector.broadcast %cst_1 : f32 to vector<64x1xf32>
    %4 = arith.divf %2, %3 : vector<64x1xf32>
    %5 = vector.broadcast %4 : vector<64x1xf32> to vector<64x32xf32>
    %6 = arith.subf %0, %5 : vector<64x32xf32>
    %7 = arith.mulf %6, %6 : vector<64x32xf32>
    %cst_2 = arith.constant dense<0.000000e+00> : vector<64xf32>
    %8 = vector.multi_reduction <add>, %7, %cst_2 [1] : vector<64x32xf32> to vector<64xf32>
    %9 = vector.shape_cast %8 : vector<64xf32> to vector<64x1xf32>
    %cst_3 = arith.constant 3.200000e+01 : f32
    %10 = vector.broadcast %cst_3 : f32 to vector<64x1xf32>
    %11 = arith.divf %9, %10 : vector<64x1xf32>
    %12 = vector.broadcast %4 : vector<64x1xf32> to vector<64x32xf32>
    %13 = arith.subf %0, %12 : vector<64x32xf32>
    %cst_4 = arith.constant 9.99999974E-6 : f32
    %14 = vector.broadcast %cst_4 : f32 to vector<64x1xf32>
    %15 = arith.addf %11, %14 : vector<64x1xf32>
    %16 = math.rsqrt %15 : vector<64x1xf32>
    %17 = vector.broadcast %16 : vector<64x1xf32> to vector<64x32xf32>
    %18 = arith.mulf %13, %17 : vector<64x32xf32>
    %c0_5 = arith.constant 0 : index
    %c0_6 = arith.constant 0 : index
    %19 = vector.load %arg2[%c0_5, %c0_6] : memref<1x32xf32, #tpu.memory_space<vmem>>, vector<1x32xf32>
    %20 = vector.broadcast %19 : vector<1x32xf32> to vector<64x32xf32>
    %21 = arith.mulf %18, %20 : vector<64x32xf32>
    %c0_7 = arith.constant 0 : index
    %c0_8 = arith.constant 0 : index
    %22 = vector.load %arg3[%c0_7, %c0_8] : memref<1x32xf32, #tpu.memory_space<vmem>>, vector<1x32xf32>
    %23 = vector.broadcast %22 : vector<1x32xf32> to vector<64x32xf32>
    %24 = arith.addf %21, %23 : vector<64x32xf32>
    %c0_9 = arith.constant 0 : index
    %c0_10 = arith.constant 0 : index
    %25 = vector.load %arg4[%c0_9, %c0_10] : memref<64x32xf32, #tpu.memory_space<vmem>>, vector<64x32xf32>
    tpu.vector_store %arg4[%c0_9, %c0_10], %24 {strides = array<i32>} : memref<64x32xf32, #tpu.memory_space<vmem>>, vector<64x32xf32>,
    return
  }
  func.func @transform_0(%arg0: i32) -> (i32, i32) {
    %c0_i32 = arith.constant 0 : i32
    %c0_i32_0 = arith.constant 0 : i32
    return %arg0, %c0_i32 : i32, i32
  }
  func.func @transform_1(%arg0: i32) -> (i32, i32) {
    %c0_i32 = arith.constant 0 : i32
    %c0_i32_0 = arith.constant 0 : i32
    %c0_i32_1 = arith.constant 0 : i32
    return %c0_i32, %c0_i32_0 : i32, i32
  }
  func.func @transform_2(%arg0: i32) -> (i32, i32) {
    %c0_i32 = arith.constant 0 : i32
    %c0_i32_0 = arith.constant 0 : i32
    %c0_i32_1 = arith.constant 0 : i32
    return %c0_i32, %c0_i32_0 : i32, i32
  }
  func.func @transform_3(%arg0: i32) -> (i32, i32) {
    %c0_i32 = arith.constant 0 : i32
    %c0_i32_0 = arith.constant 0 : i32
    return %arg0, %c0_i32 : i32, i32
  }
}

</mosaic_0001>

<llo_original>
// kernel: ocr_encoder_forward.7
$region0: #{ocr_encoder_forward.7}
  #allocation0 [shape = 'u32[]', space=smem, size = 0x4, offset = 0x4, fixed_abs, tag = 'smem constant byte address 0x4 - core index']
  #allocation1 [shape = 'u32[72,128]{1,0:T(1,128)}', space=vmem, size = 0x9000, scoped, tag = 'internal scratch']
  %s0 = inlined_call_operand.vmem [shape: f32[2,10,18,16], index: 0, kind: input, shape index: {}]
  %s1 = inlined_call_operand.vmem [shape: bf16[9,16,32], index: 1, kind: input, shape index: {}]
  %s2 = inlined_call_operand.vmem [shape: f32[1,32], index: 2, kind: input, shape index: {}]
  %s3 = inlined_call_operand.vmem [shape: f32[2,128,32], index: 3, kind: output, shape index: {}]
  %s4 = sld [smem:[#allocation0]]
  $region45: #{ocr_encoder_forward.7} parent=0
    _
  %s6 = ssub.s32 1, %s4
  %s7 = scalar_select 0, %s6, %s4
  loop: start=0, step=1, limit=4
  $region2: #{ocr_encoder_forward.7} parent=0 // loop_pre_header
    _
  $region3: #{ocr_encoder_forward.7} parent=0 // loop_header
    %s9 = sphi 0, %s13
    %p10 = scmp.ge.s32.totalorder %s9, 4
    %s19 = sphi 0, %s21
    %s22 = sphi 0, %s19
    %s23 = sphi 0, %s22
    %s39 = sphi 0, %s23
    %s43 = sphi 0, %s43
    %s45 = sphi 0, %s43
    %s46 = sphi 0, %s45
    %s60 = sphi 0, %s46
    %s64 = sphi 0, %s64
    %s66 = sphi 0, %s64
    %s67 = sphi 0, %s66
    %s81 = sphi 0, %s67
    %s87 = sphi 0, %s89
    %s90 = sphi 0, %s87
    %s91 = sphi 0, %s90
    %s107 = sphi 0, %s91
  $region4: #{ocr_encoder_forward.7} parent=0 // loop_header_branch
    %12 = sbr.rel (%p10) target = $region8
  $region5: #{ocr_encoder_forward.7} parent=0 // loop_body
    %s14 = ssub.s32 %s9, 1
    %s15 = ssub.s32 %s9, 2
    %s16 = sadd.s32 %s9, 1
    %s17 = ssub.s32 %s9, %s16
    %p18 = scmp.eq.s32.totalorder %s17, 0
    %s20 = sadd.s32 %s19, 1
    %s21 = scalar_select %p18, %s19, %s20
    %p24 = pneg %p18
    %p25 = scmp.eq.s32.totalorder %s9, 1
    %p26 = por %p24, %p25
    %p27 = scmp.ne.s32.totalorder %s19, %s22
    %p28 = scmp.eq.s32.totalorder %s9, 0
    %p29 = por %p27, %p28
    %p30 = scmp.ne.s32.totalorder %s19, %s22
    %p31 = scmp.eq.s32.totalorder %s14, 1
    %p32 = por %p30, %p31
    %p33 = scmp.ne.s32.totalorder %s22, %s23
    %p34 = scmp.eq.s32.totalorder %s14, 0
    %p35 = por %p33, %p34
    %p36 = scmp.ne.s32.totalorder %s22, %s23
    %p37 = scmp.eq.s32.totalorder %s15, 1
    %p38 = por %p36, %p37
    %p40 = scmp.ne.s32.totalorder %s23, %s39
    %p41 = scmp.eq.s32.totalorder %s15, 0
    %p42 = por %p40, %p41
    %s44 = sadd.s32 %s43, 1
    %p47 = scmp.eq.s32.totalorder %s9, 1
    %p48 = scmp.ne.s32.totalorder %s43, %s45
    %p49 = scmp.eq.s32.totalorder %s9, 0
    %p50 = por %p48, %p49
    %p51 = scmp.ne.s32.totalorder %s43, %s45
    %p52 = scmp.eq.s32.totalorder %s14, 1
    %p53 = por %p51, %p52
    %p54 = scmp.ne.s32.totalorder %s45, %s46
    %p55 = scmp.eq.s32.totalorder %s14, 0
    %p56 = por %p54, %p55
    %p57 = scmp.ne.s32.totalorder %s45, %s46
    %p58 = scmp.eq.s32.totalorder %s15, 1
    %p59 = por %p57, %p58
    %p61 = scmp.ne.s32.totalorder %s46, %s60
    %p62 = scmp.eq.s32.totalorder %s15, 0
    %p63 = por %p61, %p62
    %s65 = sadd.s32 %s64, 1
    %p68 = scmp.eq.s32.totalorder %s9, 1
    %p69 = scmp.ne.s32.totalorder %s64, %s66
    %p70 = scmp.eq.s32.totalorder %s9, 0
    %p71 = por %p69, %p70
    %p72 = scmp.ne.s32.totalorder %s64, %s66
    %p73 = scmp.eq.s32.totalorder %s14, 1
    %p74 = por %p72, %p73
    %p75 = scmp.ne.s32.totalorder %s66, %s67
    %p76 = scmp.eq.s32.totalorder %s14, 0
    %p77 = por %p75, %p76
    %p78 = scmp.ne.s32.totalorder %s66, %s67
    %p79 = scmp.eq.s32.totalorder %s15, 1
    %p80 = por %p78, %p79
    %p82 = scmp.ne.s32.totalorder %s67, %s81
    %p83 = scmp.eq.s32.totalorder %s15, 0
    %p84 = por %p82, %p83
    %s85 = ssub.s32 %s9, %s16
    %p86 = scmp.eq.s32.totalorder %s85, 0
    %s88 = sadd.s32 %s87, 1
    %s89 = scalar_select %p86, %s87, %s88
    %p92 = pneg %p86
    %p93 = scmp.eq.s32.totalorder %s9, 1
    %p94 = por %p92, %p93
    %p95 = scmp.ne.s32.totalorder %s87, %s90
    %p96 = scmp.eq.s32.totalorder %s9, 0
    %p97 = por %p95, %p96
    %p98 = scmp.ne.s32.totalorder %s87, %s90
    %p99 = scmp.eq.s32.totalorder %s14, 1
    %p100 = por %p98, %p99
    %p101 = scmp.ne.s32.totalorder %s90, %s91
    %p102 = scmp.eq.s32.totalorder %s14, 0
    %p103 = por %p101, %p102
    %p104 = scmp.ne.s32.totalorder %s90, %s91
    %p105 = scmp.eq.s32.totalorder %s15, 1
    %p106 = por %p104, %p105
    %p108 = scmp.ne.s32.totalorder %s91, %s107
    %p109 = scmp.eq.s32.totalorder %s15, 0
    %p110 = por %p108, %p109
    %p111 = scmp.le.s32.totalorder 1, %s9
    %p112 = scmp.lt.s32.totalorder %s9, 3
    %p113 = pnand %p111, %p112
    %p114 = pneg %p113
    // Predicated region
    $region9: #{ocr_encoder_forward.7} parent=5 // pred_check
      _
    $region10: #{ocr_encoder_forward.7} parent=5 // pred_check_branch
      %116 = sbr.rel (%p113) target = $region12
    $region11: #{ocr_encoder_forward.7} parent=5 // pred_region
      %s117 = ssub.s32 %s9, 1
      // Predicated region
      $region13: #{ocr_encoder_forward.7} parent=11 // pred_check
        %p118 = pneg %p56
      $region14: #{ocr_encoder_forward.7} parent=11 // pred_check_branch
        %120 = sbr.rel (%p118) target = $region16
      $region15: #{ocr_encoder_forward.7} parent=11 // pred_region
        _
      $region16: #{ocr_encoder_forward.7} parent=11 // pred_fallthru
        _
      // Predicated region
      $region17: #{ocr_encoder_forward.7} parent=11 // pred_check
        %p121 = pneg %p77
      $region18: #{ocr_encoder_forward.7} parent=11 // pred_check_branch
        %123 = sbr.rel (%p121) target = $region20
      $region19: #{ocr_encoder_forward.7} parent=11 // pred_region
        _
      $region20: #{ocr_encoder_forward.7} parent=11 // pred_fallthru
        _
    $region12: #{ocr_encoder_forward.7} parent=5 // pred_fallthru
      _
    %p124 = scmp.lt.s32.totalorder %s9, 2
    // Predicated region
    $region21: #{ocr_encoder_forward.7} parent=5 // pred_check
      %p125 = pneg %p124
    $region22: #{ocr_encoder_forward.7} parent=5 // pred_check_branch
      %127 = sbr.rel (%p125) target = $region24
    $region23: #{ocr_encoder_forward.7} parent=5 // pred_region
      // Predicated region
      $region25: #{ocr_encoder_forward.7} parent=23 // pred_check
        %p128 = pneg %p29
      $region26: #{ocr_encoder_forward.7} parent=23 // pred_check_branch
        %130 = sbr.rel (%p128) target = $region28
      $region27: #{ocr_encoder_forward.7} parent=23 // pred_region
        %p131 = scmp.lt.s32.totalorder %s9, 1
        %s132 = scalar_select %p131, %s9, 1
        %s133 = smul.addr %s132, 30
        %s134 = smul.addr %s133, 8
        %s135 = scalar_lea.vmem %s0, %s134
      $region28: #{ocr_encoder_forward.7} parent=23 // pred_fallthru
        _
    $region24: #{ocr_encoder_forward.7} parent=5 // pred_fallthru
      _
    %p136 = scmp.le.s32.totalorder 1, %s9
    %p137 = scmp.lt.s32.totalorder %s9, 3
    %p138 = pnand %p136, %p137
    %p139 = pneg %p138
    // Predicated region
    $region29: #{ocr_encoder_forward.7} parent=5 // pred_check
      _
    $region30: #{ocr_encoder_forward.7} parent=5 // pred_check_branch
      %141 = sbr.rel (%p138) target = $region32
    $region31: #{ocr_encoder_forward.7} parent=5 // pred_region
      %s142 = ssub.s32 %s9, 1
      %p143 = scmp.lt.s32.totalorder %s14, 1
      %s144 = scalar_select %p143, %s14, 1
      %s145 = smul.addr %s144, 30
      %s146 = smul.addr %s145, 8
      %s147 = scalar_lea.vmem %s0, %s146
      %p148 = pneg %p35
      %p149 = pneg %p32
      %p150 = pneg %p56
      %p151 = pneg %p53
      %p152 = pneg %p77
      %p153 = pneg %p74
      %p154 = pneg %p103
      %p155 = pneg %p100
      %p156 = scmp.lt.s32.totalorder %s14, 1
      %s157 = scalar_select %p156, %s14, 1
      %s158 = smul.addr %s157, 16
      %s159 = smul.addr %s158, 8
      %s160 = scalar_lea.vmem %s3, %s159
      %p161 = scmp.lt.s32.totalorder %s14, 1
      %s162 = scalar_select %p161, %s14, 1
      %s163 = smul.addr %s162, 30
      %s164 = smul.addr %s163, 8
      %s165 = scalar_lea.vmem %s0, %s164
      %p166 = scmp.lt.s32.totalorder %s14, 1
      %s167 = scalar_select %p166, %s14, 1
      %s168 = smul.addr %s167, 16
      %s169 = smul.addr %s168, 8
      %s170 = scalar_lea.vmem %s3, %s169
      %v172 = vld [vmem:[%s165] sm:$0xff]
      %v173 = vld [vmem:[%s165 + $0x8] sm:$0xff]
      %v174 = vld [vmem:[%s165 + $0x18] sm:$0xff]
      %v175 = vld [vmem:[%s165 + $0x20] sm:$0xff]
      %v176 = vld [vmem:[%s165 + $0x30] sm:$0xff]
      %v177 = vld [vmem:[%s165 + $0x38] sm:$0xff]
      %v178 = vld [vmem:[%s165 + $0x48] sm:$0xff]
      %v179 = vld [vmem:[%s165 + $0x50] sm:$0xff]
      %v180 = vld [vmem:[%s165 + $0x60] sm:$0xff]
      %v181 = vld [vmem:[%s165 + $0x68] sm:$0xff]
      %v182 = vld [vmem:[%s165 + $0x78] sm:$0xff]
      %v183 = vld [vmem:[%s165 + $0x80] sm:$0xff]
      %v184 = vld [vmem:[%s165 + $0x90] sm:$0xff]
      %v185 = vld [vmem:[%s165 + $0x98] sm:$0xff]
      %v186 = vld [vmem:[%s165 + $0xa8] sm:$0xff]
      %v187 = vld [vmem:[%s165 + $0xb0] sm:$0xff]
      %v188 = vpack.c.bf16 %v173, %v172
      %v189 = vpack.c.bf16 %v175, %v174
      %v190 = vpack.c.bf16 %v177, %v176
      %v191 = vpack.c.bf16 %v179, %v178
      %v192 = vpack.c.bf16 %v181, %v180
      %v193 = vpack.c.bf16 %v183, %v182
      %v194 = vpack.c.bf16 %v185, %v184
      %v195 = vpack.c.bf16 %v187, %v186
      %v196 = vld [vmem:[%s1] sm:$0xf]
      %v197 = vld [vmem:[%s1 + $0x4] sm:$0xf]
      %v198 = vld [vmem:[%s165 + $0x1] sm:$0xff]
      %v199 = vld [vmem:[%s165 + $0x9] sm:$0xff]
      %v200 = vld [vmem:[%s165 + $0x19] sm:$0xff]
      %v201 = vld [vmem:[%s165 + $0x21] sm:$0xff]
      %v202 = vld [vmem:[%s165 + $0x31] sm:$0xff]
      %v203 = vld [vmem:[%s165 + $0x39] sm:$0xff]
      %v204 = vld [vmem:[%s165 + $0x49] sm:$0xff]
      %v205 = vld [vmem:[%s165 + $0x51] sm:$0xff]
      %v206 = vld [vmem:[%s165 + $0x61] sm:$0xff]
      %v207 = vld [vmem:[%s165 + $0x69] sm:$0xff]
      %v208 = vld [vmem:[%s165 + $0x79] sm:$0xff]
      %v209 = vld [vmem:[%s165 + $0x81] sm:$0xff]
      %v210 = vld [vmem:[%s165 + $0x91] sm:$0xff]
      %v211 = vld [vmem:[%s165 + $0x99] sm:$0xff]
      %v212 = vld [vmem:[%s165 + $0xa9] sm:$0xff]
      %v213 = vld [vmem:[%s165 + $0xb1] sm:$0xff]
      %v214 = vpack.c.bf16 %v199, %v198
      %v215 = vpack.c.bf16 %v201, %v200
      %v216 = vpack.c.bf16 %v203, %v202
      %v217 = vpack.c.bf16 %v205, %v204
      %v218 = vpack.c.bf16 %v207, %v206
      %v219 = vpack.c.bf16 %v209, %v208
      %v220 = vpack.c.bf16 %v211, %v210
      %v221 = vpack.c.bf16 %v213, %v212
      %s222 = scalar_lea.vmem %s1, 8
      %v223 = vld [vmem:[%s222] sm:$0xf]
      %v224 = vld [vmem:[%s222 + $0x4] sm:$0xf]
      %v227 = vunpack.c.l.b16 %v223
      %v228 = vunpack.c.l.b16 %v224
      %v229 = vpack.c.b16 %v228, %v227
      %vm231 = vcmask 130048
      %v233 = vsel %vm231, %v214, 0
      %v236 = vsel %vm231, %v215, 0
      %v239 = vsel %vm231, %v216, 0
      %v242 = vsel %vm231, %v217, 0
      %v245 = vsel %vm231, %v218, 0
      %v248 = vsel %vm231, %v219, 0
      %v251 = vsel %vm231, %v220, 0
      %v254 = vsel %vm231, %v221, 0
      %256 = vmatpush.bf16.msra.mxu0 0
      %257 = vmatpush.bf16.msra.mxu0 0
      %258 = vmatpush.bf16.msra.mxu0 0
      %259 = vmatpush.bf16.msra.mxu0 0
      %260 = vmatpush.bf16.msra.mxu0 0
      %261 = vmatpush.bf16.msra.mxu0 0
      %262 = vmatpush.bf16.msra.mxu0 0
      %263 = vmatpush.bf16.msra.mxu0 %v229
      %264 = vmatmul.bf16.gmra.mxu0 %v233
      %v265 = vpop.f32.mrf.mxu0
      %v266 = vadd.f32 0.0, %v265
      %v267 = vpop.f32.mrf.mxu0
      %v268 = vadd.f32 0.0, %v267
      %269 = vmatmul.bf16.gmra.mxu0 %v236
      %v270 = vpop.f32.mrf.mxu0
      %v271 = vadd.f32 0.0, %v270
      %v272 = vpop.f32.mrf.mxu0
      %v273 = vadd.f32 0.0, %v272
      %274 = vmatmul.bf16.gmra.mxu0 %v239
      %v275 = vpop.f32.mrf.mxu0
      %v276 = vadd.f32 0.0, %v275
      %v277 = vpop.f32.mrf.mxu0
      %v278 = vadd.f32 0.0, %v277
      %279 = vmatmul.bf16.gmra.mxu0 %v242
      %v280 = vpop.f32.mrf.mxu0
      %v281 = vadd.f32 0.0, %v280
      %v282 = vpop.f32.mrf.mxu0
      %v283 = vadd.f32 0.0, %v282
      %284 = vmatmul.bf16.gmra.mxu0 %v245
      %v285 = vpop.f32.mrf.mxu0
      %v286 = vadd.f32 0.0, %v285
      %v287 = vpop.f32.mrf.mxu0
      %v288 = vadd.f32 0.0, %v287
      %289 = vmatmul.bf16.gmra.mxu0 %v248
      %v290 = vpop.f32.mrf.mxu0
      %v291 = vadd.f32 0.0, %v290
      %v292 = vpop.f32.mrf.mxu0
      %v293 = vadd.f32 0.0, %v292
      %294 = vmatmul.bf16.gmra.mxu0 %v251
      %v295 = vpop.f32.mrf.mxu0
      %v296 = vadd.f32 0.0, %v295
      %v297 = vpop.f32.mrf.mxu0
      %v298 = vadd.f32 0.0, %v297
      %299 = vmatmul.bf16.gmra.mxu0 %v254
      %v300 = vpop.f32.mrf.mxu0
      %v301 = vadd.f32 0.0, %v300
      %v302 = vpop.f32.mrf.mxu0
      %v303 = vadd.f32 0.0, %v302
      %304 = vdwg.mxu0
      %v307 = vunpack.c.l.b16 %v196
      %v308 = vunpack.c.l.b16 %v197
      %v309 = vpack.c.b16 %v308, %v307
      %v312 = vsel %vm231, %v188, 0
      %v315 = vsel %vm231, %v189, 0
      %v318 = vsel %vm231, %v190, 0
      %v321 = vsel %vm231, %v191, 0
      %v324 = vsel %vm231, %v192, 0
      %v327 = vsel %vm231, %v193, 0
      %v330 = vsel %vm231, %v194, 0
      %v333 = vsel %vm231, %v195, 0
      %335 = vmatpush.bf16.msra.mxu0 0
      %336 = vmatpush.bf16.msra.mxu0 0
      %337 = vmatpush.bf16.msra.mxu0 0
      %338 = vmatpush.bf16.msra.mxu0 0
      %339 = vmatpush.bf16.msra.mxu0 0
      %340 = vmatpush.bf16.msra.mxu0 0
      %341 = vmatpush.bf16.msra.mxu0 0
      %342 = vmatpush.bf16.msra.mxu0 %v309
      %343 = vmatmul.bf16.gmra.mxu0 %v312
      %v344 = vpop.f32.mrf.mxu0
      %v345 = vadd.f32 %v266, %v344
      %v346 = vpop.f32.mrf.mxu0
      %v347 = vadd.f32 %v268, %v346
      %348 = vmatmul.bf16.gmra.mxu0 %v315
      %v349 = vpop.f32.mrf.mxu0
      %v350 = vadd.f32 %v271, %v349
      %v351 = vpop.f32.mrf.mxu0
      %v352 = vadd.f32 %v273, %v351
      %353 = vmatmul.bf16.gmra.mxu0 %v318
      %v354 = vpop.f32.mrf.mxu0
      %v355 = vadd.f32 %v276, %v354
      %v356 = vpop.f32.mrf.mxu0
      %v357 = vadd.f32 %v278, %v356
      %358 = vmatmul.bf16.gmra.mxu0 %v321
      %v359 = vpop.f32.mrf.mxu0
      %v360 = vadd.f32 %v281, %v359
      %v361 = vpop.f32.mrf.mxu0
      %v362 = vadd.f32 %v283, %v361
      %363 = vmatmul.bf16.gmra.mxu0 %v324
      %v364 = vpop.f32.mrf.mxu0
      %v365 = vadd.f32 %v286, %v364
      %v366 = vpop.f32.mrf.mxu0
      %v367 = vadd.f32 %v288, %v366
      %368 = vmatmul.bf16.gmra.mxu0 %v327
      %v369 = vpop.f32.mrf.mxu0
      %v370 = vadd.f32 %v291, %v369
      %v371 = vpop.f32.mrf.mxu0
      %v372 = vadd.f32 %v293, %v371
      %373 = vmatmul.bf16.gmra.mxu0 %v330
      %v374 = vpop.f32.mrf.mxu0
      %v375 = vadd.f32 %v296, %v374
      %v376 = vpop.f32.mrf.mxu0
      %v377 = vadd.f32 %v298, %v376
      %378 = vmatmul.bf16.gmra.mxu0 %v333
      %v379 = vpop.f32.mrf.mxu0
      %v380 = vadd.f32 %v301, %v379
      %v381 = vpop.f32.mrf.mxu0
      %v382 = vadd.f32 %v303, %v381
      %383 = vdwg.mxu0
      %v384 = vld [vmem:[%s165 + $0x2] sm:$0xff]
      %v385 = vld [vmem:[%s165 + $0xa] sm:$0xff]
      %v386 = vld [vmem:[%s165 + $0x1a] sm:$0xff]
      %v387 = vld [vmem:[%s165 + $0x22] sm:$0xff]
      %v388 = vld [vmem:[%s165 + $0x32] sm:$0xff]
      %v389 = vld [vmem:[%s165 + $0x3a] sm:$0xff]
      %v390 = vld [vmem:[%s165 + $0x4a] sm:$0xff]
      %v391 = vld [vmem:[%s165 + $0x52] sm:$0xff]
      %v392 = vld [vmem:[%s165 + $0x62] sm:$0xff]
      %v393 = vld [vmem:[%s165 + $0x6a] sm:$0xff]
      %v394 = vld [vmem:[%s165 + $0x7a] sm:$0xff]
      %v395 = vld [vmem:[%s165 + $0x82] sm:$0xff]
      %v396 = vld [vmem:[%s165 + $0x92] sm:$0xff]
      %v397 = vld [vmem:[%s165 + $0x9a] sm:$0xff]
      %v398 = vld [vmem:[%s165 + $0xaa] sm:$0xff]
      %v399 = vld [vmem:[%s165 + $0xb2] sm:$0xff]
      %v400 = vpack.c.bf16 %v385, %v384
      %v401 = vpack.c.bf16 %v387, %v386
      %v402 = vpack.c.bf16 %v389, %v388
      %v403 = vpack.c.bf16 %v391, %v390
      %v404 = vpack.c.bf16 %v393, %v392
      %v405 = vpack.c.bf16 %v395, %v394
      %v406 = vpack.c.bf16 %v397, %v396
      %v407 = vpack.c.bf16 %v399, %v398
      %s408 = scalar_lea.vmem %s1, 16
      %v409 = vld [vmem:[%s408] sm:$0xf]
      %v410 = vld [vmem:[%s408 + $0x4] sm:$0xf]
      %v413 = vunpack.c.l.b16 %v409
      %v414 = vunpack.c.l.b16 %v410
      %v415 = vpack.c.b16 %v414, %v413
      %v418 = vsel %vm231, %v400, 0
      %v421 = vsel %vm231, %v401, 0
      %v424 = vsel %vm231, %v402, 0
      %v427 = vsel %vm231, %v403, 0
      %v430 = vsel %vm231, %v404, 0
      %v433 = vsel %vm231, %v405, 0
      %v436 = vsel %vm231, %v406, 0
      %v439 = vsel %vm231, %v407, 0
      %441 = vmatpush.bf16.msra.mxu0 0
      %442 = vmatpush.bf16.msra.mxu0 0
      %443 = vmatpush.bf16.msra.mxu0 0
      %444 = vmatpush.bf16.msra.mxu0 0
      %445 = vmatpush.bf16.msra.mxu0 0
      %446 = vmatpush.bf16.msra.mxu0 0
      %447 = vmatpush.bf16.msra.mxu0 0
      %448 = vmatpush.bf16.msra.mxu0 %v415
      %449 = vmatmul.bf16.gmra.mxu0 %v418
      %v450 = vpop.f32.mrf.mxu0
      %v451 = vadd.f32 0.0, %v450
      %v452 = vpop.f32.mrf.mxu0
      %v453 = vadd.f32 0.0, %v452
      %454 = vmatmul.bf16.gmra.mxu0 %v421
      %v455 = vpop.f32.mrf.mxu0
      %v456 = vadd.f32 0.0, %v455
      %v457 = vpop.f32.mrf.mxu0
      %v458 = vadd.f32 0.0, %v457
      %459 = vmatmul.bf16.gmra.mxu0 %v424
      %v460 = vpop.f32.mrf.mxu0
      %v461 = vadd.f32 0.0, %v460
      %v462 = vpop.f32.mrf.mxu0
      %v463 = vadd.f32 0.0, %v462
      %464 = vmatmul.bf16.gmra.mxu0 %v427
      %v465 = vpop.f32.mrf.mxu0
      %v466 = vadd.f32 0.0, %v465
      %v467 = vpop.f32.mrf.mxu0
      %v468 = vadd.f32 0.0, %v467
      %469 = vmatmul.bf16.gmra.mxu0 %v430
      %v470 = vpop.f32.mrf.mxu0
      %v471 = vadd.f32 0.0, %v470
      %v472 = vpop.f32.mrf.mxu0
      %v473 = vadd.f32 0.0, %v472
      %474 = vmatmul.bf16.gmra.mxu0 %v433
      %v475 = vpop.f32.mrf.mxu0
      %v476 = vadd.f32 0.0, %v475
      %v477 = vpop.f32.mrf.mxu0
      %v478 = vadd.f32 0.0, %v477
      %479 = vmatmul.bf16.gmra.mxu0 %v436
      %v480 = vpop.f32.mrf.mxu0
      %v481 = vadd.f32 0.0, %v480
      %v482 = vpop.f32.mrf.mxu0
      %v483 = vadd.f32 0.0, %v482
      %484 = vmatmul.bf16.gmra.mxu0 %v439
      %v485 = vpop.f32.mrf.mxu0
      %v486 = vadd.f32 0.0, %v485
      %v487 = vpop.f32.mrf.mxu0
      %v488 = vadd.f32 0.0, %v487
      %489 = vdwg.mxu0
      %v490 = vadd.f32 %v345, %v451
      %v491 = vadd.f32 %v347, %v453
      %v492 = vadd.f32 %v350, %v456
      %v493 = vadd.f32 %v352, %v458
      %v494 = vadd.f32 %v355, %v461
      %v495 = vadd.f32 %v357, %v463
      %v496 = vadd.f32 %v360, %v466
      %v497 = vadd.f32 %v362, %v468
      %v498 = vadd.f32 %v365, %v471
      %v499 = vadd.f32 %v367, %v473
      %v500 = vadd.f32 %v370, %v476
      %v501 = vadd.f32 %v372, %v478
      %v502 = vadd.f32 %v375, %v481
      %v503 = vadd.f32 %v377, %v483
      %v504 = vadd.f32 %v380, %v486
      %v505 = vadd.f32 %v382, %v488
      %s506 = scalar_lea.vmem %s165, 24
      %v507 = vld [vmem:[%s506] sm:$0xff]
      %v508 = vld [vmem:[%s506 + $0x8] sm:$0xff]
      %v509 = vld [vmem:[%s506 + $0x18] sm:$0xff]
      %v510 = vld [vmem:[%s506 + $0x20] sm:$0xff]
      %v511 = vld [vmem:[%s506 + $0x30] sm:$0xff]
      %v512 = vld [vmem:[%s506 + $0x38] sm:$0xff]
      %v513 = vld [vmem:[%s506 + $0x48] sm:$0xff]
      %v514 = vld [vmem:[%s506 + $0x50] sm:$0xff]
      %v515 = vld [vmem:[%s506 + $0x60] sm:$0xff]
      %v516 = vld [vmem:[%s506 + $0x68] sm:$0xff]
      %v517 = vld [vmem:[%s506 + $0x78] sm:$0xff]
      %v518 = vld [vmem:[%s506 + $0x80] sm:$0xff]
      %v519 = vld [vmem:[%s506 + $0x90] sm:$0xff]
      %v520 = vld [vmem:[%s506 + $0x98] sm:$0xff]
      %v521 = vld [vmem:[%s506 + $0xa8] sm:$0xff]
      %v522 = vld [vmem:[%s506 + $0xb0] sm:$0xff]
      %v523 = vpack.c.bf16 %v508, %v507
      %v524 = vpack.c.bf16 %v510, %v509
      %v525 = vpack.c.bf16 %v512, %v511
      %v526 = vpack.c.bf16 %v514, %v513
      %v527 = vpack.c.bf16 %v516, %v515
      %v528 = vpack.c.bf16 %v518, %v517
      %v529 = vpack.c.bf16 %v520, %v519
      %v530 = vpack.c.bf16 %v522, %v521
      %s531 = scalar_lea.vmem %s1, 24
      %v532 = vld [vmem:[%s531] sm:$0xf]
      %v533 = vld [vmem:[%s531 + $0x4] sm:$0xf]
      %v536 = vunpack.c.l.b16 %v532
      %v537 = vunpack.c.l.b16 %v533
      %v538 = vpack.c.b16 %v537, %v536
      %v541 = vsel %vm231, %v523, 0
      %v544 = vsel %vm231, %v524, 0
      %v547 = vsel %vm231, %v525, 0
      %v550 = vsel %vm231, %v526, 0
      %v553 = vsel %vm231, %v527, 0
      %v556 = vsel %vm231, %v528, 0
      %v559 = vsel %vm231, %v529, 0
      %v562 = vsel %vm231, %v530, 0
      %564 = vmatpush.bf16.msra.mxu0 0
      %565 = vmatpush.bf16.msra.mxu0 0
      %566 = vmatpush.bf16.msra.mxu0 0
      %567 = vmatpush.bf16.msra.mxu0 0
      %568 = vmatpush.bf16.msra.mxu0 0
      %569 = vmatpush.bf16.msra.mxu0 0
      %570 = vmatpush.bf16.msra.mxu0 0
      %571 = vmatpush.bf16.msra.mxu0 %v538
      %572 = vmatmul.bf16.gmra.mxu0 %v541
      %v573 = vpop.f32.mrf.mxu0
      %v574 = vadd.f32 0.0, %v573
      %v575 = vpop.f32.mrf.mxu0
      %v576 = vadd.f32 0.0, %v575
      %577 = vmatmul.bf16.gmra.mxu0 %v544
      %v578 = vpop.f32.mrf.mxu0
      %v579 = vadd.f32 0.0, %v578
      %v580 = vpop.f32.mrf.mxu0
      %v581 = vadd.f32 0.0, %v580
      %582 = vmatmul.bf16.gmra.mxu0 %v547
      %v583 = vpop.f32.mrf.mxu0
      %v584 = vadd.f32 0.0, %v583
      %v585 = vpop.f32.mrf.mxu0
      %v586 = vadd.f32 0.0, %v585
      %587 = vmatmul.bf16.gmra.mxu0 %v550
      %v588 = vpop.f32.mrf.mxu0
      %v589 = vadd.f32 0.0, %v588
      %v590 = vpop.f32.mrf.mxu0
      %v591 = vadd.f32 0.0, %v590
      %592 = vmatmul.bf16.gmra.mxu0 %v553
      %v593 = vpop.f32.mrf.mxu0
      %v594 = vadd.f32 0.0, %v593
      %v595 = vpop.f32.mrf.mxu0
      %v596 = vadd.f32 0.0, %v595
      %597 = vmatmul.bf16.gmra.mxu0 %v556
      %v598 = vpop.f32.mrf.mxu0
      %v599 = vadd.f32 0.0, %v598
      %v600 = vpop.f32.mrf.mxu0
      %v601 = vadd.f32 0.0, %v600
      %602 = vmatmul.bf16.gmra.mxu0 %v559
      %v603 = vpop.f32.mrf.mxu0
      %v604 = vadd.f32 0.0, %v603
      %v605 = vpop.f32.mrf.mxu0
      %v606 = vadd.f32 0.0, %v605
      %607 = vmatmul.bf16.gmra.mxu0 %v562
      %v608 = vpop.f32.mrf.mxu0
      %v609 = vadd.f32 0.0, %v608
      %v610 = vpop.f32.mrf.mxu0
      %v611 = vadd.f32 0.0, %v610
      %612 = vdwg.mxu0
      %v613 = vadd.f32 %v490, %v574
      %v614 = vadd.f32 %v491, %v576
      %v615 = vadd.f32 %v492, %v579
      %v616 = vadd.f32 %v493, %v581
      %v617 = vadd.f32 %v494, %v584
      %v618 = vadd.f32 %v495, %v586
      %v619 = vadd.f32 %v496, %v589
      %v620 = vadd.f32 %v497, %v591
      %v621 = vadd.f32 %v498, %v594
      %v622 = vadd.f32 %v499, %v596
      %v623 = vadd.f32 %v500, %v599
      %v624 = vadd.f32 %v501, %v601
      %v625 = vadd.f32 %v502, %v604
      %v626 = vadd.f32 %v503, %v606
      %v627 = vadd.f32 %v504, %v609
      %v628 = vadd.f32 %v505, %v611
      %v629 = vld [vmem:[%s506 + $0x1] sm:$0xff]
      %v630 = vld [vmem:[%s506 + $0x9] sm:$0xff]
      %v631 = vld [vmem:[%s506 + $0x19] sm:$0xff]
      %v632 = vld [vmem:[%s506 + $0x21] sm:$0xff]
      %v633 = vld [vmem:[%s506 + $0x31] sm:$0xff]
      %v634 = vld [vmem:[%s506 + $0x39] sm:$0xff]
      %v635 = vld [vmem:[%s506 + $0x49] sm:$0xff]
      %v636 = vld [vmem:[%s506 + $0x51] sm:$0xff]
      %v637 = vld [vmem:[%s506 + $0x61] sm:$0xff]
      %v638 = vld [vmem:[%s506 + $0x69] sm:$0xff]
      %v639 = vld [vmem:[%s506 + $0x79] sm:$0xff]
      %v640 = vld [vmem:[%s506 + $0x81] sm:$0xff]
      %v641 = vld [vmem:[%s506 + $0x91] sm:$0xff]
      %v642 = vld [vmem:[%s506 + $0x99] sm:$0xff]
      %v643 = vld [vmem:[%s506 + $0xa9] sm:$0xff]
      %v644 = vld [vmem:[%s506 + $0xb1] sm:$0xff]
      %v645 = vpack.c.bf16 %v630, %v629
      %v646 = vpack.c.bf16 %v632, %v631
      %v647 = vpack.c.bf16 %v634, %v633
      %v648 = vpack.c.bf16 %v636, %v635
      %v649 = vpack.c.bf16 %v638, %v637
      %v650 = vpack.c.bf16 %v640, %v639
      %v651 = vpack.c.bf16 %v642, %v641
      %v652 = vpack.c.bf16 %v644, %v643
      %s653 = scalar_lea.vmem %s1, 32
      %v654 = vld [vmem:[%s653] sm:$0xf]
      %v655 = vld [vmem:[%s653 + $0x4] sm:$0xf]
      %v658 = vunpack.c.l.b16 %v654
      %v659 = vunpack.c.l.b16 %v655
      %v660 = vpack.c.b16 %v659, %v658
      %v663 = vsel %vm231, %v645, 0
      %v666 = vsel %vm231, %v646, 0
      %v669 = vsel %vm231, %v647, 0
      %v672 = vsel %vm231, %v648, 0
      %v675 = vsel %vm231, %v649, 0
      %v678 = vsel %vm231, %v650, 0
      %v681 = vsel %vm231, %v651, 0
      %v684 = vsel %vm231, %v652, 0
      %686 = vmatpush.bf16.msra.mxu0 0
      %687 = vmatpush.bf16.msra.mxu0 0
      %688 = vmatpush.bf16.msra.mxu0 0
      %689 = vmatpush.bf16.msra.mxu0 0
      %690 = vmatpush.bf16.msra.mxu0 0
      %691 = vmatpush.bf16.msra.mxu0 0
      %692 = vmatpush.bf16.msra.mxu0 0
      %693 = vmatpush.bf16.msra.mxu0 %v660
      %694 = vmatmul.bf16.gmra.mxu0 %v663
      %v695 = vpop.f32.mrf.mxu0
      %v696 = vadd.f32 0.0, %v695
      %v697 = vpop.f32.mrf.mxu0
      %v698 = vadd.f32 0.0, %v697
      %699 = vmatmul.bf16.gmra.mxu0 %v666
      %v700 = vpop.f32.mrf.mxu0
      %v701 = vadd.f32 0.0, %v700
      %v702 = vpop.f32.mrf.mxu0
      %v703 = vadd.f32 0.0, %v702
      %704 = vmatmul.bf16.gmra.mxu0 %v669
      %v705 = vpop.f32.mrf.mxu0
      %v706 = vadd.f32 0.0, %v705
      %v707 = vpop.f32.mrf.mxu0
      %v708 = vadd.f32 0.0, %v707
      %709 = vmatmul.bf16.gmra.mxu0 %v672
      %v710 = vpop.f32.mrf.mxu0
      %v711 = vadd.f32 0.0, %v710
      %v712 = vpop.f32.mrf.mxu0
      %v713 = vadd.f32 0.0, %v712
      %714 = vmatmul.bf16.gmra.mxu0 %v675
      %v715 = vpop.f32.mrf.mxu0
      %v716 = vadd.f32 0.0, %v715
      %v717 = vpop.f32.mrf.mxu0
      %v718 = vadd.f32 0.0, %v717
      %719 = vmatmul.bf16.gmra.mxu0 %v678
      %v720 = vpop.f32.mrf.mxu0
      %v721 = vadd.f32 0.0, %v720
      %v722 = vpop.f32.mrf.mxu0
      %v723 = vadd.f32 0.0, %v722
      %724 = vmatmul.bf16.gmra.mxu0 %v681
      %v725 = vpop.f32.mrf.mxu0
      %v726 = vadd.f32 0.0, %v725
      %v727 = vpop.f32.mrf.mxu0
      %v728 = vadd.f32 0.0, %v727
      %729 = vmatmul.bf16.gmra.mxu0 %v684
      %v730 = vpop.f32.mrf.mxu0
      %v731 = vadd.f32 0.0, %v730
      %v732 = vpop.f32.mrf.mxu0
      %v733 = vadd.f32 0.0, %v732
      %734 = vdwg.mxu0
      %v735 = vadd.f32 %v613, %v696
      %v736 = vadd.f32 %v614, %v698
      %v737 = vadd.f32 %v615, %v701
      %v738 = vadd.f32 %v616, %v703
      %v739 = vadd.f32 %v617, %v706
      %v740 = vadd.f32 %v618, %v708
      %v741 = vadd.f32 %v619, %v711
      %v742 = vadd.f32 %v620, %v713
      %v743 = vadd.f32 %v621, %v716
      %v744 = vadd.f32 %v622, %v718
      %v745 = vadd.f32 %v623, %v721
      %v746 = vadd.f32 %v624, %v723
      %v747 = vadd.f32 %v625, %v726
      %v748 = vadd.f32 %v626, %v728
      %v749 = vadd.f32 %v627, %v731
      %v750 = vadd.f32 %v628, %v733
      %v751 = vld [vmem:[%s506 + $0x2] sm:$0xff]
      %v752 = vld [vmem:[%s506 + $0xa] sm:$0xff]
      %v753 = vld [vmem:[%s506 + $0x1a] sm:$0xff]
      %v754 = vld [vmem:[%s506 + $0x22] sm:$0xff]
      %v755 = vld [vmem:[%s506 + $0x32] sm:$0xff]
      %v756 = vld [vmem:[%s506 + $0x3a] sm:$0xff]
      %v757 = vld [vmem:[%s506 + $0x4a] sm:$0xff]
      %v758 = vld [vmem:[%s506 + $0x52] sm:$0xff]
      %v759 = vld [vmem:[%s506 + $0x62] sm:$0xff]
      %v760 = vld [vmem:[%s506 + $0x6a] sm:$0xff]
      %v761 = vld [vmem:[%s506 + $0x7a] sm:$0xff]
      %v762 = vld [vmem:[%s506 + $0x82] sm:$0xff]
      %v763 = vld [vmem:[%s506 + $0x92] sm:$0xff]
      %v764 = vld [vmem:[%s506 + $0x9a] sm:$0xff]
      %v765 = vld [vmem:[%s506 + $0xaa] sm:$0xff]
      %v766 = vld [vmem:[%s506 + $0xb2] sm:$0xff]
      %v767 = vpack.c.bf16 %v752, %v751
      %v768 = vpack.c.bf16 %v754, %v753
      %v769 = vpack.c.bf16 %v756, %v755
      %v770 = vpack.c.bf16 %v758, %v757
      %v771 = vpack.c.bf16 %v760, %v759
      %v772 = vpack.c.bf16 %v762, %v761
      %v773 = vpack.c.bf16 %v764, %v763
      %v774 = vpack.c.bf16 %v766, %v765
      %s775 = scalar_lea.vmem %s1, 40
      %v776 = vld [vmem:[%s775] sm:$0xf]
      %v777 = vld [vmem:[%s775 + $0x4] sm:$0xf]
      %v780 = vunpack.c.l.b16 %v776
      %v781 = vunpack.c.l.b16 %v777
      %v782 = vpack.c.b16 %v781, %v780
      %v785 = vsel %vm231, %v767, 0
      %v788 = vsel %vm231, %v768, 0
      %v791 = vsel %vm231, %v769, 0
      %v794 = vsel %vm231, %v770, 0
      %v797 = vsel %vm231, %v771, 0
      %v800 = vsel %vm231, %v772, 0
      %v803 = vsel %vm231, %v773, 0
      %v806 = vsel %vm231, %v774, 0
      %808 = vmatpush.bf16.msra.mxu0 0
      %809 = vmatpush.bf16.msra.mxu0 0
      %810 = vmatpush.bf16.msra.mxu0 0
      %811 = vmatpush.bf16.msra.mxu0 0
      %812 = vmatpush.bf16.msra.mxu0 0
      %813 = vmatpush.bf16.msra.mxu0 0
      %814 = vmatpush.bf16.msra.mxu0 0
      %815 = vmatpush.bf16.msra.mxu0 %v782
      %816 = vmatmul.bf16.gmra.mxu0 %v785
      %v817 = vpop.f32.mrf.mxu0
      %v818 = vadd.f32 0.0, %v817
      %v819 = vpop.f32.mrf.mxu0
      %v820 = vadd.f32 0.0, %v819
      %821 = vmatmul.bf16.gmra.mxu0 %v788
      %v822 = vpop.f32.mrf.mxu0
      %v823 = vadd.f32 0.0, %v822
      %v824 = vpop.f32.mrf.mxu0
      %v825 = vadd.f32 0.0, %v824
      %826 = vmatmul.bf16.gmra.mxu0 %v791
      %v827 = vpop.f32.mrf.mxu0
      %v828 = vadd.f32 0.0, %v827
      %v829 = vpop.f32.mrf.mxu0
      %v830 = vadd.f32 0.0, %v829
      %831 = vmatmul.bf16.gmra.mxu0 %v794
      %v832 = vpop.f32.mrf.mxu0
      %v833 = vadd.f32 0.0, %v832
      %v834 = vpop.f32.mrf.mxu0
      %v835 = vadd.f32 0.0, %v834
      %836 = vmatmul.bf16.gmra.mxu0 %v797
      %v837 = vpop.f32.mrf.mxu0
      %v838 = vadd.f32 0.0, %v837
      %v839 = vpop.f32.mrf.mxu0
      %v840 = vadd.f32 0.0, %v839
      %841 = vmatmul.bf16.gmra.mxu0 %v800
      %v842 = vpop.f32.mrf.mxu0
      %v843 = vadd.f32 0.0, %v842
      %v844 = vpop.f32.mrf.mxu0
      %v845 = vadd.f32 0.0, %v844
      %846 = vmatmul.bf16.gmra.mxu0 %v803
      %v847 = vpop.f32.mrf.mxu0
      %v848 = vadd.f32 0.0, %v847
      %v849 = vpop.f32.mrf.mxu0
      %v850 = vadd.f32 0.0, %v849
      %851 = vmatmul.bf16.gmra.mxu0 %v806
      %v852 = vpop.f32.mrf.mxu0
      %v853 = vadd.f32 0.0, %v852
      %v854 = vpop.f32.mrf.mxu0
      %v855 = vadd.f32 0.0, %v854
      %856 = vdwg.mxu0
      %v857 = vadd.f32 %v735, %v818
      %v858 = vadd.f32 %v736, %v820
      %v859 = vadd.f32 %v737, %v823
      %v860 = vadd.f32 %v738, %v825
      %v861 = vadd.f32 %v739, %v828
      %v862 = vadd.f32 %v740, %v830
      %v863 = vadd.f32 %v741, %v833
      %v864 = vadd.f32 %v742, %v835
      %v865 = vadd.f32 %v743, %v838
      %v866 = vadd.f32 %v744, %v840
      %v867 = vadd.f32 %v745, %v843
      %v868 = vadd.f32 %v746, %v845
      %v869 = vadd.f32 %v747, %v848
      %v870 = vadd.f32 %v748, %v850
      %v871 = vadd.f32 %v749, %v853
      %v872 = vadd.f32 %v750, %v855
      %s873 = scalar_lea.vmem %s165, 48
      %v874 = vld [vmem:[%s873] sm:$0xff]
      %v875 = vld [vmem:[%s873 + $0x8] sm:$0xff]
      %v876 = vld [vmem:[%s873 + $0x18] sm:$0xff]
      %v877 = vld [vmem:[%s873 + $0x20] sm:$0xff]
      %v878 = vld [vmem:[%s873 + $0x30] sm:$0xff]
      %v879 = vld [vmem:[%s873 + $0x38] sm:$0xff]
      %v880 = vld [vmem:[%s873 + $0x48] sm:$0xff]
      %v881 = vld [vmem:[%s873 + $0x50] sm:$0xff]
      %v882 = vld [vmem:[%s873 + $0x60] sm:$0xff]
      %v883 = vld [vmem:[%s873 + $0x68] sm:$0xff]
      %v884 = vld [vmem:[%s873 + $0x78] sm:$0xff]
      %v885 = vld [vmem:[%s873 + $0x80] sm:$0xff]
      %v886 = vld [vmem:[%s873 + $0x90] sm:$0xff]
      %v887 = vld [vmem:[%s873 + $0x98] sm:$0xff]
      %v888 = vld [vmem:[%s873 + $0xa8] sm:$0xff]
      %v889 = vld [vmem:[%s873 + $0xb0] sm:$0xff]
      %v890 = vpack.c.bf16 %v875, %v874
      %v891 = vpack.c.bf16 %v877, %v876
      %v892 = vpack.c.bf16 %v879, %v878
      %v893 = vpack.c.bf16 %v881, %v880
      %v894 = vpack.c.bf16 %v883, %v882
      %v895 = vpack.c.bf16 %v885, %v884
      %v896 = vpack.c.bf16 %v887, %v886
      %v897 = vpack.c.bf16 %v889, %v888
      %s898 = scalar_lea.vmem %s1, 48
      %v899 = vld [vmem:[%s898] sm:$0xf]
      %v900 = vld [vmem:[%s898 + $0x4] sm:$0xf]
      %v903 = vunpack.c.l.b16 %v899
      %v904 = vunpack.c.l.b16 %v900
      %v905 = vpack.c.b16 %v904, %v903
      %v908 = vsel %vm231, %v890, 0
      %v911 = vsel %vm231, %v891, 0
      %v914 = vsel %vm231, %v892, 0
      %v917 = vsel %vm231, %v893, 0
      %v920 = vsel %vm231, %v894, 0
      %v923 = vsel %vm231, %v895, 0
      %v926 = vsel %vm231, %v896, 0
      %v929 = vsel %vm231, %v897, 0
      %931 = vmatpush.bf16.msra.mxu0 0
      %932 = vmatpush.bf16.msra.mxu0 0
      %933 = vmatpush.bf16.msra.mxu0 0
      %934 = vmatpush.bf16.msra.mxu0 0
      %935 = vmatpush.bf16.msra.mxu0 0
      %936 = vmatpush.bf16.msra.mxu0 0
      %937 = vmatpush.bf16.msra.mxu0 0
      %938 = vmatpush.bf16.msra.mxu0 %v905
      %939 = vmatmul.bf16.gmra.mxu0 %v908
      %v940 = vpop.f32.mrf.mxu0
      %v941 = vadd.f32 0.0, %v940
      %v942 = vpop.f32.mrf.mxu0
      %v943 = vadd.f32 0.0, %v942
      %944 = vmatmul.bf16.gmra.mxu0 %v911
      %v945 = vpop.f32.mrf.mxu0
      %v946 = vadd.f32 0.0, %v945
      %v947 = vpop.f32.mrf.mxu0
      %v948 = vadd.f32 0.0, %v947
      %949 = vmatmul.bf16.gmra.mxu0 %v914
      %v950 = vpop.f32.mrf.mxu0
      %v951 = vadd.f32 0.0, %v950
      %v952 = vpop.f32.mrf.mxu0
      %v953 = vadd.f32 0.0, %v952
      %954 = vmatmul.bf16.gmra.mxu0 %v917
      %v955 = vpop.f32.mrf.mxu0
      %v956 = vadd.f32 0.0, %v955
      %v957 = vpop.f32.mrf.mxu0
      %v958 = vadd.f32 0.0, %v957
      %959 = vmatmul.bf16.gmra.mxu0 %v920
      %v960 = vpop.f32.mrf.mxu0
      %v961 = vadd.f32 0.0, %v960
      %v962 = vpop.f32.mrf.mxu0
      %v963 = vadd.f32 0.0, %v962
      %964 = vmatmul.bf16.gmra.mxu0 %v923
      %v965 = vpop.f32.mrf.mxu0
      %v966 = vadd.f32 0.0, %v965
      %v967 = vpop.f32.mrf.mxu0
      %v968 = vadd.f32 0.0, %v967
      %969 = vmatmul.bf16.gmra.mxu0 %v926
      %v970 = vpop.f32.mrf.mxu0
      %v971 = vadd.f32 0.0, %v970
      %v972 = vpop.f32.mrf.mxu0
      %v973 = vadd.f32 0.0, %v972
      %974 = vmatmul.bf16.gmra.mxu0 %v929
      %v975 = vpop.f32.mrf.mxu0
      %v976 = vadd.f32 0.0, %v975
      %v977 = vpop.f32.mrf.mxu0
      %v978 = vadd.f32 0.0, %v977
      %979 = vdwg.mxu0
      %v980 = vadd.f32 %v857, %v941
      %v981 = vadd.f32 %v858, %v943
      %v982 = vadd.f32 %v859, %v946
      %v983 = vadd.f32 %v860, %v948
      %v984 = vadd.f32 %v861, %v951
      %v985 = vadd.f32 %v862, %v953
      %v986 = vadd.f32 %v863, %v956
      %v987 = vadd.f32 %v864, %v958
      %v988 = vadd.f32 %v865, %v961
      %v989 = vadd.f32 %v866, %v963
      %v990 = vadd.f32 %v867, %v966
      %v991 = vadd.f32 %v868, %v968
      %v992 = vadd.f32 %v869, %v971
      %v993 = vadd.f32 %v870, %v973
      %v994 = vadd.f32 %v871, %v976
      %v995 = vadd.f32 %v872, %v978
      %v996 = vld [vmem:[%s873 + $0x1] sm:$0xff]
      %v997 = vld [vmem:[%s873 + $0x9] sm:$0xff]
      %v998 = vld [vmem:[%s873 + $0x19] sm:$0xff]
      %v999 = vld [vmem:[%s873 + $0x21] sm:$0xff]
      %v1000 = vld [vmem:[%s873 + $0x31] sm:$0xff]
      %v1001 = vld [vmem:[%s873 + $0x39] sm:$0xff]
      %v1002 = vld [vmem:[%s873 + $0x49] sm:$0xff]
      %v1003 = vld [vmem:[%s873 + $0x51] sm:$0xff]
      %v1004 = vld [vmem:[%s873 + $0x61] sm:$0xff]
      %v1005 = vld [vmem:[%s873 + $0x69] sm:$0xff]
      %v1006 = vld [vmem:[%s873 + $0x79] sm:$0xff]
      %v1007 = vld [vmem:[%s873 + $0x81] sm:$0xff]
      %v1008 = vld [vmem:[%s873 + $0x91] sm:$0xff]
      %v1009 = vld [vmem:[%s873 + $0x99] sm:$0xff]
      %v1010 = vld [vmem:[%s873 + $0xa9] sm:$0xff]
      %v1011 = vld [vmem:[%s873 + $0xb1] sm:$0xff]
      %v1012 = vpack.c.bf16 %v997, %v996
      %v1013 = vpack.c.bf16 %v999, %v998
      %v1014 = vpack.c.bf16 %v1001, %v1000
      %v1015 = vpack.c.bf16 %v1003, %v1002
      %v1016 = vpack.c.bf16 %v1005, %v1004
      %v1017 = vpack.c.bf16 %v1007, %v1006
      %v1018 = vpack.c.bf16 %v1009, %v1008
      %v1019 = vpack.c.bf16 %v1011, %v1010
      %s1020 = scalar_lea.vmem %s1, 56
      %v1021 = vld [vmem:[%s1020] sm:$0xf]
      %v1022 = vld [vmem:[%s1020 + $0x4] sm:$0xf]
      %v1025 = vunpack.c.l.b16 %v1021
      %v1026 = vunpack.c.l.b16 %v1022
      %v1027 = vpack.c.b16 %v1026, %v1025
      %v1030 = vsel %vm231, %v1012, 0
      %v1033 = vsel %vm231, %v1013, 0
      %v1036 = vsel %vm231, %v1014, 0
      %v1039 = vsel %vm231, %v1015, 0
      %v1042 = vsel %vm231, %v1016, 0
      %v1045 = vsel %vm231, %v1017, 0
      %v1048 = vsel %vm231, %v1018, 0
      %v1051 = vsel %vm231, %v1019, 0
      %1053 = vmatpush.bf16.msra.mxu0 0
      %1054 = vmatpush.bf16.msra.mxu0 0
      %1055 = vmatpush.bf16.msra.mxu0 0
      %1056 = vmatpush.bf16.msra.mxu0 0
      %1057 = vmatpush.bf16.msra.mxu0 0
      %1058 = vmatpush.bf16.msra.mxu0 0
      %1059 = vmatpush.bf16.msra.mxu0 0
      %1060 = vmatpush.bf16.msra.mxu0 %v1027
      %1061 = vmatmul.bf16.gmra.mxu0 %v1030
      %v1062 = vpop.f32.mrf.mxu0
      %v1063 = vadd.f32 0.0, %v1062
      %v1064 = vpop.f32.mrf.mxu0
      %v1065 = vadd.f32 0.0, %v1064
      %1066 = vmatmul.bf16.gmra.mxu0 %v1033
      %v1067 = vpop.f32.mrf.mxu0
      %v1068 = vadd.f32 0.0, %v1067
      %v1069 = vpop.f32.mrf.mxu0
      %v1070 = vadd.f32 0.0, %v1069
      %1071 = vmatmul.bf16.gmra.mxu0 %v1036
      %v1072 = vpop.f32.mrf.mxu0
      %v1073 = vadd.f32 0.0, %v1072
      %v1074 = vpop.f32.mrf.mxu0
      %v1075 = vadd.f32 0.0, %v1074
      %1076 = vmatmul.bf16.gmra.mxu0 %v1039
      %v1077 = vpop.f32.mrf.mxu0
      %v1078 = vadd.f32 0.0, %v1077
      %v1079 = vpop.f32.mrf.mxu0
      %v1080 = vadd.f32 0.0, %v1079
      %1081 = vmatmul.bf16.gmra.mxu0 %v1042
      %v1082 = vpop.f32.mrf.mxu0
      %v1083 = vadd.f32 0.0, %v1082
      %v1084 = vpop.f32.mrf.mxu0
      %v1085 = vadd.f32 0.0, %v1084
      %1086 = vmatmul.bf16.gmra.mxu0 %v1045
      %v1087 = vpop.f32.mrf.mxu0
      %v1088 = vadd.f32 0.0, %v1087
      %v1089 = vpop.f32.mrf.mxu0
      %v1090 = vadd.f32 0.0, %v1089
      %1091 = vmatmul.bf16.gmra.mxu0 %v1048
      %v1092 = vpop.f32.mrf.mxu0
      %v1093 = vadd.f32 0.0, %v1092
      %v1094 = vpop.f32.mrf.mxu0
      %v1095 = vadd.f32 0.0, %v1094
      %1096 = vmatmul.bf16.gmra.mxu0 %v1051
      %v1097 = vpop.f32.mrf.mxu0
      %v1098 = vadd.f32 0.0, %v1097
      %v1099 = vpop.f32.mrf.mxu0
      %v1100 = vadd.f32 0.0, %v1099
      %1101 = vdwg.mxu0
      %v1102 = vadd.f32 %v980, %v1063
      %v1103 = vadd.f32 %v981, %v1065
      %v1104 = vadd.f32 %v982, %v1068
      %v1105 = vadd.f32 %v983, %v1070
      %v1106 = vadd.f32 %v984, %v1073
      %v1107 = vadd.f32 %v985, %v1075
      %v1108 = vadd.f32 %v986, %v1078
      %v1109 = vadd.f32 %v987, %v1080
      %v1110 = vadd.f32 %v988, %v1083
      %v1111 = vadd.f32 %v989, %v1085
      %v1112 = vadd.f32 %v990, %v1088
      %v1113 = vadd.f32 %v991, %v1090
      %v1114 = vadd.f32 %v992, %v1093
      %v1115 = vadd.f32 %v993, %v1095
      %v1116 = vadd.f32 %v994, %v1098
      %v1117 = vadd.f32 %v995, %v1100
      %v1118 = vld [vmem:[%s873 + $0x2] sm:$0xff]
      %v1119 = vld [vmem:[%s873 + $0xa] sm:$0xff]
      %v1120 = vld [vmem:[%s873 + $0x1a] sm:$0xff]
      %v1121 = vld [vmem:[%s873 + $0x22] sm:$0xff]
      %v1122 = vld [vmem:[%s873 + $0x32] sm:$0xff]
      %v1123 = vld [vmem:[%s873 + $0x3a] sm:$0xff]
      %v1124 = vld [vmem:[%s873 + $0x4a] sm:$0xff]
      %v1125 = vld [vmem:[%s873 + $0x52] sm:$0xff]
      %v1126 = vld [vmem:[%s873 + $0x62] sm:$0xff]
      %v1127 = vld [vmem:[%s873 + $0x6a] sm:$0xff]
      %v1128 = vld [vmem:[%s873 + $0x7a] sm:$0xff]
      %v1129 = vld [vmem:[%s873 + $0x82] sm:$0xff]
      %v1130 = vld [vmem:[%s873 + $0x92] sm:$0xff]
      %v1131 = vld [vmem:[%s873 + $0x9a] sm:$0xff]
      %v1132 = vld [vmem:[%s873 + $0xaa] sm:$0xff]
      %v1133 = vld [vmem:[%s873 + $0xb2] sm:$0xff]
      %v1134 = vpack.c.bf16 %v1119, %v1118
      %v1135 = vpack.c.bf16 %v1121, %v1120
      %v1136 = vpack.c.bf16 %v1123, %v1122
      %v1137 = vpack.c.bf16 %v1125, %v1124
      %v1138 = vpack.c.bf16 %v1127, %v1126
      %v1139 = vpack.c.bf16 %v1129, %v1128
      %v1140 = vpack.c.bf16 %v1131, %v1130
      %v1141 = vpack.c.bf16 %v1133, %v1132
      %s1142 = scalar_lea.vmem %s1, 64
      %v1143 = vld [vmem:[%s1142] sm:$0xf]
      %v1144 = vld [vmem:[%s1142 + $0x4] sm:$0xf]
      %v1147 = vunpack.c.l.b16 %v1143
      %v1148 = vunpack.c.l.b16 %v1144
      %v1149 = vpack.c.b16 %v1148, %v1147
      %v1152 = vsel %vm231, %v1134, 0
      %v1155 = vsel %vm231, %v1135, 0
      %v1158 = vsel %vm231, %v1136, 0
      %v1161 = vsel %vm231, %v1137, 0
      %v1164 = vsel %vm231, %v1138, 0
      %v1167 = vsel %vm231, %v1139, 0
      %v1170 = vsel %vm231, %v1140, 0
      %v1173 = vsel %vm231, %v1141, 0
      %1175 = vmatpush.bf16.msra.mxu0 0
      %1176 = vmatpush.bf16.msra.mxu0 0
      %1177 = vmatpush.bf16.msra.mxu0 0
      %1178 = vmatpush.bf16.msra.mxu0 0
      %1179 = vmatpush.bf16.msra.mxu0 0
      %1180 = vmatpush.bf16.msra.mxu0 0
      %1181 = vmatpush.bf16.msra.mxu0 0
      %1182 = vmatpush.bf16.msra.mxu0 %v1149
      %1183 = vmatmul.bf16.gmra.mxu0 %v1152
      %v1184 = vpop.f32.mrf.mxu0
      %v1185 = vadd.f32 0.0, %v1184
      %v1186 = vpop.f32.mrf.mxu0
      %v1187 = vadd.f32 0.0, %v1186
      %1188 = vmatmul.bf16.gmra.mxu0 %v1155
      %v1189 = vpop.f32.mrf.mxu0
      %v1190 = vadd.f32 0.0, %v1189
      %v1191 = vpop.f32.mrf.mxu0
      %v1192 = vadd.f32 0.0, %v1191
      %1193 = vmatmul.bf16.gmra.mxu0 %v1158
      %v1194 = vpop.f32.mrf.mxu0
      %v1195 = vadd.f32 0.0, %v1194
      %v1196 = vpop.f32.mrf.mxu0
      %v1197 = vadd.f32 0.0, %v1196
      %1198 = vmatmul.bf16.gmra.mxu0 %v1161
      %v1199 = vpop.f32.mrf.mxu0
      %v1200 = vadd.f32 0.0, %v1199
      %v1201 = vpop.f32.mrf.mxu0
      %v1202 = vadd.f32 0.0, %v1201
      %1203 = vmatmul.bf16.gmra.mxu0 %v1164
      %v1204 = vpop.f32.mrf.mxu0
      %v1205 = vadd.f32 0.0, %v1204
      %v1206 = vpop.f32.mrf.mxu0
      %v1207 = vadd.f32 0.0, %v1206
      %1208 = vmatmul.bf16.gmra.mxu0 %v1167
      %v1209 = vpop.f32.mrf.mxu0
      %v1210 = vadd.f32 0.0, %v1209
      %v1211 = vpop.f32.mrf.mxu0
      %v1212 = vadd.f32 0.0, %v1211
      %1213 = vmatmul.bf16.gmra.mxu0 %v1170
      %v1214 = vpop.f32.mrf.mxu0
      %v1215 = vadd.f32 0.0, %v1214
      %v1216 = vpop.f32.mrf.mxu0
      %v1217 = vadd.f32 0.0, %v1216
      %1218 = vmatmul.bf16.gmra.mxu0 %v1173
      %v1219 = vpop.f32.mrf.mxu0
      %v1220 = vadd.f32 0.0, %v1219
      %v1221 = vpop.f32.mrf.mxu0
      %v1222 = vadd.f32 0.0, %v1221
      %1223 = vdwg.mxu0
      %v1224 = vadd.f32 %v1102, %v1185
      %v1225 = vadd.f32 %v1103, %v1187
      %v1226 = vadd.f32 %v1104, %v1190
      %v1227 = vadd.f32 %v1105, %v1192
      %v1228 = vadd.f32 %v1106, %v1195
      %v1229 = vadd.f32 %v1107, %v1197
      %v1230 = vadd.f32 %v1108, %v1200
      %v1231 = vadd.f32 %v1109, %v1202
      %v1232 = vadd.f32 %v1110, %v1205
      %v1233 = vadd.f32 %v1111, %v1207
      %v1234 = vadd.f32 %v1112, %v1210
      %v1235 = vadd.f32 %v1113, %v1212
      %v1236 = vadd.f32 %v1114, %v1215
      %v1237 = vadd.f32 %v1115, %v1217
      %v1238 = vadd.f32 %v1116, %v1220
      %v1239 = vadd.f32 %v1117, %v1222
      %v1240 = vld [vmem:[%s2] sm:$0x1]
      %v1242 = vperm.slane %v1240, 0
      %v1244 = vadd.f32 %v1224, %v1242
      %v1245 = vadd.f32 %v1225, %v1242
      %v1246 = vadd.f32 %v1226, %v1242
      %v1247 = vadd.f32 %v1227, %v1242
      %v1248 = vadd.f32 %v1228, %v1242
      %v1249 = vadd.f32 %v1229, %v1242
      %v1250 = vadd.f32 %v1230, %v1242
      %v1251 = vadd.f32 %v1231, %v1242
      %v1252 = vadd.f32 %v1232, %v1242
      %v1253 = vadd.f32 %v1233, %v1242
      %v1254 = vadd.f32 %v1234, %v1242
      %v1255 = vadd.f32 %v1235, %v1242
      %v1256 = vadd.f32 %v1236, %v1242
      %v1257 = vadd.f32 %v1237, %v1242
      %v1258 = vadd.f32 %v1238, %v1242
      %v1259 = vadd.f32 %v1239, %v1242
      %v1260 = vmax.f32 %v1244, 0.0
      %v1261 = vmax.f32 %v1245, 0.0
      %v1262 = vmax.f32 %v1246, 0.0
      %v1263 = vmax.f32 %v1247, 0.0
      %v1264 = vmax.f32 %v1248, 0.0
      %v1265 = vmax.f32 %v1249, 0.0
      %v1266 = vmax.f32 %v1250, 0.0
      %v1267 = vmax.f32 %v1251, 0.0
      %v1268 = vmax.f32 %v1252, 0.0
      %v1269 = vmax.f32 %v1253, 0.0
      %v1270 = vmax.f32 %v1254, 0.0
      %v1271 = vmax.f32 %v1255, 0.0
      %v1272 = vmax.f32 %v1256, 0.0
      %v1273 = vmax.f32 %v1257, 0.0
      %v1274 = vmax.f32 %v1258, 0.0
      %v1275 = vmax.f32 %v1259, 0.0
      %vm1276 = vcmask 261120
      %1277 = vst.msk [vmem:[%s170] sm:$0xff] %vm1276, %v1260
      %1278 = vst.msk [vmem:[%s170 + $0x8] sm:$0xff] %vm1276, %v1261
      %1279 = vst.msk [vmem:[%s170 + $0x10] sm:$0xff] %vm1276, %v1262
      %1280 = vst.msk [vmem:[%s170 + $0x18] sm:$0xff] %vm1276, %v1263
      %1281 = vst.msk [vmem:[%s170 + $0x20] sm:$0xff] %vm1276, %v1264
      %1282 = vst.msk [vmem:[%s170 + $0x28] sm:$0xff] %vm1276, %v1265
      %1283 = vst.msk [vmem:[%s170 + $0x30] sm:$0xff] %vm1276, %v1266
      %1284 = vst.msk [vmem:[%s170 + $0x38] sm:$0xff] %vm1276, %v1267
      %1285 = vst.msk [vmem:[%s170 + $0x40] sm:$0xff] %vm1276, %v1268
      %1286 = vst.msk [vmem:[%s170 + $0x48] sm:$0xff] %vm1276, %v1269
      %1287 = vst.msk [vmem:[%s170 + $0x50] sm:$0xff] %vm1276, %v1270
      %1288 = vst.msk [vmem:[%s170 + $0x58] sm:$0xff] %vm1276, %v1271
      %1289 = vst.msk [vmem:[%s170 + $0x60] sm:$0xff] %vm1276, %v1272
      %1290 = vst.msk [vmem:[%s170 + $0x68] sm:$0xff] %vm1276, %v1273
      %1291 = vst.msk [vmem:[%s170 + $0x70] sm:$0xff] %vm1276, %v1274
      %1292 = vst.msk [vmem:[%s170 + $0x78] sm:$0xff] %vm1276, %v1275
      %p1293 = scmp.lt.s32.totalorder %s14, 1
      %s1294 = scalar_select %p1293, %s14, 1
      %s1295 = smul.addr %s1294, 16
      %s1296 = smul.addr %s1295, 8
      %s1297 = scalar_lea.vmem %s3, %s1296
      // Predicated region
      $region33: #{ocr_encoder_forward.7} parent=31 // pred_check
        %p1298 = pneg %p100
      $region34: #{ocr_encoder_forward.7} parent=31 // pred_check_branch
        %1300 = sbr.rel (%p1298) target = $region36
      $region35: #{ocr_encoder_forward.7} parent=31 // pred_region
        _
      $region36: #{ocr_encoder_forward.7} parent=31 // pred_fallthru
        _
    $region32: #{ocr_encoder_forward.7} parent=5 // pred_fallthru
      _
    %p1301 = scmp.le.s32.totalorder 2, %s9
    // Predicated region
    $region37: #{ocr_encoder_forward.7} parent=5 // pred_check
      %p1302 = pneg %p1301
    $region38: #{ocr_encoder_forward.7} parent=5 // pred_check_branch
      %1304 = sbr.rel (%p1302) target = $region40
    $region39: #{ocr_encoder_forward.7} parent=5 // pred_region
      %s1305 = ssub.s32 %s9, 2
      // Predicated region
      $region41: #{ocr_encoder_forward.7} parent=39 // pred_check
        %p1306 = pneg %p106
      $region42: #{ocr_encoder_forward.7} parent=39 // pred_check_branch
        %1308 = sbr.rel (%p1306) target = $region44
      $region43: #{ocr_encoder_forward.7} parent=39 // pred_region
        %p1309 = scmp.lt.s32.totalorder %s15, 1
        %s1310 = scalar_select %p1309, %s15, 1
        %s1311 = smul.addr %s1310, 16
        %s1312 = smul.addr %s1311, 8
        %s1313 = scalar_lea.vmem %s3, %s1312
      $region44: #{ocr_encoder_forward.7} parent=39 // pred_fallthru
        _
    $region40: #{ocr_encoder_forward.7} parent=5 // pred_fallthru
      _
  $region6: #{ocr_encoder_forward.7} parent=0 // loop_footer
    %s13 = sadd.s32 1, %s9
  $region7: #{ocr_encoder_forward.7} parent=0 // loop_footer_branch
    %8 = sbr.rel target = $region3
  $region8: #{ocr_encoder_forward.7} parent=0 // loop_exit
    _

// kernel: ocr_encoder_forward.8
$region0: #{ocr_encoder_forward.8}
  #allocation0 [shape = 'u32[]', space=smem, size = 0x4, offset = 0x4, fixed_abs, tag = 'smem constant byte address 0x4 - core index']
  #allocation1 [shape = 'u32[72,128]{1,0:T(1,128)}', space=vmem, size = 0x9000, scoped, tag = 'internal scratch']
  #allocation2 [shape = 'f32[64,32]{1,0:T(8,128)}', space=vmem, size = 0x8000, scoped, tag = 'scratch operand']
  %s0 = inlined_call_operand.vmem [shape: bf16[128,32], index: 0, kind: input, shape index: {}]
  %s1 = inlined_call_operand.vmem [shape: bf16[32,32], index: 1, kind: input, shape index: {}]
  %s2 = inlined_call_operand.vmem [shape: f32[1,32], index: 2, kind: input, shape index: {}]
  %s3 = inlined_call_operand.vmem [shape: f32[128,32], index: 3, kind: input, shape index: {}]
  %s4 = inlined_call_operand.vmem [shape: f32[128,32], index: 4, kind: output, shape index: {}]
  %s5 = sld [smem:[#allocation0]]
  $region57: #{ocr_encoder_forward.8} parent=0
    _
  %s7 = ssub.s32 1, %s5
  %s8 = scalar_select 0, %s7, %s5
  loop: start=0, step=1, limit=4
  $region2: #{ocr_encoder_forward.8} parent=0 // loop_pre_header
    _
  $region3: #{ocr_encoder_forward.8} parent=0 // loop_header
    %s10 = sphi 0, %s14
    %p11 = scmp.ge.s32.totalorder %s10, 4
    %s17 = sphi 0, %s36
    %s18 = sphi 0, %s32
    %s19 = sphi 0, %s28
    %s20 = sphi 0, %s17
    %s21 = sphi 0, %s18
    %s22 = sphi 0, %s19
    %s23 = sphi 0, %s20
    %s24 = sphi 0, %s21
    %s25 = sphi 0, %s22
    %s41 = sphi 0, %s43
    %s44 = sphi 0, %s41
    %s45 = sphi 0, %s44
    %s61 = sphi 0, %s45
    %s69 = sphi 0, %s71
    %s72 = sphi 0, %s69
    %s73 = sphi 0, %s72
    %s89 = sphi 0, %s73
    %s95 = sphi 0, %s97
    %s98 = sphi 0, %s95
    %s99 = sphi 0, %s98
    %s115 = sphi 0, %s99
    %s123 = sphi 0, %s125
    %s126 = sphi 0, %s123
    %s127 = sphi 0, %s126
    %s143 = sphi 0, %s127
    %s151 = sphi 0, %s153
    %s154 = sphi 0, %s151
    %s155 = sphi 0, %s154
    %s171 = sphi 0, %s155
  $region4: #{ocr_encoder_forward.8} parent=0 // loop_header_branch
    %13 = sbr.rel (%p11) target = $region8
  $region5: #{ocr_encoder_forward.8} parent=0 // loop_body
    %s15 = ssub.s32 %s10, 1
    %s16 = ssub.s32 %s10, 2
    %s26 = sadd.s32 1, %s19
    %p27 = scmp.ge.s32.totalorder %s26, 1
    %s28 = scalar_select %p27, 0, %s26
    %s29 = sadd.s32 1, %s18
    %s30 = scalar_select %p27, %s29, %s18
    %p31 = scmp.ge.s32.totalorder %s30, 1
    %s32 = scalar_select %p31, 0, %s30
    %s33 = sadd.s32 1, %s17
    %s34 = scalar_select %p31, %s33, %s17
    %p35 = scmp.ge.s32.totalorder %s34, 2
    %s36 = scalar_select %p35, 0, %s34
    %s37 = ssub.s32 %s17, %s36
    %s38 = ssub.s32 %s19, %s28
    %s39 = sor.u32 %s37, %s38
    %p40 = scmp.eq.s32.totalorder %s39, 0
    %s42 = sadd.s32 %s41, 1
    %s43 = scalar_select %p40, %s41, %s42
    %p46 = pneg %p40
    %p47 = scmp.eq.s32.totalorder %s10, 1
    %p48 = por %p46, %p47
    %p49 = scmp.ne.s32.totalorder %s41, %s44
    %p50 = scmp.eq.s32.totalorder %s10, 0
    %p51 = por %p49, %p50
    %p52 = scmp.ne.s32.totalorder %s41, %s44
    %p53 = scmp.eq.s32.totalorder %s15, 1
    %p54 = por %p52, %p53
    %p55 = scmp.ne.s32.totalorder %s44, %s45
    %p56 = scmp.eq.s32.totalorder %s15, 0
    %p57 = por %p55, %p56
    %p58 = scmp.ne.s32.totalorder %s44, %s45
    %p59 = scmp.eq.s32.totalorder %s16, 1
    %p60 = por %p58, %p59
    %p62 = scmp.ne.s32.totalorder %s45, %s61
    %p63 = scmp.eq.s32.totalorder %s16, 0
    %p64 = por %p62, %p63
    %s65 = ssub.s32 %s19, %s28
    %s66 = ssub.s32 %s18, %s32
    %s67 = sor.u32 %s65, %s66
    %p68 = scmp.eq.s32.totalorder %s67, 0
    %s70 = sadd.s32 %s69, 1
    %s71 = scalar_select %p68, %s69, %s70
    %p74 = pneg %p68
    %p75 = scmp.eq.s32.totalorder %s10, 1
    %p76 = por %p74, %p75
    %p77 = scmp.ne.s32.totalorder %s69, %s72
    %p78 = scmp.eq.s32.totalorder %s10, 0
    %p79 = por %p77, %p78
    %p80 = scmp.ne.s32.totalorder %s69, %s72
    %p81 = scmp.eq.s32.totalorder %s15, 1
    %p82 = por %p80, %p81
    %p83 = scmp.ne.s32.totalorder %s72, %s73
    %p84 = scmp.eq.s32.totalorder %s15, 0
    %p85 = por %p83, %p84
    %p86 = scmp.ne.s32.totalorder %s72, %s73
    %p87 = scmp.eq.s32.totalorder %s16, 1
    %p88 = por %p86, %p87
    %p90 = scmp.ne.s32.totalorder %s73, %s89
    %p91 = scmp.eq.s32.totalorder %s16, 0
    %p92 = por %p90, %p91
    %s93 = ssub.s32 %s18, %s32
    %p94 = scmp.eq.s32.totalorder %s93, 0
    %s96 = sadd.s32 %s95, 1
    %s97 = scalar_select %p94, %s95, %s96
    %p100 = pneg %p94
    %p101 = scmp.eq.s32.totalorder %s10, 1
    %p102 = por %p100, %p101
    %p103 = scmp.ne.s32.totalorder %s95, %s98
    %p104 = scmp.eq.s32.totalorder %s10, 0
    %p105 = por %p103, %p104
    %p106 = scmp.ne.s32.totalorder %s95, %s98
    %p107 = scmp.eq.s32.totalorder %s15, 1
    %p108 = por %p106, %p107
    %p109 = scmp.ne.s32.totalorder %s98, %s99
    %p110 = scmp.eq.s32.totalorder %s15, 0
    %p111 = por %p109, %p110
    %p112 = scmp.ne.s32.totalorder %s98, %s99
    %p113 = scmp.eq.s32.totalorder %s16, 1
    %p114 = por %p112, %p113
    %p116 = scmp.ne.s32.totalorder %s99, %s115
    %p117 = scmp.eq.s32.totalorder %s16, 0
    %p118 = por %p116, %p117
    %s119 = ssub.s32 %s17, %s36
    %s120 = ssub.s32 %s18, %s32
    %s121 = sor.u32 %s119, %s120
    %p122 = scmp.eq.s32.totalorder %s121, 0
    %s124 = sadd.s32 %s123, 1
    %s125 = scalar_select %p122, %s123, %s124
    %p128 = pneg %p122
    %p129 = scmp.eq.s32.totalorder %s10, 1
    %p130 = por %p128, %p129
    %p131 = scmp.ne.s32.totalorder %s123, %s126
    %p132 = scmp.eq.s32.totalorder %s10, 0
    %p133 = por %p131, %p132
    %p134 = scmp.ne.s32.totalorder %s123, %s126
    %p135 = scmp.eq.s32.totalorder %s15, 1
    %p136 = por %p134, %p135
    %p137 = scmp.ne.s32.totalorder %s126, %s127
    %p138 = scmp.eq.s32.totalorder %s15, 0
    %p139 = por %p137, %p138
    %p140 = scmp.ne.s32.totalorder %s126, %s127
    %p141 = scmp.eq.s32.totalorder %s16, 1
    %p142 = por %p140, %p141
    %p144 = scmp.ne.s32.totalorder %s127, %s143
    %p145 = scmp.eq.s32.totalorder %s16, 0
    %p146 = por %p144, %p145
    %s147 = ssub.s32 %s17, %s36
    %s148 = ssub.s32 %s18, %s32
    %s149 = sor.u32 %s147, %s148
    %p150 = scmp.eq.s32.totalorder %s149, 0
    %s152 = sadd.s32 %s151, 1
    %s153 = scalar_select %p150, %s151, %s152
    %p156 = pneg %p150
    %p157 = scmp.eq.s32.totalorder %s10, 1
    %p158 = por %p156, %p157
    %p159 = scmp.ne.s32.totalorder %s151, %s154
    %p160 = scmp.eq.s32.totalorder %s10, 0
    %p161 = por %p159, %p160
    %p162 = scmp.ne.s32.totalorder %s151, %s154
    %p163 = scmp.eq.s32.totalorder %s15, 1
    %p164 = por %p162, %p163
    %p165 = scmp.ne.s32.totalorder %s154, %s155
    %p166 = scmp.eq.s32.totalorder %s15, 0
    %p167 = por %p165, %p166
    %p168 = scmp.ne.s32.totalorder %s154, %s155
    %p169 = scmp.eq.s32.totalorder %s16, 1
    %p170 = por %p168, %p169
    %p172 = scmp.ne.s32.totalorder %s155, %s171
    %p173 = scmp.eq.s32.totalorder %s16, 0
    %p174 = por %p172, %p173
    %p175 = scmp.le.s32.totalorder 1, %s10
    %p176 = scmp.lt.s32.totalorder %s10, 3
    %p177 = pnand %p175, %p176
    %p178 = pneg %p177
    // Predicated region
    $region9: #{ocr_encoder_forward.8} parent=5 // pred_check
      _
    $region10: #{ocr_encoder_forward.8} parent=5 // pred_check_branch
      %180 = sbr.rel (%p177) target = $region12
    $region11: #{ocr_encoder_forward.8} parent=5 // pred_region
      %s181 = ssub.s32 %s10, 1
      // Predicated region
      $region13: #{ocr_encoder_forward.8} parent=11 // pred_check
        %p182 = pneg %p85
      $region14: #{ocr_encoder_forward.8} parent=11 // pred_check_branch
        %184 = sbr.rel (%p182) target = $region16
      $region15: #{ocr_encoder_forward.8} parent=11 // pred_region
        %s185 = smul.u32 4, %s22
        %p186 = scmp.lt.s32.totalorder %s185, 3
        %s187 = scalar_select %p186, %s185, 3
        %p188 = scmp.lt.s32.totalorder %s21, 0
        %s189 = scalar_select %p188, %s21, 0
        %s190 = sadd.s32 %s189, %s187
        %s191 = smul.addr %s190, 4
        %s192 = scalar_lea.vmem %s1, %s191
        %s193 = smul.u32 4, %s22
      $region16: #{ocr_encoder_forward.8} parent=11 // pred_fallthru
        _
      // Predicated region
      $region17: #{ocr_encoder_forward.8} parent=11 // pred_check
        %p194 = pneg %p111
      $region18: #{ocr_encoder_forward.8} parent=11 // pred_check_branch
        %196 = sbr.rel (%p194) target = $region20
      $region19: #{ocr_encoder_forward.8} parent=11 // pred_region
        %p197 = scmp.lt.s32.totalorder %s21, 0
        %s198 = scalar_select %p197, %s21, 0
        %s199 = scalar_lea.vmem %s2, %s198
      $region20: #{ocr_encoder_forward.8} parent=11 // pred_fallthru
        _
    $region12: #{ocr_encoder_forward.8} parent=5 // pred_fallthru
      _
    %p200 = scmp.lt.s32.totalorder %s10, 2
    // Predicated region
    $region21: #{ocr_encoder_forward.8} parent=5 // pred_check
      %p201 = pneg %p200
    $region22: #{ocr_encoder_forward.8} parent=5 // pred_check_branch
      %203 = sbr.rel (%p201) target = $region24
    $region23: #{ocr_encoder_forward.8} parent=5 // pred_region
      // Predicated region
      $region25: #{ocr_encoder_forward.8} parent=23 // pred_check
        %p204 = pneg %p51
      $region26: #{ocr_encoder_forward.8} parent=23 // pred_check_branch
        %206 = sbr.rel (%p204) target = $region28
      $region27: #{ocr_encoder_forward.8} parent=23 // pred_region
        %s207 = smul.u32 8, %s17
        %p208 = scmp.lt.s32.totalorder %s207, 15
        %s209 = scalar_select %p208, %s207, 15
        %p210 = scmp.lt.s32.totalorder %s19, 0
        %s211 = scalar_select %p210, %s19, 0
        %s212 = sadd.s32 %s211, %s209
        %s213 = smul.addr %s212, 4
        %s214 = scalar_lea.vmem %s0, %s213
        %s215 = smul.u32 8, %s17
      $region28: #{ocr_encoder_forward.8} parent=23 // pred_fallthru
        _
      // Predicated region
      $region29: #{ocr_encoder_forward.8} parent=23 // pred_check
        %p216 = pneg %p133
      $region30: #{ocr_encoder_forward.8} parent=23 // pred_check_branch
        %218 = sbr.rel (%p216) target = $region32
      $region31: #{ocr_encoder_forward.8} parent=23 // pred_region
        %s219 = smul.u32 8, %s17
        %p220 = scmp.lt.s32.totalorder %s219, 15
        %s221 = scalar_select %p220, %s219, 15
        %p222 = scmp.lt.s32.totalorder %s18, 0
        %s223 = scalar_select %p222, %s18, 0
        %s224 = sadd.s32 %s223, %s221
        %s225 = smul.addr %s224, 8
        %s226 = scalar_lea.vmem %s3, %s225
        %s227 = smul.u32 8, %s17
      $region32: #{ocr_encoder_forward.8} parent=23 // pred_fallthru
        _
    $region24: #{ocr_encoder_forward.8} parent=5 // pred_fallthru
      _
    %p228 = scmp.le.s32.totalorder 1, %s10
    %p229 = scmp.lt.s32.totalorder %s10, 3
    %p230 = pnand %p228, %p229
    %p231 = pneg %p230
    // Predicated region
    $region33: #{ocr_encoder_forward.8} parent=5 // pred_check
      _
    $region34: #{ocr_encoder_forward.8} parent=5 // pred_check_branch
      %233 = sbr.rel (%p230) target = $region36
    $region35: #{ocr_encoder_forward.8} parent=5 // pred_region
      %s234 = ssub.s32 %s10, 1
      %s235 = smul.u32 8, %s20
      %p236 = scmp.lt.s32.totalorder %s235, 15
      %s237 = scalar_select %p236, %s235, 15
      %p238 = scmp.lt.s32.totalorder %s22, 0
      %s239 = scalar_select %p238, %s22, 0
      %s240 = sadd.s32 %s239, %s237
      %s241 = smul.addr %s240, 4
      %s242 = scalar_lea.vmem %s0, %s241
      %p243 = pneg %p57
      %p244 = pneg %p54
      %s245 = smul.u32 4, %s22
      %p246 = scmp.lt.s32.totalorder %s245, 3
      %s247 = scalar_select %p246, %s245, 3
      %p248 = scmp.lt.s32.totalorder %s21, 0
      %s249 = scalar_select %p248, %s21, 0
      %s250 = sadd.s32 %s249, %s247
      %s251 = smul.addr %s250, 4
      %s252 = scalar_lea.vmem %s1, %s251
      %p253 = pneg %p85
      %p254 = pneg %p82
      %p255 = scmp.lt.s32.totalorder %s21, 0
      %s256 = scalar_select %p255, %s21, 0
      %s257 = scalar_lea.vmem %s2, %s256
      %p258 = pneg %p111
      %p259 = pneg %p108
      %s260 = smul.u32 8, %s20
      %p261 = scmp.lt.s32.totalorder %s260, 15
      %s262 = scalar_select %p261, %s260, 15
      %p263 = scmp.lt.s32.totalorder %s21, 0
      %s264 = scalar_select %p263, %s21, 0
      %s265 = sadd.s32 %s264, %s262
      %s266 = smul.addr %s265, 8
      %s267 = scalar_lea.vmem %s3, %s266
      %p268 = pneg %p139
      %p269 = pneg %p136
      %p270 = pneg %p167
      %p271 = pneg %p164
      %s272 = smul.u32 8, %s20
      %p273 = scmp.lt.s32.totalorder %s272, 15
      %s274 = scalar_select %p273, %s272, 15
      %p275 = scmp.lt.s32.totalorder %s21, 0
      %s276 = scalar_select %p275, %s21, 0
      %s277 = sadd.s32 %s276, %s274
      %s278 = smul.addr %s277, 8
      %s279 = scalar_lea.vmem %s4, %s278
      %s280 = smul.u32 8, %s20
      %p281 = scmp.lt.s32.totalorder %s280, 15
      %s282 = scalar_select %p281, %s280, 15
      %p283 = scmp.lt.s32.totalorder %s22, 0
      %s284 = scalar_select %p283, %s22, 0
      %s285 = sadd.s32 %s284, %s282
      %s286 = smul.addr %s285, 4
      %s287 = scalar_lea.vmem %s0, %s286
      %s288 = smul.u32 8, %s20
      %s289 = smul.u32 4, %s22
      %p290 = scmp.lt.s32.totalorder %s289, 3
      %s291 = scalar_select %p290, %s289, 3
      %p292 = scmp.lt.s32.totalorder %s21, 0
      %s293 = scalar_select %p292, %s21, 0
      %s294 = sadd.s32 %s293, %s291
      %s295 = smul.addr %s294, 4
      %s296 = scalar_lea.vmem %s1, %s295
      %s297 = smul.u32 4, %s22
      %p298 = scmp.lt.s32.totalorder %s21, 0
      %s299 = scalar_select %p298, %s21, 0
      %s300 = scalar_lea.vmem %s2, %s299
      %s301 = smul.u32 8, %s20
      %p302 = scmp.lt.s32.totalorder %s301, 15
      %s303 = scalar_select %p302, %s301, 15
      %p304 = scmp.lt.s32.totalorder %s21, 0
      %s305 = scalar_select %p304, %s21, 0
      %s306 = sadd.s32 %s305, %s303
      %s307 = smul.addr %s306, 8
      %s308 = scalar_lea.vmem %s3, %s307
      %s309 = smul.u32 8, %s20
      %s310 = smul.u32 8, %s20
      %p311 = scmp.lt.s32.totalorder %s310, 15
      %s312 = scalar_select %p311, %s310, 15
      %p313 = scmp.lt.s32.totalorder %s21, 0
      %s314 = scalar_select %p313, %s21, 0
      %s315 = sadd.s32 %s314, %s312
      %s316 = smul.addr %s315, 8
      %s317 = scalar_lea.vmem %s4, %s316
      %s318 = smul.u32 8, %s20
      %p320 = scmp.eq.s32.totalorder %s22, 0
      // Predicated region
      $region37: #{ocr_encoder_forward.8} parent=35 // pred_check
        %p321 = pneg %p320
      $region38: #{ocr_encoder_forward.8} parent=35 // pred_check_branch
        %323 = sbr.rel (%p321) target = $region40
      $region39: #{ocr_encoder_forward.8} parent=35 // pred_region
        %vm324 = vcmask 261120
        %325 = vst.msk [vmem:[#allocation2] sm:$0xff] %vm324, 0.0
        %326 = vst.msk [vmem:[#allocation2 + $0x8] sm:$0xff] %vm324, 0.0
        %327 = vst.msk [vmem:[#allocation2 + $0x10] sm:$0xff] %vm324, 0.0
        %328 = vst.msk [vmem:[#allocation2 + $0x18] sm:$0xff] %vm324, 0.0
        %329 = vst.msk [vmem:[#allocation2 + $0x20] sm:$0xff] %vm324, 0.0
        %330 = vst.msk [vmem:[#allocation2 + $0x28] sm:$0xff] %vm324, 0.0
        %331 = vst.msk [vmem:[#allocation2 + $0x30] sm:$0xff] %vm324, 0.0
        %332 = vst.msk [vmem:[#allocation2 + $0x38] sm:$0xff] %vm324, 0.0
      $region40: #{ocr_encoder_forward.8} parent=35 // pred_fallthru
        _
      %v333 = vld [vmem:[#allocation2] sm:$0xff]
      %v334 = vld [vmem:[#allocation2 + $0x8] sm:$0xff]
      %v335 = vld [vmem:[#allocation2 + $0x10] sm:$0xff]
      %v336 = vld [vmem:[#allocation2 + $0x18] sm:$0xff]
      %v337 = vld [vmem:[#allocation2 + $0x20] sm:$0xff]
      %v338 = vld [vmem:[#allocation2 + $0x28] sm:$0xff]
      %v339 = vld [vmem:[#allocation2 + $0x30] sm:$0xff]
      %v340 = vld [vmem:[#allocation2 + $0x38] sm:$0xff]
      %v341 = vld [vmem:[%s287] sm:$0xf]
      %v342 = vld [vmem:[%s287 + $0x4] sm:$0xf]
      %v343 = vld [vmem:[%s287 + $0x8] sm:$0xf]
      %v344 = vld [vmem:[%s287 + $0xc] sm:$0xf]
      %v345 = vld [vmem:[%s287 + $0x10] sm:$0xf]
      %v346 = vld [vmem:[%s287 + $0x14] sm:$0xf]
      %v347 = vld [vmem:[%s287 + $0x18] sm:$0xf]
      %v348 = vld [vmem:[%s287 + $0x1c] sm:$0xf]
      %v349 = vld [vmem:[%s296] sm:$0xf]
      %v350 = vld [vmem:[%s296 + $0x4] sm:$0xf]
      %v351 = vld [vmem:[%s296 + $0x8] sm:$0xf]
      %v352 = vld [vmem:[%s296 + $0xc] sm:$0xf]
      %v361 = vunpack.c.l.b16 %v341
      %v362 = vunpack.c.l.b16 %v342
      %v363 = vunpack.c.l.b16 %v343
      %v364 = vunpack.c.l.b16 %v344
      %v365 = vunpack.c.l.b16 %v345
      %v366 = vunpack.c.l.b16 %v346
      %v367 = vunpack.c.l.b16 %v347
      %v368 = vunpack.c.l.b16 %v348
      %v369 = vpack.c.b16 %v362, %v361
      %v370 = vpack.c.b16 %v364, %v363
      %v371 = vpack.c.b16 %v366, %v365
      %v372 = vpack.c.b16 %v368, %v367
      %v377 = vunpack.c.l.b16 %v349
      %v378 = vunpack.c.l.b16 %v350
      %v379 = vunpack.c.l.b16 %v351
      %v380 = vunpack.c.l.b16 %v352
      %v381 = vpack.c.b16 %v378, %v377
      %v382 = vpack.c.b16 %v380, %v379
      %vm385 = vcmask 261120
      %v387 = vsel %vm385, %v369, 0
      %v390 = vsel %vm385, %v370, 0
      %v393 = vsel %vm385, %v371, 0
      %v396 = vsel %vm385, %v372, 0
      %398 = vmatpush.bf16.msra.mxu0 0
      %399 = vmatpush.bf16.msra.mxu0 0
      %400 = vmatpush.bf16.msra.mxu0 0
      %401 = vmatpush.bf16.msra.mxu0 0
      %402 = vmatpush.bf16.msra.mxu0 0
      %403 = vmatpush.bf16.msra.mxu0 0
      %404 = vmatpush.bf16.msra.mxu0 %v382
      %405 = vmatpush.bf16.msra.mxu0 %v381
      %406 = vmatmul.bf16.gmra.mxu0 %v387
      %v407 = vpop.f32.mrf.mxu0
      %v408 = vadd.f32 0.0, %v407
      %v409 = vpop.f32.mrf.mxu0
      %v410 = vadd.f32 0.0, %v409
      %411 = vmatmul.bf16.gmra.mxu0 %v390
      %v412 = vpop.f32.mrf.mxu0
      %v413 = vadd.f32 0.0, %v412
      %v414 = vpop.f32.mrf.mxu0
      %v415 = vadd.f32 0.0, %v414
      %416 = vmatmul.bf16.gmra.mxu0 %v393
      %v417 = vpop.f32.mrf.mxu0
      %v418 = vadd.f32 0.0, %v417
      %v419 = vpop.f32.mrf.mxu0
      %v420 = vadd.f32 0.0, %v419
      %421 = vmatmul.bf16.gmra.mxu0 %v396
      %v422 = vpop.f32.mrf.mxu0
      %v423 = vadd.f32 0.0, %v422
      %v424 = vpop.f32.mrf.mxu0
      %v425 = vadd.f32 0.0, %v424
      %426 = vdwg.mxu0
      %v427 = vadd.f32 %v333, %v408
      %v428 = vadd.f32 %v334, %v410
      %v429 = vadd.f32 %v335, %v413
      %v430 = vadd.f32 %v336, %v415
      %v431 = vadd.f32 %v337, %v418
      %v432 = vadd.f32 %v338, %v420
      %v433 = vadd.f32 %v339, %v423
      %v434 = vadd.f32 %v340, %v425
      %435 = vst.msk [vmem:[#allocation2] sm:$0xff] %vm385, %v427
      %436 = vst.msk [vmem:[#allocation2 + $0x8] sm:$0xff] %vm385, %v428
      %437 = vst.msk [vmem:[#allocation2 + $0x10] sm:$0xff] %vm385, %v429
      %438 = vst.msk [vmem:[#allocation2 + $0x18] sm:$0xff] %vm385, %v430
      %439 = vst.msk [vmem:[#allocation2 + $0x20] sm:$0xff] %vm385, %v431
      %440 = vst.msk [vmem:[#allocation2 + $0x28] sm:$0xff] %vm385, %v432
      %441 = vst.msk [vmem:[#allocation2 + $0x30] sm:$0xff] %vm385, %v433
      %442 = vst.msk [vmem:[#allocation2 + $0x38] sm:$0xff] %vm385, %v434
      // Predicated region
      $region41: #{ocr_encoder_forward.8} parent=35 // pred_check
        %p443 = pneg %p320
      $region42: #{ocr_encoder_forward.8} parent=35 // pred_check_branch
        %445 = sbr.rel (%p443) target = $region44
      $region43: #{ocr_encoder_forward.8} parent=35 // pred_region
        %v446 = vld [vmem:[#allocation2] sm:$0xff]
        %v447 = vld [vmem:[#allocation2 + $0x8] sm:$0xff]
        %v448 = vld [vmem:[#allocation2 + $0x10] sm:$0xff]
        %v449 = vld [vmem:[#allocation2 + $0x18] sm:$0xff]
        %v450 = vld [vmem:[#allocation2 + $0x20] sm:$0xff]
        %v451 = vld [vmem:[#allocation2 + $0x28] sm:$0xff]
        %v452 = vld [vmem:[#allocation2 + $0x30] sm:$0xff]
        %v453 = vld [vmem:[#allocation2 + $0x38] sm:$0xff]
        %v454 = vld [vmem:[%s300] sm:$0x1]
        %v456 = vperm.slane %v454, 0
        %v458 = vadd.f32 %v446, %v456
        %v459 = vadd.f32 %v447, %v456
        %v460 = vadd.f32 %v448, %v456
        %v461 = vadd.f32 %v449, %v456
        %v462 = vadd.f32 %v450, %v456
        %v463 = vadd.f32 %v451, %v456
        %v464 = vadd.f32 %v452, %v456
        %v465 = vadd.f32 %v453, %v456
        %v466 = vmul.f32 %v458, 5.656854
        %v467 = vmul.f32 %v459, 5.656854
        %v468 = vmul.f32 %v460, 5.656854
        %v469 = vmul.f32 %v461, 5.656854
        %v470 = vmul.f32 %v462, 5.656854
        %v471 = vmul.f32 %v463, 5.656854
        %v472 = vmul.f32 %v464, 5.656854
        %v473 = vmul.f32 %v465, 5.656854
        %v474 = vld [vmem:[%s308] sm:$0xff]
        %v475 = vld [vmem:[%s308 + $0x8] sm:$0xff]
        %v476 = vld [vmem:[%s308 + $0x10] sm:$0xff]
        %v477 = vld [vmem:[%s308 + $0x18] sm:$0xff]
        %v478 = vld [vmem:[%s308 + $0x20] sm:$0xff]
        %v479 = vld [vmem:[%s308 + $0x28] sm:$0xff]
        %v480 = vld [vmem:[%s308 + $0x30] sm:$0xff]
        %v481 = vld [vmem:[%s308 + $0x38] sm:$0xff]
        %v482 = vadd.f32 %v466, %v474
        %v483 = vadd.f32 %v467, %v475
        %v484 = vadd.f32 %v468, %v476
        %v485 = vadd.f32 %v469, %v477
        %v486 = vadd.f32 %v470, %v478
        %v487 = vadd.f32 %v471, %v479
        %v488 = vadd.f32 %v472, %v480
        %v489 = vadd.f32 %v473, %v481
        %490 = vst.msk [vmem:[%s317] sm:$0xff] %vm385, %v482
        %491 = vst.msk [vmem:[%s317 + $0x8] sm:$0xff] %vm385, %v483
        %492 = vst.msk [vmem:[%s317 + $0x10] sm:$0xff] %vm385, %v484
        %493 = vst.msk [vmem:[%s317 + $0x18] sm:$0xff] %vm385, %v485
        %494 = vst.msk [vmem:[%s317 + $0x20] sm:$0xff] %vm385, %v486
        %495 = vst.msk [vmem:[%s317 + $0x28] sm:$0xff] %vm385, %v487
        %496 = vst.msk [vmem:[%s317 + $0x30] sm:$0xff] %vm385, %v488
        %497 = vst.msk [vmem:[%s317 + $0x38] sm:$0xff] %vm385, %v489
      $region44: #{ocr_encoder_forward.8} parent=35 // pred_fallthru
        _
      %s498 = smul.u32 8, %s20
      %p499 = scmp.lt.s32.totalorder %s498, 15
      %s500 = scalar_select %p499, %s498, 15
      %p501 = scmp.lt.s32.totalorder %s21, 0
      %s502 = scalar_select %p501, %s21, 0
      %s503 = sadd.s32 %s502, %s500
      %s504 = smul.addr %s503, 8
      %s505 = scalar_lea.vmem %s4, %s504
      // Predicated region
      $region45: #{ocr_encoder_forward.8} parent=35 // pred_check
        %p506 = pneg %p164
      $region46: #{ocr_encoder_forward.8} parent=35 // pred_check_branch
        %508 = sbr.rel (%p506) target = $region48
      $region47: #{ocr_encoder_forward.8} parent=35 // pred_region
        %s509 = smul.u32 8, %s20
      $region48: #{ocr_encoder_forward.8} parent=35 // pred_fallthru
        _
    $region36: #{ocr_encoder_forward.8} parent=5 // pred_fallthru
      _
    %p510 = scmp.le.s32.totalorder 2, %s10
    // Predicated region
    $region49: #{ocr_encoder_forward.8} parent=5 // pred_check
      %p511 = pneg %p510
    $region50: #{ocr_encoder_forward.8} parent=5 // pred_check_branch
      %513 = sbr.rel (%p511) target = $region52
    $region51: #{ocr_encoder_forward.8} parent=5 // pred_region
      %s514 = ssub.s32 %s10, 2
      // Predicated region
      $region53: #{ocr_encoder_forward.8} parent=51 // pred_check
        %p515 = pneg %p170
      $region54: #{ocr_encoder_forward.8} parent=51 // pred_check_branch
        %517 = sbr.rel (%p515) target = $region56
      $region55: #{ocr_encoder_forward.8} parent=51 // pred_region
        %s518 = smul.u32 8, %s23
        %p519 = scmp.lt.s32.totalorder %s518, 15
        %s520 = scalar_select %p519, %s518, 15
        %p521 = scmp.lt.s32.totalorder %s24, 0
        %s522 = scalar_select %p521, %s24, 0
        %s523 = sadd.s32 %s522, %s520
        %s524 = smul.addr %s523, 8
        %s525 = scalar_lea.vmem %s4, %s524
      $region56: #{ocr_encoder_forward.8} parent=51 // pred_fallthru
        _
    $region52: #{ocr_encoder_forward.8} parent=5 // pred_fallthru
      _
  $region6: #{ocr_encoder_forward.8} parent=0 // loop_footer
    %s14 = sadd.s32 1, %s10
  $region7: #{ocr_encoder_forward.8} parent=0 // loop_footer_branch
    %9 = sbr.rel target = $region3
  $region8: #{ocr_encoder_forward.8} parent=0 // loop_exit
    _

// kernel: ocr_encoder_forward.6
$region0: #{ocr_encoder_forward.6}
  #allocation0 [shape = 'u32[]', space=smem, size = 0x4, offset = 0x4, fixed_abs, tag = 'smem constant byte address 0x4 - core index']
  #allocation1 [shape = 'u32[72,128]{1,0:T(1,128)}', space=vmem, size = 0x9000, scoped, tag = 'internal scratch']
  %s0 = inlined_call_operand.vmem [shape: f32[2,18,34,3], index: 0, kind: input, shape index: {}]
  %s1 = inlined_call_operand.vmem [shape: bf16[9,3,16], index: 1, kind: input, shape index: {}]
  %s2 = inlined_call_operand.vmem [shape: f32[1,16], index: 2, kind: input, shape index: {}]
  %s3 = inlined_call_operand.vmem [shape: f32[2,512,16], index: 3, kind: output, shape index: {}]
  %s4 = sld [smem:[#allocation0]]
  $region45: #{ocr_encoder_forward.6} parent=0
    _
  %s6 = ssub.s32 1, %s4
  %s7 = scalar_select 0, %s6, %s4
  loop: start=0, step=1, limit=4
  $region2: #{ocr_encoder_forward.6} parent=0 // loop_pre_header
    _
  $region3: #{ocr_encoder_forward.6} parent=0 // loop_header
    %s9 = sphi 0, %s13
    %p10 = scmp.ge.s32.totalorder %s9, 4
    %s19 = sphi 0, %s21
    %s22 = sphi 0, %s19
    %s23 = sphi 0, %s22
    %s39 = sphi 0, %s23
    %s43 = sphi 0, %s43
    %s45 = sphi 0, %s43
    %s46 = sphi 0, %s45
    %s60 = sphi 0, %s46
    %s64 = sphi 0, %s64
    %s66 = sphi 0, %s64
    %s67 = sphi 0, %s66
    %s81 = sphi 0, %s67
    %s87 = sphi 0, %s89
    %s90 = sphi 0, %s87
    %s91 = sphi 0, %s90
    %s107 = sphi 0, %s91
  $region4: #{ocr_encoder_forward.6} parent=0 // loop_header_branch
    %12 = sbr.rel (%p10) target = $region8
  $region5: #{ocr_encoder_forward.6} parent=0 // loop_body
    %s14 = ssub.s32 %s9, 1
    %s15 = ssub.s32 %s9, 2
    %s16 = sadd.s32 %s9, 1
    %s17 = ssub.s32 %s9, %s16
    %p18 = scmp.eq.s32.totalorder %s17, 0
    %s20 = sadd.s32 %s19, 1
    %s21 = scalar_select %p18, %s19, %s20
    %p24 = pneg %p18
    %p25 = scmp.eq.s32.totalorder %s9, 1
    %p26 = por %p24, %p25
    %p27 = scmp.ne.s32.totalorder %s19, %s22
    %p28 = scmp.eq.s32.totalorder %s9, 0
    %p29 = por %p27, %p28
    %p30 = scmp.ne.s32.totalorder %s19, %s22
    %p31 = scmp.eq.s32.totalorder %s14, 1
    %p32 = por %p30, %p31
    %p33 = scmp.ne.s32.totalorder %s22, %s23
    %p34 = scmp.eq.s32.totalorder %s14, 0
    %p35 = por %p33, %p34
    %p36 = scmp.ne.s32.totalorder %s22, %s23
    %p37 = scmp.eq.s32.totalorder %s15, 1
    %p38 = por %p36, %p37
    %p40 = scmp.ne.s32.totalorder %s23, %s39
    %p41 = scmp.eq.s32.totalorder %s15, 0
    %p42 = por %p40, %p41
    %s44 = sadd.s32 %s43, 1
    %p47 = scmp.eq.s32.totalorder %s9, 1
    %p48 = scmp.ne.s32.totalorder %s43, %s45
    %p49 = scmp.eq.s32.totalorder %s9, 0
    %p50 = por %p48, %p49
    %p51 = scmp.ne.s32.totalorder %s43, %s45
    %p52 = scmp.eq.s32.totalorder %s14, 1
    %p53 = por %p51, %p52
    %p54 = scmp.ne.s32.totalorder %s45, %s46
    %p55 = scmp.eq.s32.totalorder %s14, 0
    %p56 = por %p54, %p55
    %p57 = scmp.ne.s32.totalorder %s45, %s46
    %p58 = scmp.eq.s32.totalorder %s15, 1
    %p59 = por %p57, %p58
    %p61 = scmp.ne.s32.totalorder %s46, %s60
    %p62 = scmp.eq.s32.totalorder %s15, 0
    %p63 = por %p61, %p62
    %s65 = sadd.s32 %s64, 1
    %p68 = scmp.eq.s32.totalorder %s9, 1
    %p69 = scmp.ne.s32.totalorder %s64, %s66
    %p70 = scmp.eq.s32.totalorder %s9, 0
    %p71 = por %p69, %p70
    %p72 = scmp.ne.s32.totalorder %s64, %s66
    %p73 = scmp.eq.s32.totalorder %s14, 1
    %p74 = por %p72, %p73
    %p75 = scmp.ne.s32.totalorder %s66, %s67
    %p76 = scmp.eq.s32.totalorder %s14, 0
    %p77 = por %p75, %p76
    %p78 = scmp.ne.s32.totalorder %s66, %s67
    %p79 = scmp.eq.s32.totalorder %s15, 1
    %p80 = por %p78, %p79
    %p82 = scmp.ne.s32.totalorder %s67, %s81
    %p83 = scmp.eq.s32.totalorder %s15, 0
    %p84 = por %p82, %p83
    %s85 = ssub.s32 %s9, %s16
    %p86 = scmp.eq.s32.totalorder %s85, 0
    %s88 = sadd.s32 %s87, 1
    %s89 = scalar_select %p86, %s87, %s88
    %p92 = pneg %p86
    %p93 = scmp.eq.s32.totalorder %s9, 1
    %p94 = por %p92, %p93
    %p95 = scmp.ne.s32.totalorder %s87, %s90
    %p96 = scmp.eq.s32.totalorder %s9, 0
    %p97 = por %p95, %p96
    %p98 = scmp.ne.s32.totalorder %s87, %s90
    %p99 = scmp.eq.s32.totalorder %s14, 1
    %p100 = por %p98, %p99
    %p101 = scmp.ne.s32.totalorder %s90, %s91
    %p102 = scmp.eq.s32.totalorder %s14, 0
    %p103 = por %p101, %p102
    %p104 = scmp.ne.s32.totalorder %s90, %s91
    %p105 = scmp.eq.s32.totalorder %s15, 1
    %p106 = por %p104, %p105
    %p108 = scmp.ne.s32.totalorder %s91, %s107
    %p109 = scmp.eq.s32.totalorder %s15, 0
    %p110 = por %p108, %p109
    %p111 = scmp.le.s32.totalorder 1, %s9
    %p112 = scmp.lt.s32.totalorder %s9, 3
    %p113 = pnand %p111, %p112
    %p114 = pneg %p113
    // Predicated region
    $region9: #{ocr_encoder_forward.6} parent=5 // pred_check
      _
    $region10: #{ocr_encoder_forward.6} parent=5 // pred_check_branch
      %116 = sbr.rel (%p113) target = $region12
    $region11: #{ocr_encoder_forward.6} parent=5 // pred_region
      %s117 = ssub.s32 %s9, 1
      // Predicated region
      $region13: #{ocr_encoder_forward.6} parent=11 // pred_check
        %p118 = pneg %p56
      $region14: #{ocr_encoder_forward.6} parent=11 // pred_check_branch
        %120 = sbr.rel (%p118) target = $region16
      $region15: #{ocr_encoder_forward.6} parent=11 // pred_region
        _
      $region16: #{ocr_encoder_forward.6} parent=11 // pred_fallthru
        _
      // Predicated region
      $region17: #{ocr_encoder_forward.6} parent=11 // pred_check
        %p121 = pneg %p77
      $region18: #{ocr_encoder_forward.6} parent=11 // pred_check_branch
        %123 = sbr.rel (%p121) target = $region20
      $region19: #{ocr_encoder_forward.6} parent=11 // pred_region
        _
      $region20: #{ocr_encoder_forward.6} parent=11 // pred_fallthru
        _
    $region12: #{ocr_encoder_forward.6} parent=5 // pred_fallthru
      _
    %p124 = scmp.lt.s32.totalorder %s9, 2
    // Predicated region
    $region21: #{ocr_encoder_forward.6} parent=5 // pred_check
      %p125 = pneg %p124
    $region22: #{ocr_encoder_forward.6} parent=5 // pred_check_branch
      %127 = sbr.rel (%p125) target = $region24
    $region23: #{ocr_encoder_forward.6} parent=5 // pred_region
      // Predicated region
      $region25: #{ocr_encoder_forward.6} parent=23 // pred_check
        %p128 = pneg %p29
      $region26: #{ocr_encoder_forward.6} parent=23 // pred_check_branch
        %130 = sbr.rel (%p128) target = $region28
      $region27: #{ocr_encoder_forward.6} parent=23 // pred_region
        %p131 = scmp.lt.s32.totalorder %s9, 1
        %s132 = scalar_select %p131, %s9, 1
        %s133 = smul.addr %s132, 90
        %s134 = smul.addr %s133, 8
        %s135 = scalar_lea.vmem %s0, %s134
      $region28: #{ocr_encoder_forward.6} parent=23 // pred_fallthru
        _
    $region24: #{ocr_encoder_forward.6} parent=5 // pred_fallthru
      _
    %p136 = scmp.le.s32.totalorder 1, %s9
    %p137 = scmp.lt.s32.totalorder %s9, 3
    %p138 = pnand %p136, %p137
    %p139 = pneg %p138
    // Predicated region
    $region29: #{ocr_encoder_forward.6} parent=5 // pred_check
      _
    $region30: #{ocr_encoder_forward.6} parent=5 // pred_check_branch
      %141 = sbr.rel (%p138) target = $region32
    $region31: #{ocr_encoder_forward.6} parent=5 // pred_region
      %s142 = ssub.s32 %s9, 1
      %p143 = scmp.lt.s32.totalorder %s14, 1
      %s144 = scalar_select %p143, %s14, 1
      %s145 = smul.addr %s144, 90
      %s146 = smul.addr %s145, 8
      %s147 = scalar_lea.vmem %s0, %s146
      %p148 = pneg %p35
      %p149 = pneg %p32
      %p150 = pneg %p56
      %p151 = pneg %p53
      %p152 = pneg %p77
      %p153 = pneg %p74
      %p154 = pneg %p103
      %p155 = pneg %p100
      %p156 = scmp.lt.s32.totalorder %s14, 1
      %s157 = scalar_select %p156, %s14, 1
      %s158 = smul.addr %s157, 64
      %s159 = smul.addr %s158, 8
      %s160 = scalar_lea.vmem %s3, %s159
      %p161 = scmp.lt.s32.totalorder %s14, 1
      %s162 = scalar_select %p161, %s14, 1
      %s163 = smul.addr %s162, 90
      %s164 = smul.addr %s163, 8
      %s165 = scalar_lea.vmem %s0, %s164
      %p166 = scmp.lt.s32.totalorder %s14, 1
      %s167 = scalar_select %p166, %s14, 1
      %s168 = smul.addr %s167, 64
      %s169 = smul.addr %s168, 8
      %s170 = scalar_lea.vmem %s3, %s169
      %v172 = vld [vmem:[%s165] sm:$0xff]
      %v173 = vld [vmem:[%s165 + $0x8] sm:$0xff]
      %v174 = vld [vmem:[%s165 + $0x10] sm:$0xff]
      %v175 = vld [vmem:[%s165 + $0x18] sm:$0xff]
      %v176 = vld [vmem:[%s165 + $0x28] sm:$0xff]
      %v177 = vld [vmem:[%s165 + $0x30] sm:$0xff]
      %v178 = vld [vmem:[%s165 + $0x38] sm:$0xff]
      %v179 = vld [vmem:[%s165 + $0x40] sm:$0xff]
      %v180 = vld [vmem:[%s165 + $0x50] sm:$0xff]
      %v181 = vld [vmem:[%s165 + $0x58] sm:$0xff]
      %v182 = vld [vmem:[%s165 + $0x60] sm:$0xff]
      %v183 = vld [vmem:[%s165 + $0x68] sm:$0xff]
      %v184 = vld [vmem:[%s165 + $0x78] sm:$0xff]
      %v185 = vld [vmem:[%s165 + $0x80] sm:$0xff]
      %v186 = vld [vmem:[%s165 + $0x88] sm:$0xff]
      %v187 = vld [vmem:[%s165 + $0x90] sm:$0xff]
      %v188 = vld [vmem:[%s165 + $0xa0] sm:$0xff]
      %v189 = vld [vmem:[%s165 + $0xa8] sm:$0xff]
      %v190 = vld [vmem:[%s165 + $0xb0] sm:$0xff]
      %v191 = vld [vmem:[%s165 + $0xb8] sm:$0xff]
      %v192 = vld [vmem:[%s165 + $0xc8] sm:$0xff]
      %v193 = vld [vmem:[%s165 + $0xd0] sm:$0xff]
      %v194 = vld [vmem:[%s165 + $0xd8] sm:$0xff]
      %v195 = vld [vmem:[%s165 + $0xe0] sm:$0xff]
      %v196 = vld [vmem:[%s165 + $0xf0] sm:$0xff]
      %v197 = vld [vmem:[%s165 + $0xf8] sm:$0xff]
      %v198 = vld [vmem:[%s165 + $0x100] sm:$0xff]
      %v199 = vld [vmem:[%s165 + $0x108] sm:$0xff]
      %v200 = vld [vmem:[%s165 + $0x118] sm:$0xff]
      %v201 = vld [vmem:[%s165 + $0x120] sm:$0xff]
      %v202 = vld [vmem:[%s165 + $0x128] sm:$0xff]
      %v203 = vld [vmem:[%s165 + $0x130] sm:$0xff]
      %v204 = vld [vmem:[%s165 + $0x140] sm:$0xff]
      %v205 = vld [vmem:[%s165 + $0x148] sm:$0xff]
      %v206 = vld [vmem:[%s165 + $0x150] sm:$0xff]
      %v207 = vld [vmem:[%s165 + $0x158] sm:$0xff]
      %v208 = vld [vmem:[%s165 + $0x168] sm:$0xff]
      %v209 = vld [vmem:[%s165 + $0x170] sm:$0xff]
      %v210 = vld [vmem:[%s165 + $0x178] sm:$0xff]
      %v211 = vld [vmem:[%s165 + $0x180] sm:$0xff]
      %v212 = vld [vmem:[%s165 + $0x190] sm:$0xff]
      %v213 = vld [vmem:[%s165 + $0x198] sm:$0xff]
      %v214 = vld [vmem:[%s165 + $0x1a0] sm:$0xff]
      %v215 = vld [vmem:[%s165 + $0x1a8] sm:$0xff]
      %v216 = vld [vmem:[%s165 + $0x1b8] sm:$0xff]
      %v217 = vld [vmem:[%s165 + $0x1c0] sm:$0xff]
      %v218 = vld [vmem:[%s165 + $0x1c8] sm:$0xff]
      %v219 = vld [vmem:[%s165 + $0x1d0] sm:$0xff]
      %v220 = vld [vmem:[%s165 + $0x1e0] sm:$0xff]
      %v221 = vld [vmem:[%s165 + $0x1e8] sm:$0xff]
      %v222 = vld [vmem:[%s165 + $0x1f0] sm:$0xff]
      %v223 = vld [vmem:[%s165 + $0x1f8] sm:$0xff]
      %v224 = vld [vmem:[%s165 + $0x208] sm:$0xff]
      %v225 = vld [vmem:[%s165 + $0x210] sm:$0xff]
      %v226 = vld [vmem:[%s165 + $0x218] sm:$0xff]
      %v227 = vld [vmem:[%s165 + $0x220] sm:$0xff]
      %v228 = vld [vmem:[%s165 + $0x230] sm:$0xff]
      %v229 = vld [vmem:[%s165 + $0x238] sm:$0xff]
      %v230 = vld [vmem:[%s165 + $0x240] sm:$0xff]
      %v231 = vld [vmem:[%s165 + $0x248] sm:$0xff]
      %v232 = vld [vmem:[%s165 + $0x258] sm:$0xff]
      %v233 = vld [vmem:[%s165 + $0x260] sm:$0xff]
      %v234 = vld [vmem:[%s165 + $0x268] sm:$0xff]
      %v235 = vld [vmem:[%s165 + $0x270] sm:$0xff]
      %v236 = vpack.c.bf16 %v173, %v172
      %v237 = vpack.c.bf16 %v175, %v174
      %v238 = vpack.c.bf16 %v177, %v176
      %v239 = vpack.c.bf16 %v179, %v178
      %v240 = vpack.c.bf16 %v181, %v180
      %v241 = vpack.c.bf16 %v183, %v182
      %v242 = vpack.c.bf16 %v185, %v184
      %v243 = vpack.c.bf16 %v187, %v186
      %v244 = vpack.c.bf16 %v189, %v188
      %v245 = vpack.c.bf16 %v191, %v190
      %v246 = vpack.c.bf16 %v193, %v192
      %v247 = vpack.c.bf16 %v195, %v194
      %v248 = vpack.c.bf16 %v197, %v196
      %v249 = vpack.c.bf16 %v199, %v198
      %v250 = vpack.c.bf16 %v201, %v200
      %v251 = vpack.c.bf16 %v203, %v202
      %v252 = vpack.c.bf16 %v205, %v204
      %v253 = vpack.c.bf16 %v207, %v206
      %v254 = vpack.c.bf16 %v209, %v208
      %v255 = vpack.c.bf16 %v211, %v210
      %v256 = vpack.c.bf16 %v213, %v212
      %v257 = vpack.c.bf16 %v215, %v214
      %v258 = vpack.c.bf16 %v217, %v216
      %v259 = vpack.c.bf16 %v219, %v218
      %v260 = vpack.c.bf16 %v221, %v220
      %v261 = vpack.c.bf16 %v223, %v222
      %v262 = vpack.c.bf16 %v225, %v224
      %v263 = vpack.c.bf16 %v227, %v226
      %v264 = vpack.c.bf16 %v229, %v228
      %v265 = vpack.c.bf16 %v231, %v230
      %v266 = vpack.c.bf16 %v233, %v232
      %v267 = vpack.c.bf16 %v235, %v234
      %v268 = vld [vmem:[%s1] sm:$0x3]
      %v269 = vld [vmem:[%s165 + $0x1] sm:$0xff]
      %v270 = vld [vmem:[%s165 + $0x9] sm:$0xff]
      %v271 = vld [vmem:[%s165 + $0x11] sm:$0xff]
      %v272 = vld [vmem:[%s165 + $0x19] sm:$0xff]
      %v273 = vld [vmem:[%s165 + $0x29] sm:$0xff]
      %v274 = vld [vmem:[%s165 + $0x31] sm:$0xff]
      %v275 = vld [vmem:[%s165 + $0x39] sm:$0xff]
      %v276 = vld [vmem:[%s165 + $0x41] sm:$0xff]
      %v277 = vld [vmem:[%s165 + $0x51] sm:$0xff]
      %v278 = vld [vmem:[%s165 + $0x59] sm:$0xff]
      %v279 = vld [vmem:[%s165 + $0x61] sm:$0xff]
      %v280 = vld [vmem:[%s165 + $0x69] sm:$0xff]
      %v281 = vld [vmem:[%s165 + $0x79] sm:$0xff]
      %v282 = vld [vmem:[%s165 + $0x81] sm:$0xff]
      %v283 = vld [vmem:[%s165 + $0x89] sm:$0xff]
      %v284 = vld [vmem:[%s165 + $0x91] sm:$0xff]
      %v285 = vld [vmem:[%s165 + $0xa1] sm:$0xff]
      %v286 = vld [vmem:[%s165 + $0xa9] sm:$0xff]
      %v287 = vld [vmem:[%s165 + $0xb1] sm:$0xff]
      %v288 = vld [vmem:[%s165 + $0xb9] sm:$0xff]
      %v289 = vld [vmem:[%s165 + $0xc9] sm:$0xff]
      %v290 = vld [vmem:[%s165 + $0xd1] sm:$0xff]
      %v291 = vld [vmem:[%s165 + $0xd9] sm:$0xff]
      %v292 = vld [vmem:[%s165 + $0xe1] sm:$0xff]
      %v293 = vld [vmem:[%s165 + $0xf1] sm:$0xff]
      %v294 = vld [vmem:[%s165 + $0xf9] sm:$0xff]
      %v295 = vld [vmem:[%s165 + $0x101] sm:$0xff]
      %v296 = vld [vmem:[%s165 + $0x109] sm:$0xff]
      %v297 = vld [vmem:[%s165 + $0x119] sm:$0xff]
      %v298 = vld [vmem:[%s165 + $0x121] sm:$0xff]
      %v299 = vld [vmem:[%s165 + $0x129] sm:$0xff]
      %v300 = vld [vmem:[%s165 + $0x131] sm:$0xff]
      %v301 = vld [vmem:[%s165 + $0x141] sm:$0xff]
      %v302 = vld [vmem:[%s165 + $0x149] sm:$0xff]
      %v303 = vld [vmem:[%s165 + $0x151] sm:$0xff]
      %v304 = vld [vmem:[%s165 + $0x159] sm:$0xff]
      %v305 = vld [vmem:[%s165 + $0x169] sm:$0xff]
      %v306 = vld [vmem:[%s165 + $0x171] sm:$0xff]
      %v307 = vld [vmem:[%s165 + $0x179] sm:$0xff]
      %v308 = vld [vmem:[%s165 + $0x181] sm:$0xff]
      %v309 = vld [vmem:[%s165 + $0x191] sm:$0xff]
      %v310 = vld [vmem:[%s165 + $0x199] sm:$0xff]
      %v311 = vld [vmem:[%s165 + $0x1a1] sm:$0xff]
      %v312 = vld [vmem:[%s165 + $0x1a9] sm:$0xff]
      %v313 = vld [vmem:[%s165 + $0x1b9] sm:$0xff]
      %v314 = vld [vmem:[%s165 + $0x1c1] sm:$0xff]
      %v315 = vld [vmem:[%s165 + $0x1c9] sm:$0xff]
      %v316 = vld [vmem:[%s165 + $0x1d1] sm:$0xff]
      %v317 = vld [vmem:[%s165 + $0x1e1] sm:$0xff]
      %v318 = vld [vmem:[%s165 + $0x1e9] sm:$0xff]
      %v319 = vld [vmem:[%s165 + $0x1f1] sm:$0xff]
      %v320 = vld [vmem:[%s165 + $0x1f9] sm:$0xff]
      %v321 = vld [vmem:[%s165 + $0x209] sm:$0xff]
      %v322 = vld [vmem:[%s165 + $0x211] sm:$0xff]
      %v323 = vld [vmem:[%s165 + $0x219] sm:$0xff]
      %v324 = vld [vmem:[%s165 + $0x221] sm:$0xff]
      %v325 = vld [vmem:[%s165 + $0x231] sm:$0xff]
      %v326 = vld [vmem:[%s165 + $0x239] sm:$0xff]
      %v327 = vld [vmem:[%s165 + $0x241] sm:$0xff]
      %v328 = vld [vmem:[%s165 + $0x249] sm:$0xff]
      %v329 = vld [vmem:[%s165 + $0x259] sm:$0xff]
      %v330 = vld [vmem:[%s165 + $0x261] sm:$0xff]
      %v331 = vld [vmem:[%s165 + $0x269] sm:$0xff]
      %v332 = vld [vmem:[%s165 + $0x271] sm:$0xff]
      %v333 = vpack.c.bf16 %v270, %v269
      %v334 = vpack.c.bf16 %v272, %v271
      %v335 = vpack.c.bf16 %v274, %v273
      %v336 = vpack.c.bf16 %v276, %v275
      %v337 = vpack.c.bf16 %v278, %v277
      %v338 = vpack.c.bf16 %v280, %v279
      %v339 = vpack.c.bf16 %v282, %v281
      %v340 = vpack.c.bf16 %v284, %v283
      %v341 = vpack.c.bf16 %v286, %v285
      %v342 = vpack.c.bf16 %v288, %v287
      %v343 = vpack.c.bf16 %v290, %v289
      %v344 = vpack.c.bf16 %v292, %v291
      %v345 = vpack.c.bf16 %v294, %v293
      %v346 = vpack.c.bf16 %v296, %v295
      %v347 = vpack.c.bf16 %v298, %v297
      %v348 = vpack.c.bf16 %v300, %v299
      %v349 = vpack.c.bf16 %v302, %v301
      %v350 = vpack.c.bf16 %v304, %v303
      %v351 = vpack.c.bf16 %v306, %v305
      %v352 = vpack.c.bf16 %v308, %v307
      %v353 = vpack.c.bf16 %v310, %v309
      %v354 = vpack.c.bf16 %v312, %v311
      %v355 = vpack.c.bf16 %v314, %v313
      %v356 = vpack.c.bf16 %v316, %v315
      %v357 = vpack.c.bf16 %v318, %v317
      %v358 = vpack.c.bf16 %v320, %v319
      %v359 = vpack.c.bf16 %v322, %v321
      %v360 = vpack.c.bf16 %v324, %v323
      %v361 = vpack.c.bf16 %v326, %v325
      %v362 = vpack.c.bf16 %v328, %v327
      %v363 = vpack.c.bf16 %v330, %v329
      %v364 = vpack.c.bf16 %v332, %v331
      %s365 = scalar_lea.vmem %s1, 2
      %v366 = vld [vmem:[%s365] sm:$0x3]
      %vm367 = vcmask 23552
      %v369 = vsel %vm367, %v333, 0
      %v372 = vsel %vm367, %v334, 0
      %v375 = vsel %vm367, %v335, 0
      %v378 = vsel %vm367, %v336, 0
      %v381 = vsel %vm367, %v337, 0
      %v384 = vsel %vm367, %v338, 0
      %v387 = vsel %vm367, %v339, 0
      %v390 = vsel %vm367, %v340, 0
      %v393 = vsel %vm367, %v341, 0
      %v396 = vsel %vm367, %v342, 0
      %v399 = vsel %vm367, %v343, 0
      %v402 = vsel %vm367, %v344, 0
      %v405 = vsel %vm367, %v345, 0
      %v408 = vsel %vm367, %v346, 0
      %v411 = vsel %vm367, %v347, 0
      %v414 = vsel %vm367, %v348, 0
      %v417 = vsel %vm367, %v349, 0
      %v420 = vsel %vm367, %v350, 0
      %v423 = vsel %vm367, %v351, 0
      %v426 = vsel %vm367, %v352, 0
      %v429 = vsel %vm367, %v353, 0
      %v432 = vsel %vm367, %v354, 0
      %v435 = vsel %vm367, %v355, 0
      %v438 = vsel %vm367, %v356, 0
      %v441 = vsel %vm367, %v357, 0
      %v444 = vsel %vm367, %v358, 0
      %v447 = vsel %vm367, %v359, 0
      %v450 = vsel %vm367, %v360, 0
      %v453 = vsel %vm367, %v361, 0
      %v456 = vsel %vm367, %v362, 0
      %v459 = vsel %vm367, %v363, 0
      %v462 = vsel %vm367, %v364, 0
      %vm464 = vcmask 1040384
      %vm465 = vcmask 1041408
      %v466 = vsel %vm464, 4294967295, 65535
      %v467 = vsel %vm465, %v466, 0
      %v469 = vand.u32 %v366, %v467
      %471 = vmatpush.bf16.msra.mxu0 0
      %472 = vmatpush.bf16.msra.mxu0 0
      %473 = vmatpush.bf16.msra.mxu0 0
      %474 = vmatpush.bf16.msra.mxu0 0
      %475 = vmatpush.bf16.msra.mxu0 0
      %476 = vmatpush.bf16.msra.mxu0 0
      %477 = vmatpush.bf16.msra.mxu0 0
      %478 = vmatpush.bf16.msra.mxu0 %v469
      %479 = vmatmul.bf16.gmra.mxu0 %v369
      %v480 = vpop.f32.mrf.mxu0
      %v481 = vadd.f32 0.0, %v480
      %v482 = vpop.f32.mrf.mxu0
      %v483 = vadd.f32 0.0, %v482
      %484 = vmatmul.bf16.gmra.mxu0 %v372
      %v485 = vpop.f32.mrf.mxu0
      %v486 = vadd.f32 0.0, %v485
      %v487 = vpop.f32.mrf.mxu0
      %v488 = vadd.f32 0.0, %v487
      %489 = vmatmul.bf16.gmra.mxu0 %v375
      %v490 = vpop.f32.mrf.mxu0
      %v491 = vadd.f32 0.0, %v490
      %v492 = vpop.f32.mrf.mxu0
      %v493 = vadd.f32 0.0, %v492
      %494 = vmatmul.bf16.gmra.mxu0 %v378
      %v495 = vpop.f32.mrf.mxu0
      %v496 = vadd.f32 0.0, %v495
      %v497 = vpop.f32.mrf.mxu0
      %v498 = vadd.f32 0.0, %v497
      %499 = vmatmul.bf16.gmra.mxu0 %v381
      %v500 = vpop.f32.mrf.mxu0
      %v501 = vadd.f32 0.0, %v500
      %v502 = vpop.f32.mrf.mxu0
      %v503 = vadd.f32 0.0, %v502
      %504 = vmatmul.bf16.gmra.mxu0 %v384
      %v505 = vpop.f32.mrf.mxu0
      %v506 = vadd.f32 0.0, %v505
      %v507 = vpop.f32.mrf.mxu0
      %v508 = vadd.f32 0.0, %v507
      %509 = vmatmul.bf16.gmra.mxu0 %v387
      %v510 = vpop.f32.mrf.mxu0
      %v511 = vadd.f32 0.0, %v510
      %v512 = vpop.f32.mrf.mxu0
      %v513 = vadd.f32 0.0, %v512
      %514 = vmatmul.bf16.gmra.mxu0 %v390
      %v515 = vpop.f32.mrf.mxu0
      %v516 = vadd.f32 0.0, %v515
      %v517 = vpop.f32.mrf.mxu0
      %v518 = vadd.f32 0.0, %v517
      %519 = vmatmul.bf16.gmra.mxu0 %v393
      %v520 = vpop.f32.mrf.mxu0
      %v521 = vadd.f32 0.0, %v520
      %v522 = vpop.f32.mrf.mxu0
      %v523 = vadd.f32 0.0, %v522
      %524 = vmatmul.bf16.gmra.mxu0 %v396
      %v525 = vpop.f32.mrf.mxu0
      %v526 = vadd.f32 0.0, %v525
      %v527 = vpop.f32.mrf.mxu0
      %v528 = vadd.f32 0.0, %v527
      %529 = vmatmul.bf16.gmra.mxu0 %v399
      %v530 = vpop.f32.mrf.mxu0
      %v531 = vadd.f32 0.0, %v530
      %v532 = vpop.f32.mrf.mxu0
      %v533 = vadd.f32 0.0, %v532
      %534 = vmatmul.bf16.gmra.mxu0 %v402
      %v535 = vpop.f32.mrf.mxu0
      %v536 = vadd.f32 0.0, %v535
      %v537 = vpop.f32.mrf.mxu0
      %v538 = vadd.f32 0.0, %v537
      %539 = vmatmul.bf16.gmra.mxu0 %v405
      %v540 = vpop.f32.mrf.mxu0
      %v541 = vadd.f32 0.0, %v540
      %v542 = vpop.f32.mrf.mxu0
      %v543 = vadd.f32 0.0, %v542
      %544 = vmatmul.bf16.gmra.mxu0 %v408
      %v545 = vpop.f32.mrf.mxu0
      %v546 = vadd.f32 0.0, %v545
      %v547 = vpop.f32.mrf.mxu0
      %v548 = vadd.f32 0.0, %v547
      %549 = vmatmul.bf16.gmra.mxu0 %v411
      %v550 = vpop.f32.mrf.mxu0
      %v551 = vadd.f32 0.0, %v550
      %v552 = vpop.f32.mrf.mxu0
      %v553 = vadd.f32 0.0, %v552
      %554 = vmatmul.bf16.gmra.mxu0 %v414
      %v555 = vpop.f32.mrf.mxu0
      %v556 = vadd.f32 0.0, %v555
      %v557 = vpop.f32.mrf.mxu0
      %v558 = vadd.f32 0.0, %v557
      %559 = vmatmul.bf16.gmra.mxu0 %v417
      %v560 = vpop.f32.mrf.mxu0
      %v561 = vadd.f32 0.0, %v560
      %v562 = vpop.f32.mrf.mxu0
      %v563 = vadd.f32 0.0, %v562
      %564 = vmatmul.bf16.gmra.mxu0 %v420
      %v565 = vpop.f32.mrf.mxu0
      %v566 = vadd.f32 0.0, %v565
      %v567 = vpop.f32.mrf.mxu0
      %v568 = vadd.f32 0.0, %v567
      %569 = vmatmul.bf16.gmra.mxu0 %v423
      %v570 = vpop.f32.mrf.mxu0
      %v571 = vadd.f32 0.0, %v570
      %v572 = vpop.f32.mrf.mxu0
      %v573 = vadd.f32 0.0, %v572
      %574 = vmatmul.bf16.gmra.mxu0 %v426
      %v575 = vpop.f32.mrf.mxu0
      %v576 = vadd.f32 0.0, %v575
      %v577 = vpop.f32.mrf.mxu0
      %v578 = vadd.f32 0.0, %v577
      %579 = vmatmul.bf16.gmra.mxu0 %v429
      %v580 = vpop.f32.mrf.mxu0
      %v581 = vadd.f32 0.0, %v580
      %v582 = vpop.f32.mrf.mxu0
      %v583 = vadd.f32 0.0, %v582
      %584 = vmatmul.bf16.gmra.mxu0 %v432
      %v585 = vpop.f32.mrf.mxu0
      %v586 = vadd.f32 0.0, %v585
      %v587 = vpop.f32.mrf.mxu0
      %v588 = vadd.f32 0.0, %v587
      %589 = vmatmul.bf16.gmra.mxu0 %v435
      %v590 = vpop.f32.mrf.mxu0
      %v591 = vadd.f32 0.0, %v590
      %v592 = vpop.f32.mrf.mxu0
      %v593 = vadd.f32 0.0, %v592
      %594 = vmatmul.bf16.gmra.mxu0 %v438
      %v595 = vpop.f32.mrf.mxu0
      %v596 = vadd.f32 0.0, %v595
      %v597 = vpop.f32.mrf.mxu0
      %v598 = vadd.f32 0.0, %v597
      %599 = vmatmul.bf16.gmra.mxu0 %v441
      %v600 = vpop.f32.mrf.mxu0
      %v601 = vadd.f32 0.0, %v600
      %v602 = vpop.f32.mrf.mxu0
      %v603 = vadd.f32 0.0, %v602
      %604 = vmatmul.bf16.gmra.mxu0 %v444
      %v605 = vpop.f32.mrf.mxu0
      %v606 = vadd.f32 0.0, %v605
      %v607 = vpop.f32.mrf.mxu0
      %v608 = vadd.f32 0.0, %v607
      %609 = vmatmul.bf16.gmra.mxu0 %v447
      %v610 = vpop.f32.mrf.mxu0
      %v611 = vadd.f32 0.0, %v610
      %v612 = vpop.f32.mrf.mxu0
      %v613 = vadd.f32 0.0, %v612
      %614 = vmatmul.bf16.gmra.mxu0 %v450
      %v615 = vpop.f32.mrf.mxu0
      %v616 = vadd.f32 0.0, %v615
      %v617 = vpop.f32.mrf.mxu0
      %v618 = vadd.f32 0.0, %v617
      %619 = vmatmul.bf16.gmra.mxu0 %v453
      %v620 = vpop.f32.mrf.mxu0
      %v621 = vadd.f32 0.0, %v620
      %v622 = vpop.f32.mrf.mxu0
      %v623 = vadd.f32 0.0, %v622
      %624 = vmatmul.bf16.gmra.mxu0 %v456
      %v625 = vpop.f32.mrf.mxu0
      %v626 = vadd.f32 0.0, %v625
      %v627 = vpop.f32.mrf.mxu0
      %v628 = vadd.f32 0.0, %v627
      %629 = vmatmul.bf16.gmra.mxu0 %v459
      %v630 = vpop.f32.mrf.mxu0
      %v631 = vadd.f32 0.0, %v630
      %v632 = vpop.f32.mrf.mxu0
      %v633 = vadd.f32 0.0, %v632
      %634 = vmatmul.bf16.gmra.mxu0 %v462
      %v635 = vpop.f32.mrf.mxu0
      %v636 = vadd.f32 0.0, %v635
      %v637 = vpop.f32.mrf.mxu0
      %v638 = vadd.f32 0.0, %v637
      %639 = vdwg.mxu0
      %v641 = vsel %vm367, %v236, 0
      %v644 = vsel %vm367, %v237, 0
      %v647 = vsel %vm367, %v238, 0
      %v650 = vsel %vm367, %v239, 0
      %v653 = vsel %vm367, %v240, 0
      %v656 = vsel %vm367, %v241, 0
      %v659 = vsel %vm367, %v242, 0
      %v662 = vsel %vm367, %v243, 0
      %v665 = vsel %vm367, %v244, 0
      %v668 = vsel %vm367, %v245, 0
      %v671 = vsel %vm367, %v246, 0
      %v674 = vsel %vm367, %v247, 0
      %v677 = vsel %vm367, %v248, 0
      %v680 = vsel %vm367, %v249, 0
      %v683 = vsel %vm367, %v250, 0
      %v686 = vsel %vm367, %v251, 0
      %v689 = vsel %vm367, %v252, 0
      %v692 = vsel %vm367, %v253, 0
      %v695 = vsel %vm367, %v254, 0
      %v698 = vsel %vm367, %v255, 0
      %v701 = vsel %vm367, %v256, 0
      %v704 = vsel %vm367, %v257, 0
      %v707 = vsel %vm367, %v258, 0
      %v710 = vsel %vm367, %v259, 0
      %v713 = vsel %vm367, %v260, 0
      %v716 = vsel %vm367, %v261, 0
      %v719 = vsel %vm367, %v262, 0
      %v722 = vsel %vm367, %v263, 0
      %v725 = vsel %vm367, %v264, 0
      %v728 = vsel %vm367, %v265, 0
      %v731 = vsel %vm367, %v266, 0
      %v734 = vsel %vm367, %v267, 0
      %v737 = vand.u32 %v268, %v467
      %739 = vmatpush.bf16.msra.mxu0 0
      %740 = vmatpush.bf16.msra.mxu0 0
      %741 = vmatpush.bf16.msra.mxu0 0
      %742 = vmatpush.bf16.msra.mxu0 0
      %743 = vmatpush.bf16.msra.mxu0 0
      %744 = vmatpush.bf16.msra.mxu0 0
      %745 = vmatpush.bf16.msra.mxu0 0
      %746 = vmatpush.bf16.msra.mxu0 %v737
      %747 = vmatmul.bf16.gmra.mxu0 %v641
      %v748 = vpop.f32.mrf.mxu0
      %v749 = vadd.f32 %v481, %v748
      %v750 = vpop.f32.mrf.mxu0
      %v751 = vadd.f32 %v483, %v750
      %752 = vmatmul.bf16.gmra.mxu0 %v644
      %v753 = vpop.f32.mrf.mxu0
      %v754 = vadd.f32 %v486, %v753
      %v755 = vpop.f32.mrf.mxu0
      %v756 = vadd.f32 %v488, %v755
      %757 = vmatmul.bf16.gmra.mxu0 %v647
      %v758 = vpop.f32.mrf.mxu0
      %v759 = vadd.f32 %v491, %v758
      %v760 = vpop.f32.mrf.mxu0
      %v761 = vadd.f32 %v493, %v760
      %762 = vmatmul.bf16.gmra.mxu0 %v650
      %v763 = vpop.f32.mrf.mxu0
      %v764 = vadd.f32 %v496, %v763
      %v765 = vpop.f32.mrf.mxu0
      %v766 = vadd.f32 %v498, %v765
      %767 = vmatmul.bf16.gmra.mxu0 %v653
      %v768 = vpop.f32.mrf.mxu0
      %v769 = vadd.f32 %v501, %v768
      %v770 = vpop.f32.mrf.mxu0
      %v771 = vadd.f32 %v503, %v770
      %772 = vmatmul.bf16.gmra.mxu0 %v656
      %v773 = vpop.f32.mrf.mxu0
      %v774 = vadd.f32 %v506, %v773
      %v775 = vpop.f32.mrf.mxu0
      %v776 = vadd.f32 %v508, %v775
      %777 = vmatmul.bf16.gmra.mxu0 %v659
      %v778 = vpop.f32.mrf.mxu0
      %v779 = vadd.f32 %v511, %v778
      %v780 = vpop.f32.mrf.mxu0
      %v781 = vadd.f32 %v513, %v780
      %782 = vmatmul.bf16.gmra.mxu0 %v662
      %v783 = vpop.f32.mrf.mxu0
      %v784 = vadd.f32 %v516, %v783
      %v785 = vpop.f32.mrf.mxu0
      %v786 = vadd.f32 %v518, %v785
      %787 = vmatmul.bf16.gmra.mxu0 %v665
      %v788 = vpop.f32.mrf.mxu0
      %v789 = vadd.f32 %v521, %v788
      %v790 = vpop.f32.mrf.mxu0
      %v791 = vadd.f32 %v523, %v790
      %792 = vmatmul.bf16.gmra.mxu0 %v668
      %v793 = vpop.f32.mrf.mxu0
      %v794 = vadd.f32 %v526, %v793
      %v795 = vpop.f32.mrf.mxu0
      %v796 = vadd.f32 %v528, %v795
      %797 = vmatmul.bf16.gmra.mxu0 %v671
      %v798 = vpop.f32.mrf.mxu0
      %v799 = vadd.f32 %v531, %v798
      %v800 = vpop.f32.mrf.mxu0
      %v801 = vadd.f32 %v533, %v800
      %802 = vmatmul.bf16.gmra.mxu0 %v674
      %v803 = vpop.f32.mrf.mxu0
      %v804 = vadd.f32 %v536, %v803
      %v805 = vpop.f32.mrf.mxu0
      %v806 = vadd.f32 %v538, %v805
      %807 = vmatmul.bf16.gmra.mxu0 %v677
      %v808 = vpop.f32.mrf.mxu0
      %v809 = vadd.f32 %v541, %v808
      %v810 = vpop.f32.mrf.mxu0
      %v811 = vadd.f32 %v543, %v810
      %812 = vmatmul.bf16.gmra.mxu0 %v680
      %v813 = vpop.f32.mrf.mxu0
      %v814 = vadd.f32 %v546, %v813
      %v815 = vpop.f32.mrf.mxu0
      %v816 = vadd.f32 %v548, %v815
      %817 = vmatmul.bf16.gmra.mxu0 %v683
      %v818 = vpop.f32.mrf.mxu0
      %v819 = vadd.f32 %v551, %v818
      %v820 = vpop.f32.mrf.mxu0
      %v821 = vadd.f32 %v553, %v820
      %822 = vmatmul.bf16.gmra.mxu0 %v686
      %v823 = vpop.f32.mrf.mxu0
      %v824 = vadd.f32 %v556, %v823
      %v825 = vpop.f32.mrf.mxu0
      %v826 = vadd.f32 %v558, %v825
      %827 = vmatmul.bf16.gmra.mxu0 %v689
      %v828 = vpop.f32.mrf.mxu0
      %v829 = vadd.f32 %v561, %v828
      %v830 = vpop.f32.mrf.mxu0
      %v831 = vadd.f32 %v563, %v830
      %832 = vmatmul.bf16.gmra.mxu0 %v692
      %v833 = vpop.f32.mrf.mxu0
      %v834 = vadd.f32 %v566, %v833
      %v835 = vpop.f32.mrf.mxu0
      %v836 = vadd.f32 %v568, %v835
      %837 = vmatmul.bf16.gmra.mxu0 %v695
      %v838 = vpop.f32.mrf.mxu0
      %v839 = vadd.f32 %v571, %v838
      %v840 = vpop.f32.mrf.mxu0
      %v841 = vadd.f32 %v573, %v840
      %842 = vmatmul.bf16.gmra.mxu0 %v698
      %v843 = vpop.f32.mrf.mxu0
      %v844 = vadd.f32 %v576, %v843
      %v845 = vpop.f32.mrf.mxu0
      %v846 = vadd.f32 %v578, %v845
      %847 = vmatmul.bf16.gmra.mxu0 %v701
      %v848 = vpop.f32.mrf.mxu0
      %v849 = vadd.f32 %v581, %v848
      %v850 = vpop.f32.mrf.mxu0
      %v851 = vadd.f32 %v583, %v850
      %852 = vmatmul.bf16.gmra.mxu0 %v704
      %v853 = vpop.f32.mrf.mxu0
      %v854 = vadd.f32 %v586, %v853
      %v855 = vpop.f32.mrf.mxu0
      %v856 = vadd.f32 %v588, %v855
      %857 = vmatmul.bf16.gmra.mxu0 %v707
      %v858 = vpop.f32.mrf.mxu0
      %v859 = vadd.f32 %v591, %v858
      %v860 = vpop.f32.mrf.mxu0
      %v861 = vadd.f32 %v593, %v860
      %862 = vmatmul.bf16.gmra.mxu0 %v710
      %v863 = vpop.f32.mrf.mxu0
      %v864 = vadd.f32 %v596, %v863
      %v865 = vpop.f32.mrf.mxu0
      %v866 = vadd.f32 %v598, %v865
      %867 = vmatmul.bf16.gmra.mxu0 %v713
      %v868 = vpop.f32.mrf.mxu0
      %v869 = vadd.f32 %v601, %v868
      %v870 = vpop.f32.mrf.mxu0
      %v871 = vadd.f32 %v603, %v870
      %872 = vmatmul.bf16.gmra.mxu0 %v716
      %v873 = vpop.f32.mrf.mxu0
      %v874 = vadd.f32 %v606, %v873
      %v875 = vpop.f32.mrf.mxu0
      %v876 = vadd.f32 %v608, %v875
      %877 = vmatmul.bf16.gmra.mxu0 %v719
      %v878 = vpop.f32.mrf.mxu0
      %v879 = vadd.f32 %v611, %v878
      %v880 = vpop.f32.mrf.mxu0
      %v881 = vadd.f32 %v613, %v880
      %882 = vmatmul.bf16.gmra.mxu0 %v722
      %v883 = vpop.f32.mrf.mxu0
      %v884 = vadd.f32 %v616, %v883
      %v885 = vpop.f32.mrf.mxu0
      %v886 = vadd.f32 %v618, %v885
      %887 = vmatmul.bf16.gmra.mxu0 %v725
      %v888 = vpop.f32.mrf.mxu0
      %v889 = vadd.f32 %v621, %v888
      %v890 = vpop.f32.mrf.mxu0
      %v891 = vadd.f32 %v623, %v890
      %892 = vmatmul.bf16.gmra.mxu0 %v728
      %v893 = vpop.f32.mrf.mxu0
      %v894 = vadd.f32 %v626, %v893
      %v895 = vpop.f32.mrf.mxu0
      %v896 = vadd.f32 %v628, %v895
      %897 = vmatmul.bf16.gmra.mxu0 %v731
      %v898 = vpop.f32.mrf.mxu0
      %v899 = vadd.f32 %v631, %v898
      %v900 = vpop.f32.mrf.mxu0
      %v901 = vadd.f32 %v633, %v900
      %902 = vmatmul.bf16.gmra.mxu0 %v734
      %v903 = vpop.f32.mrf.mxu0
      %v904 = vadd.f32 %v636, %v903
      %v905 = vpop.f32.mrf.mxu0
      %v906 = vadd.f32 %v638, %v905
      %907 = vdwg.mxu0
      %v908 = vld [vmem:[%s165 + $0x2] sm:$0xff]
      %v909 = vld [vmem:[%s165 + $0xa] sm:$0xff]
      %v910 = vld [vmem:[%s165 + $0x12] sm:$0xff]
      %v911 = vld [vmem:[%s165 + $0x1a] sm:$0xff]
      %v912 = vld [vmem:[%s165 + $0x2a] sm:$0xff]
      %v913 = vld [vmem:[%s165 + $0x32] sm:$0xff]
      %v914 = vld [vmem:[%s165 + $0x3a] sm:$0xff]
      %v915 = vld [vmem:[%s165 + $0x42] sm:$0xff]
      %v916 = vld [vmem:[%s165 + $0x52] sm:$0xff]
      %v917 = vld [vmem:[%s165 + $0x5a] sm:$0xff]
      %v918 = vld [vmem:[%s165 + $0x62] sm:$0xff]
      %v919 = vld [vmem:[%s165 + $0x6a] sm:$0xff]
      %v920 = vld [vmem:[%s165 + $0x7a] sm:$0xff]
      %v921 = vld [vmem:[%s165 + $0x82] sm:$0xff]
      %v922 = vld [vmem:[%s165 + $0x8a] sm:$0xff]
      %v923 = vld [vmem:[%s165 + $0x92] sm:$0xff]
      %v924 = vld [vmem:[%s165 + $0xa2] sm:$0xff]
      %v925 = vld [vmem:[%s165 + $0xaa] sm:$0xff]
      %v926 = vld [vmem:[%s165 + $0xb2] sm:$0xff]
      %v927 = vld [vmem:[%s165 + $0xba] sm:$0xff]
      %v928 = vld [vmem:[%s165 + $0xca] sm:$0xff]
      %v929 = vld [vmem:[%s165 + $0xd2] sm:$0xff]
      %v930 = vld [vmem:[%s165 + $0xda] sm:$0xff]
      %v931 = vld [vmem:[%s165 + $0xe2] sm:$0xff]
      %v932 = vld [vmem:[%s165 + $0xf2] sm:$0xff]
      %v933 = vld [vmem:[%s165 + $0xfa] sm:$0xff]
      %v934 = vld [vmem:[%s165 + $0x102] sm:$0xff]
      %v935 = vld [vmem:[%s165 + $0x10a] sm:$0xff]
      %v936 = vld [vmem:[%s165 + $0x11a] sm:$0xff]
      %v937 = vld [vmem:[%s165 + $0x122] sm:$0xff]
      %v938 = vld [vmem:[%s165 + $0x12a] sm:$0xff]
      %v939 = vld [vmem:[%s165 + $0x132] sm:$0xff]
      %v940 = vld [vmem:[%s165 + $0x142] sm:$0xff]
      %v941 = vld [vmem:[%s165 + $0x14a] sm:$0xff]
      %v942 = vld [vmem:[%s165 + $0x152] sm:$0xff]
      %v943 = vld [vmem:[%s165 + $0x15a] sm:$0xff]
      %v944 = vld [vmem:[%s165 + $0x16a] sm:$0xff]
      %v945 = vld [vmem:[%s165 + $0x172] sm:$0xff]
      %v946 = vld [vmem:[%s165 + $0x17a] sm:$0xff]
      %v947 = vld [vmem:[%s165 + $0x182] sm:$0xff]
      %v948 = vld [vmem:[%s165 + $0x192] sm:$0xff]
      %v949 = vld [vmem:[%s165 + $0x19a] sm:$0xff]
      %v950 = vld [vmem:[%s165 + $0x1a2] sm:$0xff]
      %v951 = vld [vmem:[%s165 + $0x1aa] sm:$0xff]
      %v952 = vld [vmem:[%s165 + $0x1ba] sm:$0xff]
      %v953 = vld [vmem:[%s165 + $0x1c2] sm:$0xff]
      %v954 = vld [vmem:[%s165 + $0x1ca] sm:$0xff]
      %v955 = vld [vmem:[%s165 + $0x1d2] sm:$0xff]
      %v956 = vld [vmem:[%s165 + $0x1e2] sm:$0xff]
      %v957 = vld [vmem:[%s165 + $0x1ea] sm:$0xff]
      %v958 = vld [vmem:[%s165 + $0x1f2] sm:$0xff]
      %v959 = vld [vmem:[%s165 + $0x1fa] sm:$0xff]
      %v960 = vld [vmem:[%s165 + $0x20a] sm:$0xff]
      %v961 = vld [vmem:[%s165 + $0x212] sm:$0xff]
      %v962 = vld [vmem:[%s165 + $0x21a] sm:$0xff]
      %v963 = vld [vmem:[%s165 + $0x222] sm:$0xff]
      %v964 = vld [vmem:[%s165 + $0x232] sm:$0xff]
      %v965 = vld [vmem:[%s165 + $0x23a] sm:$0xff]
      %v966 = vld [vmem:[%s165 + $0x242] sm:$0xff]
      %v967 = vld [vmem:[%s165 + $0x24a] sm:$0xff]
      %v968 = vld [vmem:[%s165 + $0x25a] sm:$0xff]
      %v969 = vld [vmem:[%s165 + $0x262] sm:$0xff]
      %v970 = vld [vmem:[%s165 + $0x26a] sm:$0xff]
      %v971 = vld [vmem:[%s165 + $0x272] sm:$0xff]
      %v972 = vpack.c.bf16 %v909, %v908
      %v973 = vpack.c.bf16 %v911, %v910
      %v974 = vpack.c.bf16 %v913, %v912
      %v975 = vpack.c.bf16 %v915, %v914
      %v976 = vpack.c.bf16 %v917, %v916
      %v977 = vpack.c.bf16 %v919, %v918
      %v978 = vpack.c.bf16 %v921, %v920
      %v979 = vpack.c.bf16 %v923, %v922
      %v980 = vpack.c.bf16 %v925, %v924
      %v981 = vpack.c.bf16 %v927, %v926
      %v982 = vpack.c.bf16 %v929, %v928
      %v983 = vpack.c.bf16 %v931, %v930
      %v984 = vpack.c.bf16 %v933, %v932
      %v985 = vpack.c.bf16 %v935, %v934
      %v986 = vpack.c.bf16 %v937, %v936
      %v987 = vpack.c.bf16 %v939, %v938
      %v988 = vpack.c.bf16 %v941, %v940
      %v989 = vpack.c.bf16 %v943, %v942
      %v990 = vpack.c.bf16 %v945, %v944
      %v991 = vpack.c.bf16 %v947, %v946
      %v992 = vpack.c.bf16 %v949, %v948
      %v993 = vpack.c.bf16 %v951, %v950
      %v994 = vpack.c.bf16 %v953, %v952
      %v995 = vpack.c.bf16 %v955, %v954
      %v996 = vpack.c.bf16 %v957, %v956
      %v997 = vpack.c.bf16 %v959, %v958
      %v998 = vpack.c.bf16 %v961, %v960
      %v999 = vpack.c.bf16 %v963, %v962
      %v1000 = vpack.c.bf16 %v965, %v964
      %v1001 = vpack.c.bf16 %v967, %v966
      %v1002 = vpack.c.bf16 %v969, %v968
      %v1003 = vpack.c.bf16 %v971, %v970
      %s1004 = scalar_lea.vmem %s1, 4
      %v1005 = vld [vmem:[%s1004] sm:$0x3]
      %v1007 = vsel %vm367, %v972, 0
      %v1010 = vsel %vm367, %v973, 0
      %v1013 = vsel %vm367, %v974, 0
      %v1016 = vsel %vm367, %v975, 0
      %v1019 = vsel %vm367, %v976, 0
      %v1022 = vsel %vm367, %v977, 0
      %v1025 = vsel %vm367, %v978, 0
      %v1028 = vsel %vm367, %v979, 0
      %v1031 = vsel %vm367, %v980, 0
      %v1034 = vsel %vm367, %v981, 0
      %v1037 = vsel %vm367, %v982, 0
      %v1040 = vsel %vm367, %v983, 0
      %v1043 = vsel %vm367, %v984, 0
      %v1046 = vsel %vm367, %v985, 0
      %v1049 = vsel %vm367, %v986, 0
      %v1052 = vsel %vm367, %v987, 0
      %v1055 = vsel %vm367, %v988, 0
      %v1058 = vsel %vm367, %v989, 0
      %v1061 = vsel %vm367, %v990, 0
      %v1064 = vsel %vm367, %v991, 0
      %v1067 = vsel %vm367, %v992, 0
      %v1070 = vsel %vm367, %v993, 0
      %v1073 = vsel %vm367, %v994, 0
      %v1076 = vsel %vm367, %v995, 0
      %v1079 = vsel %vm367, %v996, 0
      %v1082 = vsel %vm367, %v997, 0
      %v1085 = vsel %vm367, %v998, 0
      %v1088 = vsel %vm367, %v999, 0
      %v1091 = vsel %vm367, %v1000, 0
      %v1094 = vsel %vm367, %v1001, 0
      %v1097 = vsel %vm367, %v1002, 0
      %v1100 = vsel %vm367, %v1003, 0
      %v1103 = vand.u32 %v1005, %v467
      %1105 = vmatpush.bf16.msra.mxu0 0
      %1106 = vmatpush.bf16.msra.mxu0 0
      %1107 = vmatpush.bf16.msra.mxu0 0
      %1108 = vmatpush.bf16.msra.mxu0 0
      %1109 = vmatpush.bf16.msra.mxu0 0
      %1110 = vmatpush.bf16.msra.mxu0 0
      %1111 = vmatpush.bf16.msra.mxu0 0
      %1112 = vmatpush.bf16.msra.mxu0 %v1103
      %1113 = vmatmul.bf16.gmra.mxu0 %v1007
      %v1114 = vpop.f32.mrf.mxu0
      %v1115 = vadd.f32 0.0, %v1114
      %v1116 = vpop.f32.mrf.mxu0
      %v1117 = vadd.f32 0.0, %v1116
      %1118 = vmatmul.bf16.gmra.mxu0 %v1010
      %v1119 = vpop.f32.mrf.mxu0
      %v1120 = vadd.f32 0.0, %v1119
      %v1121 = vpop.f32.mrf.mxu0
      %v1122 = vadd.f32 0.0, %v1121
      %1123 = vmatmul.bf16.gmra.mxu0 %v1013
      %v1124 = vpop.f32.mrf.mxu0
      %v1125 = vadd.f32 0.0, %v1124
      %v1126 = vpop.f32.mrf.mxu0
      %v1127 = vadd.f32 0.0, %v1126
      %1128 = vmatmul.bf16.gmra.mxu0 %v1016
      %v1129 = vpop.f32.mrf.mxu0
      %v1130 = vadd.f32 0.0, %v1129
      %v1131 = vpop.f32.mrf.mxu0
      %v1132 = vadd.f32 0.0, %v1131
      %1133 = vmatmul.bf16.gmra.mxu0 %v1019
      %v1134 = vpop.f32.mrf.mxu0
      %v1135 = vadd.f32 0.0, %v1134
      %v1136 = vpop.f32.mrf.mxu0
      %v1137 = vadd.f32 0.0, %v1136
      %1138 = vmatmul.bf16.gmra.mxu0 %v1022
      %v1139 = vpop.f32.mrf.mxu0
      %v1140 = vadd.f32 0.0, %v1139
      %v1141 = vpop.f32.mrf.mxu0
      %v1142 = vadd.f32 0.0, %v1141
      %1143 = vmatmul.bf16.gmra.mxu0 %v1025
      %v1144 = vpop.f32.mrf.mxu0
      %v1145 = vadd.f32 0.0, %v1144
      %v1146 = vpop.f32.mrf.mxu0
      %v1147 = vadd.f32 0.0, %v1146
      %1148 = vmatmul.bf16.gmra.mxu0 %v1028
      %v1149 = vpop.f32.mrf.mxu0
      %v1150 = vadd.f32 0.0, %v1149
      %v1151 = vpop.f32.mrf.mxu0
      %v1152 = vadd.f32 0.0, %v1151
      %1153 = vmatmul.bf16.gmra.mxu0 %v1031
      %v1154 = vpop.f32.mrf.mxu0
      %v1155 = vadd.f32 0.0, %v1154
      %v1156 = vpop.f32.mrf.mxu0
      %v1157 = vadd.f32 0.0, %v1156
      %1158 = vmatmul.bf16.gmra.mxu0 %v1034
      %v1159 = vpop.f32.mrf.mxu0
      %v1160 = vadd.f32 0.0, %v1159
      %v1161 = vpop.f32.mrf.mxu0
      %v1162 = vadd.f32 0.0, %v1161
      %1163 = vmatmul.bf16.gmra.mxu0 %v1037
      %v1164 = vpop.f32.mrf.mxu0
      %v1165 = vadd.f32 0.0, %v1164
      %v1166 = vpop.f32.mrf.mxu0
      %v1167 = vadd.f32 0.0, %v1166
      %1168 = vmatmul.bf16.gmra.mxu0 %v1040
      %v1169 = vpop.f32.mrf.mxu0
      %v1170 = vadd.f32 0.0, %v1169
      %v1171 = vpop.f32.mrf.mxu0
      %v1172 = vadd.f32 0.0, %v1171
      %1173 = vmatmul.bf16.gmra.mxu0 %v1043
      %v1174 = vpop.f32.mrf.mxu0
      %v1175 = vadd.f32 0.0, %v1174
      %v1176 = vpop.f32.mrf.mxu0
      %v1177 = vadd.f32 0.0, %v1176
      %1178 = vmatmul.bf16.gmra.mxu0 %v1046
      %v1179 = vpop.f32.mrf.mxu0
      %v1180 = vadd.f32 0.0, %v1179
      %v1181 = vpop.f32.mrf.mxu0
      %v1182 = vadd.f32 0.0, %v1181
      %1183 = vmatmul.bf16.gmra.mxu0 %v1049
      %v1184 = vpop.f32.mrf.mxu0
      %v1185 = vadd.f32 0.0, %v1184
      %v1186 = vpop.f32.mrf.mxu0
      %v1187 = vadd.f32 0.0, %v1186
      %1188 = vmatmul.bf16.gmra.mxu0 %v1052
      %v1189 = vpop.f32.mrf.mxu0
      %v1190 = vadd.f32 0.0, %v1189
      %v1191 = vpop.f32.mrf.mxu0
      %v1192 = vadd.f32 0.0, %v1191
      %1193 = vmatmul.bf16.gmra.mxu0 %v1055
      %v1194 = vpop.f32.mrf.mxu0
      %v1195 = vadd.f32 0.0, %v1194
      %v1196 = vpop.f32.mrf.mxu0
      %v1197 = vadd.f32 0.0, %v1196
      %1198 = vmatmul.bf16.gmra.mxu0 %v1058
      %v1199 = vpop.f32.mrf.mxu0
      %v1200 = vadd.f32 0.0, %v1199
      %v1201 = vpop.f32.mrf.mxu0
      %v1202 = vadd.f32 0.0, %v1201
      %1203 = vmatmul.bf16.gmra.mxu0 %v1061
      %v1204 = vpop.f32.mrf.mxu0
      %v1205 = vadd.f32 0.0, %v1204
      %v1206 = vpop.f32.mrf.mxu0
      %v1207 = vadd.f32 0.0, %v1206
      %1208 = vmatmul.bf16.gmra.mxu0 %v1064
      %v1209 = vpop.f32.mrf.mxu0
      %v1210 = vadd.f32 0.0, %v1209
      %v1211 = vpop.f32.mrf.mxu0
      %v1212 = vadd.f32 0.0, %v1211
      %1213 = vmatmul.bf16.gmra.mxu0 %v1067
      %v1214 = vpop.f32.mrf.mxu0
      %v1215 = vadd.f32 0.0, %v1214
      %v1216 = vpop.f32.mrf.mxu0
      %v1217 = vadd.f32 0.0, %v1216
      %1218 = vmatmul.bf16.gmra.mxu0 %v1070
      %v1219 = vpop.f32.mrf.mxu0
      %v1220 = vadd.f32 0.0, %v1219
      %v1221 = vpop.f32.mrf.mxu0
      %v1222 = vadd.f32 0.0, %v1221
      %1223 = vmatmul.bf16.gmra.mxu0 %v1073
      %v1224 = vpop.f32.mrf.mxu0
      %v1225 = vadd.f32 0.0, %v1224
      %v1226 = vpop.f32.mrf.mxu0
      %v1227 = vadd.f32 0.0, %v1226
      %1228 = vmatmul.bf16.gmra.mxu0 %v1076
      %v1229 = vpop.f32.mrf.mxu0
      %v1230 = vadd.f32 0.0, %v1229
      %v1231 = vpop.f32.mrf.mxu0
      %v1232 = vadd.f32 0.0, %v1231
      %1233 = vmatmul.bf16.gmra.mxu0 %v1079
      %v1234 = vpop.f32.mrf.mxu0
      %v1235 = vadd.f32 0.0, %v1234
      %v1236 = vpop.f32.mrf.mxu0
      %v1237 = vadd.f32 0.0, %v1236
      %1238 = vmatmul.bf16.gmra.mxu0 %v1082
      %v1239 = vpop.f32.mrf.mxu0
      %v1240 = vadd.f32 0.0, %v1239
      %v1241 = vpop.f32.mrf.mxu0
      %v1242 = vadd.f32 0.0, %v1241
      %1243 = vmatmul.bf16.gmra.mxu0 %v1085
      %v1244 = vpop.f32.mrf.mxu0
      %v1245 = vadd.f32 0.0, %v1244
      %v1246 = vpop.f32.mrf.mxu0
      %v1247 = vadd.f32 0.0, %v1246
      %1248 = vmatmul.bf16.gmra.mxu0 %v1088
      %v1249 = vpop.f32.mrf.mxu0
      %v1250 = vadd.f32 0.0, %v1249
      %v1251 = vpop.f32.mrf.mxu0
      %v1252 = vadd.f32 0.0, %v1251
      %1253 = vmatmul.bf16.gmra.mxu0 %v1091
      %v1254 = vpop.f32.mrf.mxu0
      %v1255 = vadd.f32 0.0, %v1254
      %v1256 = vpop.f32.mrf.mxu0
      %v1257 = vadd.f32 0.0, %v1256
      %1258 = vmatmul.bf16.gmra.mxu0 %v1094
      %v1259 = vpop.f32.mrf.mxu0
      %v1260 = vadd.f32 0.0, %v1259
      %v1261 = vpop.f32.mrf.mxu0
      %v1262 = vadd.f32 0.0, %v1261
      %1263 = vmatmul.bf16.gmra.mxu0 %v1097
      %v1264 = vpop.f32.mrf.mxu0
      %v1265 = vadd.f32 0.0, %v1264
      %v1266 = vpop.f32.mrf.mxu0
      %v1267 = vadd.f32 0.0, %v1266
      %1268 = vmatmul.bf16.gmra.mxu0 %v1100
      %v1269 = vpop.f32.mrf.mxu0
      %v1270 = vadd.f32 0.0, %v1269
      %v1271 = vpop.f32.mrf.mxu0
      %v1272 = vadd.f32 0.0, %v1271
      %1273 = vdwg.mxu0
      %v1274 = vadd.f32 %v749, %v1115
      %v1275 = vadd.f32 %v751, %v1117
      %v1276 = vadd.f32 %v754, %v1120
      %v1277 = vadd.f32 %v756, %v1122
      %v1278 = vadd.f32 %v759, %v1125
      %v1279 = vadd.f32 %v761, %v1127
      %v1280 = vadd.f32 %v764, %v1130
      %v1281 = vadd.f32 %v766, %v1132
      %v1282 = vadd.f32 %v769, %v1135
      %v1283 = vadd.f32 %v771, %v1137
      %v1284 = vadd.f32 %v774, %v1140
      %v1285 = vadd.f32 %v776, %v1142
      %v1286 = vadd.f32 %v779, %v1145
      %v1287 = vadd.f32 %v781, %v1147
      %v1288 = vadd.f32 %v784, %v1150
      %v1289 = vadd.f32 %v786, %v1152
      %v1290 = vadd.f32 %v789, %v1155
      %v1291 = vadd.f32 %v791, %v1157
      %v1292 = vadd.f32 %v794, %v1160
      %v1293 = vadd.f32 %v796, %v1162
      %v1294 = vadd.f32 %v799, %v1165
      %v1295 = vadd.f32 %v801, %v1167
      %v1296 = vadd.f32 %v804, %v1170
      %v1297 = vadd.f32 %v806, %v1172
      %v1298 = vadd.f32 %v809, %v1175
      %v1299 = vadd.f32 %v811, %v1177
      %v1300 = vadd.f32 %v814, %v1180
      %v1301 = vadd.f32 %v816, %v1182
      %v1302 = vadd.f32 %v819, %v1185
      %v1303 = vadd.f32 %v821, %v1187
      %v1304 = vadd.f32 %v824, %v1190
      %v1305 = vadd.f32 %v826, %v1192
      %v1306 = vadd.f32 %v829, %v1195
      %v1307 = vadd.f32 %v831, %v1197
      %v1308 = vadd.f32 %v834, %v1200
      %v1309 = vadd.f32 %v836, %v1202
      %v1310 = vadd.f32 %v839, %v1205
      %v1311 = vadd.f32 %v841, %v1207
      %v1312 = vadd.f32 %v844, %v1210
      %v1313 = vadd.f32 %v846, %v1212
      %v1314 = vadd.f32 %v849, %v1215
      %v1315 = vadd.f32 %v851, %v1217
      %v1316 = vadd.f32 %v854, %v1220
      %v1317 = vadd.f32 %v856, %v1222
      %v1318 = vadd.f32 %v859, %v1225
      %v1319 = vadd.f32 %v861, %v1227
      %v1320 = vadd.f32 %v864, %v1230
      %v1321 = vadd.f32 %v866, %v1232
      %v1322 = vadd.f32 %v869, %v1235
      %v1323 = vadd.f32 %v871, %v1237
      %v1324 = vadd.f32 %v874, %v1240
      %v1325 = vadd.f32 %v876, %v1242
      %v1326 = vadd.f32 %v879, %v1245
      %v1327 = vadd.f32 %v881, %v1247
      %v1328 = vadd.f32 %v884, %v1250
      %v1329 = vadd.f32 %v886, %v1252
      %v1330 = vadd.f32 %v889, %v1255
      %v1331 = vadd.f32 %v891, %v1257
      %v1332 = vadd.f32 %v894, %v1260
      %v1333 = vadd.f32 %v896, %v1262
      %v1334 = vadd.f32 %v899, %v1265
      %v1335 = vadd.f32 %v901, %v1267
      %v1336 = vadd.f32 %v904, %v1270
      %v1337 = vadd.f32 %v906, %v1272
      %s1338 = scalar_lea.vmem %s165, 40
      %v1339 = vld [vmem:[%s1338] sm:$0xff]
      %v1340 = vld [vmem:[%s1338 + $0x8] sm:$0xff]
      %v1341 = vld [vmem:[%s1338 + $0x10] sm:$0xff]
      %v1342 = vld [vmem:[%s1338 + $0x18] sm:$0xff]
      %v1343 = vld [vmem:[%s1338 + $0x28] sm:$0xff]
      %v1344 = vld [vmem:[%s1338 + $0x30] sm:$0xff]
      %v1345 = vld [vmem:[%s1338 + $0x38] sm:$0xff]
      %v1346 = vld [vmem:[%s1338 + $0x40] sm:$0xff]
      %v1347 = vld [vmem:[%s1338 + $0x50] sm:$0xff]
      %v1348 = vld [vmem:[%s1338 + $0x58] sm:$0xff]
      %v1349 = vld [vmem:[%s1338 + $0x60] sm:$0xff]
      %v1350 = vld [vmem:[%s1338 + $0x68] sm:$0xff]
      %v1351 = vld [vmem:[%s1338 + $0x78] sm:$0xff]
      %v1352 = vld [vmem:[%s1338 + $0x80] sm:$0xff]
      %v1353 = vld [vmem:[%s1338 + $0x88] sm:$0xff]
      %v1354 = vld [vmem:[%s1338 + $0x90] sm:$0xff]
      %v1355 = vld [vmem:[%s1338 + $0xa0] sm:$0xff]
      %v1356 = vld [vmem:[%s1338 + $0xa8] sm:$0xff]
      %v1357 = vld [vmem:[%s1338 + $0xb0] sm:$0xff]
      %v1358 = vld [vmem:[%s1338 + $0xb8] sm:$0xff]
      %v1359 = vld [vmem:[%s1338 + $0xc8] sm:$0xff]
      %v1360 = vld [vmem:[%s1338 + $0xd0] sm:$0xff]
      %v1361 = vld [vmem:[%s1338 + $0xd8] sm:$0xff]
      %v1362 = vld [vmem:[%s1338 + $0xe0] sm:$0xff]
      %v1363 = vld [vmem:[%s1338 + $0xf0] sm:$0xff]
      %v1364 = vld [vmem:[%s1338 + $0xf8] sm:$0xff]
      %v1365 = vld [vmem:[%s1338 + $0x100] sm:$0xff]
      %v1366 = vld [vmem:[%s1338 + $0x108] sm:$0xff]
      %v1367 = vld [vmem:[%s1338 + $0x118] sm:$0xff]
      %v1368 = vld [vmem:[%s1338 + $0x120] sm:$0xff]
      %v1369 = vld [vmem:[%s1338 + $0x128] sm:$0xff]
      %v1370 = vld [vmem:[%s1338 + $0x130] sm:$0xff]
      %v1371 = vld [vmem:[%s1338 + $0x140] sm:$0xff]
      %v1372 = vld [vmem:[%s1338 + $0x148] sm:$0xff]
      %v1373 = vld [vmem:[%s1338 + $0x150] sm:$0xff]
      %v1374 = vld [vmem:[%s1338 + $0x158] sm:$0xff]
      %v1375 = vld [vmem:[%s1338 + $0x168] sm:$0xff]
      %v1376 = vld [vmem:[%s1338 + $0x170] sm:$0xff]
      %v1377 = vld [vmem:[%s1338 + $0x178] sm:$0xff]
      %v1378 = vld [vmem:[%s1338 + $0x180] sm:$0xff]
      %v1379 = vld [vmem:[%s1338 + $0x190] sm:$0xff]
      %v1380 = vld [vmem:[%s1338 + $0x198] sm:$0xff]
      %v1381 = vld [vmem:[%s1338 + $0x1a0] sm:$0xff]
      %v1382 = vld [vmem:[%s1338 + $0x1a8] sm:$0xff]
      %v1383 = vld [vmem:[%s1338 + $0x1b8] sm:$0xff]
      %v1384 = vld [vmem:[%s1338 + $0x1c0] sm:$0xff]
      %v1385 = vld [vmem:[%s1338 + $0x1c8] sm:$0xff]
      %v1386 = vld [vmem:[%s1338 + $0x1d0] sm:$0xff]
      %v1387 = vld [vmem:[%s1338 + $0x1e0] sm:$0xff]
      %v1388 = vld [vmem:[%s1338 + $0x1e8] sm:$0xff]
      %v1389 = vld [vmem:[%s1338 + $0x1f0] sm:$0xff]
      %v1390 = vld [vmem:[%s1338 + $0x1f8] sm:$0xff]
      %v1391 = vld [vmem:[%s1338 + $0x208] sm:$0xff]
      %v1392 = vld [vmem:[%s1338 + $0x210] sm:$0xff]
      %v1393 = vld [vmem:[%s1338 + $0x218] sm:$0xff]
      %v1394 = vld [vmem:[%s1338 + $0x220] sm:$0xff]
      %v1395 = vld [vmem:[%s1338 + $0x230] sm:$0xff]
      %v1396 = vld [vmem:[%s1338 + $0x238] sm:$0xff]
      %v1397 = vld [vmem:[%s1338 + $0x240] sm:$0xff]
      %v1398 = vld [vmem:[%s1338 + $0x248] sm:$0xff]
      %v1399 = vld [vmem:[%s1338 + $0x258] sm:$0xff]
      %v1400 = vld [vmem:[%s1338 + $0x260] sm:$0xff]
      %v1401 = vld [vmem:[%s1338 + $0x268] sm:$0xff]
      %v1402 = vld [vmem:[%s1338 + $0x270] sm:$0xff]
      %v1403 = vpack.c.bf16 %v1340, %v1339
      %v1404 = vpack.c.bf16 %v1342, %v1341
      %v1405 = vpack.c.bf16 %v1344, %v1343
      %v1406 = vpack.c.bf16 %v1346, %v1345
      %v1407 = vpack.c.bf16 %v1348, %v1347
      %v1408 = vpack.c.bf16 %v1350, %v1349
      %v1409 = vpack.c.bf16 %v1352, %v1351
      %v1410 = vpack.c.bf16 %v1354, %v1353
      %v1411 = vpack.c.bf16 %v1356, %v1355
      %v1412 = vpack.c.bf16 %v1358, %v1357
      %v1413 = vpack.c.bf16 %v1360, %v1359
      %v1414 = vpack.c.bf16 %v1362, %v1361
      %v1415 = vpack.c.bf16 %v1364, %v1363
      %v1416 = vpack.c.bf16 %v1366, %v1365
      %v1417 = vpack.c.bf16 %v1368, %v1367
      %v1418 = vpack.c.bf16 %v1370, %v1369
      %v1419 = vpack.c.bf16 %v1372, %v1371
      %v1420 = vpack.c.bf16 %v1374, %v1373
      %v1421 = vpack.c.bf16 %v1376, %v1375
      %v1422 = vpack.c.bf16 %v1378, %v1377
      %v1423 = vpack.c.bf16 %v1380, %v1379
      %v1424 = vpack.c.bf16 %v1382, %v1381
      %v1425 = vpack.c.bf16 %v1384, %v1383
      %v1426 = vpack.c.bf16 %v1386, %v1385
      %v1427 = vpack.c.bf16 %v1388, %v1387
      %v1428 = vpack.c.bf16 %v1390, %v1389
      %v1429 = vpack.c.bf16 %v1392, %v1391
      %v1430 = vpack.c.bf16 %v1394, %v1393
      %v1431 = vpack.c.bf16 %v1396, %v1395
      %v1432 = vpack.c.bf16 %v1398, %v1397
      %v1433 = vpack.c.bf16 %v1400, %v1399
      %v1434 = vpack.c.bf16 %v1402, %v1401
      %s1435 = scalar_lea.vmem %s1, 6
      %v1436 = vld [vmem:[%s1435] sm:$0x3]
      %v1438 = vsel %vm367, %v1403, 0
      %v1441 = vsel %vm367, %v1404, 0
      %v1444 = vsel %vm367, %v1405, 0
      %v1447 = vsel %vm367, %v1406, 0
      %v1450 = vsel %vm367, %v1407, 0
      %v1453 = vsel %vm367, %v1408, 0
      %v1456 = vsel %vm367, %v1409, 0
      %v1459 = vsel %vm367, %v1410, 0
      %v1462 = vsel %vm367, %v1411, 0
      %v1465 = vsel %vm367, %v1412, 0
      %v1468 = vsel %vm367, %v1413, 0
      %v1471 = vsel %vm367, %v1414, 0
      %v1474 = vsel %vm367, %v1415, 0
      %v1477 = vsel %vm367, %v1416, 0
      %v1480 = vsel %vm367, %v1417, 0
      %v1483 = vsel %vm367, %v1418, 0
      %v1486 = vsel %vm367, %v1419, 0
      %v1489 = vsel %vm367, %v1420, 0
      %v1492 = vsel %vm367, %v1421, 0
      %v1495 = vsel %vm367, %v1422, 0
      %v1498 = vsel %vm367, %v1423, 0
      %v1501 = vsel %vm367, %v1424, 0
      %v1504 = vsel %vm367, %v1425, 0
      %v1507 = vsel %vm367, %v1426, 0
      %v1510 = vsel %vm367, %v1427, 0
      %v1513 = vsel %vm367, %v1428, 0
      %v1516 = vsel %vm367, %v1429, 0
      %v1519 = vsel %vm367, %v1430, 0
      %v1522 = vsel %vm367, %v1431, 0
      %v1525 = vsel %vm367, %v1432, 0
      %v1528 = vsel %vm367, %v1433, 0
      %v1531 = vsel %vm367, %v1434, 0
      %v1534 = vand.u32 %v1436, %v467
      %1536 = vmatpush.bf16.msra.mxu0 0
      %1537 = vmatpush.bf16.msra.mxu0 0
      %1538 = vmatpush.bf16.msra.mxu0 0
      %1539 = vmatpush.bf16.msra.mxu0 0
      %1540 = vmatpush.bf16.msra.mxu0 0
      %1541 = vmatpush.bf16.msra.mxu0 0
      %1542 = vmatpush.bf16.msra.mxu0 0
      %1543 = vmatpush.bf16.msra.mxu0 %v1534
      %1544 = vmatmul.bf16.gmra.mxu0 %v1438
      %v1545 = vpop.f32.mrf.mxu0
      %v1546 = vadd.f32 0.0, %v1545
      %v1547 = vpop.f32.mrf.mxu0
      %v1548 = vadd.f32 0.0, %v1547
      %1549 = vmatmul.bf16.gmra.mxu0 %v1441
      %v1550 = vpop.f32.mrf.mxu0
      %v1551 = vadd.f32 0.0, %v1550
      %v1552 = vpop.f32.mrf.mxu0
      %v1553 = vadd.f32 0.0, %v1552
      %1554 = vmatmul.bf16.gmra.mxu0 %v1444
      %v1555 = vpop.f32.mrf.mxu0
      %v1556 = vadd.f32 0.0, %v1555
      %v1557 = vpop.f32.mrf.mxu0
      %v1558 = vadd.f32 0.0, %v1557
      %1559 = vmatmul.bf16.gmra.mxu0 %v1447
      %v1560 = vpop.f32.mrf.mxu0
      %v1561 = vadd.f32 0.0, %v1560
      %v1562 = vpop.f32.mrf.mxu0
      %v1563 = vadd.f32 0.0, %v1562
      %1564 = vmatmul.bf16.gmra.mxu0 %v1450
      %v1565 = vpop.f32.mrf.mxu0
      %v1566 = vadd.f32 0.0, %v1565
      %v1567 = vpop.f32.mrf.mxu0
      %v1568 = vadd.f32 0.0, %v1567
      %1569 = vmatmul.bf16.gmra.mxu0 %v1453
      %v1570 = vpop.f32.mrf.mxu0
      %v1571 = vadd.f32 0.0, %v1570
      %v1572 = vpop.f32.mrf.mxu0
      %v1573 = vadd.f32 0.0, %v1572
      %1574 = vmatmul.bf16.gmra.mxu0 %v1456
      %v1575 = vpop.f32.mrf.mxu0
      %v1576 = vadd.f32 0.0, %v1575
      %v1577 = vpop.f32.mrf.mxu0
      %v1578 = vadd.f32 0.0, %v1577
      %1579 = vmatmul.bf16.gmra.mxu0 %v1459
      %v1580 = vpop.f32.mrf.mxu0
      %v1581 = vadd.f32 0.0, %v1580
      %v1582 = vpop.f32.mrf.mxu0
      %v1583 = vadd.f32 0.0, %v1582
      %1584 = vmatmul.bf16.gmra.mxu0 %v1462
      %v1585 = vpop.f32.mrf.mxu0
      %v1586 = vadd.f32 0.0, %v1585
      %v1587 = vpop.f32.mrf.mxu0
      %v1588 = vadd.f32 0.0, %v1587
      %1589 = vmatmul.bf16.gmra.mxu0 %v1465
      %v1590 = vpop.f32.mrf.mxu0
      %v1591 = vadd.f32 0.0, %v1590
      %v1592 = vpop.f32.mrf.mxu0
      %v1593 = vadd.f32 0.0, %v1592
      %1594 = vmatmul.bf16.gmra.mxu0 %v1468
      %v1595 = vpop.f32.mrf.mxu0
      %v1596 = vadd.f32 0.0, %v1595
      %v1597 = vpop.f32.mrf.mxu0
      %v1598 = vadd.f32 0.0, %v1597
      %1599 = vmatmul.bf16.gmra.mxu0 %v1471
      %v1600 = vpop.f32.mrf.mxu0
      %v1601 = vadd.f32 0.0, %v1600
      %v1602 = vpop.f32.mrf.mxu0
      %v1603 = vadd.f32 0.0, %v1602
      %1604 = vmatmul.bf16.gmra.mxu0 %v1474
      %v1605 = vpop.f32.mrf.mxu0
      %v1606 = vadd.f32 0.0, %v1605
      %v1607 = vpop.f32.mrf.mxu0
      %v1608 = vadd.f32 0.0, %v1607
      %1609 = vmatmul.bf16.gmra.mxu0 %v1477
      %v1610 = vpop.f32.mrf.mxu0
      %v1611 = vadd.f32 0.0, %v1610
      %v1612 = vpop.f32.mrf.mxu0
      %v1613 = vadd.f32 0.0, %v1612
      %1614 = vmatmul.bf16.gmra.mxu0 %v1480
      %v1615 = vpop.f32.mrf.mxu0
      %v1616 = vadd.f32 0.0, %v1615
      %v1617 = vpop.f32.mrf.mxu0
      %v1618 = vadd.f32 0.0, %v1617
      %1619 = vmatmul.bf16.gmra.mxu0 %v1483
      %v1620 = vpop.f32.mrf.mxu0
      %v1621 = vadd.f32 0.0, %v1620
      %v1622 = vpop.f32.mrf.mxu0
      %v1623 = vadd.f32 0.0, %v1622
      %1624 = vmatmul.bf16.gmra.mxu0 %v1486
      %v1625 = vpop.f32.mrf.mxu0
      %v1626 = vadd.f32 0.0, %v1625
      %v1627 = vpop.f32.mrf.mxu0
      %v1628 = vadd.f32 0.0, %v1627
      %1629 = vmatmul.bf16.gmra.mxu0 %v1489
      %v1630 = vpop.f32.mrf.mxu0
      %v1631 = vadd.f32 0.0, %v1630
      %v1632 = vpop.f32.mrf.mxu0
      %v1633 = vadd.f32 0.0, %v1632
      %1634 = vmatmul.bf16.gmra.mxu0 %v1492
      %v1635 = vpop.f32.mrf.mxu0
      %v1636 = vadd.f32 0.0, %v1635
      %v1637 = vpop.f32.mrf.mxu0
      %v1638 = vadd.f32 0.0, %v1637
      %1639 = vmatmul.bf16.gmra.mxu0 %v1495
      %v1640 = vpop.f32.mrf.mxu0
      %v1641 = vadd.f32 0.0, %v1640
      %v1642 = vpop.f32.mrf.mxu0
      %v1643 = vadd.f32 0.0, %v1642
      %1644 = vmatmul.bf16.gmra.mxu0 %v1498
      %v1645 = vpop.f32.mrf.mxu0
      %v1646 = vadd.f32 0.0, %v1645
      %v1647 = vpop.f32.mrf.mxu0
      %v1648 = vadd.f32 0.0, %v1647
      %1649 = vmatmul.bf16.gmra.mxu0 %v1501
      %v1650 = vpop.f32.mrf.mxu0
      %v1651 = vadd.f32 0.0, %v1650
      %v1652 = vpop.f32.mrf.mxu0
      %v1653 = vadd.f32 0.0, %v1652
      %1654 = vmatmul.bf16.gmra.mxu0 %v1504
      %v1655 = vpop.f32.mrf.mxu0
      %v1656 = vadd.f32 0.0, %v1655
      %v1657 = vpop.f32.mrf.mxu0
      %v1658 = vadd.f32 0.0, %v1657
      %1659 = vmatmul.bf16.gmra.mxu0 %v1507
      %v1660 = vpop.f32.mrf.mxu0
      %v1661 = vadd.f32 0.0, %v1660
      %v1662 = vpop.f32.mrf.mxu0
      %v1663 = vadd.f32 0.0, %v1662
      %1664 = vmatmul.bf16.gmra.mxu0 %v1510
      %v1665 = vpop.f32.mrf.mxu0
      %v1666 = vadd.f32 0.0, %v1665
      %v1667 = vpop.f32.mrf.mxu0
      %v1668 = vadd.f32 0.0, %v1667
      %1669 = vmatmul.bf16.gmra.mxu0 %v1513
      %v1670 = vpop.f32.mrf.mxu0
      %v1671 = vadd.f32 0.0, %v1670
      %v1672 = vpop.f32.mrf.mxu0
      %v1673 = vadd.f32 0.0, %v1672
      %1674 = vmatmul.bf16.gmra.mxu0 %v1516
      %v1675 = vpop.f32.mrf.mxu0
      %v1676 = vadd.f32 0.0, %v1675
      %v1677 = vpop.f32.mrf.mxu0
      %v1678 = vadd.f32 0.0, %v1677
      %1679 = vmatmul.bf16.gmra.mxu0 %v1519
      %v1680 = vpop.f32.mrf.mxu0
      %v1681 = vadd.f32 0.0, %v1680
      %v1682 = vpop.f32.mrf.mxu0
      %v1683 = vadd.f32 0.0, %v1682
      %1684 = vmatmul.bf16.gmra.mxu0 %v1522
      %v1685 = vpop.f32.mrf.mxu0
      %v1686 = vadd.f32 0.0, %v1685
      %v1687 = vpop.f32.mrf.mxu0
      %v1688 = vadd.f32 0.0, %v1687
      %1689 = vmatmul.bf16.gmra.mxu0 %v1525
      %v1690 = vpop.f32.mrf.mxu0
      %v1691 = vadd.f32 0.0, %v1690
      %v1692 = vpop.f32.mrf.mxu0
      %v1693 = vadd.f32 0.0, %v1692
      %1694 = vmatmul.bf16.gmra.mxu0 %v1528
      %v1695 = vpop.f32.mrf.mxu0
      %v1696 = vadd.f32 0.0, %v1695
      %v1697 = vpop.f32.mrf.mxu0
      %v1698 = vadd.f32 0.0, %v1697
      %1699 = vmatmul.bf16.gmra.mxu0 %v1531
      %v1700 = vpop.f32.mrf.mxu0
      %v1701 = vadd.f32 0.0, %v1700
      %v1702 = vpop.f32.mrf.mxu0
      %v1703 = vadd.f32 0.0, %v1702
      %1704 = vdwg.mxu0
      %v1705 = vadd.f32 %v1274, %v1546
      %v1706 = vadd.f32 %v1275, %v1548
      %v1707 = vadd.f32 %v1276, %v1551
      %v1708 = vadd.f32 %v1277, %v1553
      %v1709 = vadd.f32 %v1278, %v1556
      %v1710 = vadd.f32 %v1279, %v1558
      %v1711 = vadd.f32 %v1280, %v1561
      %v1712 = vadd.f32 %v1281, %v1563
      %v1713 = vadd.f32 %v1282, %v1566
      %v1714 = vadd.f32 %v1283, %v1568
      %v1715 = vadd.f32 %v1284, %v1571
      %v1716 = vadd.f32 %v1285, %v1573
      %v1717 = vadd.f32 %v1286, %v1576
      %v1718 = vadd.f32 %v1287, %v1578
      %v1719 = vadd.f32 %v1288, %v1581
      %v1720 = vadd.f32 %v1289, %v1583
      %v1721 = vadd.f32 %v1290, %v1586
      %v1722 = vadd.f32 %v1291, %v1588
      %v1723 = vadd.f32 %v1292, %v1591
      %v1724 = vadd.f32 %v1293, %v1593
      %v1725 = vadd.f32 %v1294, %v1596
      %v1726 = vadd.f32 %v1295, %v1598
      %v1727 = vadd.f32 %v1296, %v1601
      %v1728 = vadd.f32 %v1297, %v1603
      %v1729 = vadd.f32 %v1298, %v1606
      %v1730 = vadd.f32 %v1299, %v1608
      %v1731 = vadd.f32 %v1300, %v1611
      %v1732 = vadd.f32 %v1301, %v1613
      %v1733 = vadd.f32 %v1302, %v1616
      %v1734 = vadd.f32 %v1303, %v1618
      %v1735 = vadd.f32 %v1304, %v1621
      %v1736 = vadd.f32 %v1305, %v1623
      %v1737 = vadd.f32 %v1306, %v1626
      %v1738 = vadd.f32 %v1307, %v1628
      %v1739 = vadd.f32 %v1308, %v1631
      %v1740 = vadd.f32 %v1309, %v1633
      %v1741 = vadd.f32 %v1310, %v1636
      %v1742 = vadd.f32 %v1311, %v1638
      %v1743 = vadd.f32 %v1312, %v1641
      %v1744 = vadd.f32 %v1313, %v1643
      %v1745 = vadd.f32 %v1314, %v1646
      %v1746 = vadd.f32 %v1315, %v1648
      %v1747 = vadd.f32 %v1316, %v1651
      %v1748 = vadd.f32 %v1317, %v1653
      %v1749 = vadd.f32 %v1318, %v1656
      %v1750 = vadd.f32 %v1319, %v1658
      %v1751 = vadd.f32 %v1320, %v1661
      %v1752 = vadd.f32 %v1321, %v1663
      %v1753 = vadd.f32 %v1322, %v1666
      %v1754 = vadd.f32 %v1323, %v1668
      %v1755 = vadd.f32 %v1324, %v1671
      %v1756 = vadd.f32 %v1325, %v1673
      %v1757 = vadd.f32 %v1326, %v1676
      %v1758 = vadd.f32 %v1327, %v1678
      %v1759 = vadd.f32 %v1328, %v1681
      %v1760 = vadd.f32 %v1329, %v1683
      %v1761 = vadd.f32 %v1330, %v1686
      %v1762 = vadd.f32 %v1331, %v1688
      %v1763 = vadd.f32 %v1332, %v1691
      %v1764 = vadd.f32 %v1333, %v1693
      %v1765 = vadd.f32 %v1334, %v1696
      %v1766 = vadd.f32 %v1335, %v1698
      %v1767 = vadd.f32 %v1336, %v1701
      %v1768 = vadd.f32 %v1337, %v1703
      %v1769 = vld [vmem:[%s1338 + $0x1] sm:$0xff]
      %v1770 = vld [vmem:[%s1338 + $0x9] sm:$0xff]
      %v1771 = vld [vmem:[%s1338 + $0x11] sm:$0xff]
      %v1772 = vld [vmem:[%s1338 + $0x19] sm:$0xff]
      %v1773 = vld [vmem:[%s1338 + $0x29] sm:$0xff]
      %v1774 = vld [vmem:[%s1338 + $0x31] sm:$0xff]
      %v1775 = vld [vmem:[%s1338 + $0x39] sm:$0xff]
      %v1776 = vld [vmem:[%s1338 + $0x41] sm:$0xff]
      %v1777 = vld [vmem:[%s1338 + $0x51] sm:$0xff]
      %v1778 = vld [vmem:[%s1338 + $0x59] sm:$0xff]
      %v1779 = vld [vmem:[%s1338 + $0x61] sm:$0xff]
      %v1780 = vld [vmem:[%s1338 + $0x69] sm:$0xff]
      %v1781 = vld [vmem:[%s1338 + $0x79] sm:$0xff]
      %v1782 = vld [vmem:[%s1338 + $0x81] sm:$0xff]
      %v1783 = vld [vmem:[%s1338 + $0x89] sm:$0xff]
      %v1784 = vld [vmem:[%s1338 + $0x91] sm:$0xff]
      %v1785 = vld [vmem:[%s1338 + $0xa1] sm:$0xff]
      %v1786 = vld [vmem:[%s1338 + $0xa9] sm:$0xff]
      %v1787 = vld [vmem:[%s1338 + $0xb1] sm:$0xff]
      %v1788 = vld [vmem:[%s1338 + $0xb9] sm:$0xff]
      %v1789 = vld [vmem:[%s1338 + $0xc9] sm:$0xff]
      %v1790 = vld [vmem:[%s1338 + $0xd1] sm:$0xff]
      %v1791 = vld [vmem:[%s1338 + $0xd9] sm:$0xff]
      %v1792 = vld [vmem:[%s1338 + $0xe1] sm:$0xff]
      %v1793 = vld [vmem:[%s1338 + $0xf1] sm:$0xff]
      %v1794 = vld [vmem:[%s1338 + $0xf9] sm:$0xff]
      %v1795 = vld [vmem:[%s1338 + $0x101] sm:$0xff]
      %v1796 = vld [vmem:[%s1338 + $0x109] sm:$0xff]
      %v1797 = vld [vmem:[%s1338 + $0x119] sm:$0xff]
      %v1798 = vld [vmem:[%s1338 + $0x121] sm:$0xff]
      %v1799 = vld [vmem:[%s1338 + $0x129] sm:$0xff]
      %v1800 = vld [vmem:[%s1338 + $0x131] sm:$0xff]
      %v1801 = vld [vmem:[%s1338 + $0x141] sm:$0xff]
      %v1802 = vld [vmem:[%s1338 + $0x149] sm:$0xff]
      %v1803 = vld [vmem:[%s1338 + $0x151] sm:$0xff]
      %v1804 = vld [vmem:[%s1338 + $0x159] sm:$0xff]
      %v1805 = vld [vmem:[%s1338 + $0x169] sm:$0xff]
      %v1806 = vld [vmem:[%s1338 + $0x171] sm:$0xff]
      %v1807 = vld [vmem:[%s1338 + $0x179] sm:$0xff]
      %v1808 = vld [vmem:[%s1338 + $0x181] sm:$0xff]
      %v1809 = vld [vmem:[%s1338 + $0x191] sm:$0xff]
      %v1810 = vld [vmem:[%s1338 + $0x199] sm:$0xff]
      %v1811 = vld [vmem:[%s1338 + $0x1a1] sm:$0xff]
      %v1812 = vld [vmem:[%s1338 + $0x1a9] sm:$0xff]
      %v1813 = vld [vmem:[%s1338 + $0x1b9] sm:$0xff]
      %v1814 = vld [vmem:[%s1338 + $0x1c1] sm:$0xff]
      %v1815 = vld [vmem:[%s1338 + $0x1c9] sm:$0xff]
      %v1816 = vld [vmem:[%s1338 + $0x1d1] sm:$0xff]
      %v1817 = vld [vmem:[%s1338 + $0x1e1] sm:$0xff]
      %v1818 = vld [vmem:[%s1338 + $0x1e9] sm:$0xff]
      %v1819 = vld [vmem:[%s1338 + $0x1f1] sm:$0xff]
      %v1820 = vld [vmem:[%s1338 + $0x1f9] sm:$0xff]
      %v1821 = vld [vmem:[%s1338 + $0x209] sm:$0xff]
      %v1822 = vld [vmem:[%s1338 + $0x211] sm:$0xff]
      %v1823 = vld [vmem:[%s1338 + $0x219] sm:$0xff]
      %v1824 = vld [vmem:[%s1338 + $0x221] sm:$0xff]
      %v1825 = vld [vmem:[%s1338 + $0x231] sm:$0xff]
      %v1826 = vld [vmem:[%s1338 + $0x239] sm:$0xff]
      %v1827 = vld [vmem:[%s1338 + $0x241] sm:$0xff]
      %v1828 = vld [vmem:[%s1338 + $0x249] sm:$0xff]
      %v1829 = vld [vmem:[%s1338 + $0x259] sm:$0xff]
      %v1830 = vld [vmem:[%s1338 + $0x261] sm:$0xff]
      %v1831 = vld [vmem:[%s1338 + $0x269] sm:$0xff]
      %v1832 = vld [vmem:[%s1338 + $0x271] sm:$0xff]
      %v1833 = vpack.c.bf16 %v1770, %v1769
      %v1834 = vpack.c.bf16 %v1772, %v1771
      %v1835 = vpack.c.bf16 %v1774, %v1773
      %v1836 = vpack.c.bf16 %v1776, %v1775
      %v1837 = vpack.c.bf16 %v1778, %v1777
      %v1838 = vpack.c.bf16 %v1780, %v1779
      %v1839 = vpack.c.bf16 %v1782, %v1781
      %v1840 = vpack.c.bf16 %v1784, %v1783
      %v1841 = vpack.c.bf16 %v1786, %v1785
      %v1842 = vpack.c.bf16 %v1788, %v1787
      %v1843 = vpack.c.bf16 %v1790, %v1789
      %v1844 = vpack.c.bf16 %v1792, %v1791
      %v1845 = vpack.c.bf16 %v1794, %v1793
      %v1846 = vpack.c.bf16 %v1796, %v1795
      %v1847 = vpack.c.bf16 %v1798, %v1797
      %v1848 = vpack.c.bf16 %v1800, %v1799
      %v1849 = vpack.c.bf16 %v1802, %v1801
      %v1850 = vpack.c.bf16 %v1804, %v1803
      %v1851 = vpack.c.bf16 %v1806, %v1805
      %v1852 = vpack.c.bf16 %v1808, %v1807
      %v1853 = vpack.c.bf16 %v1810, %v1809
      %v1854 = vpack.c.bf16 %v1812, %v1811
      %v1855 = vpack.c.bf16 %v1814, %v1813
      %v1856 = vpack.c.bf16 %v1816, %v1815
      %v1857 = vpack.c.bf16 %v1818, %v1817
      %v1858 = vpack.c.bf16 %v1820, %v1819
      %v1859 = vpack.c.bf16 %v1822, %v1821
      %v1860 = vpack.c.bf16 %v1824, %v1823
      %v1861 = vpack.c.bf16 %v1826, %v1825
      %v1862 = vpack.c.bf16 %v1828, %v1827
      %v1863 = vpack.c.bf16 %v1830, %v1829
      %v1864 = vpack.c.bf16 %v1832, %v1831
      %s1865 = scalar_lea.vmem %s1, 8
      %v1866 = vld [vmem:[%s1865] sm:$0x3]
      %v1868 = vsel %vm367, %v1833, 0
      %v1871 = vsel %vm367, %v1834, 0
      %v1874 = vsel %vm367, %v1835, 0
      %v1877 = vsel %vm367, %v1836, 0
      %v1880 = vsel %vm367, %v1837, 0
      %v1883 = vsel %vm367, %v1838, 0
      %v1886 = vsel %vm367, %v1839, 0
      %v1889 = vsel %vm367, %v1840, 0
      %v1892 = vsel %vm367, %v1841, 0
      %v1895 = vsel %vm367, %v1842, 0
      %v1898 = vsel %vm367, %v1843, 0
      %v1901 = vsel %vm367, %v1844, 0
      %v1904 = vsel %vm367, %v1845, 0
      %v1907 = vsel %vm367, %v1846, 0
      %v1910 = vsel %vm367, %v1847, 0
      %v1913 = vsel %vm367, %v1848, 0
      %v1916 = vsel %vm367, %v1849, 0
      %v1919 = vsel %vm367, %v1850, 0
      %v1922 = vsel %vm367, %v1851, 0
      %v1925 = vsel %vm367, %v1852, 0
      %v1928 = vsel %vm367, %v1853, 0
      %v1931 = vsel %vm367, %v1854, 0
      %v1934 = vsel %vm367, %v1855, 0
      %v1937 = vsel %vm367, %v1856, 0
      %v1940 = vsel %vm367, %v1857, 0
      %v1943 = vsel %vm367, %v1858, 0
      %v1946 = vsel %vm367, %v1859, 0
      %v1949 = vsel %vm367, %v1860, 0
      %v1952 = vsel %vm367, %v1861, 0
      %v1955 = vsel %vm367, %v1862, 0
      %v1958 = vsel %vm367, %v1863, 0
      %v1961 = vsel %vm367, %v1864, 0
      %v1964 = vand.u32 %v1866, %v467
      %1966 = vmatpush.bf16.msra.mxu0 0
      %1967 = vmatpush.bf16.msra.mxu0 0
      %1968 = vmatpush.bf16.msra.mxu0 0
      %1969 = vmatpush.bf16.msra.mxu0 0
      %1970 = vmatpush.bf16.msra.mxu0 0
      %1971 = vmatpush.bf16.msra.mxu0 0
      %1972 = vmatpush.bf16.msra.mxu0 0
      %1973 = vmatpush.bf16.msra.mxu0 %v1964
      %1974 = vmatmul.bf16.gmra.mxu0 %v1868
      %v1975 = vpop.f32.mrf.mxu0
      %v1976 = vadd.f32 0.0, %v1975
      %v1977 = vpop.f32.mrf.mxu0
      %v1978 = vadd.f32 0.0, %v1977
      %1979 = vmatmul.bf16.gmra.mxu0 %v1871
      %v1980 = vpop.f32.mrf.mxu0
      %v1981 = vadd.f32 0.0, %v1980
      %v1982 = vpop.f32.mrf.mxu0
      %v1983 = vadd.f32 0.0, %v1982
      %1984 = vmatmul.bf16.gmra.mxu0 %v1874
      %v1985 = vpop.f32.mrf.mxu0
      %v1986 = vadd.f32 0.0, %v1985
      %v1987 = vpop.f32.mrf.mxu0
      %v1988 = vadd.f32 0.0, %v1987
      %1989 = vmatmul.bf16.gmra.mxu0 %v1877
      %v1990 = vpop.f32.mrf.mxu0
      %v1991 = vadd.f32 0.0, %v1990
      %v1992 = vpop.f32.mrf.mxu0
      %v1993 = vadd.f32 0.0, %v1992
      %1994 = vmatmul.bf16.gmra.mxu0 %v1880
      %v1995 = vpop.f32.mrf.mxu0
      %v1996 = vadd.f32 0.0, %v1995
      %v1997 = vpop.f32.mrf.mxu0
      %v1998 = vadd.f32 0.0, %v1997
      %1999 = vmatmul.bf16.gmra.mxu0 %v1883
      %v2000 = vpop.f32.mrf.mxu0
      %v2001 = vadd.f32 0.0, %v2000
      %v2002 = vpop.f32.mrf.mxu0
      %v2003 = vadd.f32 0.0, %v2002
      %2004 = vmatmul.bf16.gmra.mxu0 %v1886
      %v2005 = vpop.f32.mrf.mxu0
      %v2006 = vadd.f32 0.0, %v2005
      %v2007 = vpop.f32.mrf.mxu0
      %v2008 = vadd.f32 0.0, %v2007
      %2009 = vmatmul.bf16.gmra.mxu0 %v1889
      %v2010 = vpop.f32.mrf.mxu0
      %v2011 = vadd.f32 0.0, %v2010
      %v2012 = vpop.f32.mrf.mxu0
      %v2013 = vadd.f32 0.0, %v2012
      %2014 = vmatmul.bf16.gmra.mxu0 %v1892
      %v2015 = vpop.f32.mrf.mxu0
      %v2016 = vadd.f32 0.0, %v2015
      %v2017 = vpop.f32.mrf.mxu0
      %v2018 = vadd.f32 0.0, %v2017
      %2019 = vmatmul.bf16.gmra.mxu0 %v1895
      %v2020 = vpop.f32.mrf.mxu0
      %v2021 = vadd.f32 0.0, %v2020
      %v2022 = vpop.f32.mrf.mxu0
      %v2023 = vadd.f32 0.0, %v2022
      %2024 = vmatmul.bf16.gmra.mxu0 %v1898
      %v2025 = vpop.f32.mrf.mxu0
      %v2026 = vadd.f32 0.0, %v2025
      %v2027 = vpop.f32.mrf.mxu0
      %v2028 = vadd.f32 0.0, %v2027
      %2029 = vmatmul.bf16.gmra.mxu0 %v1901
      %v2030 = vpop.f32.mrf.mxu0
      %v2031 = vadd.f32 0.0, %v2030
      %v2032 = vpop.f32.mrf.mxu0
      %v2033 = vadd.f32 0.0, %v2032
      %2034 = vmatmul.bf16.gmra.mxu0 %v1904
      %v2035 = vpop.f32.mrf.mxu0
      %v2036 = vadd.f32 0.0, %v2035
      %v2037 = vpop.f32.mrf.mxu0
      %v2038 = vadd.f32 0.0, %v2037
      %2039 = vmatmul.bf16.gmra.mxu0 %v1907
      %v2040 = vpop.f32.mrf.mxu0
      %v2041 = vadd.f32 0.0, %v2040
      %v2042 = vpop.f32.mrf.mxu0
      %v2043 = vadd.f32 0.0, %v2042
      %2044 = vmatmul.bf16.gmra.mxu0 %v1910
      %v2045 = vpop.f32.mrf.mxu0
      %v2046 = vadd.f32 0.0, %v2045
      %v2047 = vpop.f32.mrf.mxu0
      %v2048 = vadd.f32 0.0, %v2047
      %2049 = vmatmul.bf16.gmra.mxu0 %v1913
      %v2050 = vpop.f32.mrf.mxu0
      %v2051 = vadd.f32 0.0, %v2050
      %v2052 = vpop.f32.mrf.mxu0
      %v2053 = vadd.f32 0.0, %v2052
      %2054 = vmatmul.bf16.gmra.mxu0 %v1916
      %v2055 = vpop.f32.mrf.mxu0
      %v2056 = vadd.f32 0.0, %v2055
      %v2057 = vpop.f32.mrf.mxu0
      %v2058 = vadd.f32 0.0, %v2057
      %2059 = vmatmul.bf16.gmra.mxu0 %v1919
      %v2060 = vpop.f32.mrf.mxu0
      %v2061 = vadd.f32 0.0, %v2060
      %v2062 = vpop.f32.mrf.mxu0
      %v2063 = vadd.f32 0.0, %v2062
      %2064 = vmatmul.bf16.gmra.mxu0 %v1922
      %v2065 = vpop.f32.mrf.mxu0
      %v2066 = vadd.f32 0.0, %v2065
      %v2067 = vpop.f32.mrf.mxu0
      %v2068 = vadd.f32 0.0, %v2067
      %2069 = vmatmul.bf16.gmra.mxu0 %v1925
      %v2070 = vpop.f32.mrf.mxu0
      %v2071 = vadd.f32 0.0, %v2070
      %v2072 = vpop.f32.mrf.mxu0
      %v2073 = vadd.f32 0.0, %v2072
      %2074 = vmatmul.bf16.gmra.mxu0 %v1928
      %v2075 = vpop.f32.mrf.mxu0
      %v2076 = vadd.f32 0.0, %v2075
      %v2077 = vpop.f32.mrf.mxu0
      %v2078 = vadd.f32 0.0, %v2077
      %2079 = vmatmul.bf16.gmra.mxu0 %v1931
      %v2080 = vpop.f32.mrf.mxu0
      %v2081 = vadd.f32 0.0, %v2080
      %v2082 = vpop.f32.mrf.mxu0
      %v2083 = vadd.f32 0.0, %v2082
      %2084 = vmatmul.bf16.gmra.mxu0 %v1934
      %v2085 = vpop.f32.mrf.mxu0
      %v2086 = vadd.f32 0.0, %v2085
      %v2087 = vpop.f32.mrf.mxu0
      %v2088 = vadd.f32 0.0, %v2087
      %2089 = vmatmul.bf16.gmra.mxu0 %v1937
      %v2090 = vpop.f32.mrf.mxu0
      %v2091 = vadd.f32 0.0, %v2090
      %v2092 = vpop.f32.mrf.mxu0
      %v2093 = vadd.f32 0.0, %v2092
      %2094 = vmatmul.bf16.gmra.mxu0 %v1940
      %v2095 = vpop.f32.mrf.mxu0
      %v2096 = vadd.f32 0.0, %v2095
      %v2097 = vpop.f32.mrf.mxu0
      %v2098 = vadd.f32 0.0, %v2097
      %2099 = vmatmul.bf16.gmra.mxu0 %v1943
      %v2100 = vpop.f32.mrf.mxu0
      %v2101 = vadd.f32 0.0, %v2100
      %v2102 = vpop.f32.mrf.mxu0
      %v2103 = vadd.f32 0.0, %v2102
      %2104 = vmatmul.bf16.gmra.mxu0 %v1946
      %v2105 = vpop.f32.mrf.mxu0
      %v2106 = vadd.f32 0.0, %v2105
      %v2107 = vpop.f32.mrf.mxu0
      %v2108 = vadd.f32 0.0, %v2107
      %2109 = vmatmul.bf16.gmra.mxu0 %v1949
      %v2110 = vpop.f32.mrf.mxu0
      %v2111 = vadd.f32 0.0, %v2110
      %v2112 = vpop.f32.mrf.mxu0
      %v2113 = vadd.f32 0.0, %v2112
      %2114 = vmatmul.bf16.gmra.mxu0 %v1952
      %v2115 = vpop.f32.mrf.mxu0
      %v2116 = vadd.f32 0.0, %v2115
      %v2117 = vpop.f32.mrf.mxu0
      %v2118 = vadd.f32 0.0, %v2117
      %2119 = vmatmul.bf16.gmra.mxu0 %v1955
      %v2120 = vpop.f32.mrf.mxu0
      %v2121 = vadd.f32 0.0, %v2120
      %v2122 = vpop.f32.mrf.mxu0
      %v2123 = vadd.f32 0.0, %v2122
      %2124 = vmatmul.bf16.gmra.mxu0 %v1958
      %v2125 = vpop.f32.mrf.mxu0
      %v2126 = vadd.f32 0.0, %v2125
      %v2127 = vpop.f32.mrf.mxu0
      %v2128 = vadd.f32 0.0, %v2127
      %2129 = vmatmul.bf16.gmra.mxu0 %v1961
      %v2130 = vpop.f32.mrf.mxu0
      %v2131 = vadd.f32 0.0, %v2130
      %v2132 = vpop.f32.mrf.mxu0
      %v2133 = vadd.f32 0.0, %v2132
      %2134 = vdwg.mxu0
      %v2135 = vadd.f32 %v1705, %v1976
      %v2136 = vadd.f32 %v1706, %v1978
      %v2137 = vadd.f32 %v1707, %v1981
      %v2138 = vadd.f32 %v1708, %v1983
      %v2139 = vadd.f32 %v1709, %v1986
      %v2140 = vadd.f32 %v1710, %v1988
      %v2141 = vadd.f32 %v1711, %v1991
      %v2142 = vadd.f32 %v1712, %v1993
      %v2143 = vadd.f32 %v1713, %v1996
      %v2144 = vadd.f32 %v1714, %v1998
      %v2145 = vadd.f32 %v1715, %v2001
      %v2146 = vadd.f32 %v1716, %v2003
      %v2147 = vadd.f32 %v1717, %v2006
      %v2148 = vadd.f32 %v1718, %v2008
      %v2149 = vadd.f32 %v1719, %v2011
      %v2150 = vadd.f32 %v1720, %v2013
      %v2151 = vadd.f32 %v1721, %v2016
      %v2152 = vadd.f32 %v1722, %v2018
      %v2153 = vadd.f32 %v1723, %v2021
      %v2154 = vadd.f32 %v1724, %v2023
      %v2155 = vadd.f32 %v1725, %v2026
      %v2156 = vadd.f32 %v1726, %v2028
      %v2157 = vadd.f32 %v1727, %v2031
      %v2158 = vadd.f32 %v1728, %v2033
      %v2159 = vadd.f32 %v1729, %v2036
      %v2160 = vadd.f32 %v1730, %v2038
      %v2161 = vadd.f32 %v1731, %v2041
      %v2162 = vadd.f32 %v1732, %v2043
      %v2163 = vadd.f32 %v1733, %v2046
      %v2164 = vadd.f32 %v1734, %v2048
      %v2165 = vadd.f32 %v1735, %v2051
      %v2166 = vadd.f32 %v1736, %v2053
      %v2167 = vadd.f32 %v1737, %v2056
      %v2168 = vadd.f32 %v1738, %v2058
      %v2169 = vadd.f32 %v1739, %v2061
      %v2170 = vadd.f32 %v1740, %v2063
      %v2171 = vadd.f32 %v1741, %v2066
      %v2172 = vadd.f32 %v1742, %v2068
      %v2173 = vadd.f32 %v1743, %v2071
      %v2174 = vadd.f32 %v1744, %v2073
      %v2175 = vadd.f32 %v1745, %v2076
      %v2176 = vadd.f32 %v1746, %v2078
      %v2177 = vadd.f32 %v1747, %v2081
      %v2178 = vadd.f32 %v1748, %v2083
      %v2179 = vadd.f32 %v1749, %v2086
      %v2180 = vadd.f32 %v1750, %v2088
      %v2181 = vadd.f32 %v1751, %v2091
      %v2182 = vadd.f32 %v1752, %v2093
      %v2183 = vadd.f32 %v1753, %v2096
      %v2184 = vadd.f32 %v1754, %v2098
      %v2185 = vadd.f32 %v1755, %v2101
      %v2186 = vadd.f32 %v1756, %v2103
      %v2187 = vadd.f32 %v1757, %v2106
      %v2188 = vadd.f32 %v1758, %v2108
      %v2189 = vadd.f32 %v1759, %v2111
      %v2190 = vadd.f32 %v1760, %v2113
      %v2191 = vadd.f32 %v1761, %v2116
      %v2192 = vadd.f32 %v1762, %v2118
      %v2193 = vadd.f32 %v1763, %v2121
      %v2194 = vadd.f32 %v1764, %v2123
      %v2195 = vadd.f32 %v1765, %v2126
      %v2196 = vadd.f32 %v1766, %v2128
      %v2197 = vadd.f32 %v1767, %v2131
      %v2198 = vadd.f32 %v1768, %v2133
      %v2199 = vld [vmem:[%s1338 + $0x2] sm:$0xff]
      %v2200 = vld [vmem:[%s1338 + $0xa] sm:$0xff]
      %v2201 = vld [vmem:[%s1338 + $0x12] sm:$0xff]
      %v2202 = vld [vmem:[%s1338 + $0x1a] sm:$0xff]
      %v2203 = vld [vmem:[%s1338 + $0x2a] sm:$0xff]
      %v2204 = vld [vmem:[%s1338 + $0x32] sm:$0xff]
      %v2205 = vld [vmem:[%s1338 + $0x3a] sm:$0xff]
      %v2206 = vld [vmem:[%s1338 + $0x42] sm:$0xff]
      %v2207 = vld [vmem:[%s1338 + $0x52] sm:$0xff]
      %v2208 = vld [vmem:[%s1338 + $0x5a] sm:$0xff]
      %v2209 = vld [vmem:[%s1338 + $0x62] sm:$0xff]
      %v2210 = vld [vmem:[%s1338 + $0x6a] sm:$0xff]
      %v2211 = vld [vmem:[%s1338 + $0x7a] sm:$0xff]
      %v2212 = vld [vmem:[%s1338 + $0x82] sm:$0xff]
      %v2213 = vld [vmem:[%s1338 + $0x8a] sm:$0xff]
      %v2214 = vld [vmem:[%s1338 + $0x92] sm:$0xff]
      %v2215 = vld [vmem:[%s1338 + $0xa2] sm:$0xff]
      %v2216 = vld [vmem:[%s1338 + $0xaa] sm:$0xff]
      %v2217 = vld [vmem:[%s1338 + $0xb2] sm:$0xff]
      %v2218 = vld [vmem:[%s1338 + $0xba] sm:$0xff]
      %v2219 = vld [vmem:[%s1338 + $0xca] sm:$0xff]
      %v2220 = vld [vmem:[%s1338 + $0xd2] sm:$0xff]
      %v2221 = vld [vmem:[%s1338 + $0xda] sm:$0xff]
      %v2222 = vld [vmem:[%s1338 + $0xe2] sm:$0xff]
      %v2223 = vld [vmem:[%s1338 + $0xf2] sm:$0xff]
      %v2224 = vld [vmem:[%s1338 + $0xfa] sm:$0xff]
      %v2225 = vld [vmem:[%s1338 + $0x102] sm:$0xff]
      %v2226 = vld [vmem:[%s1338 + $0x10a] sm:$0xff]
      %v2227 = vld [vmem:[%s1338 + $0x11a] sm:$0xff]
      %v2228 = vld [vmem:[%s1338 + $0x122] sm:$0xff]
      %v2229 = vld [vmem:[%s1338 + $0x12a] sm:$0xff]
      %v2230 = vld [vmem:[%s1338 + $0x132] sm:$0xff]
      %v2231 = vld [vmem:[%s1338 + $0x142] sm:$0xff]
      %v2232 = vld [vmem:[%s1338 + $0x14a] sm:$0xff]
      %v2233 = vld [vmem:[%s1338 + $0x152] sm:$0xff]
      %v2234 = vld [vmem:[%s1338 + $0x15a] sm:$0xff]
      %v2235 = vld [vmem:[%s1338 + $0x16a] sm:$0xff]
      %v2236 = vld [vmem:[%s1338 + $0x172] sm:$0xff]
      %v2237 = vld [vmem:[%s1338 + $0x17a] sm:$0xff]
      %v2238 = vld [vmem:[%s1338 + $0x182] sm:$0xff]
      %v2239 = vld [vmem:[%s1338 + $0x192] sm:$0xff]
      %v2240 = vld [vmem:[%s1338 + $0x19a] sm:$0xff]
      %v2241 = vld [vmem:[%s1338 + $0x1a2] sm:$0xff]
      %v2242 = vld [vmem:[%s1338 + $0x1aa] sm:$0xff]
      %v2243 = vld [vmem:[%s1338 + $0x1ba] sm:$0xff]
      %v2244 = vld [vmem:[%s1338 + $0x1c2] sm:$0xff]
      %v2245 = vld [vmem:[%s1338 + $0x1ca] sm:$0xff]
      %v2246 = vld [vmem:[%s1338 + $0x1d2] sm:$0xff]
      %v2247 = vld [vmem:[%s1338 + $0x1e2] sm:$0xff]
      %v2248 = vld [vmem:[%s1338 + $0x1ea] sm:$0xff]
      %v2249 = vld [vmem:[%s1338 + $0x1f2] sm:$0xff]
      %v2250 = vld [vmem:[%s1338 + $0x1fa] sm:$0xff]
      %v2251 = vld [vmem:[%s1338 + $0x20a] sm:$0xff]
      %v2252 = vld [vmem:[%s1338 + $0x212] sm:$0xff]
      %v2253 = vld [vmem:[%s1338 + $0x21a] sm:$0xff]
      %v2254 = vld [vmem:[%s1338 + $0x222] sm:$0xff]
      %v2255 = vld [vmem:[%s1338 + $0x232] sm:$0xff]
      %v2256 = vld [vmem:[%s1338 + $0x23a] sm:$0xff]
      %v2257 = vld [vmem:[%s1338 + $0x242] sm:$0xff]
      %v2258 = vld [vmem:[%s1338 + $0x24a] sm:$0xff]
      %v2259 = vld [vmem:[%s1338 + $0x25a] sm:$0xff]
      %v2260 = vld [vmem:[%s1338 + $0x262] sm:$0xff]
      %v2261 = vld [vmem:[%s1338 + $0x26a] sm:$0xff]
      %v2262 = vld [vmem:[%s1338 + $0x272] sm:$0xff]
      %v2263 = vpack.c.bf16 %v2200, %v2199
      %v2264 = vpack.c.bf16 %v2202, %v2201
      %v2265 = vpack.c.bf16 %v2204, %v2203
      %v2266 = vpack.c.bf16 %v2206, %v2205
      %v2267 = vpack.c.bf16 %v2208, %v2207
      %v2268 = vpack.c.bf16 %v2210, %v2209
      %v2269 = vpack.c.bf16 %v2212, %v2211
      %v2270 = vpack.c.bf16 %v2214, %v2213
      %v2271 = vpack.c.bf16 %v2216, %v2215
      %v2272 = vpack.c.bf16 %v2218, %v2217
      %v2273 = vpack.c.bf16 %v2220, %v2219
      %v2274 = vpack.c.bf16 %v2222, %v2221
      %v2275 = vpack.c.bf16 %v2224, %v2223
      %v2276 = vpack.c.bf16 %v2226, %v2225
      %v2277 = vpack.c.bf16 %v2228, %v2227
      %v2278 = vpack.c.bf16 %v2230, %v2229
      %v2279 = vpack.c.bf16 %v2232, %v2231
      %v2280 = vpack.c.bf16 %v2234, %v2233
      %v2281 = vpack.c.bf16 %v2236, %v2235
      %v2282 = vpack.c.bf16 %v2238, %v2237
      %v2283 = vpack.c.bf16 %v2240, %v2239
      %v2284 = vpack.c.bf16 %v2242, %v2241
      %v2285 = vpack.c.bf16 %v2244, %v2243
      %v2286 = vpack.c.bf16 %v2246, %v2245
      %v2287 = vpack.c.bf16 %v2248, %v2247
      %v2288 = vpack.c.bf16 %v2250, %v2249
      %v2289 = vpack.c.bf16 %v2252, %v2251
      %v2290 = vpack.c.bf16 %v2254, %v2253
      %v2291 = vpack.c.bf16 %v2256, %v2255
      %v2292 = vpack.c.bf16 %v2258, %v2257
      %v2293 = vpack.c.bf16 %v2260, %v2259
      %v2294 = vpack.c.bf16 %v2262, %v2261
      %s2295 = scalar_lea.vmem %s1, 10
      %v2296 = vld [vmem:[%s2295] sm:$0x3]
      %v2298 = vsel %vm367, %v2263, 0
      %v2301 = vsel %vm367, %v2264, 0
      %v2304 = vsel %vm367, %v2265, 0
      %v2307 = vsel %vm367, %v2266, 0
      %v2310 = vsel %vm367, %v2267, 0
      %v2313 = vsel %vm367, %v2268, 0
      %v2316 = vsel %vm367, %v2269, 0
      %v2319 = vsel %vm367, %v2270, 0
      %v2322 = vsel %vm367, %v2271, 0
      %v2325 = vsel %vm367, %v2272, 0
      %v2328 = vsel %vm367, %v2273, 0
      %v2331 = vsel %vm367, %v2274, 0
      %v2334 = vsel %vm367, %v2275, 0
      %v2337 = vsel %vm367, %v2276, 0
      %v2340 = vsel %vm367, %v2277, 0
      %v2343 = vsel %vm367, %v2278, 0
      %v2346 = vsel %vm367, %v2279, 0
      %v2349 = vsel %vm367, %v2280, 0
      %v2352 = vsel %vm367, %v2281, 0
      %v2355 = vsel %vm367, %v2282, 0
      %v2358 = vsel %vm367, %v2283, 0
      %v2361 = vsel %vm367, %v2284, 0
      %v2364 = vsel %vm367, %v2285, 0
      %v2367 = vsel %vm367, %v2286, 0
      %v2370 = vsel %vm367, %v2287, 0
      %v2373 = vsel %vm367, %v2288, 0
      %v2376 = vsel %vm367, %v2289, 0
      %v2379 = vsel %vm367, %v2290, 0
      %v2382 = vsel %vm367, %v2291, 0
      %v2385 = vsel %vm367, %v2292, 0
      %v2388 = vsel %vm367, %v2293, 0
      %v2391 = vsel %vm367, %v2294, 0
      %v2394 = vand.u32 %v2296, %v467
      %2396 = vmatpush.bf16.msra.mxu0 0
      %2397 = vmatpush.bf16.msra.mxu0 0
      %2398 = vmatpush.bf16.msra.mxu0 0
      %2399 = vmatpush.bf16.msra.mxu0 0
      %2400 = vmatpush.bf16.msra.mxu0 0
      %2401 = vmatpush.bf16.msra.mxu0 0
      %2402 = vmatpush.bf16.msra.mxu0 0
      %2403 = vmatpush.bf16.msra.mxu0 %v2394
      %2404 = vmatmul.bf16.gmra.mxu0 %v2298
      %v2405 = vpop.f32.mrf.mxu0
      %v2406 = vadd.f32 0.0, %v2405
      %v2407 = vpop.f32.mrf.mxu0
      %v2408 = vadd.f32 0.0, %v2407
      %2409 = vmatmul.bf16.gmra.mxu0 %v2301
      %v2410 = vpop.f32.mrf.mxu0
      %v2411 = vadd.f32 0.0, %v2410
      %v2412 = vpop.f32.mrf.mxu0
      %v2413 = vadd.f32 0.0, %v2412
      %2414 = vmatmul.bf16.gmra.mxu0 %v2304
      %v2415 = vpop.f32.mrf.mxu0
      %v2416 = vadd.f32 0.0, %v2415
      %v2417 = vpop.f32.mrf.mxu0
      %v2418 = vadd.f32 0.0, %v2417
      %2419 = vmatmul.bf16.gmra.mxu0 %v2307
      %v2420 = vpop.f32.mrf.mxu0
      %v2421 = vadd.f32 0.0, %v2420
      %v2422 = vpop.f32.mrf.mxu0
      %v2423 = vadd.f32 0.0, %v2422
      %2424 = vmatmul.bf16.gmra.mxu0 %v2310
      %v2425 = vpop.f32.mrf.mxu0
      %v2426 = vadd.f32 0.0, %v2425
      %v2427 = vpop.f32.mrf.mxu0
      %v2428 = vadd.f32 0.0, %v2427
      %2429 = vmatmul.bf16.gmra.mxu0 %v2313
      %v2430 = vpop.f32.mrf.mxu0
      %v2431 = vadd.f32 0.0, %v2430
      %v2432 = vpop.f32.mrf.mxu0
      %v2433 = vadd.f32 0.0, %v2432
      %2434 = vmatmul.bf16.gmra.mxu0 %v2316
      %v2435 = vpop.f32.mrf.mxu0
      %v2436 = vadd.f32 0.0, %v2435
      %v2437 = vpop.f32.mrf.mxu0
      %v2438 = vadd.f32 0.0, %v2437
      %2439 = vmatmul.bf16.gmra.mxu0 %v2319
      %v2440 = vpop.f32.mrf.mxu0
      %v2441 = vadd.f32 0.0, %v2440
      %v2442 = vpop.f32.mrf.mxu0
      %v2443 = vadd.f32 0.0, %v2442
      %2444 = vmatmul.bf16.gmra.mxu0 %v2322
      %v2445 = vpop.f32.mrf.mxu0
      %v2446 = vadd.f32 0.0, %v2445
      %v2447 = vpop.f32.mrf.mxu0
      %v2448 = vadd.f32 0.0, %v2447
      %2449 = vmatmul.bf16.gmra.mxu0 %v2325
      %v2450 = vpop.f32.mrf.mxu0
      %v2451 = vadd.f32 0.0, %v2450
      %v2452 = vpop.f32.mrf.mxu0
      %v2453 = vadd.f32 0.0, %v2452
      %2454 = vmatmul.bf16.gmra.mxu0 %v2328
      %v2455 = vpop.f32.mrf.mxu0
      %v2456 = vadd.f32 0.0, %v2455
      %v2457 = vpop.f32.mrf.mxu0
      %v2458 = vadd.f32 0.0, %v2457
      %2459 = vmatmul.bf16.gmra.mxu0 %v2331
      %v2460 = vpop.f32.mrf.mxu0
      %v2461 = vadd.f32 0.0, %v2460
      %v2462 = vpop.f32.mrf.mxu0
      %v2463 = vadd.f32 0.0, %v2462
      %2464 = vmatmul.bf16.gmra.mxu0 %v2334
      %v2465 = vpop.f32.mrf.mxu0
      %v2466 = vadd.f32 0.0, %v2465
      %v2467 = vpop.f32.mrf.mxu0
      %v2468 = vadd.f32 0.0, %v2467
      %2469 = vmatmul.bf16.gmra.mxu0 %v2337
      %v2470 = vpop.f32.mrf.mxu0
      %v2471 = vadd.f32 0.0, %v2470
      %v2472 = vpop.f32.mrf.mxu0
      %v2473 = vadd.f32 0.0, %v2472
      %2474 = vmatmul.bf16.gmra.mxu0 %v2340
      %v2475 = vpop.f32.mrf.mxu0
      %v2476 = vadd.f32 0.0, %v2475
      %v2477 = vpop.f32.mrf.mxu0
      %v2478 = vadd.f32 0.0, %v2477
      %2479 = vmatmul.bf16.gmra.mxu0 %v2343
      %v2480 = vpop.f32.mrf.mxu0
      %v2481 = vadd.f32 0.0, %v2480
      %v2482 = vpop.f32.mrf.mxu0
      %v2483 = vadd.f32 0.0, %v2482
      %2484 = vmatmul.bf16.gmra.mxu0 %v2346
      %v2485 = vpop.f32.mrf.mxu0
      %v2486 = vadd.f32 0.0, %v2485
      %v2487 = vpop.f32.mrf.mxu0
      %v2488 = vadd.f32 0.0, %v2487
      %2489 = vmatmul.bf16.gmra.mxu0 %v2349
      %v2490 = vpop.f32.mrf.mxu0
      %v2491 = vadd.f32 0.0, %v2490
      %v2492 = vpop.f32.mrf.mxu0
      %v2493 = vadd.f32 0.0, %v2492
      %2494 = vmatmul.bf16.gmra.mxu0 %v2352
      %v2495 = vpop.f32.mrf.mxu0
      %v2496 = vadd.f32 0.0, %v2495
      %v2497 = vpop.f32.mrf.mxu0
      %v2498 = vadd.f32 0.0, %v2497
      %2499 = vmatmul.bf16.gmra.mxu0 %v2355
      %v2500 = vpop.f32.mrf.mxu0
      %v2501 = vadd.f32 0.0, %v2500
      %v2502 = vpop.f32.mrf.mxu0
      %v2503 = vadd.f32 0.0, %v2502
      %2504 = vmatmul.bf16.gmra.mxu0 %v2358
      %v2505 = vpop.f32.mrf.mxu0
      %v2506 = vadd.f32 0.0, %v2505
      %v2507 = vpop.f32.mrf.mxu0
      %v2508 = vadd.f32 0.0, %v2507
      %2509 = vmatmul.bf16.gmra.mxu0 %v2361
      %v2510 = vpop.f32.mrf.mxu0
      %v2511 = vadd.f32 0.0, %v2510
      %v2512 = vpop.f32.mrf.mxu0
      %v2513 = vadd.f32 0.0, %v2512
      %2514 = vmatmul.bf16.gmra.mxu0 %v2364
      %v2515 = vpop.f32.mrf.mxu0
      %v2516 = vadd.f32 0.0, %v2515
      %v2517 = vpop.f32.mrf.mxu0
      %v2518 = vadd.f32 0.0, %v2517
      %2519 = vmatmul.bf16.gmra.mxu0 %v2367
      %v2520 = vpop.f32.mrf.mxu0
      %v2521 = vadd.f32 0.0, %v2520
      %v2522 = vpop.f32.mrf.mxu0
      %v2523 = vadd.f32 0.0, %v2522
      %2524 = vmatmul.bf16.gmra.mxu0 %v2370
      %v2525 = vpop.f32.mrf.mxu0
      %v2526 = vadd.f32 0.0, %v2525
      %v2527 = vpop.f32.mrf.mxu0
      %v2528 = vadd.f32 0.0, %v2527
      %2529 = vmatmul.bf16.gmra.mxu0 %v2373
      %v2530 = vpop.f32.mrf.mxu0
      %v2531 = vadd.f32 0.0, %v2530
      %v2532 = vpop.f32.mrf.mxu0
      %v2533 = vadd.f32 0.0, %v2532
      %2534 = vmatmul.bf16.gmra.mxu0 %v2376
      %v2535 = vpop.f32.mrf.mxu0
      %v2536 = vadd.f32 0.0, %v2535
      %v2537 = vpop.f32.mrf.mxu0
      %v2538 = vadd.f32 0.0, %v2537
      %2539 = vmatmul.bf16.gmra.mxu0 %v2379
      %v2540 = vpop.f32.mrf.mxu0
      %v2541 = vadd.f32 0.0, %v2540
      %v2542 = vpop.f32.mrf.mxu0
      %v2543 = vadd.f32 0.0, %v2542
      %2544 = vmatmul.bf16.gmra.mxu0 %v2382
      %v2545 = vpop.f32.mrf.mxu0
      %v2546 = vadd.f32 0.0, %v2545
      %v2547 = vpop.f32.mrf.mxu0
      %v2548 = vadd.f32 0.0, %v2547
      %2549 = vmatmul.bf16.gmra.mxu0 %v2385
      %v2550 = vpop.f32.mrf.mxu0
      %v2551 = vadd.f32 0.0, %v2550
      %v2552 = vpop.f32.mrf.mxu0
      %v2553 = vadd.f32 0.0, %v2552
      %2554 = vmatmul.bf16.gmra.mxu0 %v2388
      %v2555 = vpop.f32.mrf.mxu0
      %v2556 = vadd.f32 0.0, %v2555
      %v2557 = vpop.f32.mrf.mxu0
      %v2558 = vadd.f32 0.0, %v2557
      %2559 = vmatmul.bf16.gmra.mxu0 %v2391
      %v2560 = vpop.f32.mrf.mxu0
      %v2561 = vadd.f32 0.0, %v2560
      %v2562 = vpop.f32.mrf.mxu0
      %v2563 = vadd.f32 0.0, %v2562
      %2564 = vdwg.mxu0
      %v2565 = vadd.f32 %v2135, %v2406
      %v2566 = vadd.f32 %v2136, %v2408
      %v2567 = vadd.f32 %v2137, %v2411
      %v2568 = vadd.f32 %v2138, %v2413
      %v2569 = vadd.f32 %v2139, %v2416
      %v2570 = vadd.f32 %v2140, %v2418
      %v2571 = vadd.f32 %v2141, %v2421
      %v2572 = vadd.f32 %v2142, %v2423
      %v2573 = vadd.f32 %v2143, %v2426
      %v2574 = vadd.f32 %v2144, %v2428
      %v2575 = vadd.f32 %v2145, %v2431
      %v2576 = vadd.f32 %v2146, %v2433
      %v2577 = vadd.f32 %v2147, %v2436
      %v2578 = vadd.f32 %v2148, %v2438
      %v2579 = vadd.f32 %v2149, %v2441
      %v2580 = vadd.f32 %v2150, %v2443
      %v2581 = vadd.f32 %v2151, %v2446
      %v2582 = vadd.f32 %v2152, %v2448
      %v2583 = vadd.f32 %v2153, %v2451
      %v2584 = vadd.f32 %v2154, %v2453
      %v2585 = vadd.f32 %v2155, %v2456
      %v2586 = vadd.f32 %v2156, %v2458
      %v2587 = vadd.f32 %v2157, %v2461
      %v2588 = vadd.f32 %v2158, %v2463
      %v2589 = vadd.f32 %v2159, %v2466
      %v2590 = vadd.f32 %v2160, %v2468
      %v2591 = vadd.f32 %v2161, %v2471
      %v2592 = vadd.f32 %v2162, %v2473
      %v2593 = vadd.f32 %v2163, %v2476
      %v2594 = vadd.f32 %v2164, %v2478
      %v2595 = vadd.f32 %v2165, %v2481
      %v2596 = vadd.f32 %v2166, %v2483
      %v2597 = vadd.f32 %v2167, %v2486
      %v2598 = vadd.f32 %v2168, %v2488
      %v2599 = vadd.f32 %v2169, %v2491
      %v2600 = vadd.f32 %v2170, %v2493
      %v2601 = vadd.f32 %v2171, %v2496
      %v2602 = vadd.f32 %v2172, %v2498
      %v2603 = vadd.f32 %v2173, %v2501
      %v2604 = vadd.f32 %v2174, %v2503
      %v2605 = vadd.f32 %v2175, %v2506
      %v2606 = vadd.f32 %v2176, %v2508
      %v2607 = vadd.f32 %v2177, %v2511
      %v2608 = vadd.f32 %v2178, %v2513
      %v2609 = vadd.f32 %v2179, %v2516
      %v2610 = vadd.f32 %v2180, %v2518
      %v2611 = vadd.f32 %v2181, %v2521
      %v2612 = vadd.f32 %v2182, %v2523
      %v2613 = vadd.f32 %v2183, %v2526
      %v2614 = vadd.f32 %v2184, %v2528
      %v2615 = vadd.f32 %v2185, %v2531
      %v2616 = vadd.f32 %v2186, %v2533
      %v2617 = vadd.f32 %v2187, %v2536
      %v2618 = vadd.f32 %v2188, %v2538
      %v2619 = vadd.f32 %v2189, %v2541
      %v2620 = vadd.f32 %v2190, %v2543
      %v2621 = vadd.f32 %v2191, %v2546
      %v2622 = vadd.f32 %v2192, %v2548
      %v2623 = vadd.f32 %v2193, %v2551
      %v2624 = vadd.f32 %v2194, %v2553
      %v2625 = vadd.f32 %v2195, %v2556
      %v2626 = vadd.f32 %v2196, %v2558
      %v2627 = vadd.f32 %v2197, %v2561
      %v2628 = vadd.f32 %v2198, %v2563
      %s2629 = scalar_lea.vmem %s165, 80
      %v2630 = vld [vmem:[%s2629] sm:$0xff]
      %v2631 = vld [vmem:[%s2629 + $0x8] sm:$0xff]
      %v2632 = vld [vmem:[%s2629 + $0x10] sm:$0xff]
      %v2633 = vld [vmem:[%s2629 + $0x18] sm:$0xff]
      %v2634 = vld [vmem:[%s2629 + $0x28] sm:$0xff]
      %v2635 = vld [vmem:[%s2629 + $0x30] sm:$0xff]
      %v2636 = vld [vmem:[%s2629 + $0x38] sm:$0xff]
      %v2637 = vld [vmem:[%s2629 + $0x40] sm:$0xff]
      %v2638 = vld [vmem:[%s2629 + $0x50] sm:$0xff]
      %v2639 = vld [vmem:[%s2629 + $0x58] sm:$0xff]
      %v2640 = vld [vmem:[%s2629 + $0x60] sm:$0xff]
      %v2641 = vld [vmem:[%s2629 + $0x68] sm:$0xff]
      %v2642 = vld [vmem:[%s2629 + $0x78] sm:$0xff]
      %v2643 = vld [vmem:[%s2629 + $0x80] sm:$0xff]
      %v2644 = vld [vmem:[%s2629 + $0x88] sm:$0xff]
      %v2645 = vld [vmem:[%s2629 + $0x90] sm:$0xff]
      %v2646 = vld [vmem:[%s2629 + $0xa0] sm:$0xff]
      %v2647 = vld [vmem:[%s2629 + $0xa8] sm:$0xff]
      %v2648 = vld [vmem:[%s2629 + $0xb0] sm:$0xff]
      %v2649 = vld [vmem:[%s2629 + $0xb8] sm:$0xff]
      %v2650 = vld [vmem:[%s2629 + $0xc8] sm:$0xff]
      %v2651 = vld [vmem:[%s2629 + $0xd0] sm:$0xff]
      %v2652 = vld [vmem:[%s2629 + $0xd8] sm:$0xff]
      %v2653 = vld [vmem:[%s2629 + $0xe0] sm:$0xff]
      %v2654 = vld [vmem:[%s2629 + $0xf0] sm:$0xff]
      %v2655 = vld [vmem:[%s2629 + $0xf8] sm:$0xff]
      %v2656 = vld [vmem:[%s2629 + $0x100] sm:$0xff]
      %v2657 = vld [vmem:[%s2629 + $0x108] sm:$0xff]
      %v2658 = vld [vmem:[%s2629 + $0x118] sm:$0xff]
      %v2659 = vld [vmem:[%s2629 + $0x120] sm:$0xff]
      %v2660 = vld [vmem:[%s2629 + $0x128] sm:$0xff]
      %v2661 = vld [vmem:[%s2629 + $0x130] sm:$0xff]
      %v2662 = vld [vmem:[%s2629 + $0x140] sm:$0xff]
      %v2663 = vld [vmem:[%s2629 + $0x148] sm:$0xff]
      %v2664 = vld [vmem:[%s2629 + $0x150] sm:$0xff]
      %v2665 = vld [vmem:[%s2629 + $0x158] sm:$0xff]
      %v2666 = vld [vmem:[%s2629 + $0x168] sm:$0xff]
      %v2667 = vld [vmem:[%s2629 + $0x170] sm:$0xff]
      %v2668 = vld [vmem:[%s2629 + $0x178] sm:$0xff]
      %v2669 = vld [vmem:[%s2629 + $0x180] sm:$0xff]
      %v2670 = vld [vmem:[%s2629 + $0x190] sm:$0xff]
      %v2671 = vld [vmem:[%s2629 + $0x198] sm:$0xff]
      %v2672 = vld [vmem:[%s2629 + $0x1a0] sm:$0xff]
      %v2673 = vld [vmem:[%s2629 + $0x1a8] sm:$0xff]
      %v2674 = vld [vmem:[%s2629 + $0x1b8] sm:$0xff]
      %v2675 = vld [vmem:[%s2629 + $0x1c0] sm:$0xff]
      %v2676 = vld [vmem:[%s2629 + $0x1c8] sm:$0xff]
      %v2677 = vld [vmem:[%s2629 + $0x1d0] sm:$0xff]
      %v2678 = vld [vmem:[%s2629 + $0x1e0] sm:$0xff]
      %v2679 = vld [vmem:[%s2629 + $0x1e8] sm:$0xff]
      %v2680 = vld [vmem:[%s2629 + $0x1f0] sm:$0xff]
      %v2681 = vld [vmem:[%s2629 + $0x1f8] sm:$0xff]
      %v2682 = vld [vmem:[%s2629 + $0x208] sm:$0xff]
      %v2683 = vld [vmem:[%s2629 + $0x210] sm:$0xff]
      %v2684 = vld [vmem:[%s2629 + $0x218] sm:$0xff]
      %v2685 = vld [vmem:[%s2629 + $0x220] sm:$0xff]
      %v2686 = vld [vmem:[%s2629 + $0x230] sm:$0xff]
      %v2687 = vld [vmem:[%s2629 + $0x238] sm:$0xff]
      %v2688 = vld [vmem:[%s2629 + $0x240] sm:$0xff]
      %v2689 = vld [vmem:[%s2629 + $0x248] sm:$0xff]
      %v2690 = vld [vmem:[%s2629 + $0x258] sm:$0xff]
      %v2691 = vld [vmem:[%s2629 + $0x260] sm:$0xff]
      %v2692 = vld [vmem:[%s2629 + $0x268] sm:$0xff]
      %v2693 = vld [vmem:[%s2629 + $0x270] sm:$0xff]
      %v2694 = vpack.c.bf16 %v2631, %v2630
      %v2695 = vpack.c.bf16 %v2633, %v2632
      %v2696 = vpack.c.bf16 %v2635, %v2634
      %v2697 = vpack.c.bf16 %v2637, %v2636
      %v2698 = vpack.c.bf16 %v2639, %v2638
      %v2699 = vpack.c.bf16 %v2641, %v2640
      %v2700 = vpack.c.bf16 %v2643, %v2642
      %v2701 = vpack.c.bf16 %v2645, %v2644
      %v2702 = vpack.c.bf16 %v2647, %v2646
      %v2703 = vpack.c.bf16 %v2649, %v2648
      %v2704 = vpack.c.bf16 %v2651, %v2650
      %v2705 = vpack.c.bf16 %v2653, %v2652
      %v2706 = vpack.c.bf16 %v2655, %v2654
      %v2707 = vpack.c.bf16 %v2657, %v2656
      %v2708 = vpack.c.bf16 %v2659, %v2658
      %v2709 = vpack.c.bf16 %v2661, %v2660
      %v2710 = vpack.c.bf16 %v2663, %v2662
      %v2711 = vpack.c.bf16 %v2665, %v2664
      %v2712 = vpack.c.bf16 %v2667, %v2666
      %v2713 = vpack.c.bf16 %v2669, %v2668
      %v2714 = vpack.c.bf16 %v2671, %v2670
      %v2715 = vpack.c.bf16 %v2673, %v2672
      %v2716 = vpack.c.bf16 %v2675, %v2674
      %v2717 = vpack.c.bf16 %v2677, %v2676
      %v2718 = vpack.c.bf16 %v2679, %v2678
      %v2719 = vpack.c.bf16 %v2681, %v2680
      %v2720 = vpack.c.bf16 %v2683, %v2682
      %v2721 = vpack.c.bf16 %v2685, %v2684
      %v2722 = vpack.c.bf16 %v2687, %v2686
      %v2723 = vpack.c.bf16 %v2689, %v2688
      %v2724 = vpack.c.bf16 %v2691, %v2690
      %v2725 = vpack.c.bf16 %v2693, %v2692
      %s2726 = scalar_lea.vmem %s1, 12
      %v2727 = vld [vmem:[%s2726] sm:$0x3]
      %v2729 = vsel %vm367, %v2694, 0
      %v2732 = vsel %vm367, %v2695, 0
      %v2735 = vsel %vm367, %v2696, 0
      %v2738 = vsel %vm367, %v2697, 0
      %v2741 = vsel %vm367, %v2698, 0
      %v2744 = vsel %vm367, %v2699, 0
      %v2747 = vsel %vm367, %v2700, 0
      %v2750 = vsel %vm367, %v2701, 0
      %v2753 = vsel %vm367, %v2702, 0
      %v2756 = vsel %vm367, %v2703, 0
      %v2759 = vsel %vm367, %v2704, 0
      %v2762 = vsel %vm367, %v2705, 0
      %v2765 = vsel %vm367, %v2706, 0
      %v2768 = vsel %vm367, %v2707, 0
      %v2771 = vsel %vm367, %v2708, 0
      %v2774 = vsel %vm367, %v2709, 0
      %v2777 = vsel %vm367, %v2710, 0
      %v2780 = vsel %vm367, %v2711, 0
      %v2783 = vsel %vm367, %v2712, 0
      %v2786 = vsel %vm367, %v2713, 0
      %v2789 = vsel %vm367, %v2714, 0
      %v2792 = vsel %vm367, %v2715, 0
      %v2795 = vsel %vm367, %v2716, 0
      %v2798 = vsel %vm367, %v2717, 0
      %v2801 = vsel %vm367, %v2718, 0
      %v2804 = vsel %vm367, %v2719, 0
      %v2807 = vsel %vm367, %v2720, 0
      %v2810 = vsel %vm367, %v2721, 0
      %v2813 = vsel %vm367, %v2722, 0
      %v2816 = vsel %vm367, %v2723, 0
      %v2819 = vsel %vm367, %v2724, 0
      %v2822 = vsel %vm367, %v2725, 0
      %v2825 = vand.u32 %v2727, %v467
      %2827 = vmatpush.bf16.msra.mxu0 0
      %2828 = vmatpush.bf16.msra.mxu0 0
      %2829 = vmatpush.bf16.msra.mxu0 0
      %2830 = vmatpush.bf16.msra.mxu0 0
      %2831 = vmatpush.bf16.msra.mxu0 0
      %2832 = vmatpush.bf16.msra.mxu0 0
      %2833 = vmatpush.bf16.msra.mxu0 0
      %2834 = vmatpush.bf16.msra.mxu0 %v2825
      %2835 = vmatmul.bf16.gmra.mxu0 %v2729
      %v2836 = vpop.f32.mrf.mxu0
      %v2837 = vadd.f32 0.0, %v2836
      %v2838 = vpop.f32.mrf.mxu0
      %v2839 = vadd.f32 0.0, %v2838
      %2840 = vmatmul.bf16.gmra.mxu0 %v2732
      %v2841 = vpop.f32.mrf.mxu0
      %v2842 = vadd.f32 0.0, %v2841
      %v2843 = vpop.f32.mrf.mxu0
      %v2844 = vadd.f32 0.0, %v2843
      %2845 = vmatmul.bf16.gmra.mxu0 %v2735
      %v2846 = vpop.f32.mrf.mxu0
      %v2847 = vadd.f32 0.0, %v2846
      %v2848 = vpop.f32.mrf.mxu0
      %v2849 = vadd.f32 0.0, %v2848
      %2850 = vmatmul.bf16.gmra.mxu0 %v2738
      %v2851 = vpop.f32.mrf.mxu0
      %v2852 = vadd.f32 0.0, %v2851
      %v2853 = vpop.f32.mrf.mxu0
      %v2854 = vadd.f32 0.0, %v2853
      %2855 = vmatmul.bf16.gmra.mxu0 %v2741
      %v2856 = vpop.f32.mrf.mxu0
      %v2857 = vadd.f32 0.0, %v2856
      %v2858 = vpop.f32.mrf.mxu0
      %v2859 = vadd.f32 0.0, %v2858
      %2860 = vmatmul.bf16.gmra.mxu0 %v2744
      %v2861 = vpop.f32.mrf.mxu0
      %v2862 = vadd.f32 0.0, %v2861
      %v2863 = vpop.f32.mrf.mxu0
      %v2864 = vadd.f32 0.0, %v2863
      %2865 = vmatmul.bf16.gmra.mxu0 %v2747
      %v2866 = vpop.f32.mrf.mxu0
      %v2867 = vadd.f32 0.0, %v2866
      %v2868 = vpop.f32.mrf.mxu0
      %v2869 = vadd.f32 0.0, %v2868
      %2870 = vmatmul.bf16.gmra.mxu0 %v2750
      %v2871 = vpop.f32.mrf.mxu0
      %v2872 = vadd.f32 0.0, %v2871
      %v2873 = vpop.f32.mrf.mxu0
      %v2874 = vadd.f32 0.0, %v2873
      %2875 = vmatmul.bf16.gmra.mxu0 %v2753
      %v2876 = vpop.f32.mrf.mxu0
      %v2877 = vadd.f32 0.0, %v2876
      %v2878 = vpop.f32.mrf.mxu0
      %v2879 = vadd.f32 0.0, %v2878
      %2880 = vmatmul.bf16.gmra.mxu0 %v2756
      %v2881 = vpop.f32.mrf.mxu0
      %v2882 = vadd.f32 0.0, %v2881
      %v2883 = vpop.f32.mrf.mxu0
      %v2884 = vadd.f32 0.0, %v2883
      %2885 = vmatmul.bf16.gmra.mxu0 %v2759
      %v2886 = vpop.f32.mrf.mxu0
      %v2887 = vadd.f32 0.0, %v2886
      %v2888 = vpop.f32.mrf.mxu0
      %v2889 = vadd.f32 0.0, %v2888
      %2890 = vmatmul.bf16.gmra.mxu0 %v2762
      %v2891 = vpop.f32.mrf.mxu0
      %v2892 = vadd.f32 0.0, %v2891
      %v2893 = vpop.f32.mrf.mxu0
      %v2894 = vadd.f32 0.0, %v2893
      %2895 = vmatmul.bf16.gmra.mxu0 %v2765
      %v2896 = vpop.f32.mrf.mxu0
      %v2897 = vadd.f32 0.0, %v2896
      %v2898 = vpop.f32.mrf.mxu0
      %v2899 = vadd.f32 0.0, %v2898
      %2900 = vmatmul.bf16.gmra.mxu0 %v2768
      %v2901 = vpop.f32.mrf.mxu0
      %v2902 = vadd.f32 0.0, %v2901
      %v2903 = vpop.f32.mrf.mxu0
      %v2904 = vadd.f32 0.0, %v2903
      %2905 = vmatmul.bf16.gmra.mxu0 %v2771
      %v2906 = vpop.f32.mrf.mxu0
      %v2907 = vadd.f32 0.0, %v2906
      %v2908 = vpop.f32.mrf.mxu0
      %v2909 = vadd.f32 0.0, %v2908
      %2910 = vmatmul.bf16.gmra.mxu0 %v2774
      %v2911 = vpop.f32.mrf.mxu0
      %v2912 = vadd.f32 0.0, %v2911
      %v2913 = vpop.f32.mrf.mxu0
      %v2914 = vadd.f32 0.0, %v2913
      %2915 = vmatmul.bf16.gmra.mxu0 %v2777
      %v2916 = vpop.f32.mrf.mxu0
      %v2917 = vadd.f32 0.0, %v2916
      %v2918 = vpop.f32.mrf.mxu0
      %v2919 = vadd.f32 0.0, %v2918
      %2920 = vmatmul.bf16.gmra.mxu0 %v2780
      %v2921 = vpop.f32.mrf.mxu0
      %v2922 = vadd.f32 0.0, %v2921
      %v2923 = vpop.f32.mrf.mxu0
      %v2924 = vadd.f32 0.0, %v2923
      %2925 = vmatmul.bf16.gmra.mxu0 %v2783
      %v2926 = vpop.f32.mrf.mxu0
      %v2927 = vadd.f32 0.0, %v2926
      %v2928 = vpop.f32.mrf.mxu0
      %v2929 = vadd.f32 0.0, %v2928
      %2930 = vmatmul.bf16.gmra.mxu0 %v2786
      %v2931 = vpop.f32.mrf.mxu0
      %v2932 = vadd.f32 0.0, %v2931
      %v2933 = vpop.f32.mrf.mxu0
      %v2934 = vadd.f32 0.0, %v2933
      %2935 = vmatmul.bf16.gmra.mxu0 %v2789
      %v2936 = vpop.f32.mrf.mxu0
      %v2937 = vadd.f32 0.0, %v2936
      %v2938 = vpop.f32.mrf.mxu0
      %v2939 = vadd.f32 0.0, %v2938
      %2940 = vmatmul.bf16.gmra.mxu0 %v2792
      %v2941 = vpop.f32.mrf.mxu0
      %v2942 = vadd.f32 0.0, %v2941
      %v2943 = vpop.f32.mrf.mxu0
      %v2944 = vadd.f32 0.0, %v2943
      %2945 = vmatmul.bf16.gmra.mxu0 %v2795
      %v2946 = vpop.f32.mrf.mxu0
      %v2947 = vadd.f32 0.0, %v2946
      %v2948 = vpop.f32.mrf.mxu0
      %v2949 = vadd.f32 0.0, %v2948
      %2950 = vmatmul.bf16.gmra.mxu0 %v2798
      %v2951 = vpop.f32.mrf.mxu0
      %v2952 = vadd.f32 0.0, %v2951
      %v2953 = vpop.f32.mrf.mxu0
      %v2954 = vadd.f32 0.0, %v2953
      %2955 = vmatmul.bf16.gmra.mxu0 %v2801
      %v2956 = vpop.f32.mrf.mxu0
      %v2957 = vadd.f32 0.0, %v2956
      %v2958 = vpop.f32.mrf.mxu0
      %v2959 = vadd.f32 0.0, %v2958
      %2960 = vmatmul.bf16.gmra.mxu0 %v2804
      %v2961 = vpop.f32.mrf.mxu0
      %v2962 = vadd.f32 0.0, %v2961
      %v2963 = vpop.f32.mrf.mxu0
      %v2964 = vadd.f32 0.0, %v2963
      %2965 = vmatmul.bf16.gmra.mxu0 %v2807
      %v2966 = vpop.f32.mrf.mxu0
      %v2967 = vadd.f32 0.0, %v2966
      %v2968 = vpop.f32.mrf.mxu0
      %v2969 = vadd.f32 0.0, %v2968
      %2970 = vmatmul.bf16.gmra.mxu0 %v2810
      %v2971 = vpop.f32.mrf.mxu0
      %v2972 = vadd.f32 0.0, %v2971
      %v2973 = vpop.f32.mrf.mxu0
      %v2974 = vadd.f32 0.0, %v2973
      %2975 = vmatmul.bf16.gmra.mxu0 %v2813
      %v2976 = vpop.f32.mrf.mxu0
      %v2977 = vadd.f32 0.0, %v2976
      %v2978 = vpop.f32.mrf.mxu0
      %v2979 = vadd.f32 0.0, %v2978
      %2980 = vmatmul.bf16.gmra.mxu0 %v2816
      %v2981 = vpop.f32.mrf.mxu0
      %v2982 = vadd.f32 0.0, %v2981
      %v2983 = vpop.f32.mrf.mxu0
      %v2984 = vadd.f32 0.0, %v2983
      %2985 = vmatmul.bf16.gmra.mxu0 %v2819
      %v2986 = vpop.f32.mrf.mxu0
      %v2987 = vadd.f32 0.0, %v2986
      %v2988 = vpop.f32.mrf.mxu0
      %v2989 = vadd.f32 0.0, %v2988
      %2990 = vmatmul.bf16.gmra.mxu0 %v2822
      %v2991 = vpop.f32.mrf.mxu0
      %v2992 = vadd.f32 0.0, %v2991
      %v2993 = vpop.f32.mrf.mxu0
      %v2994 = vadd.f32 0.0, %v2993
      %2995 = vdwg.mxu0
      %v2996 = vadd.f32 %v2565, %v2837
      %v2997 = vadd.f32 %v2566, %v2839
      %v2998 = vadd.f32 %v2567, %v2842
      %v2999 = vadd.f32 %v2568, %v2844
      %v3000 = vadd.f32 %v2569, %v2847
      %v3001 = vadd.f32 %v2570, %v2849
      %v3002 = vadd.f32 %v2571, %v2852
      %v3003 = vadd.f32 %v2572, %v2854
      %v3004 = vadd.f32 %v2573, %v2857
      %v3005 = vadd.f32 %v2574, %v2859
      %v3006 = vadd.f32 %v2575, %v2862
      %v3007 = vadd.f32 %v2576, %v2864
      %v3008 = vadd.f32 %v2577, %v2867
      %v3009 = vadd.f32 %v2578, %v2869
      %v3010 = vadd.f32 %v2579, %v2872
      %v3011 = vadd.f32 %v2580, %v2874
      %v3012 = vadd.f32 %v2581, %v2877
      %v3013 = vadd.f32 %v2582, %v2879
      %v3014 = vadd.f32 %v2583, %v2882
      %v3015 = vadd.f32 %v2584, %v2884
      %v3016 = vadd.f32 %v2585, %v2887
      %v3017 = vadd.f32 %v2586, %v2889
      %v3018 = vadd.f32 %v2587, %v2892
      %v3019 = vadd.f32 %v2588, %v2894
      %v3020 = vadd.f32 %v2589, %v2897
      %v3021 = vadd.f32 %v2590, %v2899
      %v3022 = vadd.f32 %v2591, %v2902
      %v3023 = vadd.f32 %v2592, %v2904
      %v3024 = vadd.f32 %v2593, %v2907
      %v3025 = vadd.f32 %v2594, %v2909
      %v3026 = vadd.f32 %v2595, %v2912
      %v3027 = vadd.f32 %v2596, %v2914
      %v3028 = vadd.f32 %v2597, %v2917
      %v3029 = vadd.f32 %v2598, %v2919
      %v3030 = vadd.f32 %v2599, %v2922
      %v3031 = vadd.f32 %v2600, %v2924
      %v3032 = vadd.f32 %v2601, %v2927
      %v3033 = vadd.f32 %v2602, %v2929
      %v3034 = vadd.f32 %v2603, %v2932
      %v3035 = vadd.f32 %v2604, %v2934
      %v3036 = vadd.f32 %v2605, %v2937
      %v3037 = vadd.f32 %v2606, %v2939
      %v3038 = vadd.f32 %v2607, %v2942
      %v3039 = vadd.f32 %v2608, %v2944
      %v3040 = vadd.f32 %v2609, %v2947
      %v3041 = vadd.f32 %v2610, %v2949
      %v3042 = vadd.f32 %v2611, %v2952
      %v3043 = vadd.f32 %v2612, %v2954
      %v3044 = vadd.f32 %v2613, %v2957
      %v3045 = vadd.f32 %v2614, %v2959
      %v3046 = vadd.f32 %v2615, %v2962
      %v3047 = vadd.f32 %v2616, %v2964
      %v3048 = vadd.f32 %v2617, %v2967
      %v3049 = vadd.f32 %v2618, %v2969
      %v3050 = vadd.f32 %v2619, %v2972
      %v3051 = vadd.f32 %v2620, %v2974
      %v3052 = vadd.f32 %v2621, %v2977
      %v3053 = vadd.f32 %v2622, %v2979
      %v3054 = vadd.f32 %v2623, %v2982
      %v3055 = vadd.f32 %v2624, %v2984
      %v3056 = vadd.f32 %v2625, %v2987
      %v3057 = vadd.f32 %v2626, %v2989
      %v3058 = vadd.f32 %v2627, %v2992
      %v3059 = vadd.f32 %v2628, %v2994
      %v3060 = vld [vmem:[%s2629 + $0x1] sm:$0xff]
      %v3061 = vld [vmem:[%s2629 + $0x9] sm:$0xff]
      %v3062 = vld [vmem:[%s2629 + $0x11] sm:$0xff]
      %v3063 = vld [vmem:[%s2629 + $0x19] sm:$0xff]
      %v3064 = vld [vmem:[%s2629 + $0x29] sm:$0xff]
      %v3065 = vld [vmem:[%s2629 + $0x31] sm:$0xff]
      %v3066 = vld [vmem:[%s2629 + $0x39] sm:$0xff]
      %v3067 = vld [vmem:[%s2629 + $0x41] sm:$0xff]
      %v3068 = vld [vmem:[%s2629 + $0x51] sm:$0xff]
      %v3069 = vld [vmem:[%s2629 + $0x59] sm:$0xff]
      %v3070 = vld [vmem:[%s2629 + $0x61] sm:$0xff]
      %v3071 = vld [vmem:[%s2629 + $0x69] sm:$0xff]
      %v3072 = vld [vmem:[%s2629 + $0x79] sm:$0xff]
      %v3073 = vld [vmem:[%s2629 + $0x81] sm:$0xff]
      %v3074 = vld [vmem:[%s2629 + $0x89] sm:$0xff]
      %v3075 = vld [vmem:[%s2629 + $0x91] sm:$0xff]
      %v3076 = vld [vmem:[%s2629 + $0xa1] sm:$0xff]
      %v3077 = vld [vmem:[%s2629 + $0xa9] sm:$0xff]
      %v3078 = vld [vmem:[%s2629 + $0xb1] sm:$0xff]
      %v3079 = vld [vmem:[%s2629 + $0xb9] sm:$0xff]
      %v3080 = vld [vmem:[%s2629 + $0xc9] sm:$0xff]
      %v3081 = vld [vmem:[%s2629 + $0xd1] sm:$0xff]
      %v3082 = vld [vmem:[%s2629 + $0xd9] sm:$0xff]
      %v3083 = vld [vmem:[%s2629 + $0xe1] sm:$0xff]
      %v3084 = vld [vmem:[%s2629 + $0xf1] sm:$0xff]
      %v3085 = vld [vmem:[%s2629 + $0xf9] sm:$0xff]
      %v3086 = vld [vmem:[%s2629 + $0x101] sm:$0xff]
      %v3087 = vld [vmem:[%s2629 + $0x109] sm:$0xff]
      %v3088 = vld [vmem:[%s2629 + $0x119] sm:$0xff]
      %v3089 = vld [vmem:[%s2629 + $0x121] sm:$0xff]
      %v3090 = vld [vmem:[%s2629 + $0x129] sm:$0xff]
      %v3091 = vld [vmem:[%s2629 + $0x131] sm:$0xff]
      %v3092 = vld [vmem:[%s2629 + $0x141] sm:$0xff]
      %v3093 = vld [vmem:[%s2629 + $0x149] sm:$0xff]
      %v3094 = vld [vmem:[%s2629 + $0x151] sm:$0xff]
      %v3095 = vld [vmem:[%s2629 + $0x159] sm:$0xff]
      %v3096 = vld [vmem:[%s2629 + $0x169] sm:$0xff]
      %v3097 = vld [vmem:[%s2629 + $0x171] sm:$0xff]
      %v3098 = vld [vmem:[%s2629 + $0x179] sm:$0xff]
      %v3099 = vld [vmem:[%s2629 + $0x181] sm:$0xff]
      %v3100 = vld [vmem:[%s2629 + $0x191] sm:$0xff]
      %v3101 = vld [vmem:[%s2629 + $0x199] sm:$0xff]
      %v3102 = vld [vmem:[%s2629 + $0x1a1] sm:$0xff]
      %v3103 = vld [vmem:[%s2629 + $0x1a9] sm:$0xff]
      %v3104 = vld [vmem:[%s2629 + $0x1b9] sm:$0xff]
      %v3105 = vld [vmem:[%s2629 + $0x1c1] sm:$0xff]
      %v3106 = vld [vmem:[%s2629 + $0x1c9] sm:$0xff]
      %v3107 = vld [vmem:[%s2629 + $0x1d1] sm:$0xff]
      %v3108 = vld [vmem:[%s2629 + $0x1e1] sm:$0xff]
      %v3109 = vld [vmem:[%s2629 + $0x1e9] sm:$0xff]
      %v3110 = vld [vmem:[%s2629 + $0x1f1] sm:$0xff]
      %v3111 = vld [vmem:[%s2629 + $0x1f9] sm:$0xff]
      %v3112 = vld [vmem:[%s2629 + $0x209] sm:$0xff]
      %v3113 = vld [vmem:[%s2629 + $0x211] sm:$0xff]
      %v3114 = vld [vmem:[%s2629 + $0x219] sm:$0xff]
      %v3115 = vld [vmem:[%s2629 + $0x221] sm:$0xff]
      %v3116 = vld [vmem:[%s2629 + $0x231] sm:$0xff]
      %v3117 = vld [vmem:[%s2629 + $0x239] sm:$0xff]
      %v3118 = vld [vmem:[%s2629 + $0x241] sm:$0xff]
      %v3119 = vld [vmem:[%s2629 + $0x249] sm:$0xff]
      %v3120 = vld [vmem:[%s2629 + $0x259] sm:$0xff]
      %v3121 = vld [vmem:[%s2629 + $0x261] sm:$0xff]
      %v3122 = vld [vmem:[%s2629 + $0x269] sm:$0xff]
      %v3123 = vld [vmem:[%s2629 + $0x271] sm:$0xff]
      %v3124 = vpack.c.bf16 %v3061, %v3060
      %v3125 = vpack.c.bf16 %v3063, %v3062
      %v3126 = vpack.c.bf16 %v3065, %v3064
      %v3127 = vpack.c.bf16 %v3067, %v3066
      %v3128 = vpack.c.bf16 %v3069, %v3068
      %v3129 = vpack.c.bf16 %v3071, %v3070
      %v3130 = vpack.c.bf16 %v3073, %v3072
      %v3131 = vpack.c.bf16 %v3075, %v3074
      %v3132 = vpack.c.bf16 %v3077, %v3076
      %v3133 = vpack.c.bf16 %v3079, %v3078
      %v3134 = vpack.c.bf16 %v3081, %v3080
      %v3135 = vpack.c.bf16 %v3083, %v3082
      %v3136 = vpack.c.bf16 %v3085, %v3084
      %v3137 = vpack.c.bf16 %v3087, %v3086
      %v3138 = vpack.c.bf16 %v3089, %v3088
      %v3139 = vpack.c.bf16 %v3091, %v3090
      %v3140 = vpack.c.bf16 %v3093, %v3092
      %v3141 = vpack.c.bf16 %v3095, %v3094
      %v3142 = vpack.c.bf16 %v3097, %v3096
      %v3143 = vpack.c.bf16 %v3099, %v3098
      %v3144 = vpack.c.bf16 %v3101, %v3100
      %v3145 = vpack.c.bf16 %v3103, %v3102
      %v3146 = vpack.c.bf16 %v3105, %v3104
      %v3147 = vpack.c.bf16 %v3107, %v3106
      %v3148 = vpack.c.bf16 %v3109, %v3108
      %v3149 = vpack.c.bf16 %v3111, %v3110
      %v3150 = vpack.c.bf16 %v3113, %v3112
      %v3151 = vpack.c.bf16 %v3115, %v3114
      %v3152 = vpack.c.bf16 %v3117, %v3116
      %v3153 = vpack.c.bf16 %v3119, %v3118
      %v3154 = vpack.c.bf16 %v3121, %v3120
      %v3155 = vpack.c.bf16 %v3123, %v3122
      %s3156 = scalar_lea.vmem %s1, 14
      %v3157 = vld [vmem:[%s3156] sm:$0x3]
      %v3159 = vsel %vm367, %v3124, 0
      %v3162 = vsel %vm367, %v3125, 0
      %v3165 = vsel %vm367, %v3126, 0
      %v3168 = vsel %vm367, %v3127, 0
      %v3171 = vsel %vm367, %v3128, 0
      %v3174 = vsel %vm367, %v3129, 0
      %v3177 = vsel %vm367, %v3130, 0
      %v3180 = vsel %vm367, %v3131, 0
      %v3183 = vsel %vm367, %v3132, 0
      %v3186 = vsel %vm367, %v3133, 0
      %v3189 = vsel %vm367, %v3134, 0
      %v3192 = vsel %vm367, %v3135, 0
      %v3195 = vsel %vm367, %v3136, 0
      %v3198 = vsel %vm367, %v3137, 0
      %v3201 = vsel %vm367, %v3138, 0
      %v3204 = vsel %vm367, %v3139, 0
      %v3207 = vsel %vm367, %v3140, 0
      %v3210 = vsel %vm367, %v3141, 0
      %v3213 = vsel %vm367, %v3142, 0
      %v3216 = vsel %vm367, %v3143, 0
      %v3219 = vsel %vm367, %v3144, 0
      %v3222 = vsel %vm367, %v3145, 0
      %v3225 = vsel %vm367, %v3146, 0
      %v3228 = vsel %vm367, %v3147, 0
      %v3231 = vsel %vm367, %v3148, 0
      %v3234 = vsel %vm367, %v3149, 0
      %v3237 = vsel %vm367, %v3150, 0
      %v3240 = vsel %vm367, %v3151, 0
      %v3243 = vsel %vm367, %v3152, 0
      %v3246 = vsel %vm367, %v3153, 0
      %v3249 = vsel %vm367, %v3154, 0
      %v3252 = vsel %vm367, %v3155, 0
      %v3255 = vand.u32 %v3157, %v467
      %3257 = vmatpush.bf16.msra.mxu0 0
      %3258 = vmatpush.bf16.msra.mxu0 0
      %3259 = vmatpush.bf16.msra.mxu0 0
      %3260 = vmatpush.bf16.msra.mxu0 0
      %3261 = vmatpush.bf16.msra.mxu0 0
      %3262 = vmatpush.bf16.msra.mxu0 0
      %3263 = vmatpush.bf16.msra.mxu0 0
      %3264 = vmatpush.bf16.msra.mxu0 %v3255
      %3265 = vmatmul.bf16.gmra.mxu0 %v3159
      %v3266 = vpop.f32.mrf.mxu0
      %v3267 = vadd.f32 0.0, %v3266
      %v3268 = vpop.f32.mrf.mxu0
      %v3269 = vadd.f32 0.0, %v3268
      %3270 = vmatmul.bf16.gmra.mxu0 %v3162
      %v3271 = vpop.f32.mrf.mxu0
      %v3272 = vadd.f32 0.0, %v3271
      %v3273 = vpop.f32.mrf.mxu0
      %v3274 = vadd.f32 0.0, %v3273
      %3275 = vmatmul.bf16.gmra.mxu0 %v3165
      %v3276 = vpop.f32.mrf.mxu0
      %v3277 = vadd.f32 0.0, %v3276
      %v3278 = vpop.f32.mrf.mxu0
      %v3279 = vadd.f32 0.0, %v3278
      %3280 = vmatmul.bf16.gmra.mxu0 %v3168
      %v3281 = vpop.f32.mrf.mxu0
      %v3282 = vadd.f32 0.0, %v3281
      %v3283 = vpop.f32.mrf.mxu0
      %v3284 = vadd.f32 0.0, %v3283
      %3285 = vmatmul.bf16.gmra.mxu0 %v3171
      %v3286 = vpop.f32.mrf.mxu0
      %v3287 = vadd.f32 0.0, %v3286
      %v3288 = vpop.f32.mrf.mxu0
      %v3289 = vadd.f32 0.0, %v3288
      %3290 = vmatmul.bf16.gmra.mxu0 %v3174
      %v3291 = vpop.f32.mrf.mxu0
      %v3292 = vadd.f32 0.0, %v3291
      %v3293 = vpop.f32.mrf.mxu0
      %v3294 = vadd.f32 0.0, %v3293
      %3295 = vmatmul.bf16.gmra.mxu0 %v3177
      %v3296 = vpop.f32.mrf.mxu0
      %v3297 = vadd.f32 0.0, %v3296
      %v3298 = vpop.f32.mrf.mxu0
      %v3299 = vadd.f32 0.0, %v3298
      %3300 = vmatmul.bf16.gmra.mxu0 %v3180
      %v3301 = vpop.f32.mrf.mxu0
      %v3302 = vadd.f32 0.0, %v3301
      %v3303 = vpop.f32.mrf.mxu0
      %v3304 = vadd.f32 0.0, %v3303
      %3305 = vmatmul.bf16.gmra.mxu0 %v3183
      %v3306 = vpop.f32.mrf.mxu0
      %v3307 = vadd.f32 0.0, %v3306
      %v3308 = vpop.f32.mrf.mxu0
      %v3309 = vadd.f32 0.0, %v3308
      %3310 = vmatmul.bf16.gmra.mxu0 %v3186
      %v3311 = vpop.f32.mrf.mxu0
      %v3312 = vadd.f32 0.0, %v3311
      %v3313 = vpop.f32.mrf.mxu0
      %v3314 = vadd.f32 0.0, %v3313
      %3315 = vmatmul.bf16.gmra.mxu0 %v3189
      %v3316 = vpop.f32.mrf.mxu0
      %v3317 = vadd.f32 0.0, %v3316
      %v3318 = vpop.f32.mrf.mxu0
      %v3319 = vadd.f32 0.0, %v3318
      %3320 = vmatmul.bf16.gmra.mxu0 %v3192
      %v3321 = vpop.f32.mrf.mxu0
      %v3322 = vadd.f32 0.0, %v3321
      %v3323 = vpop.f32.mrf.mxu0
      %v3324 = vadd.f32 0.0, %v3323
      %3325 = vmatmul.bf16.gmra.mxu0 %v3195
      %v3326 = vpop.f32.mrf.mxu0
      %v3327 = vadd.f32 0.0, %v3326
      %v3328 = vpop.f32.mrf.mxu0
      %v3329 = vadd.f32 0.0, %v3328
      %3330 = vmatmul.bf16.gmra.mxu0 %v3198
      %v3331 = vpop.f32.mrf.mxu0
      %v3332 = vadd.f32 0.0, %v3331
      %v3333 = vpop.f32.mrf.mxu0
      %v3334 = vadd.f32 0.0, %v3333
      %3335 = vmatmul.bf16.gmra.mxu0 %v3201
      %v3336 = vpop.f32.mrf.mxu0
      %v3337 = vadd.f32 0.0, %v3336
      %v3338 = vpop.f32.mrf.mxu0
      %v3339 = vadd.f32 0.0, %v3338
      %3340 = vmatmul.bf16.gmra.mxu0 %v3204
      %v3341 = vpop.f32.mrf.mxu0
      %v3342 = vadd.f32 0.0, %v3341
      %v3343 = vpop.f32.mrf.mxu0
      %v3344 = vadd.f32 0.0, %v3343
      %3345 = vmatmul.bf16.gmra.mxu0 %v3207
      %v3346 = vpop.f32.mrf.mxu0
      %v3347 = vadd.f32 0.0, %v3346
      %v3348 = vpop.f32.mrf.mxu0
      %v3349 = vadd.f32 0.0, %v3348
      %3350 = vmatmul.bf16.gmra.mxu0 %v3210
      %v3351 = vpop.f32.mrf.mxu0
      %v3352 = vadd.f32 0.0, %v3351
      %v3353 = vpop.f32.mrf.mxu0
      %v3354 = vadd.f32 0.0, %v3353
      %3355 = vmatmul.bf16.gmra.mxu0 %v3213
      %v3356 = vpop.f32.mrf.mxu0
      %v3357 = vadd.f32 0.0, %v3356
      %v3358 = vpop.f32.mrf.mxu0
      %v3359 = vadd.f32 0.0, %v3358
      %3360 = vmatmul.bf16.gmra.mxu0 %v3216
      %v3361 = vpop.f32.mrf.mxu0
      %v3362 = vadd.f32 0.0, %v3361
      %v3363 = vpop.f32.mrf.mxu0
      %v3364 = vadd.f32 0.0, %v3363
      %3365 = vmatmul.bf16.gmra.mxu0 %v3219
      %v3366 = vpop.f32.mrf.mxu0
      %v3367 = vadd.f32 0.0, %v3366
      %v3368 = vpop.f32.mrf.mxu0
      %v3369 = vadd.f32 0.0, %v3368
      %3370 = vmatmul.bf16.gmra.mxu0 %v3222
      %v3371 = vpop.f32.mrf.mxu0
      %v3372 = vadd.f32 0.0, %v3371
      %v3373 = vpop.f32.mrf.mxu0
      %v3374 = vadd.f32 0.0, %v3373
      %3375 = vmatmul.bf16.gmra.mxu0 %v3225
      %v3376 = vpop.f32.mrf.mxu0
      %v3377 = vadd.f32 0.0, %v3376
      %v3378 = vpop.f32.mrf.mxu0
      %v3379 = vadd.f32 0.0, %v3378
      %3380 = vmatmul.bf16.gmra.mxu0 %v3228
      %v3381 = vpop.f32.mrf.mxu0
      %v3382 = vadd.f32 0.0, %v3381
      %v3383 = vpop.f32.mrf.mxu0
      %v3384 = vadd.f32 0.0, %v3383
      %3385 = vmatmul.bf16.gmra.mxu0 %v3231
      %v3386 = vpop.f32.mrf.mxu0
      %v3387 = vadd.f32 0.0, %v3386
      %v3388 = vpop.f32.mrf.mxu0
      %v3389 = vadd.f32 0.0, %v3388
      %3390 = vmatmul.bf16.gmra.mxu0 %v3234
      %v3391 = vpop.f32.mrf.mxu0
      %v3392 = vadd.f32 0.0, %v3391
      %v3393 = vpop.f32.mrf.mxu0
      %v3394 = vadd.f32 0.0, %v3393
      %3395 = vmatmul.bf16.gmra.mxu0 %v3237
      %v3396 = vpop.f32.mrf.mxu0
      %v3397 = vadd.f32 0.0, %v3396
      %v3398 = vpop.f32.mrf.mxu0
      %v3399 = vadd.f32 0.0, %v3398
      %3400 = vmatmul.bf16.gmra.mxu0 %v3240
      %v3401 = vpop.f32.mrf.mxu0
      %v3402 = vadd.f32 0.0, %v3401
      %v3403 = vpop.f32.mrf.mxu0
      %v3404 = vadd.f32 0.0, %v3403
      %3405 = vmatmul.bf16.gmra.mxu0 %v3243
      %v3406 = vpop.f32.mrf.mxu0
      %v3407 = vadd.f32 0.0, %v3406
      %v3408 = vpop.f32.mrf.mxu0
      %v3409 = vadd.f32 0.0, %v3408
      %3410 = vmatmul.bf16.gmra.mxu0 %v3246
      %v3411 = vpop.f32.mrf.mxu0
      %v3412 = vadd.f32 0.0, %v3411
      %v3413 = vpop.f32.mrf.mxu0
      %v3414 = vadd.f32 0.0, %v3413
      %3415 = vmatmul.bf16.gmra.mxu0 %v3249
      %v3416 = vpop.f32.mrf.mxu0
      %v3417 = vadd.f32 0.0, %v3416
      %v3418 = vpop.f32.mrf.mxu0
      %v3419 = vadd.f32 0.0, %v3418
      %3420 = vmatmul.bf16.gmra.mxu0 %v3252
      %v3421 = vpop.f32.mrf.mxu0
      %v3422 = vadd.f32 0.0, %v3421
      %v3423 = vpop.f32.mrf.mxu0
      %v3424 = vadd.f32 0.0, %v3423
      %3425 = vdwg.mxu0
      %v3426 = vadd.f32 %v2996, %v3267
      %v3427 = vadd.f32 %v2997, %v3269
      %v3428 = vadd.f32 %v2998, %v3272
      %v3429 = vadd.f32 %v2999, %v3274
      %v3430 = vadd.f32 %v3000, %v3277
      %v3431 = vadd.f32 %v3001, %v3279
      %v3432 = vadd.f32 %v3002, %v3282
      %v3433 = vadd.f32 %v3003, %v3284
      %v3434 = vadd.f32 %v3004, %v3287
      %v3435 = vadd.f32 %v3005, %v3289
      %v3436 = vadd.f32 %v3006, %v3292
      %v3437 = vadd.f32 %v3007, %v3294
      %v3438 = vadd.f32 %v3008, %v3297
      %v3439 = vadd.f32 %v3009, %v3299
      %v3440 = vadd.f32 %v3010, %v3302
      %v3441 = vadd.f32 %v3011, %v3304
      %v3442 = vadd.f32 %v3012, %v3307
      %v3443 = vadd.f32 %v3013, %v3309
      %v3444 = vadd.f32 %v3014, %v3312
      %v3445 = vadd.f32 %v3015, %v3314
      %v3446 = vadd.f32 %v3016, %v3317
      %v3447 = vadd.f32 %v3017, %v3319
      %v3448 = vadd.f32 %v3018, %v3322
      %v3449 = vadd.f32 %v3019, %v3324
      %v3450 = vadd.f32 %v3020, %v3327
      %v3451 = vadd.f32 %v3021, %v3329
      %v3452 = vadd.f32 %v3022, %v3332
      %v3453 = vadd.f32 %v3023, %v3334
      %v3454 = vadd.f32 %v3024, %v3337
      %v3455 = vadd.f32 %v3025, %v3339
      %v3456 = vadd.f32 %v3026, %v3342
      %v3457 = vadd.f32 %v3027, %v3344
      %v3458 = vadd.f32 %v3028, %v3347
      %v3459 = vadd.f32 %v3029, %v3349
      %v3460 = vadd.f32 %v3030, %v3352
      %v3461 = vadd.f32 %v3031, %v3354
      %v3462 = vadd.f32 %v3032, %v3357
      %v3463 = vadd.f32 %v3033, %v3359
      %v3464 = vadd.f32 %v3034, %v3362
      %v3465 = vadd.f32 %v3035, %v3364
      %v3466 = vadd.f32 %v3036, %v3367
      %v3467 = vadd.f32 %v3037, %v3369
      %v3468 = vadd.f32 %v3038, %v3372
      %v3469 = vadd.f32 %v3039, %v3374
      %v3470 = vadd.f32 %v3040, %v3377
      %v3471 = vadd.f32 %v3041, %v3379
      %v3472 = vadd.f32 %v3042, %v3382
      %v3473 = vadd.f32 %v3043, %v3384
      %v3474 = vadd.f32 %v3044, %v3387
      %v3475 = vadd.f32 %v3045, %v3389
      %v3476 = vadd.f32 %v3046, %v3392
      %v3477 = vadd.f32 %v3047, %v3394
      %v3478 = vadd.f32 %v3048, %v3397
      %v3479 = vadd.f32 %v3049, %v3399
      %v3480 = vadd.f32 %v3050, %v3402
      %v3481 = vadd.f32 %v3051, %v3404
      %v3482 = vadd.f32 %v3052, %v3407
      %v3483 = vadd.f32 %v3053, %v3409
      %v3484 = vadd.f32 %v3054, %v3412
      %v3485 = vadd.f32 %v3055, %v3414
      %v3486 = vadd.f32 %v3056, %v3417
      %v3487 = vadd.f32 %v3057, %v3419
      %v3488 = vadd.f32 %v3058, %v3422
      %v3489 = vadd.f32 %v3059, %v3424
      %v3490 = vld [vmem:[%s2629 + $0x2] sm:$0xff]
      %v3491 = vld [vmem:[%s2629 + $0xa] sm:$0xff]
      %v3492 = vld [vmem:[%s2629 + $0x12] sm:$0xff]
      %v3493 = vld [vmem:[%s2629 + $0x1a] sm:$0xff]
      %v3494 = vld [vmem:[%s2629 + $0x2a] sm:$0xff]
      %v3495 = vld [vmem:[%s2629 + $0x32] sm:$0xff]
      %v3496 = vld [vmem:[%s2629 + $0x3a] sm:$0xff]
      %v3497 = vld [vmem:[%s2629 + $0x42] sm:$0xff]
      %v3498 = vld [vmem:[%s2629 + $0x52] sm:$0xff]
      %v3499 = vld [vmem:[%s2629 + $0x5a] sm:$0xff]
      %v3500 = vld [vmem:[%s2629 + $0x62] sm:$0xff]
      %v3501 = vld [vmem:[%s2629 + $0x6a] sm:$0xff]
      %v3502 = vld [vmem:[%s2629 + $0x7a] sm:$0xff]
      %v3503 = vld [vmem:[%s2629 + $0x82] sm:$0xff]
      %v3504 = vld [vmem:[%s2629 + $0x8a] sm:$0xff]
      %v3505 = vld [vmem:[%s2629 + $0x92] sm:$0xff]
      %v3506 = vld [vmem:[%s2629 + $0xa2] sm:$0xff]
      %v3507 = vld [vmem:[%s2629 + $0xaa] sm:$0xff]
      %v3508 = vld [vmem:[%s2629 + $0xb2] sm:$0xff]
      %v3509 = vld [vmem:[%s2629 + $0xba] sm:$0xff]
      %v3510 = vld [vmem:[%s2629 + $0xca] sm:$0xff]
      %v3511 = vld [vmem:[%s2629 + $0xd2] sm:$0xff]
      %v3512 = vld [vmem:[%s2629 + $0xda] sm:$0xff]
      %v3513 = vld [vmem:[%s2629 + $0xe2] sm:$0xff]
      %v3514 = vld [vmem:[%s2629 + $0xf2] sm:$0xff]
      %v3515 = vld [vmem:[%s2629 + $0xfa] sm:$0xff]
      %v3516 = vld [vmem:[%s2629 + $0x102] sm:$0xff]
      %v3517 = vld [vmem:[%s2629 + $0x10a] sm:$0xff]
      %v3518 = vld [vmem:[%s2629 + $0x11a] sm:$0xff]
      %v3519 = vld [vmem:[%s2629 + $0x122] sm:$0xff]
      %v3520 = vld [vmem:[%s2629 + $0x12a] sm:$0xff]
      %v3521 = vld [vmem:[%s2629 + $0x132] sm:$0xff]
      %v3522 = vld [vmem:[%s2629 + $0x142] sm:$0xff]
      %v3523 = vld [vmem:[%s2629 + $0x14a] sm:$0xff]
      %v3524 = vld [vmem:[%s2629 + $0x152] sm:$0xff]
      %v3525 = vld [vmem:[%s2629 + $0x15a] sm:$0xff]
      %v3526 = vld [vmem:[%s2629 + $0x16a] sm:$0xff]
      %v3527 = vld [vmem:[%s2629 + $0x172] sm:$0xff]
      %v3528 = vld [vmem:[%s2629 + $0x17a] sm:$0xff]
      %v3529 = vld [vmem:[%s2629 + $0x182] sm:$0xff]
      %v3530 = vld [vmem:[%s2629 + $0x192] sm:$0xff]
      %v3531 = vld [vmem:[%s2629 + $0x19a] sm:$0xff]
      %v3532 = vld [vmem:[%s2629 + $0x1a2] sm:$0xff]
      %v3533 = vld [vmem:[%s2629 + $0x1aa] sm:$0xff]
      %v3534 = vld [vmem:[%s2629 + $0x1ba] sm:$0xff]
      %v3535 = vld [vmem:[%s2629 + $0x1c2] sm:$0xff]
      %v3536 = vld [vmem:[%s2629 + $0x1ca] sm:$0xff]
      %v3537 = vld [vmem:[%s2629 + $0x1d2] sm:$0xff]
      %v3538 = vld [vmem:[%s2629 + $0x1e2] sm:$0xff]
      %v3539 = vld [vmem:[%s2629 + $0x1ea] sm:$0xff]
      %v3540 = vld [vmem:[%s2629 + $0x1f2] sm:$0xff]
      %v3541 = vld [vmem:[%s2629 + $0x1fa] sm:$0xff]
      %v3542 = vld [vmem:[%s2629 + $0x20a] sm:$0xff]
      %v3543 = vld [vmem:[%s2629 + $0x212] sm:$0xff]
      %v3544 = vld [vmem:[%s2629 + $0x21a] sm:$0xff]
      %v3545 = vld [vmem:[%s2629 + $0x222] sm:$0xff]
      %v3546 = vld [vmem:[%s2629 + $0x232] sm:$0xff]
      %v3547 = vld [vmem:[%s2629 + $0x23a] sm:$0xff]
      %v3548 = vld [vmem:[%s2629 + $0x242] sm:$0xff]
      %v3549 = vld [vmem:[%s2629 + $0x24a] sm:$0xff]
      %v3550 = vld [vmem:[%s2629 + $0x25a] sm:$0xff]
      %v3551 = vld [vmem:[%s2629 + $0x262] sm:$0xff]
      %v3552 = vld [vmem:[%s2629 + $0x26a] sm:$0xff]
      %v3553 = vld [vmem:[%s2629 + $0x272] sm:$0xff]
      %v3554 = vpack.c.bf16 %v3491, %v3490
      %v3555 = vpack.c.bf16 %v3493, %v3492
      %v3556 = vpack.c.bf16 %v3495, %v3494
      %v3557 = vpack.c.bf16 %v3497, %v3496
      %v3558 = vpack.c.bf16 %v3499, %v3498
      %v3559 = vpack.c.bf16 %v3501, %v3500
      %v3560 = vpack.c.bf16 %v3503, %v3502
      %v3561 = vpack.c.bf16 %v3505, %v3504
      %v3562 = vpack.c.bf16 %v3507, %v3506
      %v3563 = vpack.c.bf16 %v3509, %v3508
      %v3564 = vpack.c.bf16 %v3511, %v3510
      %v3565 = vpack.c.bf16 %v3513, %v3512
      %v3566 = vpack.c.bf16 %v3515, %v3514
      %v3567 = vpack.c.bf16 %v3517, %v3516
      %v3568 = vpack.c.bf16 %v3519, %v3518
      %v3569 = vpack.c.bf16 %v3521, %v3520
      %v3570 = vpack.c.bf16 %v3523, %v3522
      %v3571 = vpack.c.bf16 %v3525, %v3524
      %v3572 = vpack.c.bf16 %v3527, %v3526
      %v3573 = vpack.c.bf16 %v3529, %v3528
      %v3574 = vpack.c.bf16 %v3531, %v3530
      %v3575 = vpack.c.bf16 %v3533, %v3532
      %v3576 = vpack.c.bf16 %v3535, %v3534
      %v3577 = vpack.c.bf16 %v3537, %v3536
      %v3578 = vpack.c.bf16 %v3539, %v3538
      %v3579 = vpack.c.bf16 %v3541, %v3540
      %v3580 = vpack.c.bf16 %v3543, %v3542
      %v3581 = vpack.c.bf16 %v3545, %v3544
      %v3582 = vpack.c.bf16 %v3547, %v3546
      %v3583 = vpack.c.bf16 %v3549, %v3548
      %v3584 = vpack.c.bf16 %v3551, %v3550
      %v3585 = vpack.c.bf16 %v3553, %v3552
      %s3586 = scalar_lea.vmem %s1, 16
      %v3587 = vld [vmem:[%s3586] sm:$0x3]
      %v3589 = vsel %vm367, %v3554, 0
      %v3592 = vsel %vm367, %v3555, 0
      %v3595 = vsel %vm367, %v3556, 0
      %v3598 = vsel %vm367, %v3557, 0
      %v3601 = vsel %vm367, %v3558, 0
      %v3604 = vsel %vm367, %v3559, 0
      %v3607 = vsel %vm367, %v3560, 0
      %v3610 = vsel %vm367, %v3561, 0
      %v3613 = vsel %vm367, %v3562, 0
      %v3616 = vsel %vm367, %v3563, 0
      %v3619 = vsel %vm367, %v3564, 0
      %v3622 = vsel %vm367, %v3565, 0
      %v3625 = vsel %vm367, %v3566, 0
      %v3628 = vsel %vm367, %v3567, 0
      %v3631 = vsel %vm367, %v3568, 0
      %v3634 = vsel %vm367, %v3569, 0
      %v3637 = vsel %vm367, %v3570, 0
      %v3640 = vsel %vm367, %v3571, 0
      %v3643 = vsel %vm367, %v3572, 0
      %v3646 = vsel %vm367, %v3573, 0
      %v3649 = vsel %vm367, %v3574, 0
      %v3652 = vsel %vm367, %v3575, 0
      %v3655 = vsel %vm367, %v3576, 0
      %v3658 = vsel %vm367, %v3577, 0
      %v3661 = vsel %vm367, %v3578, 0
      %v3664 = vsel %vm367, %v3579, 0
      %v3667 = vsel %vm367, %v3580, 0
      %v3670 = vsel %vm367, %v3581, 0
      %v3673 = vsel %vm367, %v3582, 0
      %v3676 = vsel %vm367, %v3583, 0
      %v3679 = vsel %vm367, %v3584, 0
      %v3682 = vsel %vm367, %v3585, 0
      %v3685 = vand.u32 %v3587, %v467
      %3687 = vmatpush.bf16.msra.mxu0 0
      %3688 = vmatpush.bf16.msra.mxu0 0
      %3689 = vmatpush.bf16.msra.mxu0 0
      %3690 = vmatpush.bf16.msra.mxu0 0
      %3691 = vmatpush.bf16.msra.mxu0 0
      %3692 = vmatpush.bf16.msra.mxu0 0
      %3693 = vmatpush.bf16.msra.mxu0 0
      %3694 = vmatpush.bf16.msra.mxu0 %v3685
      %3695 = vmatmul.bf16.gmra.mxu0 %v3589
      %v3696 = vpop.f32.mrf.mxu0
      %v3697 = vadd.f32 0.0, %v3696
      %v3698 = vpop.f32.mrf.mxu0
      %v3699 = vadd.f32 0.0, %v3698
      %3700 = vmatmul.bf16.gmra.mxu0 %v3592
      %v3701 = vpop.f32.mrf.mxu0
      %v3702 = vadd.f32 0.0, %v3701
      %v3703 = vpop.f32.mrf.mxu0
      %v3704 = vadd.f32 0.0, %v3703
      %3705 = vmatmul.bf16.gmra.mxu0 %v3595
      %v3706 = vpop.f32.mrf.mxu0
      %v3707 = vadd.f32 0.0, %v3706
      %v3708 = vpop.f32.mrf.mxu0
      %v3709 = vadd.f32 0.0, %v3708
      %3710 = vmatmul.bf16.gmra.mxu0 %v3598
      %v3711 = vpop.f32.mrf.mxu0
      %v3712 = vadd.f32 0.0, %v3711
      %v3713 = vpop.f32.mrf.mxu0
      %v3714 = vadd.f32 0.0, %v3713
      %3715 = vmatmul.bf16.gmra.mxu0 %v3601
      %v3716 = vpop.f32.mrf.mxu0
      %v3717 = vadd.f32 0.0, %v3716
      %v3718 = vpop.f32.mrf.mxu0
      %v3719 = vadd.f32 0.0, %v3718
      %3720 = vmatmul.bf16.gmra.mxu0 %v3604
      %v3721 = vpop.f32.mrf.mxu0
      %v3722 = vadd.f32 0.0, %v3721
      %v3723 = vpop.f32.mrf.mxu0
      %v3724 = vadd.f32 0.0, %v3723
      %3725 = vmatmul.bf16.gmra.mxu0 %v3607
      %v3726 = vpop.f32.mrf.mxu0
      %v3727 = vadd.f32 0.0, %v3726
      %v3728 = vpop.f32.mrf.mxu0
      %v3729 = vadd.f32 0.0, %v3728
      %3730 = vmatmul.bf16.gmra.mxu0 %v3610
      %v3731 = vpop.f32.mrf.mxu0
      %v3732 = vadd.f32 0.0, %v3731
      %v3733 = vpop.f32.mrf.mxu0
      %v3734 = vadd.f32 0.0, %v3733
      %3735 = vmatmul.bf16.gmra.mxu0 %v3613
      %v3736 = vpop.f32.mrf.mxu0
      %v3737 = vadd.f32 0.0, %v3736
      %v3738 = vpop.f32.mrf.mxu0
      %v3739 = vadd.f32 0.0, %v3738
      %3740 = vmatmul.bf16.gmra.mxu0 %v3616
      %v3741 = vpop.f32.mrf.mxu0
      %v3742 = vadd.f32 0.0, %v3741
      %v3743 = vpop.f32.mrf.mxu0
      %v3744 = vadd.f32 0.0, %v3743
      %3745 = vmatmul.bf16.gmra.mxu0 %v3619
      %v3746 = vpop.f32.mrf.mxu0
      %v3747 = vadd.f32 0.0, %v3746
      %v3748 = vpop.f32.mrf.mxu0
      %v3749 = vadd.f32 0.0, %v3748
      %3750 = vmatmul.bf16.gmra.mxu0 %v3622
      %v3751 = vpop.f32.mrf.mxu0
      %v3752 = vadd.f32 0.0, %v3751
      %v3753 = vpop.f32.mrf.mxu0
      %v3754 = vadd.f32 0.0, %v3753
      %3755 = vmatmul.bf16.gmra.mxu0 %v3625
      %v3756 = vpop.f32.mrf.mxu0
      %v3757 = vadd.f32 0.0, %v3756
      %v3758 = vpop.f32.mrf.mxu0
      %v3759 = vadd.f32 0.0, %v3758
      %3760 = vmatmul.bf16.gmra.mxu0 %v3628
      %v3761 = vpop.f32.mrf.mxu0
      %v3762 = vadd.f32 0.0, %v3761
      %v3763 = vpop.f32.mrf.mxu0
      %v3764 = vadd.f32 0.0, %v3763
      %3765 = vmatmul.bf16.gmra.mxu0 %v3631
      %v3766 = vpop.f32.mrf.mxu0
      %v3767 = vadd.f32 0.0, %v3766
      %v3768 = vpop.f32.mrf.mxu0
      %v3769 = vadd.f32 0.0, %v3768
      %3770 = vmatmul.bf16.gmra.mxu0 %v3634
      %v3771 = vpop.f32.mrf.mxu0
      %v3772 = vadd.f32 0.0, %v3771
      %v3773 = vpop.f32.mrf.mxu0
      %v3774 = vadd.f32 0.0, %v3773
      %3775 = vmatmul.bf16.gmra.mxu0 %v3637
      %v3776 = vpop.f32.mrf.mxu0
      %v3777 = vadd.f32 0.0, %v3776
      %v3778 = vpop.f32.mrf.mxu0
      %v3779 = vadd.f32 0.0, %v3778
      %3780 = vmatmul.bf16.gmra.mxu0 %v3640
      %v3781 = vpop.f32.mrf.mxu0
      %v3782 = vadd.f32 0.0, %v3781
      %v3783 = vpop.f32.mrf.mxu0
      %v3784 = vadd.f32 0.0, %v3783
      %3785 = vmatmul.bf16.gmra.mxu0 %v3643
      %v3786 = vpop.f32.mrf.mxu0
      %v3787 = vadd.f32 0.0, %v3786
      %v3788 = vpop.f32.mrf.mxu0
      %v3789 = vadd.f32 0.0, %v3788
      %3790 = vmatmul.bf16.gmra.mxu0 %v3646
      %v3791 = vpop.f32.mrf.mxu0
      %v3792 = vadd.f32 0.0, %v3791
      %v3793 = vpop.f32.mrf.mxu0
      %v3794 = vadd.f32 0.0, %v3793
      %3795 = vmatmul.bf16.gmra.mxu0 %v3649
      %v3796 = vpop.f32.mrf.mxu0
      %v3797 = vadd.f32 0.0, %v3796
      %v3798 = vpop.f32.mrf.mxu0
      %v3799 = vadd.f32 0.0, %v3798
      %3800 = vmatmul.bf16.gmra.mxu0 %v3652
      %v3801 = vpop.f32.mrf.mxu0
      %v3802 = vadd.f32 0.0, %v3801
      %v3803 = vpop.f32.mrf.mxu0
      %v3804 = vadd.f32 0.0, %v3803
      %3805 = vmatmul.bf16.gmra.mxu0 %v3655
      %v3806 = vpop.f32.mrf.mxu0
      %v3807 = vadd.f32 0.0, %v3806
      %v3808 = vpop.f32.mrf.mxu0
      %v3809 = vadd.f32 0.0, %v3808
      %3810 = vmatmul.bf16.gmra.mxu0 %v3658
      %v3811 = vpop.f32.mrf.mxu0
      %v3812 = vadd.f32 0.0, %v3811
      %v3813 = vpop.f32.mrf.mxu0
      %v3814 = vadd.f32 0.0, %v3813
      %3815 = vmatmul.bf16.gmra.mxu0 %v3661
      %v3816 = vpop.f32.mrf.mxu0
      %v3817 = vadd.f32 0.0, %v3816
      %v3818 = vpop.f32.mrf.mxu0
      %v3819 = vadd.f32 0.0, %v3818
      %3820 = vmatmul.bf16.gmra.mxu0 %v3664
      %v3821 = vpop.f32.mrf.mxu0
      %v3822 = vadd.f32 0.0, %v3821
      %v3823 = vpop.f32.mrf.mxu0
      %v3824 = vadd.f32 0.0, %v3823
      %3825 = vmatmul.bf16.gmra.mxu0 %v3667
      %v3826 = vpop.f32.mrf.mxu0
      %v3827 = vadd.f32 0.0, %v3826
      %v3828 = vpop.f32.mrf.mxu0
      %v3829 = vadd.f32 0.0, %v3828
      %3830 = vmatmul.bf16.gmra.mxu0 %v3670
      %v3831 = vpop.f32.mrf.mxu0
      %v3832 = vadd.f32 0.0, %v3831
      %v3833 = vpop.f32.mrf.mxu0
      %v3834 = vadd.f32 0.0, %v3833
      %3835 = vmatmul.bf16.gmra.mxu0 %v3673
      %v3836 = vpop.f32.mrf.mxu0
      %v3837 = vadd.f32 0.0, %v3836
      %v3838 = vpop.f32.mrf.mxu0
      %v3839 = vadd.f32 0.0, %v3838
      %3840 = vmatmul.bf16.gmra.mxu0 %v3676
      %v3841 = vpop.f32.mrf.mxu0
      %v3842 = vadd.f32 0.0, %v3841
      %v3843 = vpop.f32.mrf.mxu0
      %v3844 = vadd.f32 0.0, %v3843
      %3845 = vmatmul.bf16.gmra.mxu0 %v3679
      %v3846 = vpop.f32.mrf.mxu0
      %v3847 = vadd.f32 0.0, %v3846
      %v3848 = vpop.f32.mrf.mxu0
      %v3849 = vadd.f32 0.0, %v3848
      %3850 = vmatmul.bf16.gmra.mxu0 %v3682
      %v3851 = vpop.f32.mrf.mxu0
      %v3852 = vadd.f32 0.0, %v3851
      %v3853 = vpop.f32.mrf.mxu0
      %v3854 = vadd.f32 0.0, %v3853
      %3855 = vdwg.mxu0
      %v3856 = vadd.f32 %v3426, %v3697
      %v3857 = vadd.f32 %v3427, %v3699
      %v3858 = vadd.f32 %v3428, %v3702
      %v3859 = vadd.f32 %v3429, %v3704
      %v3860 = vadd.f32 %v3430, %v3707
      %v3861 = vadd.f32 %v3431, %v3709
      %v3862 = vadd.f32 %v3432, %v3712
      %v3863 = vadd.f32 %v3433, %v3714
      %v3864 = vadd.f32 %v3434, %v3717
      %v3865 = vadd.f32 %v3435, %v3719
      %v3866 = vadd.f32 %v3436, %v3722
      %v3867 = vadd.f32 %v3437, %v3724
      %v3868 = vadd.f32 %v3438, %v3727
      %v3869 = vadd.f32 %v3439, %v3729
      %v3870 = vadd.f32 %v3440, %v3732
      %v3871 = vadd.f32 %v3441, %v3734
      %v3872 = vadd.f32 %v3442, %v3737
      %v3873 = vadd.f32 %v3443, %v3739
      %v3874 = vadd.f32 %v3444, %v3742
      %v3875 = vadd.f32 %v3445, %v3744
      %v3876 = vadd.f32 %v3446, %v3747
      %v3877 = vadd.f32 %v3447, %v3749
      %v3878 = vadd.f32 %v3448, %v3752
      %v3879 = vadd.f32 %v3449, %v3754
      %v3880 = vadd.f32 %v3450, %v3757
      %v3881 = vadd.f32 %v3451, %v3759
      %v3882 = vadd.f32 %v3452, %v3762
      %v3883 = vadd.f32 %v3453, %v3764
      %v3884 = vadd.f32 %v3454, %v3767
      %v3885 = vadd.f32 %v3455, %v3769
      %v3886 = vadd.f32 %v3456, %v3772
      %v3887 = vadd.f32 %v3457, %v3774
      %v3888 = vadd.f32 %v3458, %v3777
      %v3889 = vadd.f32 %v3459, %v3779
      %v3890 = vadd.f32 %v3460, %v3782
      %v3891 = vadd.f32 %v3461, %v3784
      %v3892 = vadd.f32 %v3462, %v3787
      %v3893 = vadd.f32 %v3463, %v3789
      %v3894 = vadd.f32 %v3464, %v3792
      %v3895 = vadd.f32 %v3465, %v3794
      %v3896 = vadd.f32 %v3466, %v3797
      %v3897 = vadd.f32 %v3467, %v3799
      %v3898 = vadd.f32 %v3468, %v3802
      %v3899 = vadd.f32 %v3469, %v3804
      %v3900 = vadd.f32 %v3470, %v3807
      %v3901 = vadd.f32 %v3471, %v3809
      %v3902 = vadd.f32 %v3472, %v3812
      %v3903 = vadd.f32 %v3473, %v3814
      %v3904 = vadd.f32 %v3474, %v3817
      %v3905 = vadd.f32 %v3475, %v3819
      %v3906 = vadd.f32 %v3476, %v3822
      %v3907 = vadd.f32 %v3477, %v3824
      %v3908 = vadd.f32 %v3478, %v3827
      %v3909 = vadd.f32 %v3479, %v3829
      %v3910 = vadd.f32 %v3480, %v3832
      %v3911 = vadd.f32 %v3481, %v3834
      %v3912 = vadd.f32 %v3482, %v3837
      %v3913 = vadd.f32 %v3483, %v3839
      %v3914 = vadd.f32 %v3484, %v3842
      %v3915 = vadd.f32 %v3485, %v3844
      %v3916 = vadd.f32 %v3486, %v3847
      %v3917 = vadd.f32 %v3487, %v3849
      %v3918 = vadd.f32 %v3488, %v3852
      %v3919 = vadd.f32 %v3489, %v3854
      %v3920 = vld [vmem:[%s2] sm:$0x1]
      %v3922 = vperm.slane %v3920, 0
      %v3924 = vadd.f32 %v3856, %v3922
      %v3925 = vadd.f32 %v3857, %v3922
      %v3926 = vadd.f32 %v3858, %v3922
      %v3927 = vadd.f32 %v3859, %v3922
      %v3928 = vadd.f32 %v3860, %v3922
      %v3929 = vadd.f32 %v3861, %v3922
      %v3930 = vadd.f32 %v3862, %v3922
      %v3931 = vadd.f32 %v3863, %v3922
      %v3932 = vadd.f32 %v3864, %v3922
      %v3933 = vadd.f32 %v3865, %v3922
      %v3934 = vadd.f32 %v3866, %v3922
      %v3935 = vadd.f32 %v3867, %v3922
      %v3936 = vadd.f32 %v3868, %v3922
      %v3937 = vadd.f32 %v3869, %v3922
      %v3938 = vadd.f32 %v3870, %v3922
      %v3939 = vadd.f32 %v3871, %v3922
      %v3940 = vadd.f32 %v3872, %v3922
      %v3941 = vadd.f32 %v3873, %v3922
      %v3942 = vadd.f32 %v3874, %v3922
      %v3943 = vadd.f32 %v3875, %v3922
      %v3944 = vadd.f32 %v3876, %v3922
      %v3945 = vadd.f32 %v3877, %v3922
      %v3946 = vadd.f32 %v3878, %v3922
      %v3947 = vadd.f32 %v3879, %v3922
      %v3948 = vadd.f32 %v3880, %v3922
      %v3949 = vadd.f32 %v3881, %v3922
      %v3950 = vadd.f32 %v3882, %v3922
      %v3951 = vadd.f32 %v3883, %v3922
      %v3952 = vadd.f32 %v3884, %v3922
      %v3953 = vadd.f32 %v3885, %v3922
      %v3954 = vadd.f32 %v3886, %v3922
      %v3955 = vadd.f32 %v3887, %v3922
      %v3956 = vadd.f32 %v3888, %v3922
      %v3957 = vadd.f32 %v3889, %v3922
      %v3958 = vadd.f32 %v3890, %v3922
      %v3959 = vadd.f32 %v3891, %v3922
      %v3960 = vadd.f32 %v3892, %v3922
      %v3961 = vadd.f32 %v3893, %v3922
      %v3962 = vadd.f32 %v3894, %v3922
      %v3963 = vadd.f32 %v3895, %v3922
      %v3964 = vadd.f32 %v3896, %v3922
      %v3965 = vadd.f32 %v3897, %v3922
      %v3966 = vadd.f32 %v3898, %v3922
      %v3967 = vadd.f32 %v3899, %v3922
      %v3968 = vadd.f32 %v3900, %v3922
      %v3969 = vadd.f32 %v3901, %v3922
      %v3970 = vadd.f32 %v3902, %v3922
      %v3971 = vadd.f32 %v3903, %v3922
      %v3972 = vadd.f32 %v3904, %v3922
      %v3973 = vadd.f32 %v3905, %v3922
      %v3974 = vadd.f32 %v3906, %v3922
      %v3975 = vadd.f32 %v3907, %v3922
      %v3976 = vadd.f32 %v3908, %v3922
      %v3977 = vadd.f32 %v3909, %v3922
      %v3978 = vadd.f32 %v3910, %v3922
      %v3979 = vadd.f32 %v3911, %v3922
      %v3980 = vadd.f32 %v3912, %v3922
      %v3981 = vadd.f32 %v3913, %v3922
      %v3982 = vadd.f32 %v3914, %v3922
      %v3983 = vadd.f32 %v3915, %v3922
      %v3984 = vadd.f32 %v3916, %v3922
      %v3985 = vadd.f32 %v3917, %v3922
      %v3986 = vadd.f32 %v3918, %v3922
      %v3987 = vadd.f32 %v3919, %v3922
      %v3988 = vmax.f32 %v3924, 0.0
      %v3989 = vmax.f32 %v3925, 0.0
      %v3990 = vmax.f32 %v3926, 0.0
      %v3991 = vmax.f32 %v3927, 0.0
      %v3992 = vmax.f32 %v3928, 0.0
      %v3993 = vmax.f32 %v3929, 0.0
      %v3994 = vmax.f32 %v3930, 0.0
      %v3995 = vmax.f32 %v3931, 0.0
      %v3996 = vmax.f32 %v3932, 0.0
      %v3997 = vmax.f32 %v3933, 0.0
      %v3998 = vmax.f32 %v3934, 0.0
      %v3999 = vmax.f32 %v3935, 0.0
      %v4000 = vmax.f32 %v3936, 0.0
      %v4001 = vmax.f32 %v3937, 0.0
      %v4002 = vmax.f32 %v3938, 0.0
      %v4003 = vmax.f32 %v3939, 0.0
      %v4004 = vmax.f32 %v3940, 0.0
      %v4005 = vmax.f32 %v3941, 0.0
      %v4006 = vmax.f32 %v3942, 0.0
      %v4007 = vmax.f32 %v3943, 0.0
      %v4008 = vmax.f32 %v3944, 0.0
      %v4009 = vmax.f32 %v3945, 0.0
      %v4010 = vmax.f32 %v3946, 0.0
      %v4011 = vmax.f32 %v3947, 0.0
      %v4012 = vmax.f32 %v3948, 0.0
      %v4013 = vmax.f32 %v3949, 0.0
      %v4014 = vmax.f32 %v3950, 0.0
      %v4015 = vmax.f32 %v3951, 0.0
      %v4016 = vmax.f32 %v3952, 0.0
      %v4017 = vmax.f32 %v3953, 0.0
      %v4018 = vmax.f32 %v3954, 0.0
      %v4019 = vmax.f32 %v3955, 0.0
      %v4020 = vmax.f32 %v3956, 0.0
      %v4021 = vmax.f32 %v3957, 0.0
      %v4022 = vmax.f32 %v3958, 0.0
      %v4023 = vmax.f32 %v3959, 0.0
      %v4024 = vmax.f32 %v3960, 0.0
      %v4025 = vmax.f32 %v3961, 0.0
      %v4026 = vmax.f32 %v3962, 0.0
      %v4027 = vmax.f32 %v3963, 0.0
      %v4028 = vmax.f32 %v3964, 0.0
      %v4029 = vmax.f32 %v3965, 0.0
      %v4030 = vmax.f32 %v3966, 0.0
      %v4031 = vmax.f32 %v3967, 0.0
      %v4032 = vmax.f32 %v3968, 0.0
      %v4033 = vmax.f32 %v3969, 0.0
      %v4034 = vmax.f32 %v3970, 0.0
      %v4035 = vmax.f32 %v3971, 0.0
      %v4036 = vmax.f32 %v3972, 0.0
      %v4037 = vmax.f32 %v3973, 0.0
      %v4038 = vmax.f32 %v3974, 0.0
      %v4039 = vmax.f32 %v3975, 0.0
      %v4040 = vmax.f32 %v3976, 0.0
      %v4041 = vmax.f32 %v3977, 0.0
      %v4042 = vmax.f32 %v3978, 0.0
      %v4043 = vmax.f32 %v3979, 0.0
      %v4044 = vmax.f32 %v3980, 0.0
      %v4045 = vmax.f32 %v3981, 0.0
      %v4046 = vmax.f32 %v3982, 0.0
      %v4047 = vmax.f32 %v3983, 0.0
      %v4048 = vmax.f32 %v3984, 0.0
      %v4049 = vmax.f32 %v3985, 0.0
      %v4050 = vmax.f32 %v3986, 0.0
      %v4051 = vmax.f32 %v3987, 0.0
      %vm4052 = vcmask 130048
      %4053 = vst.msk [vmem:[%s170] sm:$0xff] %vm4052, %v3988
      %4054 = vst.msk [vmem:[%s170 + $0x8] sm:$0xff] %vm4052, %v3989
      %4055 = vst.msk [vmem:[%s170 + $0x10] sm:$0xff] %vm4052, %v3990
      %4056 = vst.msk [vmem:[%s170 + $0x18] sm:$0xff] %vm4052, %v3991
      %4057 = vst.msk [vmem:[%s170 + $0x20] sm:$0xff] %vm4052, %v3992
      %4058 = vst.msk [vmem:[%s170 + $0x28] sm:$0xff] %vm4052, %v3993
      %4059 = vst.msk [vmem:[%s170 + $0x30] sm:$0xff] %vm4052, %v3994
      %4060 = vst.msk [vmem:[%s170 + $0x38] sm:$0xff] %vm4052, %v3995
      %4061 = vst.msk [vmem:[%s170 + $0x40] sm:$0xff] %vm4052, %v3996
      %4062 = vst.msk [vmem:[%s170 + $0x48] sm:$0xff] %vm4052, %v3997
      %4063 = vst.msk [vmem:[%s170 + $0x50] sm:$0xff] %vm4052, %v3998
      %4064 = vst.msk [vmem:[%s170 + $0x58] sm:$0xff] %vm4052, %v3999
      %4065 = vst.msk [vmem:[%s170 + $0x60] sm:$0xff] %vm4052, %v4000
      %4066 = vst.msk [vmem:[%s170 + $0x68] sm:$0xff] %vm4052, %v4001
      %4067 = vst.msk [vmem:[%s170 + $0x70] sm:$0xff] %vm4052, %v4002
      %4068 = vst.msk [vmem:[%s170 + $0x78] sm:$0xff] %vm4052, %v4003
      %4069 = vst.msk [vmem:[%s170 + $0x80] sm:$0xff] %vm4052, %v4004
      %4070 = vst.msk [vmem:[%s170 + $0x88] sm:$0xff] %vm4052, %v4005
      %4071 = vst.msk [vmem:[%s170 + $0x90] sm:$0xff] %vm4052, %v4006
      %4072 = vst.msk [vmem:[%s170 + $0x98] sm:$0xff] %vm4052, %v4007
      %4073 = vst.msk [vmem:[%s170 + $0xa0] sm:$0xff] %vm4052, %v4008
      %4074 = vst.msk [vmem:[%s170 + $0xa8] sm:$0xff] %vm4052, %v4009
      %4075 = vst.msk [vmem:[%s170 + $0xb0] sm:$0xff] %vm4052, %v4010
      %4076 = vst.msk [vmem:[%s170 + $0xb8] sm:$0xff] %vm4052, %v4011
      %4077 = vst.msk [vmem:[%s170 + $0xc0] sm:$0xff] %vm4052, %v4012
      %4078 = vst.msk [vmem:[%s170 + $0xc8] sm:$0xff] %vm4052, %v4013
      %4079 = vst.msk [vmem:[%s170 + $0xd0] sm:$0xff] %vm4052, %v4014
      %4080 = vst.msk [vmem:[%s170 + $0xd8] sm:$0xff] %vm4052, %v4015
      %4081 = vst.msk [vmem:[%s170 + $0xe0] sm:$0xff] %vm4052, %v4016
      %4082 = vst.msk [vmem:[%s170 + $0xe8] sm:$0xff] %vm4052, %v4017
      %4083 = vst.msk [vmem:[%s170 + $0xf0] sm:$0xff] %vm4052, %v4018
      %4084 = vst.msk [vmem:[%s170 + $0xf8] sm:$0xff] %vm4052, %v4019
      %4085 = vst.msk [vmem:[%s170 + $0x100] sm:$0xff] %vm4052, %v4020
      %4086 = vst.msk [vmem:[%s170 + $0x108] sm:$0xff] %vm4052, %v4021
      %4087 = vst.msk [vmem:[%s170 + $0x110] sm:$0xff] %vm4052, %v4022
      %4088 = vst.msk [vmem:[%s170 + $0x118] sm:$0xff] %vm4052, %v4023
      %4089 = vst.msk [vmem:[%s170 + $0x120] sm:$0xff] %vm4052, %v4024
      %4090 = vst.msk [vmem:[%s170 + $0x128] sm:$0xff] %vm4052, %v4025
      %4091 = vst.msk [vmem:[%s170 + $0x130] sm:$0xff] %vm4052, %v4026
      %4092 = vst.msk [vmem:[%s170 + $0x138] sm:$0xff] %vm4052, %v4027
      %4093 = vst.msk [vmem:[%s170 + $0x140] sm:$0xff] %vm4052, %v4028
      %4094 = vst.msk [vmem:[%s170 + $0x148] sm:$0xff] %vm4052, %v4029
      %4095 = vst.msk [vmem:[%s170 + $0x150] sm:$0xff] %vm4052, %v4030
      %4096 = vst.msk [vmem:[%s170 + $0x158] sm:$0xff] %vm4052, %v4031
      %4097 = vst.msk [vmem:[%s170 + $0x160] sm:$0xff] %vm4052, %v4032
      %4098 = vst.msk [vmem:[%s170 + $0x168] sm:$0xff] %vm4052, %v4033
      %4099 = vst.msk [vmem:[%s170 + $0x170] sm:$0xff] %vm4052, %v4034
      %4100 = vst.msk [vmem:[%s170 + $0x178] sm:$0xff] %vm4052, %v4035
      %4101 = vst.msk [vmem:[%s170 + $0x180] sm:$0xff] %vm4052, %v4036
      %4102 = vst.msk [vmem:[%s170 + $0x188] sm:$0xff] %vm4052, %v4037
      %4103 = vst.msk [vmem:[%s170 + $0x190] sm:$0xff] %vm4052, %v4038
      %4104 = vst.msk [vmem:[%s170 + $0x198] sm:$0xff] %vm4052, %v4039
      %4105 = vst.msk [vmem:[%s170 + $0x1a0] sm:$0xff] %vm4052, %v4040
      %4106 = vst.msk [vmem:[%s170 + $0x1a8] sm:$0xff] %vm4052, %v4041
      %4107 = vst.msk [vmem:[%s170 + $0x1b0] sm:$0xff] %vm4052, %v4042
      %4108 = vst.msk [vmem:[%s170 + $0x1b8] sm:$0xff] %vm4052, %v4043
      %4109 = vst.msk [vmem:[%s170 + $0x1c0] sm:$0xff] %vm4052, %v4044
      %4110 = vst.msk [vmem:[%s170 + $0x1c8] sm:$0xff] %vm4052, %v4045
      %4111 = vst.msk [vmem:[%s170 + $0x1d0] sm:$0xff] %vm4052, %v4046
      %4112 = vst.msk [vmem:[%s170 + $0x1d8] sm:$0xff] %vm4052, %v4047
      %4113 = vst.msk [vmem:[%s170 + $0x1e0] sm:$0xff] %vm4052, %v4048
      %4114 = vst.msk [vmem:[%s170 + $0x1e8] sm:$0xff] %vm4052, %v4049
      %4115 = vst.msk [vmem:[%s170 + $0x1f0] sm:$0xff] %vm4052, %v4050
      %4116 = vst.msk [vmem:[%s170 + $0x1f8] sm:$0xff] %vm4052, %v4051
      %p4117 = scmp.lt.s32.totalorder %s14, 1
      %s4118 = scalar_select %p4117, %s14, 1
      %s4119 = smul.addr %s4118, 64
      %s4120 = smul.addr %s4119, 8
      %s4121 = scalar_lea.vmem %s3, %s4120
      // Predicated region
      $region33: #{ocr_encoder_forward.6} parent=31 // pred_check
        %p4122 = pneg %p100
      $region34: #{ocr_encoder_forward.6} parent=31 // pred_check_branch
        %4124 = sbr.rel (%p4122) target = $region36
      $region35: #{ocr_encoder_forward.6} parent=31 // pred_region
        _
      $region36: #{ocr_encoder_forward.6} parent=31 // pred_fallthru
        _
    $region32: #{ocr_encoder_forward.6} parent=5 // pred_fallthru
      _
    %p4125 = scmp.le.s32.totalorder 2, %s9
    // Predicated region
    $region37: #{ocr_encoder_forward.6} parent=5 // pred_check
      %p4126 = pneg %p4125
    $region38: #{ocr_encoder_forward.6} parent=5 // pred_check_branch
      %4128 = sbr.rel (%p4126) target = $region40
    $region39: #{ocr_encoder_forward.6} parent=5 // pred_region
      %s4129 = ssub.s32 %s9, 2
      // Predicated region
      $region41: #{ocr_encoder_forward.6} parent=39 // pred_check
        %p4130 = pneg %p106
      $region42: #{ocr_encoder_forward.6} parent=39 // pred_check_branch
        %4132 = sbr.rel (%p4130) target = $region44
      $region43: #{ocr_encoder_forward.6} parent=39 // pred_region
        %p4133 = scmp.lt.s32.totalorder %s15, 1
        %s4134 = scalar_select %p4133, %s15, 1
        %s4135 = smul.addr %s4134, 64
        %s4136 = smul.addr %s4135, 8
        %s4137 = scalar_lea.vmem %s3, %s4136
      $region44: #{ocr_encoder_forward.6} parent=39 // pred_fallthru
        _
    $region40: #{ocr_encoder_forward.6} parent=5 // pred_fallthru
      _
  $region6: #{ocr_encoder_forward.6} parent=0 // loop_footer
    %s13 = sadd.s32 1, %s9
  $region7: #{ocr_encoder_forward.6} parent=0 // loop_footer_branch
    %8 = sbr.rel target = $region3
  $region8: #{ocr_encoder_forward.6} parent=0 // loop_exit
    _

// kernel: ocr_encoder_forward.11
$region0: #{ocr_encoder_forward.11}
  #allocation0 [shape = 'u32[]', space=smem, size = 0x4, offset = 0x4, fixed_abs, tag = 'smem constant byte address 0x4 - core index']
  #allocation1 [shape = 'u32[72,128]{1,0:T(1,128)}', space=vmem, size = 0x9000, scoped, tag = 'internal scratch']
  %s0 = inlined_call_operand.vmem [shape: f32[128,32], index: 0, kind: input, shape index: {}]
  %s1 = inlined_call_operand.vmem [shape: f32[1,32], index: 1, kind: input, shape index: {}]
  %s2 = inlined_call_operand.vmem [shape: f32[1,32], index: 2, kind: input, shape index: {}]
  %s3 = inlined_call_operand.vmem [shape: f32[128,32], index: 3, kind: output, shape index: {}]
  %s4 = sld [smem:[#allocation0]]
  $region45: #{ocr_encoder_forward.11} parent=0
    _
  %s6 = ssub.s32 1, %s4
  %s7 = scalar_select 0, %s6, %s4
  loop: start=0, step=1, limit=4
  $region2: #{ocr_encoder_forward.11} parent=0 // loop_pre_header
    _
  $region3: #{ocr_encoder_forward.11} parent=0 // loop_header
    %s9 = sphi 0, %s13
    %p10 = scmp.ge.s32.totalorder %s9, 4
    %s19 = sphi 0, %s21
    %s22 = sphi 0, %s19
    %s23 = sphi 0, %s22
    %s39 = sphi 0, %s23
    %s43 = sphi 0, %s43
    %s45 = sphi 0, %s43
    %s46 = sphi 0, %s45
    %s60 = sphi 0, %s46
    %s64 = sphi 0, %s64
    %s66 = sphi 0, %s64
    %s67 = sphi 0, %s66
    %s81 = sphi 0, %s67
    %s87 = sphi 0, %s89
    %s90 = sphi 0, %s87
    %s91 = sphi 0, %s90
    %s107 = sphi 0, %s91
  $region4: #{ocr_encoder_forward.11} parent=0 // loop_header_branch
    %12 = sbr.rel (%p10) target = $region8
  $region5: #{ocr_encoder_forward.11} parent=0 // loop_body
    %s14 = ssub.s32 %s9, 1
    %s15 = ssub.s32 %s9, 2
    %s16 = sadd.s32 %s9, 1
    %s17 = ssub.s32 %s9, %s16
    %p18 = scmp.eq.s32.totalorder %s17, 0
    %s20 = sadd.s32 %s19, 1
    %s21 = scalar_select %p18, %s19, %s20
    %p24 = pneg %p18
    %p25 = scmp.eq.s32.totalorder %s9, 1
    %p26 = por %p24, %p25
    %p27 = scmp.ne.s32.totalorder %s19, %s22
    %p28 = scmp.eq.s32.totalorder %s9, 0
    %p29 = por %p27, %p28
    %p30 = scmp.ne.s32.totalorder %s19, %s22
    %p31 = scmp.eq.s32.totalorder %s14, 1
    %p32 = por %p30, %p31
    %p33 = scmp.ne.s32.totalorder %s22, %s23
    %p34 = scmp.eq.s32.totalorder %s14, 0
    %p35 = por %p33, %p34
    %p36 = scmp.ne.s32.totalorder %s22, %s23
    %p37 = scmp.eq.s32.totalorder %s15, 1
    %p38 = por %p36, %p37
    %p40 = scmp.ne.s32.totalorder %s23, %s39
    %p41 = scmp.eq.s32.totalorder %s15, 0
    %p42 = por %p40, %p41
    %s44 = sadd.s32 %s43, 1
    %p47 = scmp.eq.s32.totalorder %s9, 1
    %p48 = scmp.ne.s32.totalorder %s43, %s45
    %p49 = scmp.eq.s32.totalorder %s9, 0
    %p50 = por %p48, %p49
    %p51 = scmp.ne.s32.totalorder %s43, %s45
    %p52 = scmp.eq.s32.totalorder %s14, 1
    %p53 = por %p51, %p52
    %p54 = scmp.ne.s32.totalorder %s45, %s46
    %p55 = scmp.eq.s32.totalorder %s14, 0
    %p56 = por %p54, %p55
    %p57 = scmp.ne.s32.totalorder %s45, %s46
    %p58 = scmp.eq.s32.totalorder %s15, 1
    %p59 = por %p57, %p58
    %p61 = scmp.ne.s32.totalorder %s46, %s60
    %p62 = scmp.eq.s32.totalorder %s15, 0
    %p63 = por %p61, %p62
    %s65 = sadd.s32 %s64, 1
    %p68 = scmp.eq.s32.totalorder %s9, 1
    %p69 = scmp.ne.s32.totalorder %s64, %s66
    %p70 = scmp.eq.s32.totalorder %s9, 0
    %p71 = por %p69, %p70
    %p72 = scmp.ne.s32.totalorder %s64, %s66
    %p73 = scmp.eq.s32.totalorder %s14, 1
    %p74 = por %p72, %p73
    %p75 = scmp.ne.s32.totalorder %s66, %s67
    %p76 = scmp.eq.s32.totalorder %s14, 0
    %p77 = por %p75, %p76
    %p78 = scmp.ne.s32.totalorder %s66, %s67
    %p79 = scmp.eq.s32.totalorder %s15, 1
    %p80 = por %p78, %p79
    %p82 = scmp.ne.s32.totalorder %s67, %s81
    %p83 = scmp.eq.s32.totalorder %s15, 0
    %p84 = por %p82, %p83
    %s85 = ssub.s32 %s9, %s16
    %p86 = scmp.eq.s32.totalorder %s85, 0
    %s88 = sadd.s32 %s87, 1
    %s89 = scalar_select %p86, %s87, %s88
    %p92 = pneg %p86
    %p93 = scmp.eq.s32.totalorder %s9, 1
    %p94 = por %p92, %p93
    %p95 = scmp.ne.s32.totalorder %s87, %s90
    %p96 = scmp.eq.s32.totalorder %s9, 0
    %p97 = por %p95, %p96
    %p98 = scmp.ne.s32.totalorder %s87, %s90
    %p99 = scmp.eq.s32.totalorder %s14, 1
    %p100 = por %p98, %p99
    %p101 = scmp.ne.s32.totalorder %s90, %s91
    %p102 = scmp.eq.s32.totalorder %s14, 0
    %p103 = por %p101, %p102
    %p104 = scmp.ne.s32.totalorder %s90, %s91
    %p105 = scmp.eq.s32.totalorder %s15, 1
    %p106 = por %p104, %p105
    %p108 = scmp.ne.s32.totalorder %s91, %s107
    %p109 = scmp.eq.s32.totalorder %s15, 0
    %p110 = por %p108, %p109
    %p111 = scmp.le.s32.totalorder 1, %s9
    %p112 = scmp.lt.s32.totalorder %s9, 3
    %p113 = pnand %p111, %p112
    %p114 = pneg %p113
    // Predicated region
    $region9: #{ocr_encoder_forward.11} parent=5 // pred_check
      _
    $region10: #{ocr_encoder_forward.11} parent=5 // pred_check_branch
      %116 = sbr.rel (%p113) target = $region12
    $region11: #{ocr_encoder_forward.11} parent=5 // pred_region
      %s117 = ssub.s32 %s9, 1
      // Predicated region
      $region13: #{ocr_encoder_forward.11} parent=11 // pred_check
        %p118 = pneg %p56
      $region14: #{ocr_encoder_forward.11} parent=11 // pred_check_branch
        %120 = sbr.rel (%p118) target = $region16
      $region15: #{ocr_encoder_forward.11} parent=11 // pred_region
        _
      $region16: #{ocr_encoder_forward.11} parent=11 // pred_fallthru
        _
      // Predicated region
      $region17: #{ocr_encoder_forward.11} parent=11 // pred_check
        %p121 = pneg %p77
      $region18: #{ocr_encoder_forward.11} parent=11 // pred_check_branch
        %123 = sbr.rel (%p121) target = $region20
      $region19: #{ocr_encoder_forward.11} parent=11 // pred_region
        _
      $region20: #{ocr_encoder_forward.11} parent=11 // pred_fallthru
        _
    $region12: #{ocr_encoder_forward.11} parent=5 // pred_fallthru
      _
    %p124 = scmp.lt.s32.totalorder %s9, 2
    // Predicated region
    $region21: #{ocr_encoder_forward.11} parent=5 // pred_check
      %p125 = pneg %p124
    $region22: #{ocr_encoder_forward.11} parent=5 // pred_check_branch
      %127 = sbr.rel (%p125) target = $region24
    $region23: #{ocr_encoder_forward.11} parent=5 // pred_region
      // Predicated region
      $region25: #{ocr_encoder_forward.11} parent=23 // pred_check
        %p128 = pneg %p29
      $region26: #{ocr_encoder_forward.11} parent=23 // pred_check_branch
        %130 = sbr.rel (%p128) target = $region28
      $region27: #{ocr_encoder_forward.11} parent=23 // pred_region
        %s131 = smul.u32 8, %s9
        %p132 = scmp.lt.s32.totalorder %s131, 15
        %s133 = scalar_select %p132, %s131, 15
        %s134 = smul.addr %s133, 8
        %s135 = scalar_lea.vmem %s0, %s134
        %s136 = smul.u32 8, %s9
      $region28: #{ocr_encoder_forward.11} parent=23 // pred_fallthru
        _
    $region24: #{ocr_encoder_forward.11} parent=5 // pred_fallthru
      _
    %p137 = scmp.le.s32.totalorder 1, %s9
    %p138 = scmp.lt.s32.totalorder %s9, 3
    %p139 = pnand %p137, %p138
    %p140 = pneg %p139
    // Predicated region
    $region29: #{ocr_encoder_forward.11} parent=5 // pred_check
      _
    $region30: #{ocr_encoder_forward.11} parent=5 // pred_check_branch
      %142 = sbr.rel (%p139) target = $region32
    $region31: #{ocr_encoder_forward.11} parent=5 // pred_region
      %s143 = ssub.s32 %s9, 1
      %s144 = smul.u32 8, %s14
      %p145 = scmp.lt.s32.totalorder %s144, 15
      %s146 = scalar_select %p145, %s144, 15
      %s147 = smul.addr %s146, 8
      %s148 = scalar_lea.vmem %s0, %s147
      %p149 = pneg %p35
      %p150 = pneg %p32
      %p151 = pneg %p56
      %p152 = pneg %p53
      %p153 = pneg %p77
      %p154 = pneg %p74
      %p155 = pneg %p103
      %p156 = pneg %p100
      %s157 = smul.u32 8, %s14
      %p158 = scmp.lt.s32.totalorder %s157, 15
      %s159 = scalar_select %p158, %s157, 15
      %s160 = smul.addr %s159, 8
      %s161 = scalar_lea.vmem %s3, %s160
      %s162 = smul.u32 8, %s14
      %p163 = scmp.lt.s32.totalorder %s162, 15
      %s164 = scalar_select %p163, %s162, 15
      %s165 = smul.addr %s164, 8
      %s166 = scalar_lea.vmem %s0, %s165
      %s167 = smul.u32 8, %s14
      %s168 = smul.u32 8, %s14
      %p169 = scmp.lt.s32.totalorder %s168, 15
      %s170 = scalar_select %p169, %s168, 15
      %s171 = smul.addr %s170, 8
      %s172 = scalar_lea.vmem %s3, %s171
      %s173 = smul.u32 8, %s14
      %v174 = vld [vmem:[%s166] sm:$0xff]
      %v175 = vld [vmem:[%s166 + $0x8] sm:$0xff]
      %v176 = vld [vmem:[%s166 + $0x10] sm:$0xff]
      %v177 = vld [vmem:[%s166 + $0x18] sm:$0xff]
      %v178 = vld [vmem:[%s166 + $0x20] sm:$0xff]
      %v179 = vld [vmem:[%s166 + $0x28] sm:$0xff]
      %v180 = vld [vmem:[%s166 + $0x30] sm:$0xff]
      %v181 = vld [vmem:[%s166 + $0x38] sm:$0xff]
      %vm182 = vcmask 261120
      %v183 = vsel %vm182, %v174, 0.0
      %184 = vadd.xlane.f32.xlu0 %v183
      %v185 = vpop.xlane.xlu0 %184
      %v186 = vsel %vm182, %v175, 0.0
      %187 = vadd.xlane.f32.xlu0 %v186
      %v188 = vpop.xlane.xlu0 %187
      %v189 = vsel %vm182, %v176, 0.0
      %190 = vadd.xlane.f32.xlu0 %v189
      %v191 = vpop.xlane.xlu0 %190
      %v192 = vsel %vm182, %v177, 0.0
      %193 = vadd.xlane.f32.xlu0 %v192
      %v194 = vpop.xlane.xlu0 %193
      %v195 = vsel %vm182, %v178, 0.0
      %196 = vadd.xlane.f32.xlu0 %v195
      %v197 = vpop.xlane.xlu0 %196
      %v198 = vsel %vm182, %v179, 0.0
      %199 = vadd.xlane.f32.xlu0 %v198
      %v200 = vpop.xlane.xlu0 %199
      %v201 = vsel %vm182, %v180, 0.0
      %202 = vadd.xlane.f32.xlu0 %v201
      %v203 = vpop.xlane.xlu0 %202
      %v204 = vsel %vm182, %v181, 0.0
      %205 = vadd.xlane.f32.xlu0 %v204
      %v206 = vpop.xlane.xlu0 %205
      %v207 = vrcp.pop 32.0
      %v208 = vmul.f32 32.0, %v207
      %v209 = vsub.f32 1.0, %v208
      %v210 = vmul.f32 %v207, %v209
      %v211 = vadd.f32 %v207, %v210
      %vm212 = vweird.f32 %v207
      %v213 = vsel %vm212, %v207, %v211
      %v214 = vmul.f32 %v185, %v213
      %v215 = vmul.f32 %v188, %v213
      %v216 = vmul.f32 %v191, %v213
      %v217 = vmul.f32 %v194, %v213
      %v218 = vmul.f32 %v197, %v213
      %v219 = vmul.f32 %v200, %v213
      %v220 = vmul.f32 %v203, %v213
      %v221 = vmul.f32 %v206, %v213
      %v222 = vsub.f32 %v174, %v214
      %v223 = vsub.f32 %v175, %v215
      %v224 = vsub.f32 %v176, %v216
      %v225 = vsub.f32 %v177, %v217
      %v226 = vsub.f32 %v178, %v218
      %v227 = vsub.f32 %v179, %v219
      %v228 = vsub.f32 %v180, %v220
      %v229 = vsub.f32 %v181, %v221
      %v230 = vmul.f32 %v222, %v222
      %v231 = vmul.f32 %v223, %v223
      %v232 = vmul.f32 %v224, %v224
      %v233 = vmul.f32 %v225, %v225
      %v234 = vmul.f32 %v226, %v226
      %v235 = vmul.f32 %v227, %v227
      %v236 = vmul.f32 %v228, %v228
      %v237 = vmul.f32 %v229, %v229
      %v238 = vsel %vm182, %v230, 0.0
      %239 = vadd.xlane.f32.xlu0 %v238
      %v240 = vpop.xlane.xlu0 %239
      %v241 = vsel %vm182, %v231, 0.0
      %242 = vadd.xlane.f32.xlu0 %v241
      %v243 = vpop.xlane.xlu0 %242
      %v244 = vsel %vm182, %v232, 0.0
      %245 = vadd.xlane.f32.xlu0 %v244
      %v246 = vpop.xlane.xlu0 %245
      %v247 = vsel %vm182, %v233, 0.0
      %248 = vadd.xlane.f32.xlu0 %v247
      %v249 = vpop.xlane.xlu0 %248
      %v250 = vsel %vm182, %v234, 0.0
      %251 = vadd.xlane.f32.xlu0 %v250
      %v252 = vpop.xlane.xlu0 %251
      %v253 = vsel %vm182, %v235, 0.0
      %254 = vadd.xlane.f32.xlu0 %v253
      %v255 = vpop.xlane.xlu0 %254
      %v256 = vsel %vm182, %v236, 0.0
      %257 = vadd.xlane.f32.xlu0 %v256
      %v258 = vpop.xlane.xlu0 %257
      %v259 = vsel %vm182, %v237, 0.0
      %260 = vadd.xlane.f32.xlu0 %v259
      %v261 = vpop.xlane.xlu0 %260
      %v262 = vmul.f32 %v240, %v213
      %v263 = vmul.f32 %v243, %v213
      %v264 = vmul.f32 %v246, %v213
      %v265 = vmul.f32 %v249, %v213
      %v266 = vmul.f32 %v252, %v213
      %v267 = vmul.f32 %v255, %v213
      %v268 = vmul.f32 %v258, %v213
      %v269 = vmul.f32 %v261, %v213
      %v270 = vadd.f32 %v262, 1e-05
      %v271 = vadd.f32 %v263, 1e-05
      %v272 = vadd.f32 %v264, 1e-05
      %v273 = vadd.f32 %v265, 1e-05
      %v274 = vadd.f32 %v266, 1e-05
      %v275 = vadd.f32 %v267, 1e-05
      %v276 = vadd.f32 %v268, 1e-05
      %v277 = vadd.f32 %v269, 1e-05
      %v278 = vrsqrt.pop %v270
      %v279 = vmul.f32 %v278, %v270
      %v280 = vmul.f32 %v279, %v278
      %v281 = vmul.f32 0.5, %v280
      %v282 = vsub.f32 1.5, %v281
      %v283 = vmul.f32 %v278, %v282
      %vm284 = vweird.f32 %v270
      %vm285 = vweird.f32 %v278
      %vm286 = vmor %vm284, %vm285
      %v287 = vsel %vm286, %v278, %v283
      %v288 = vrsqrt.pop %v271
      %v289 = vmul.f32 %v288, %v271
      %v290 = vmul.f32 %v289, %v288
      %v291 = vmul.f32 0.5, %v290
      %v292 = vsub.f32 1.5, %v291
      %v293 = vmul.f32 %v288, %v292
      %vm294 = vweird.f32 %v271
      %vm295 = vweird.f32 %v288
      %vm296 = vmor %vm294, %vm295
      %v297 = vsel %vm296, %v288, %v293
      %v298 = vrsqrt.pop %v272
      %v299 = vmul.f32 %v298, %v272
      %v300 = vmul.f32 %v299, %v298
      %v301 = vmul.f32 0.5, %v300
      %v302 = vsub.f32 1.5, %v301
      %v303 = vmul.f32 %v298, %v302
      %vm304 = vweird.f32 %v272
      %vm305 = vweird.f32 %v298
      %vm306 = vmor %vm304, %vm305
      %v307 = vsel %vm306, %v298, %v303
      %v308 = vrsqrt.pop %v273
      %v309 = vmul.f32 %v308, %v273
      %v310 = vmul.f32 %v309, %v308
      %v311 = vmul.f32 0.5, %v310
      %v312 = vsub.f32 1.5, %v311
      %v313 = vmul.f32 %v308, %v312
      %vm314 = vweird.f32 %v273
      %vm315 = vweird.f32 %v308
      %vm316 = vmor %vm314, %vm315
      %v317 = vsel %vm316, %v308, %v313
      %v318 = vrsqrt.pop %v274
      %v319 = vmul.f32 %v318, %v274
      %v320 = vmul.f32 %v319, %v318
      %v321 = vmul.f32 0.5, %v320
      %v322 = vsub.f32 1.5, %v321
      %v323 = vmul.f32 %v318, %v322
      %vm324 = vweird.f32 %v274
      %vm325 = vweird.f32 %v318
      %vm326 = vmor %vm324, %vm325
      %v327 = vsel %vm326, %v318, %v323
      %v328 = vrsqrt.pop %v275
      %v329 = vmul.f32 %v328, %v275
      %v330 = vmul.f32 %v329, %v328
      %v331 = vmul.f32 0.5, %v330
      %v332 = vsub.f32 1.5, %v331
      %v333 = vmul.f32 %v328, %v332
      %vm334 = vweird.f32 %v275
      %vm335 = vweird.f32 %v328
      %vm336 = vmor %vm334, %vm335
      %v337 = vsel %vm336, %v328, %v333
      %v338 = vrsqrt.pop %v276
      %v339 = vmul.f32 %v338, %v276
      %v340 = vmul.f32 %v339, %v338
      %v341 = vmul.f32 0.5, %v340
      %v342 = vsub.f32 1.5, %v341
      %v343 = vmul.f32 %v338, %v342
      %vm344 = vweird.f32 %v276
      %vm345 = vweird.f32 %v338
      %vm346 = vmor %vm344, %vm345
      %v347 = vsel %vm346, %v338, %v343
      %v348 = vrsqrt.pop %v277
      %v349 = vmul.f32 %v348, %v277
      %v350 = vmul.f32 %v349, %v348
      %v351 = vmul.f32 0.5, %v350
      %v352 = vsub.f32 1.5, %v351
      %v353 = vmul.f32 %v348, %v352
      %vm354 = vweird.f32 %v277
      %vm355 = vweird.f32 %v348
      %vm356 = vmor %vm354, %vm355
      %v357 = vsel %vm356, %v348, %v353
      %v358 = vmul.f32 %v222, %v287
      %v359 = vmul.f32 %v223, %v297
      %v360 = vmul.f32 %v224, %v307
      %v361 = vmul.f32 %v225, %v317
      %v362 = vmul.f32 %v226, %v327
      %v363 = vmul.f32 %v227, %v337
      %v364 = vmul.f32 %v228, %v347
      %v365 = vmul.f32 %v229, %v357
      %v366 = vld [vmem:[%s1] sm:$0x1]
      %v368 = vperm.slane %v366, 0
      %v370 = vmul.f32 %v358, %v368
      %v371 = vmul.f32 %v359, %v368
      %v372 = vmul.f32 %v360, %v368
      %v373 = vmul.f32 %v361, %v368
      %v374 = vmul.f32 %v362, %v368
      %v375 = vmul.f32 %v363, %v368
      %v376 = vmul.f32 %v364, %v368
      %v377 = vmul.f32 %v365, %v368
      %v378 = vld [vmem:[%s2] sm:$0x1]
      %v380 = vperm.slane %v378, 0
      %v382 = vadd.f32 %v370, %v380
      %v383 = vadd.f32 %v371, %v380
      %v384 = vadd.f32 %v372, %v380
      %v385 = vadd.f32 %v373, %v380
      %v386 = vadd.f32 %v374, %v380
      %v387 = vadd.f32 %v375, %v380
      %v388 = vadd.f32 %v376, %v380
      %v389 = vadd.f32 %v377, %v380
      %390 = vst.msk [vmem:[%s172] sm:$0xff] %vm182, %v382
      %391 = vst.msk [vmem:[%s172 + $0x8] sm:$0xff] %vm182, %v383
      %392 = vst.msk [vmem:[%s172 + $0x10] sm:$0xff] %vm182, %v384
      %393 = vst.msk [vmem:[%s172 + $0x18] sm:$0xff] %vm182, %v385
      %394 = vst.msk [vmem:[%s172 + $0x20] sm:$0xff] %vm182, %v386
      %395 = vst.msk [vmem:[%s172 + $0x28] sm:$0xff] %vm182, %v387
      %396 = vst.msk [vmem:[%s172 + $0x30] sm:$0xff] %vm182, %v388
      %397 = vst.msk [vmem:[%s172 + $0x38] sm:$0xff] %vm182, %v389
      %s398 = smul.u32 8, %s14
      %p399 = scmp.lt.s32.totalorder %s398, 15
      %s400 = scalar_select %p399, %s398, 15
      %s401 = smul.addr %s400, 8
      %s402 = scalar_lea.vmem %s3, %s401
      // Predicated region
      $region33: #{ocr_encoder_forward.11} parent=31 // pred_check
        %p403 = pneg %p100
      $region34: #{ocr_encoder_forward.11} parent=31 // pred_check_branch
        %405 = sbr.rel (%p403) target = $region36
      $region35: #{ocr_encoder_forward.11} parent=31 // pred_region
        %s406 = smul.u32 8, %s14
      $region36: #{ocr_encoder_forward.11} parent=31 // pred_fallthru
        _
    $region32: #{ocr_encoder_forward.11} parent=5 // pred_fallthru
      _
    %p407 = scmp.le.s32.totalorder 2, %s9
    // Predicated region
    $region37: #{ocr_encoder_forward.11} parent=5 // pred_check
      %p408 = pneg %p407
    $region38: #{ocr_encoder_forward.11} parent=5 // pred_check_branch
      %410 = sbr.rel (%p408) target = $region40
    $region39: #{ocr_encoder_forward.11} parent=5 // pred_region
      %s411 = ssub.s32 %s9, 2
      // Predicated region
      $region41: #{ocr_encoder_forward.11} parent=39 // pred_check
        %p412 = pneg %p106
      $region42: #{ocr_encoder_forward.11} parent=39 // pred_check_branch
        %414 = sbr.rel (%p412) target = $region44
      $region43: #{ocr_encoder_forward.11} parent=39 // pred_region
        %s415 = smul.u32 8, %s15
        %p416 = scmp.lt.s32.totalorder %s415, 15
        %s417 = scalar_select %p416, %s415, 15
        %s418 = smul.addr %s417, 8
        %s419 = scalar_lea.vmem %s3, %s418
      $region44: #{ocr_encoder_forward.11} parent=39 // pred_fallthru
        _
    $region40: #{ocr_encoder_forward.11} parent=5 // pred_fallthru
      _
  $region6: #{ocr_encoder_forward.11} parent=0 // loop_footer
    %s13 = sadd.s32 1, %s9
  $region7: #{ocr_encoder_forward.11} parent=0 // loop_footer_branch
    %8 = sbr.rel target = $region3
  $region8: #{ocr_encoder_forward.11} parent=0 // loop_exit
    _

// kernel: ocr_encoder_forward.9
$region0: #{ocr_encoder_forward.9}
  #allocation0 [shape = 'u32[]', space=smem, size = 0x4, offset = 0x4, fixed_abs, tag = 'smem constant byte address 0x4 - core index']
  #allocation1 [shape = 'u32[72,128]{1,0:T(1,128)}', space=vmem, size = 0x9000, scoped, tag = 'internal scratch']
  %s0 = inlined_call_operand.vmem [shape: f32[2,64,32], index: 0, kind: input, shape index: {}]
  %s1 = inlined_call_operand.vmem [shape: bf16[32,96], index: 1, kind: input, shape index: {}]
  %s2 = inlined_call_operand.vmem [shape: f32[1,96], index: 2, kind: input, shape index: {}]
  %s3 = inlined_call_operand.vmem [shape: bf16[4,8,32], index: 3, kind: input, shape index: {}]
  %s4 = inlined_call_operand.vmem [shape: f32[1,32], index: 4, kind: input, shape index: {}]
  %s5 = inlined_call_operand.vmem [shape: f32[1,32], index: 5, kind: input, shape index: {}]
  %s6 = inlined_call_operand.vmem [shape: f32[1,32], index: 6, kind: input, shape index: {}]
  %s7 = inlined_call_operand.vmem [shape: bf16[32,64], index: 7, kind: input, shape index: {}]
  %s8 = inlined_call_operand.vmem [shape: f32[1,64], index: 8, kind: input, shape index: {}]
  %s9 = inlined_call_operand.vmem [shape: bf16[64,32], index: 9, kind: input, shape index: {}]
  %s10 = inlined_call_operand.vmem [shape: f32[1,32], index: 10, kind: input, shape index: {}]
  %s11 = inlined_call_operand.vmem [shape: f32[1,32], index: 11, kind: input, shape index: {}]
  %s12 = inlined_call_operand.vmem [shape: f32[1,32], index: 12, kind: input, shape index: {}]
  %s13 = inlined_call_operand.vmem [shape: f32[2,64,32], index: 13, kind: output, shape index: {}]
  %s14 = sld [smem:[#allocation0]]
  $region85: #{ocr_encoder_forward.9} parent=0
    _
  %s16 = ssub.s32 1, %s14
  %s17 = scalar_select 0, %s16, %s14
  loop: start=0, step=1, limit=4
  $region2: #{ocr_encoder_forward.9} parent=0 // loop_pre_header
    _
  $region3: #{ocr_encoder_forward.9} parent=0 // loop_header
    %s19 = sphi 0, %s23
    %p20 = scmp.ge.s32.totalorder %s19, 4
    %s29 = sphi 0, %s31
    %s32 = sphi 0, %s29
    %s33 = sphi 0, %s32
    %s49 = sphi 0, %s33
    %s53 = sphi 0, %s53
    %s55 = sphi 0, %s53
    %s56 = sphi 0, %s55
    %s70 = sphi 0, %s56
    %s74 = sphi 0, %s74
    %s76 = sphi 0, %s74
    %s77 = sphi 0, %s76
    %s91 = sphi 0, %s77
    %s95 = sphi 0, %s95
    %s97 = sphi 0, %s95
    %s98 = sphi 0, %s97
    %s112 = sphi 0, %s98
    %s116 = sphi 0, %s116
    %s118 = sphi 0, %s116
    %s119 = sphi 0, %s118
    %s133 = sphi 0, %s119
    %s137 = sphi 0, %s137
    %s139 = sphi 0, %s137
    %s140 = sphi 0, %s139
    %s154 = sphi 0, %s140
    %s158 = sphi 0, %s158
    %s160 = sphi 0, %s158
    %s161 = sphi 0, %s160
    %s175 = sphi 0, %s161
    %s179 = sphi 0, %s179
    %s181 = sphi 0, %s179
    %s182 = sphi 0, %s181
    %s196 = sphi 0, %s182
    %s200 = sphi 0, %s200
    %s202 = sphi 0, %s200
    %s203 = sphi 0, %s202
    %s217 = sphi 0, %s203
    %s221 = sphi 0, %s221
    %s223 = sphi 0, %s221
    %s224 = sphi 0, %s223
    %s238 = sphi 0, %s224
    %s242 = sphi 0, %s242
    %s244 = sphi 0, %s242
    %s245 = sphi 0, %s244
    %s259 = sphi 0, %s245
    %s263 = sphi 0, %s263
    %s265 = sphi 0, %s263
    %s266 = sphi 0, %s265
    %s280 = sphi 0, %s266
    %s284 = sphi 0, %s284
    %s286 = sphi 0, %s284
    %s287 = sphi 0, %s286
    %s301 = sphi 0, %s287
    %s307 = sphi 0, %s309
    %s310 = sphi 0, %s307
    %s311 = sphi 0, %s310
    %s327 = sphi 0, %s311
  $region4: #{ocr_encoder_forward.9} parent=0 // loop_header_branch
    %22 = sbr.rel (%p20) target = $region8
  $region5: #{ocr_encoder_forward.9} parent=0 // loop_body
    %s24 = ssub.s32 %s19, 1
    %s25 = ssub.s32 %s19, 2
    %s26 = sadd.s32 %s19, 1
    %s27 = ssub.s32 %s19, %s26
    %p28 = scmp.eq.s32.totalorder %s27, 0
    %s30 = sadd.s32 %s29, 1
    %s31 = scalar_select %p28, %s29, %s30
    %p34 = pneg %p28
    %p35 = scmp.eq.s32.totalorder %s19, 1
    %p36 = por %p34, %p35
    %p37 = scmp.ne.s32.totalorder %s29, %s32
    %p38 = scmp.eq.s32.totalorder %s19, 0
    %p39 = por %p37, %p38
    %p40 = scmp.ne.s32.totalorder %s29, %s32
    %p41 = scmp.eq.s32.totalorder %s24, 1
    %p42 = por %p40, %p41
    %p43 = scmp.ne.s32.totalorder %s32, %s33
    %p44 = scmp.eq.s32.totalorder %s24, 0
    %p45 = por %p43, %p44
    %p46 = scmp.ne.s32.totalorder %s32, %s33
    %p47 = scmp.eq.s32.totalorder %s25, 1
    %p48 = por %p46, %p47
    %p50 = scmp.ne.s32.totalorder %s33, %s49
    %p51 = scmp.eq.s32.totalorder %s25, 0
    %p52 = por %p50, %p51
    %s54 = sadd.s32 %s53, 1
    %p57 = scmp.eq.s32.totalorder %s19, 1
    %p58 = scmp.ne.s32.totalorder %s53, %s55
    %p59 = scmp.eq.s32.totalorder %s19, 0
    %p60 = por %p58, %p59
    %p61 = scmp.ne.s32.totalorder %s53, %s55
    %p62 = scmp.eq.s32.totalorder %s24, 1
    %p63 = por %p61, %p62
    %p64 = scmp.ne.s32.totalorder %s55, %s56
    %p65 = scmp.eq.s32.totalorder %s24, 0
    %p66 = por %p64, %p65
    %p67 = scmp.ne.s32.totalorder %s55, %s56
    %p68 = scmp.eq.s32.totalorder %s25, 1
    %p69 = por %p67, %p68
    %p71 = scmp.ne.s32.totalorder %s56, %s70
    %p72 = scmp.eq.s32.totalorder %s25, 0
    %p73 = por %p71, %p72
    %s75 = sadd.s32 %s74, 1
    %p78 = scmp.eq.s32.totalorder %s19, 1
    %p79 = scmp.ne.s32.totalorder %s74, %s76
    %p80 = scmp.eq.s32.totalorder %s19, 0
    %p81 = por %p79, %p80
    %p82 = scmp.ne.s32.totalorder %s74, %s76
    %p83 = scmp.eq.s32.totalorder %s24, 1
    %p84 = por %p82, %p83
    %p85 = scmp.ne.s32.totalorder %s76, %s77
    %p86 = scmp.eq.s32.totalorder %s24, 0
    %p87 = por %p85, %p86
    %p88 = scmp.ne.s32.totalorder %s76, %s77
    %p89 = scmp.eq.s32.totalorder %s25, 1
    %p90 = por %p88, %p89
    %p92 = scmp.ne.s32.totalorder %s77, %s91
    %p93 = scmp.eq.s32.totalorder %s25, 0
    %p94 = por %p92, %p93
    %s96 = sadd.s32 %s95, 1
    %p99 = scmp.eq.s32.totalorder %s19, 1
    %p100 = scmp.ne.s32.totalorder %s95, %s97
    %p101 = scmp.eq.s32.totalorder %s19, 0
    %p102 = por %p100, %p101
    %p103 = scmp.ne.s32.totalorder %s95, %s97
    %p104 = scmp.eq.s32.totalorder %s24, 1
    %p105 = por %p103, %p104
    %p106 = scmp.ne.s32.totalorder %s97, %s98
    %p107 = scmp.eq.s32.totalorder %s24, 0
    %p108 = por %p106, %p107
    %p109 = scmp.ne.s32.totalorder %s97, %s98
    %p110 = scmp.eq.s32.totalorder %s25, 1
    %p111 = por %p109, %p110
    %p113 = scmp.ne.s32.totalorder %s98, %s112
    %p114 = scmp.eq.s32.totalorder %s25, 0
    %p115 = por %p113, %p114
    %s117 = sadd.s32 %s116, 1
    %p120 = scmp.eq.s32.totalorder %s19, 1
    %p121 = scmp.ne.s32.totalorder %s116, %s118
    %p122 = scmp.eq.s32.totalorder %s19, 0
    %p123 = por %p121, %p122
    %p124 = scmp.ne.s32.totalorder %s116, %s118
    %p125 = scmp.eq.s32.totalorder %s24, 1
    %p126 = por %p124, %p125
    %p127 = scmp.ne.s32.totalorder %s118, %s119
    %p128 = scmp.eq.s32.totalorder %s24, 0
    %p129 = por %p127, %p128
    %p130 = scmp.ne.s32.totalorder %s118, %s119
    %p131 = scmp.eq.s32.totalorder %s25, 1
    %p132 = por %p130, %p131
    %p134 = scmp.ne.s32.totalorder %s119, %s133
    %p135 = scmp.eq.s32.totalorder %s25, 0
    %p136 = por %p134, %p135
    %s138 = sadd.s32 %s137, 1
    %p141 = scmp.eq.s32.totalorder %s19, 1
    %p142 = scmp.ne.s32.totalorder %s137, %s139
    %p143 = scmp.eq.s32.totalorder %s19, 0
    %p144 = por %p142, %p143
    %p145 = scmp.ne.s32.totalorder %s137, %s139
    %p146 = scmp.eq.s32.totalorder %s24, 1
    %p147 = por %p145, %p146
    %p148 = scmp.ne.s32.totalorder %s139, %s140
    %p149 = scmp.eq.s32.totalorder %s24, 0
    %p150 = por %p148, %p149
    %p151 = scmp.ne.s32.totalorder %s139, %s140
    %p152 = scmp.eq.s32.totalorder %s25, 1
    %p153 = por %p151, %p152
    %p155 = scmp.ne.s32.totalorder %s140, %s154
    %p156 = scmp.eq.s32.totalorder %s25, 0
    %p157 = por %p155, %p156
    %s159 = sadd.s32 %s158, 1
    %p162 = scmp.eq.s32.totalorder %s19, 1
    %p163 = scmp.ne.s32.totalorder %s158, %s160
    %p164 = scmp.eq.s32.totalorder %s19, 0
    %p165 = por %p163, %p164
    %p166 = scmp.ne.s32.totalorder %s158, %s160
    %p167 = scmp.eq.s32.totalorder %s24, 1
    %p168 = por %p166, %p167
    %p169 = scmp.ne.s32.totalorder %s160, %s161
    %p170 = scmp.eq.s32.totalorder %s24, 0
    %p171 = por %p169, %p170
    %p172 = scmp.ne.s32.totalorder %s160, %s161
    %p173 = scmp.eq.s32.totalorder %s25, 1
    %p174 = por %p172, %p173
    %p176 = scmp.ne.s32.totalorder %s161, %s175
    %p177 = scmp.eq.s32.totalorder %s25, 0
    %p178 = por %p176, %p177
    %s180 = sadd.s32 %s179, 1
    %p183 = scmp.eq.s32.totalorder %s19, 1
    %p184 = scmp.ne.s32.totalorder %s179, %s181
    %p185 = scmp.eq.s32.totalorder %s19, 0
    %p186 = por %p184, %p185
    %p187 = scmp.ne.s32.totalorder %s179, %s181
    %p188 = scmp.eq.s32.totalorder %s24, 1
    %p189 = por %p187, %p188
    %p190 = scmp.ne.s32.totalorder %s181, %s182
    %p191 = scmp.eq.s32.totalorder %s24, 0
    %p192 = por %p190, %p191
    %p193 = scmp.ne.s32.totalorder %s181, %s182
    %p194 = scmp.eq.s32.totalorder %s25, 1
    %p195 = por %p193, %p194
    %p197 = scmp.ne.s32.totalorder %s182, %s196
    %p198 = scmp.eq.s32.totalorder %s25, 0
    %p199 = por %p197, %p198
    %s201 = sadd.s32 %s200, 1
    %p204 = scmp.eq.s32.totalorder %s19, 1
    %p205 = scmp.ne.s32.totalorder %s200, %s202
    %p206 = scmp.eq.s32.totalorder %s19, 0
    %p207 = por %p205, %p206
    %p208 = scmp.ne.s32.totalorder %s200, %s202
    %p209 = scmp.eq.s32.totalorder %s24, 1
    %p210 = por %p208, %p209
    %p211 = scmp.ne.s32.totalorder %s202, %s203
    %p212 = scmp.eq.s32.totalorder %s24, 0
    %p213 = por %p211, %p212
    %p214 = scmp.ne.s32.totalorder %s202, %s203
    %p215 = scmp.eq.s32.totalorder %s25, 1
    %p216 = por %p214, %p215
    %p218 = scmp.ne.s32.totalorder %s203, %s217
    %p219 = scmp.eq.s32.totalorder %s25, 0
    %p220 = por %p218, %p219
    %s222 = sadd.s32 %s221, 1
    %p225 = scmp.eq.s32.totalorder %s19, 1
    %p226 = scmp.ne.s32.totalorder %s221, %s223
    %p227 = scmp.eq.s32.totalorder %s19, 0
    %p228 = por %p226, %p227
    %p229 = scmp.ne.s32.totalorder %s221, %s223
    %p230 = scmp.eq.s32.totalorder %s24, 1
    %p231 = por %p229, %p230
    %p232 = scmp.ne.s32.totalorder %s223, %s224
    %p233 = scmp.eq.s32.totalorder %s24, 0
    %p234 = por %p232, %p233
    %p235 = scmp.ne.s32.totalorder %s223, %s224
    %p236 = scmp.eq.s32.totalorder %s25, 1
    %p237 = por %p235, %p236
    %p239 = scmp.ne.s32.totalorder %s224, %s238
    %p240 = scmp.eq.s32.totalorder %s25, 0
    %p241 = por %p239, %p240
    %s243 = sadd.s32 %s242, 1
    %p246 = scmp.eq.s32.totalorder %s19, 1
    %p247 = scmp.ne.s32.totalorder %s242, %s244
    %p248 = scmp.eq.s32.totalorder %s19, 0
    %p249 = por %p247, %p248
    %p250 = scmp.ne.s32.totalorder %s242, %s244
    %p251 = scmp.eq.s32.totalorder %s24, 1
    %p252 = por %p250, %p251
    %p253 = scmp.ne.s32.totalorder %s244, %s245
    %p254 = scmp.eq.s32.totalorder %s24, 0
    %p255 = por %p253, %p254
    %p256 = scmp.ne.s32.totalorder %s244, %s245
    %p257 = scmp.eq.s32.totalorder %s25, 1
    %p258 = por %p256, %p257
    %p260 = scmp.ne.s32.totalorder %s245, %s259
    %p261 = scmp.eq.s32.totalorder %s25, 0
    %p262 = por %p260, %p261
    %s264 = sadd.s32 %s263, 1
    %p267 = scmp.eq.s32.totalorder %s19, 1
    %p268 = scmp.ne.s32.totalorder %s263, %s265
    %p269 = scmp.eq.s32.totalorder %s19, 0
    %p270 = por %p268, %p269
    %p271 = scmp.ne.s32.totalorder %s263, %s265
    %p272 = scmp.eq.s32.totalorder %s24, 1
    %p273 = por %p271, %p272
    %p274 = scmp.ne.s32.totalorder %s265, %s266
    %p275 = scmp.eq.s32.totalorder %s24, 0
    %p276 = por %p274, %p275
    %p277 = scmp.ne.s32.totalorder %s265, %s266
    %p278 = scmp.eq.s32.totalorder %s25, 1
    %p279 = por %p277, %p278
    %p281 = scmp.ne.s32.totalorder %s266, %s280
    %p282 = scmp.eq.s32.totalorder %s25, 0
    %p283 = por %p281, %p282
    %s285 = sadd.s32 %s284, 1
    %p288 = scmp.eq.s32.totalorder %s19, 1
    %p289 = scmp.ne.s32.totalorder %s284, %s286
    %p290 = scmp.eq.s32.totalorder %s19, 0
    %p291 = por %p289, %p290
    %p292 = scmp.ne.s32.totalorder %s284, %s286
    %p293 = scmp.eq.s32.totalorder %s24, 1
    %p294 = por %p292, %p293
    %p295 = scmp.ne.s32.totalorder %s286, %s287
    %p296 = scmp.eq.s32.totalorder %s24, 0
    %p297 = por %p295, %p296
    %p298 = scmp.ne.s32.totalorder %s286, %s287
    %p299 = scmp.eq.s32.totalorder %s25, 1
    %p300 = por %p298, %p299
    %p302 = scmp.ne.s32.totalorder %s287, %s301
    %p303 = scmp.eq.s32.totalorder %s25, 0
    %p304 = por %p302, %p303
    %s305 = ssub.s32 %s19, %s26
    %p306 = scmp.eq.s32.totalorder %s305, 0
    %s308 = sadd.s32 %s307, 1
    %s309 = scalar_select %p306, %s307, %s308
    %p312 = pneg %p306
    %p313 = scmp.eq.s32.totalorder %s19, 1
    %p314 = por %p312, %p313
    %p315 = scmp.ne.s32.totalorder %s307, %s310
    %p316 = scmp.eq.s32.totalorder %s19, 0
    %p317 = por %p315, %p316
    %p318 = scmp.ne.s32.totalorder %s307, %s310
    %p319 = scmp.eq.s32.totalorder %s24, 1
    %p320 = por %p318, %p319
    %p321 = scmp.ne.s32.totalorder %s310, %s311
    %p322 = scmp.eq.s32.totalorder %s24, 0
    %p323 = por %p321, %p322
    %p324 = scmp.ne.s32.totalorder %s310, %s311
    %p325 = scmp.eq.s32.totalorder %s25, 1
    %p326 = por %p324, %p325
    %p328 = scmp.ne.s32.totalorder %s311, %s327
    %p329 = scmp.eq.s32.totalorder %s25, 0
    %p330 = por %p328, %p329
    %p331 = scmp.le.s32.totalorder 1, %s19
    %p332 = scmp.lt.s32.totalorder %s19, 3
    %p333 = pnand %p331, %p332
    %p334 = pneg %p333
    // Predicated region
    $region9: #{ocr_encoder_forward.9} parent=5 // pred_check
      _
    $region10: #{ocr_encoder_forward.9} parent=5 // pred_check_branch
      %336 = sbr.rel (%p333) target = $region12
    $region11: #{ocr_encoder_forward.9} parent=5 // pred_region
      %s337 = ssub.s32 %s19, 1
      // Predicated region
      $region13: #{ocr_encoder_forward.9} parent=11 // pred_check
        %p338 = pneg %p66
      $region14: #{ocr_encoder_forward.9} parent=11 // pred_check_branch
        %340 = sbr.rel (%p338) target = $region16
      $region15: #{ocr_encoder_forward.9} parent=11 // pred_region
        _
      $region16: #{ocr_encoder_forward.9} parent=11 // pred_fallthru
        _
      // Predicated region
      $region17: #{ocr_encoder_forward.9} parent=11 // pred_check
        %p341 = pneg %p87
      $region18: #{ocr_encoder_forward.9} parent=11 // pred_check_branch
        %343 = sbr.rel (%p341) target = $region20
      $region19: #{ocr_encoder_forward.9} parent=11 // pred_region
        _
      $region20: #{ocr_encoder_forward.9} parent=11 // pred_fallthru
        _
      // Predicated region
      $region21: #{ocr_encoder_forward.9} parent=11 // pred_check
        %p344 = pneg %p108
      $region22: #{ocr_encoder_forward.9} parent=11 // pred_check_branch
        %346 = sbr.rel (%p344) target = $region24
      $region23: #{ocr_encoder_forward.9} parent=11 // pred_region
        _
      $region24: #{ocr_encoder_forward.9} parent=11 // pred_fallthru
        _
      // Predicated region
      $region25: #{ocr_encoder_forward.9} parent=11 // pred_check
        %p347 = pneg %p129
      $region26: #{ocr_encoder_forward.9} parent=11 // pred_check_branch
        %349 = sbr.rel (%p347) target = $region28
      $region27: #{ocr_encoder_forward.9} parent=11 // pred_region
        _
      $region28: #{ocr_encoder_forward.9} parent=11 // pred_fallthru
        _
      // Predicated region
      $region29: #{ocr_encoder_forward.9} parent=11 // pred_check
        %p350 = pneg %p150
      $region30: #{ocr_encoder_forward.9} parent=11 // pred_check_branch
        %352 = sbr.rel (%p350) target = $region32
      $region31: #{ocr_encoder_forward.9} parent=11 // pred_region
        _
      $region32: #{ocr_encoder_forward.9} parent=11 // pred_fallthru
        _
      // Predicated region
      $region33: #{ocr_encoder_forward.9} parent=11 // pred_check
        %p353 = pneg %p171
      $region34: #{ocr_encoder_forward.9} parent=11 // pred_check_branch
        %355 = sbr.rel (%p353) target = $region36
      $region35: #{ocr_encoder_forward.9} parent=11 // pred_region
        _
      $region36: #{ocr_encoder_forward.9} parent=11 // pred_fallthru
        _
      // Predicated region
      $region37: #{ocr_encoder_forward.9} parent=11 // pred_check
        %p356 = pneg %p192
      $region38: #{ocr_encoder_forward.9} parent=11 // pred_check_branch
        %358 = sbr.rel (%p356) target = $region40
      $region39: #{ocr_encoder_forward.9} parent=11 // pred_region
        _
      $region40: #{ocr_encoder_forward.9} parent=11 // pred_fallthru
        _
      // Predicated region
      $region41: #{ocr_encoder_forward.9} parent=11 // pred_check
        %p359 = pneg %p213
      $region42: #{ocr_encoder_forward.9} parent=11 // pred_check_branch
        %361 = sbr.rel (%p359) target = $region44
      $region43: #{ocr_encoder_forward.9} parent=11 // pred_region
        _
      $region44: #{ocr_encoder_forward.9} parent=11 // pred_fallthru
        _
      // Predicated region
      $region45: #{ocr_encoder_forward.9} parent=11 // pred_check
        %p362 = pneg %p234
      $region46: #{ocr_encoder_forward.9} parent=11 // pred_check_branch
        %364 = sbr.rel (%p362) target = $region48
      $region47: #{ocr_encoder_forward.9} parent=11 // pred_region
        _
      $region48: #{ocr_encoder_forward.9} parent=11 // pred_fallthru
        _
      // Predicated region
      $region49: #{ocr_encoder_forward.9} parent=11 // pred_check
        %p365 = pneg %p255
      $region50: #{ocr_encoder_forward.9} parent=11 // pred_check_branch
        %367 = sbr.rel (%p365) target = $region52
      $region51: #{ocr_encoder_forward.9} parent=11 // pred_region
        _
      $region52: #{ocr_encoder_forward.9} parent=11 // pred_fallthru
        _
      // Predicated region
      $region53: #{ocr_encoder_forward.9} parent=11 // pred_check
        %p368 = pneg %p276
      $region54: #{ocr_encoder_forward.9} parent=11 // pred_check_branch
        %370 = sbr.rel (%p368) target = $region56
      $region55: #{ocr_encoder_forward.9} parent=11 // pred_region
        _
      $region56: #{ocr_encoder_forward.9} parent=11 // pred_fallthru
        _
      // Predicated region
      $region57: #{ocr_encoder_forward.9} parent=11 // pred_check
        %p371 = pneg %p297
      $region58: #{ocr_encoder_forward.9} parent=11 // pred_check_branch
        %373 = sbr.rel (%p371) target = $region60
      $region59: #{ocr_encoder_forward.9} parent=11 // pred_region
        _
      $region60: #{ocr_encoder_forward.9} parent=11 // pred_fallthru
        _
    $region12: #{ocr_encoder_forward.9} parent=5 // pred_fallthru
      _
    %p374 = scmp.lt.s32.totalorder %s19, 2
    // Predicated region
    $region61: #{ocr_encoder_forward.9} parent=5 // pred_check
      %p375 = pneg %p374
    $region62: #{ocr_encoder_forward.9} parent=5 // pred_check_branch
      %377 = sbr.rel (%p375) target = $region64
    $region63: #{ocr_encoder_forward.9} parent=5 // pred_region
      // Predicated region
      $region65: #{ocr_encoder_forward.9} parent=63 // pred_check
        %p378 = pneg %p39
      $region66: #{ocr_encoder_forward.9} parent=63 // pred_check_branch
        %380 = sbr.rel (%p378) target = $region68
      $region67: #{ocr_encoder_forward.9} parent=63 // pred_region
        %p381 = scmp.lt.s32.totalorder %s19, 1
        %s382 = scalar_select %p381, %s19, 1
        %s383 = smul.addr %s382, 8
        %s384 = smul.addr %s383, 8
        %s385 = scalar_lea.vmem %s0, %s384
      $region68: #{ocr_encoder_forward.9} parent=63 // pred_fallthru
        _
    $region64: #{ocr_encoder_forward.9} parent=5 // pred_fallthru
      _
    %p386 = scmp.le.s32.totalorder 1, %s19
    %p387 = scmp.lt.s32.totalorder %s19, 3
    %p388 = pnand %p386, %p387
    %p389 = pneg %p388
    // Predicated region
    $region69: #{ocr_encoder_forward.9} parent=5 // pred_check
      _
    $region70: #{ocr_encoder_forward.9} parent=5 // pred_check_branch
      %391 = sbr.rel (%p388) target = $region72
    $region71: #{ocr_encoder_forward.9} parent=5 // pred_region
      %s392 = ssub.s32 %s19, 1
      %p393 = scmp.lt.s32.totalorder %s24, 1
      %s394 = scalar_select %p393, %s24, 1
      %s395 = smul.addr %s394, 8
      %s396 = smul.addr %s395, 8
      %s397 = scalar_lea.vmem %s0, %s396
      %p398 = pneg %p45
      %p399 = pneg %p42
      %p400 = pneg %p66
      %p401 = pneg %p63
      %p402 = pneg %p87
      %p403 = pneg %p84
      %p404 = pneg %p108
      %p405 = pneg %p105
      %p406 = pneg %p129
      %p407 = pneg %p126
      %p408 = pneg %p150
      %p409 = pneg %p147
      %p410 = pneg %p171
      %p411 = pneg %p168
      %p412 = pneg %p192
      %p413 = pneg %p189
      %p414 = pneg %p213
      %p415 = pneg %p210
      %p416 = pneg %p234
      %p417 = pneg %p231
      %p418 = pneg %p255
      %p419 = pneg %p252
      %p420 = pneg %p276
      %p421 = pneg %p273
      %p422 = pneg %p297
      %p423 = pneg %p294
      %p424 = pneg %p323
      %p425 = pneg %p320
      %p426 = scmp.lt.s32.totalorder %s24, 1
      %s427 = scalar_select %p426, %s24, 1
      %s428 = smul.addr %s427, 8
      %s429 = smul.addr %s428, 8
      %s430 = scalar_lea.vmem %s13, %s429
      %p431 = scmp.lt.s32.totalorder %s24, 1
      %s432 = scalar_select %p431, %s24, 1
      %s433 = smul.addr %s432, 8
      %s434 = smul.addr %s433, 8
      %s435 = scalar_lea.vmem %s0, %s434
      %p436 = scmp.lt.s32.totalorder %s24, 1
      %s437 = scalar_select %p436, %s24, 1
      %s438 = smul.addr %s437, 8
      %s439 = smul.addr %s438, 8
      %s440 = scalar_lea.vmem %s13, %s439
      %v442 = vld [vmem:[%s435] sm:$0xff]
      %v443 = vld [vmem:[%s435 + $0x8] sm:$0xff]
      %v444 = vld [vmem:[%s435 + $0x10] sm:$0xff]
      %v445 = vld [vmem:[%s435 + $0x18] sm:$0xff]
      %v446 = vld [vmem:[%s435 + $0x20] sm:$0xff]
      %v447 = vld [vmem:[%s435 + $0x28] sm:$0xff]
      %v448 = vld [vmem:[%s435 + $0x30] sm:$0xff]
      %v449 = vld [vmem:[%s435 + $0x38] sm:$0xff]
      %v450 = vpack.c.bf16 %v443, %v442
      %v451 = vpack.c.bf16 %v445, %v444
      %v452 = vpack.c.bf16 %v447, %v446
      %v453 = vpack.c.bf16 %v449, %v448
      %v454 = vld [vmem:[%s1] sm:$0xf]
      %v455 = vld [vmem:[%s1 + $0x4] sm:$0xf]
      %v456 = vld [vmem:[%s1 + $0x8] sm:$0xf]
      %v457 = vld [vmem:[%s1 + $0xc] sm:$0xf]
      %v458 = vld [vmem:[%s2] sm:$0x1]
      %v460 = vperm.slane %v458, 0
      %v466 = vunpack.c.l.b16 %v454
      %v467 = vunpack.c.l.b16 %v455
      %v468 = vunpack.c.l.b16 %v456
      %v469 = vunpack.c.l.b16 %v457
      %v470 = vpack.c.b16 %v467, %v466
      %v471 = vpack.c.b16 %v469, %v468
      %vm474 = vcmask 261120
      %v476 = vsel %vm474, %v450, 0
      %v479 = vsel %vm474, %v451, 0
      %v482 = vsel %vm474, %v452, 0
      %v485 = vsel %vm474, %v453, 0
      %487 = vmatpush.bf16.msra.mxu0 0
      %488 = vmatpush.bf16.msra.mxu0 0
      %489 = vmatpush.bf16.msra.mxu0 0
      %490 = vmatpush.bf16.msra.mxu0 0
      %491 = vmatpush.bf16.msra.mxu0 0
      %492 = vmatpush.bf16.msra.mxu0 0
      %493 = vmatpush.bf16.msra.mxu0 %v471
      %494 = vmatpush.bf16.msra.mxu0 %v470
      %495 = vmatmul.bf16.gmra.mxu0 %v476
      %v496 = vpop.f32.mrf.mxu0
      %v497 = vadd.f32 %v460, %v496
      %v498 = vpop.f32.mrf.mxu0
      %v499 = vadd.f32 %v460, %v498
      %500 = vmatmul.bf16.gmra.mxu0 %v479
      %v501 = vpop.f32.mrf.mxu0
      %v502 = vadd.f32 %v460, %v501
      %v503 = vpop.f32.mrf.mxu0
      %v504 = vadd.f32 %v460, %v503
      %505 = vmatmul.bf16.gmra.mxu0 %v482
      %v506 = vpop.f32.mrf.mxu0
      %v507 = vadd.f32 %v460, %v506
      %v508 = vpop.f32.mrf.mxu0
      %v509 = vadd.f32 %v460, %v508
      %510 = vmatmul.bf16.gmra.mxu0 %v485
      %v511 = vpop.f32.mrf.mxu0
      %v512 = vadd.f32 %v460, %v511
      %v513 = vpop.f32.mrf.mxu0
      %v514 = vadd.f32 %v460, %v513
      %515 = vdwg.mxu0
      %v516 = vpack.c.bf16 %v499, %v497
      %v517 = vpack.c.bf16 %v504, %v502
      %v518 = vpack.c.bf16 %v509, %v507
      %v519 = vpack.c.bf16 %v514, %v512
      %524 = vrot.lane.b32.xlu0 %v516, 96
      %v525 = vpop.permute.xlu0 %524
      %526 = vrot.lane.b32.xlu0 %v517, 96
      %v527 = vpop.permute.xlu0 %526
      %528 = vrot.lane.b32.xlu0 %v518, 96
      %v529 = vpop.permute.xlu0 %528
      %530 = vrot.lane.b32.xlu0 %v519, 96
      %v531 = vpop.permute.xlu0 %530
      %vm532 = vcmask 64512
      %v534 = vsel %vm532, %v516, 0
      %v537 = vsel %vm532, %v517, 0
      %v540 = vsel %vm532, %v518, 0
      %v543 = vsel %vm532, %v519, 0
      %v546 = vsel %vm532, %v525, 0
      %v549 = vsel %vm532, %v527, 0
      %v552 = vsel %vm532, %v529, 0
      %v555 = vsel %vm532, %v531, 0
      %557 = vmatpush.bf16.xpose.msra.mxu0 0
      %558 = vmatpush.bf16.xpose.msra.mxu0 0
      %559 = vmatpush.bf16.xpose.msra.mxu0 0
      %560 = vmatpush.bf16.xpose.msra.mxu0 0
      %561 = vmatpush.bf16.xpose.msra.mxu0 %v555
      %562 = vmatpush.bf16.xpose.msra.mxu0 %v552
      %563 = vmatpush.bf16.xpose.msra.mxu0 %v549
      %564 = vmatpush.bf16.xpose.msra.mxu0 %v546
      %565 = vmatmul.bf16.gmra.mxu0 %v534
      %v566 = vpop.f32.mrf.mxu0
      %v567 = vadd.f32 0.0, %v566
      %v568 = vpop.f32.mrf.mxu0
      %v569 = vadd.f32 0.0, %v568
      %570 = vmatmul.bf16.gmra.mxu0 %v537
      %v571 = vpop.f32.mrf.mxu0
      %v572 = vadd.f32 0.0, %v571
      %v573 = vpop.f32.mrf.mxu0
      %v574 = vadd.f32 0.0, %v573
      %575 = vmatmul.bf16.gmra.mxu0 %v540
      %v576 = vpop.f32.mrf.mxu0
      %v577 = vadd.f32 0.0, %v576
      %v578 = vpop.f32.mrf.mxu0
      %v579 = vadd.f32 0.0, %v578
      %580 = vmatmul.bf16.gmra.mxu0 %v543
      %v581 = vpop.f32.mrf.mxu0
      %v582 = vadd.f32 0.0, %v581
      %v583 = vpop.f32.mrf.mxu0
      %v584 = vadd.f32 0.0, %v583
      %585 = vdwg.mxu0
      %v586 = vmul.f32 %v567, 0.35355338
      %v587 = vmul.f32 %v569, 0.35355338
      %v588 = vmul.f32 %v572, 0.35355338
      %v589 = vmul.f32 %v574, 0.35355338
      %v590 = vmul.f32 %v577, 0.35355338
      %v591 = vmul.f32 %v579, 0.35355338
      %v592 = vmul.f32 %v582, 0.35355338
      %v593 = vmul.f32 %v584, 0.35355338
      %vm594 = vcmask 523264
      %v595 = vsel %vm594, %v586, -inf
      %596 = vmax.xlane.f32.xlu0 %v595
      %v597 = vpop.xlane.xlu0 %596
      %v598 = vsel %vm594, %v587, -inf
      %599 = vmax.xlane.f32.xlu0 %v598
      %v600 = vpop.xlane.xlu0 %599
      %v601 = vsel %vm594, %v588, -inf
      %602 = vmax.xlane.f32.xlu0 %v601
      %v603 = vpop.xlane.xlu0 %602
      %v604 = vsel %vm594, %v589, -inf
      %605 = vmax.xlane.f32.xlu0 %v604
      %v606 = vpop.xlane.xlu0 %605
      %v607 = vsel %vm594, %v590, -inf
      %608 = vmax.xlane.f32.xlu0 %v607
      %v609 = vpop.xlane.xlu0 %608
      %v610 = vsel %vm594, %v591, -inf
      %611 = vmax.xlane.f32.xlu0 %v610
      %v612 = vpop.xlane.xlu0 %611
      %v613 = vsel %vm594, %v592, -inf
      %614 = vmax.xlane.f32.xlu0 %v613
      %v615 = vpop.xlane.xlu0 %614
      %v616 = vsel %vm594, %v593, -inf
      %617 = vmax.xlane.f32.xlu0 %v616
      %v618 = vpop.xlane.xlu0 %617
      %v619 = vsub.f32 %v586, %v597
      %v620 = vsub.f32 %v587, %v600
      %v621 = vsub.f32 %v588, %v603
      %v622 = vsub.f32 %v589, %v606
      %v623 = vsub.f32 %v590, %v609
      %v624 = vsub.f32 %v591, %v612
      %v625 = vsub.f32 %v592, %v615
      %v626 = vsub.f32 %v593, %v618
      %v627 = vmul.f32 %v619, 1.442695
      %v628 = vpow.pop %v627
      %v629 = vmul.f32 %v620, 1.442695
      %v630 = vpow.pop %v629
      %v631 = vmul.f32 %v621, 1.442695
      %v632 = vpow.pop %v631
      %v633 = vmul.f32 %v622, 1.442695
      %v634 = vpow.pop %v633
      %v635 = vmul.f32 %v623, 1.442695
      %v636 = vpow.pop %v635
      %v637 = vmul.f32 %v624, 1.442695
      %v638 = vpow.pop %v637
      %v639 = vmul.f32 %v625, 1.442695
      %v640 = vpow.pop %v639
      %v641 = vmul.f32 %v626, 1.442695
      %v642 = vpow.pop %v641
      %v643 = vsel %vm594, %v628, 0.0
      %644 = vadd.xlane.f32.xlu0 %v643
      %v645 = vpop.xlane.xlu0 %644
      %v646 = vsel %vm594, %v630, 0.0
      %647 = vadd.xlane.f32.xlu0 %v646
      %v648 = vpop.xlane.xlu0 %647
      %v649 = vsel %vm594, %v632, 0.0
      %650 = vadd.xlane.f32.xlu0 %v649
      %v651 = vpop.xlane.xlu0 %650
      %v652 = vsel %vm594, %v634, 0.0
      %653 = vadd.xlane.f32.xlu0 %v652
      %v654 = vpop.xlane.xlu0 %653
      %v655 = vsel %vm594, %v636, 0.0
      %656 = vadd.xlane.f32.xlu0 %v655
      %v657 = vpop.xlane.xlu0 %656
      %v658 = vsel %vm594, %v638, 0.0
      %659 = vadd.xlane.f32.xlu0 %v658
      %v660 = vpop.xlane.xlu0 %659
      %v661 = vsel %vm594, %v640, 0.0
      %662 = vadd.xlane.f32.xlu0 %v661
      %v663 = vpop.xlane.xlu0 %662
      %v664 = vsel %vm594, %v642, 0.0
      %665 = vadd.xlane.f32.xlu0 %v664
      %v666 = vpop.xlane.xlu0 %665
      %v667 = vrcp.pop %v645
      %v668 = vrcp.pop %v648
      %v669 = vrcp.pop %v651
      %v670 = vrcp.pop %v654
      %v671 = vrcp.pop %v657
      %v672 = vrcp.pop %v660
      %v673 = vrcp.pop %v663
      %v674 = vrcp.pop %v666
      %v675 = vmul.f32 %v628, %v667
      %v676 = vmul.f32 %v630, %v668
      %v677 = vmul.f32 %v632, %v669
      %v678 = vmul.f32 %v634, %v670
      %v679 = vmul.f32 %v636, %v671
      %v680 = vmul.f32 %v638, %v672
      %v681 = vmul.f32 %v640, %v673
      %v682 = vmul.f32 %v642, %v674
      %v683 = vpack.c.bf16 %v676, %v675
      %v684 = vpack.c.bf16 %v678, %v677
      %v685 = vpack.c.bf16 %v680, %v679
      %v686 = vpack.c.bf16 %v682, %v681
      %687 = vrot.lane.b32.xlu0 %v516, 64
      %v688 = vpop.permute.xlu0 %687
      %689 = vrot.lane.b32.xlu0 %v517, 64
      %v690 = vpop.permute.xlu0 %689
      %691 = vrot.lane.b32.xlu0 %v518, 64
      %v692 = vpop.permute.xlu0 %691
      %693 = vrot.lane.b32.xlu0 %v519, 64
      %v694 = vpop.permute.xlu0 %693
      %v700 = vsel %vm594, %v683, 0
      %v703 = vsel %vm594, %v684, 0
      %v706 = vsel %vm594, %v685, 0
      %v709 = vsel %vm594, %v686, 0
      %711 = vmatpush.bf16.msra.mxu0 0
      %712 = vmatpush.bf16.msra.mxu0 0
      %713 = vmatpush.bf16.msra.mxu0 0
      %714 = vmatpush.bf16.msra.mxu0 0
      %715 = vmatpush.bf16.msra.mxu0 %v694
      %716 = vmatpush.bf16.msra.mxu0 %v692
      %717 = vmatpush.bf16.msra.mxu0 %v690
      %718 = vmatpush.bf16.msra.mxu0 %v688
      %719 = vmatmul.bf16.gmra.mxu0 %v700
      %v720 = vpop.f32.mrf.mxu0
      %v721 = vadd.f32 0.0, %v720
      %v722 = vpop.f32.mrf.mxu0
      %v723 = vadd.f32 0.0, %v722
      %724 = vmatmul.bf16.gmra.mxu0 %v703
      %v725 = vpop.f32.mrf.mxu0
      %v726 = vadd.f32 0.0, %v725
      %v727 = vpop.f32.mrf.mxu0
      %v728 = vadd.f32 0.0, %v727
      %729 = vmatmul.bf16.gmra.mxu0 %v706
      %v730 = vpop.f32.mrf.mxu0
      %v731 = vadd.f32 0.0, %v730
      %v732 = vpop.f32.mrf.mxu0
      %v733 = vadd.f32 0.0, %v732
      %734 = vmatmul.bf16.gmra.mxu0 %v709
      %v735 = vpop.f32.mrf.mxu0
      %v736 = vadd.f32 0.0, %v735
      %v737 = vpop.f32.mrf.mxu0
      %v738 = vadd.f32 0.0, %v737
      %739 = vdwg.mxu0
      %v740 = vpack.c.bf16 %v723, %v721
      %v741 = vpack.c.bf16 %v728, %v726
      %v742 = vpack.c.bf16 %v733, %v731
      %v743 = vpack.c.bf16 %v738, %v736
      %v744 = vld [vmem:[%s3] sm:$0xf]
      %745 = vrot.lane.b32.xlu0 %v516, 120
      %v746 = vpop.permute.xlu0 %745
      %747 = vrot.lane.b32.xlu0 %v517, 120
      %v748 = vpop.permute.xlu0 %747
      %749 = vrot.lane.b32.xlu0 %v518, 120
      %v750 = vpop.permute.xlu0 %749
      %751 = vrot.lane.b32.xlu0 %v519, 120
      %v752 = vpop.permute.xlu0 %751
      %753 = vrot.lane.b32.xlu0 %v516, 88
      %v754 = vpop.permute.xlu0 %753
      %755 = vrot.lane.b32.xlu0 %v517, 88
      %v756 = vpop.permute.xlu0 %755
      %757 = vrot.lane.b32.xlu0 %v518, 88
      %v758 = vpop.permute.xlu0 %757
      %759 = vrot.lane.b32.xlu0 %v519, 88
      %v760 = vpop.permute.xlu0 %759
      %v762 = vsel %vm532, %v746, 0
      %v765 = vsel %vm532, %v748, 0
      %v768 = vsel %vm532, %v750, 0
      %v771 = vsel %vm532, %v752, 0
      %v774 = vsel %vm532, %v754, 0
      %v777 = vsel %vm532, %v756, 0
      %v780 = vsel %vm532, %v758, 0
      %v783 = vsel %vm532, %v760, 0
      %785 = vmatpush.bf16.xpose.msra.mxu0 0
      %786 = vmatpush.bf16.xpose.msra.mxu0 0
      %787 = vmatpush.bf16.xpose.msra.mxu0 0
      %788 = vmatpush.bf16.xpose.msra.mxu0 0
      %789 = vmatpush.bf16.xpose.msra.mxu0 %v783
      %790 = vmatpush.bf16.xpose.msra.mxu0 %v780
      %791 = vmatpush.bf16.xpose.msra.mxu0 %v777
      %792 = vmatpush.bf16.xpose.msra.mxu0 %v774
      %793 = vmatmul.bf16.gmra.mxu0 %v762
      %v794 = vpop.f32.mrf.mxu0
      %v795 = vadd.f32 0.0, %v794
      %v796 = vpop.f32.mrf.mxu0
      %v797 = vadd.f32 0.0, %v796
      %798 = vmatmul.bf16.gmra.mxu0 %v765
      %v799 = vpop.f32.mrf.mxu0
      %v800 = vadd.f32 0.0, %v799
      %v801 = vpop.f32.mrf.mxu0
      %v802 = vadd.f32 0.0, %v801
      %803 = vmatmul.bf16.gmra.mxu0 %v768
      %v804 = vpop.f32.mrf.mxu0
      %v805 = vadd.f32 0.0, %v804
      %v806 = vpop.f32.mrf.mxu0
      %v807 = vadd.f32 0.0, %v806
      %808 = vmatmul.bf16.gmra.mxu0 %v771
      %v809 = vpop.f32.mrf.mxu0
      %v810 = vadd.f32 0.0, %v809
      %v811 = vpop.f32.mrf.mxu0
      %v812 = vadd.f32 0.0, %v811
      %813 = vdwg.mxu0
      %v814 = vmul.f32 %v795, 0.35355338
      %v815 = vmul.f32 %v797, 0.35355338
      %v816 = vmul.f32 %v800, 0.35355338
      %v817 = vmul.f32 %v802, 0.35355338
      %v818 = vmul.f32 %v805, 0.35355338
      %v819 = vmul.f32 %v807, 0.35355338
      %v820 = vmul.f32 %v810, 0.35355338
      %v821 = vmul.f32 %v812, 0.35355338
      %v822 = vsel %vm594, %v814, -inf
      %823 = vmax.xlane.f32.xlu0 %v822
      %v824 = vpop.xlane.xlu0 %823
      %v825 = vsel %vm594, %v815, -inf
      %826 = vmax.xlane.f32.xlu0 %v825
      %v827 = vpop.xlane.xlu0 %826
      %v828 = vsel %vm594, %v816, -inf
      %829 = vmax.xlane.f32.xlu0 %v828
      %v830 = vpop.xlane.xlu0 %829
      %v831 = vsel %vm594, %v817, -inf
      %832 = vmax.xlane.f32.xlu0 %v831
      %v833 = vpop.xlane.xlu0 %832
      %v834 = vsel %vm594, %v818, -inf
      %835 = vmax.xlane.f32.xlu0 %v834
      %v836 = vpop.xlane.xlu0 %835
      %v837 = vsel %vm594, %v819, -inf
      %838 = vmax.xlane.f32.xlu0 %v837
      %v839 = vpop.xlane.xlu0 %838
      %v840 = vsel %vm594, %v820, -inf
      %841 = vmax.xlane.f32.xlu0 %v840
      %v842 = vpop.xlane.xlu0 %841
      %v843 = vsel %vm594, %v821, -inf
      %844 = vmax.xlane.f32.xlu0 %v843
      %v845 = vpop.xlane.xlu0 %844
      %v846 = vsub.f32 %v814, %v824
      %v847 = vsub.f32 %v815, %v827
      %v848 = vsub.f32 %v816, %v830
      %v849 = vsub.f32 %v817, %v833
      %v850 = vsub.f32 %v818, %v836
      %v851 = vsub.f32 %v819, %v839
      %v852 = vsub.f32 %v820, %v842
      %v853 = vsub.f32 %v821, %v845
      %v854 = vmul.f32 %v846, 1.442695
      %v855 = vpow.pop %v854
      %v856 = vmul.f32 %v847, 1.442695
      %v857 = vpow.pop %v856
      %v858 = vmul.f32 %v848, 1.442695
      %v859 = vpow.pop %v858
      %v860 = vmul.f32 %v849, 1.442695
      %v861 = vpow.pop %v860
      %v862 = vmul.f32 %v850, 1.442695
      %v863 = vpow.pop %v862
      %v864 = vmul.f32 %v851, 1.442695
      %v865 = vpow.pop %v864
      %v866 = vmul.f32 %v852, 1.442695
      %v867 = vpow.pop %v866
      %v868 = vmul.f32 %v853, 1.442695
      %v869 = vpow.pop %v868
      %v870 = vsel %vm594, %v855, 0.0
      %871 = vadd.xlane.f32.xlu0 %v870
      %v872 = vpop.xlane.xlu0 %871
      %v873 = vsel %vm594, %v857, 0.0
      %874 = vadd.xlane.f32.xlu0 %v873
      %v875 = vpop.xlane.xlu0 %874
      %v876 = vsel %vm594, %v859, 0.0
      %877 = vadd.xlane.f32.xlu0 %v876
      %v878 = vpop.xlane.xlu0 %877
      %v879 = vsel %vm594, %v861, 0.0
      %880 = vadd.xlane.f32.xlu0 %v879
      %v881 = vpop.xlane.xlu0 %880
      %v882 = vsel %vm594, %v863, 0.0
      %883 = vadd.xlane.f32.xlu0 %v882
      %v884 = vpop.xlane.xlu0 %883
      %v885 = vsel %vm594, %v865, 0.0
      %886 = vadd.xlane.f32.xlu0 %v885
      %v887 = vpop.xlane.xlu0 %886
      %v888 = vsel %vm594, %v867, 0.0
      %889 = vadd.xlane.f32.xlu0 %v888
      %v890 = vpop.xlane.xlu0 %889
      %v891 = vsel %vm594, %v869, 0.0
      %892 = vadd.xlane.f32.xlu0 %v891
      %v893 = vpop.xlane.xlu0 %892
      %v894 = vrcp.pop %v872
      %v895 = vrcp.pop %v875
      %v896 = vrcp.pop %v878
      %v897 = vrcp.pop %v881
      %v898 = vrcp.pop %v884
      %v899 = vrcp.pop %v887
      %v900 = vrcp.pop %v890
      %v901 = vrcp.pop %v893
      %v902 = vmul.f32 %v855, %v894
      %v903 = vmul.f32 %v857, %v895
      %v904 = vmul.f32 %v859, %v896
      %v905 = vmul.f32 %v861, %v897
      %v906 = vmul.f32 %v863, %v898
      %v907 = vmul.f32 %v865, %v899
      %v908 = vmul.f32 %v867, %v900
      %v909 = vmul.f32 %v869, %v901
      %v910 = vpack.c.bf16 %v903, %v902
      %v911 = vpack.c.bf16 %v905, %v904
      %v912 = vpack.c.bf16 %v907, %v906
      %v913 = vpack.c.bf16 %v909, %v908
      %914 = vrot.lane.b32.xlu0 %v516, 56
      %v915 = vpop.permute.xlu0 %914
      %916 = vrot.lane.b32.xlu0 %v517, 56
      %v917 = vpop.permute.xlu0 %916
      %918 = vrot.lane.b32.xlu0 %v518, 56
      %v919 = vpop.permute.xlu0 %918
      %920 = vrot.lane.b32.xlu0 %v519, 56
      %v921 = vpop.permute.xlu0 %920
      %v927 = vsel %vm594, %v910, 0
      %v930 = vsel %vm594, %v911, 0
      %v933 = vsel %vm594, %v912, 0
      %v936 = vsel %vm594, %v913, 0
      %938 = vmatpush.bf16.msra.mxu0 0
      %939 = vmatpush.bf16.msra.mxu0 0
      %940 = vmatpush.bf16.msra.mxu0 0
      %941 = vmatpush.bf16.msra.mxu0 0
      %942 = vmatpush.bf16.msra.mxu0 %v921
      %943 = vmatpush.bf16.msra.mxu0 %v919
      %944 = vmatpush.bf16.msra.mxu0 %v917
      %945 = vmatpush.bf16.msra.mxu0 %v915
      %946 = vmatmul.bf16.gmra.mxu0 %v927
      %v947 = vpop.f32.mrf.mxu0
      %v948 = vadd.f32 0.0, %v947
      %v949 = vpop.f32.mrf.mxu0
      %v950 = vadd.f32 0.0, %v949
      %951 = vmatmul.bf16.gmra.mxu0 %v930
      %v952 = vpop.f32.mrf.mxu0
      %v953 = vadd.f32 0.0, %v952
      %v954 = vpop.f32.mrf.mxu0
      %v955 = vadd.f32 0.0, %v954
      %956 = vmatmul.bf16.gmra.mxu0 %v933
      %v957 = vpop.f32.mrf.mxu0
      %v958 = vadd.f32 0.0, %v957
      %v959 = vpop.f32.mrf.mxu0
      %v960 = vadd.f32 0.0, %v959
      %961 = vmatmul.bf16.gmra.mxu0 %v936
      %v962 = vpop.f32.mrf.mxu0
      %v963 = vadd.f32 0.0, %v962
      %v964 = vpop.f32.mrf.mxu0
      %v965 = vadd.f32 0.0, %v964
      %966 = vdwg.mxu0
      %v967 = vpack.c.bf16 %v950, %v948
      %v968 = vpack.c.bf16 %v955, %v953
      %v969 = vpack.c.bf16 %v960, %v958
      %v970 = vpack.c.bf16 %v965, %v963
      %s971 = scalar_lea.vmem %s3, 4
      %v972 = vld [vmem:[%s971] sm:$0xf]
      %v974 = vsel %vm532, %v967, 0
      %v977 = vsel %vm532, %v968, 0
      %v980 = vsel %vm532, %v969, 0
      %v983 = vsel %vm532, %v970, 0
      %vm985 = vcmask 1043456
      %v987 = vsel %vm985, %v972, 0
      %989 = vmatpush.bf16.msra.mxu0 0
      %990 = vmatpush.bf16.msra.mxu0 0
      %991 = vmatpush.bf16.msra.mxu0 0
      %992 = vmatpush.bf16.msra.mxu0 0
      %993 = vmatpush.bf16.msra.mxu0 0
      %994 = vmatpush.bf16.msra.mxu0 0
      %995 = vmatpush.bf16.msra.mxu0 0
      %996 = vmatpush.bf16.msra.mxu0 %v987
      %997 = vmatmul.bf16.gmra.mxu0 %v974
      %v998 = vpop.f32.mrf.mxu0
      %v999 = vadd.f32 0.0, %v998
      %v1000 = vpop.f32.mrf.mxu0
      %v1001 = vadd.f32 0.0, %v1000
      %1002 = vmatmul.bf16.gmra.mxu0 %v977
      %v1003 = vpop.f32.mrf.mxu0
      %v1004 = vadd.f32 0.0, %v1003
      %v1005 = vpop.f32.mrf.mxu0
      %v1006 = vadd.f32 0.0, %v1005
      %1007 = vmatmul.bf16.gmra.mxu0 %v980
      %v1008 = vpop.f32.mrf.mxu0
      %v1009 = vadd.f32 0.0, %v1008
      %v1010 = vpop.f32.mrf.mxu0
      %v1011 = vadd.f32 0.0, %v1010
      %1012 = vmatmul.bf16.gmra.mxu0 %v983
      %v1013 = vpop.f32.mrf.mxu0
      %v1014 = vadd.f32 0.0, %v1013
      %v1015 = vpop.f32.mrf.mxu0
      %v1016 = vadd.f32 0.0, %v1015
      %1017 = vdwg.mxu0
      %v1019 = vsel %vm532, %v740, 0
      %v1022 = vsel %vm532, %v741, 0
      %v1025 = vsel %vm532, %v742, 0
      %v1028 = vsel %vm532, %v743, 0
      %v1031 = vsel %vm985, %v744, 0
      %1033 = vmatpush.bf16.msra.mxu0 0
      %1034 = vmatpush.bf16.msra.mxu0 0
      %1035 = vmatpush.bf16.msra.mxu0 0
      %1036 = vmatpush.bf16.msra.mxu0 0
      %1037 = vmatpush.bf16.msra.mxu0 0
      %1038 = vmatpush.bf16.msra.mxu0 0
      %1039 = vmatpush.bf16.msra.mxu0 0
      %1040 = vmatpush.bf16.msra.mxu0 %v1031
      %1041 = vmatmul.bf16.gmra.mxu0 %v1019
      %v1042 = vpop.f32.mrf.mxu0
      %v1043 = vadd.f32 %v999, %v1042
      %v1044 = vpop.f32.mrf.mxu0
      %v1045 = vadd.f32 %v1001, %v1044
      %1046 = vmatmul.bf16.gmra.mxu0 %v1022
      %v1047 = vpop.f32.mrf.mxu0
      %v1048 = vadd.f32 %v1004, %v1047
      %v1049 = vpop.f32.mrf.mxu0
      %v1050 = vadd.f32 %v1006, %v1049
      %1051 = vmatmul.bf16.gmra.mxu0 %v1025
      %v1052 = vpop.f32.mrf.mxu0
      %v1053 = vadd.f32 %v1009, %v1052
      %v1054 = vpop.f32.mrf.mxu0
      %v1055 = vadd.f32 %v1011, %v1054
      %1056 = vmatmul.bf16.gmra.mxu0 %v1028
      %v1057 = vpop.f32.mrf.mxu0
      %v1058 = vadd.f32 %v1014, %v1057
      %v1059 = vpop.f32.mrf.mxu0
      %v1060 = vadd.f32 %v1016, %v1059
      %1061 = vdwg.mxu0
      %1062 = vrot.lane.b32.xlu0 %v516, 112
      %v1063 = vpop.permute.xlu0 %1062
      %1064 = vrot.lane.b32.xlu0 %v517, 112
      %v1065 = vpop.permute.xlu0 %1064
      %1066 = vrot.lane.b32.xlu0 %v518, 112
      %v1067 = vpop.permute.xlu0 %1066
      %1068 = vrot.lane.b32.xlu0 %v519, 112
      %v1069 = vpop.permute.xlu0 %1068
      %1070 = vrot.lane.b32.xlu0 %v516, 80
      %v1071 = vpop.permute.xlu0 %1070
      %1072 = vrot.lane.b32.xlu0 %v517, 80
      %v1073 = vpop.permute.xlu0 %1072
      %1074 = vrot.lane.b32.xlu0 %v518, 80
      %v1075 = vpop.permute.xlu0 %1074
      %1076 = vrot.lane.b32.xlu0 %v519, 80
      %v1077 = vpop.permute.xlu0 %1076
      %v1079 = vsel %vm532, %v1063, 0
      %v1082 = vsel %vm532, %v1065, 0
      %v1085 = vsel %vm532, %v1067, 0
      %v1088 = vsel %vm532, %v1069, 0
      %v1091 = vsel %vm532, %v1071, 0
      %v1094 = vsel %vm532, %v1073, 0
      %v1097 = vsel %vm532, %v1075, 0
      %v1100 = vsel %vm532, %v1077, 0
      %1102 = vmatpush.bf16.xpose.msra.mxu0 0
      %1103 = vmatpush.bf16.xpose.msra.mxu0 0
      %1104 = vmatpush.bf16.xpose.msra.mxu0 0
      %1105 = vmatpush.bf16.xpose.msra.mxu0 0
      %1106 = vmatpush.bf16.xpose.msra.mxu0 %v1100
      %1107 = vmatpush.bf16.xpose.msra.mxu0 %v1097
      %1108 = vmatpush.bf16.xpose.msra.mxu0 %v1094
      %1109 = vmatpush.bf16.xpose.msra.mxu0 %v1091
      %1110 = vmatmul.bf16.gmra.mxu0 %v1079
      %v1111 = vpop.f32.mrf.mxu0
      %v1112 = vadd.f32 0.0, %v1111
      %v1113 = vpop.f32.mrf.mxu0
      %v1114 = vadd.f32 0.0, %v1113
      %1115 = vmatmul.bf16.gmra.mxu0 %v1082
      %v1116 = vpop.f32.mrf.mxu0
      %v1117 = vadd.f32 0.0, %v1116
      %v1118 = vpop.f32.mrf.mxu0
      %v1119 = vadd.f32 0.0, %v1118
      %1120 = vmatmul.bf16.gmra.mxu0 %v1085
      %v1121 = vpop.f32.mrf.mxu0
      %v1122 = vadd.f32 0.0, %v1121
      %v1123 = vpop.f32.mrf.mxu0
      %v1124 = vadd.f32 0.0, %v1123
      %1125 = vmatmul.bf16.gmra.mxu0 %v1088
      %v1126 = vpop.f32.mrf.mxu0
      %v1127 = vadd.f32 0.0, %v1126
      %v1128 = vpop.f32.mrf.mxu0
      %v1129 = vadd.f32 0.0, %v1128
      %1130 = vdwg.mxu0
      %v1131 = vmul.f32 %v1112, 0.35355338
      %v1132 = vmul.f32 %v1114, 0.35355338
      %v1133 = vmul.f32 %v1117, 0.35355338
      %v1134 = vmul.f32 %v1119, 0.35355338
      %v1135 = vmul.f32 %v1122, 0.35355338
      %v1136 = vmul.f32 %v1124, 0.35355338
      %v1137 = vmul.f32 %v1127, 0.35355338
      %v1138 = vmul.f32 %v1129, 0.35355338
      %v1139 = vsel %vm594, %v1131, -inf
      %1140 = vmax.xlane.f32.xlu0 %v1139
      %v1141 = vpop.xlane.xlu0 %1140
      %v1142 = vsel %vm594, %v1132, -inf
      %1143 = vmax.xlane.f32.xlu0 %v1142
      %v1144 = vpop.xlane.xlu0 %1143
      %v1145 = vsel %vm594, %v1133, -inf
      %1146 = vmax.xlane.f32.xlu0 %v1145
      %v1147 = vpop.xlane.xlu0 %1146
      %v1148 = vsel %vm594, %v1134, -inf
      %1149 = vmax.xlane.f32.xlu0 %v1148
      %v1150 = vpop.xlane.xlu0 %1149
      %v1151 = vsel %vm594, %v1135, -inf
      %1152 = vmax.xlane.f32.xlu0 %v1151
      %v1153 = vpop.xlane.xlu0 %1152
      %v1154 = vsel %vm594, %v1136, -inf
      %1155 = vmax.xlane.f32.xlu0 %v1154
      %v1156 = vpop.xlane.xlu0 %1155
      %v1157 = vsel %vm594, %v1137, -inf
      %1158 = vmax.xlane.f32.xlu0 %v1157
      %v1159 = vpop.xlane.xlu0 %1158
      %v1160 = vsel %vm594, %v1138, -inf
      %1161 = vmax.xlane.f32.xlu0 %v1160
      %v1162 = vpop.xlane.xlu0 %1161
      %v1163 = vsub.f32 %v1131, %v1141
      %v1164 = vsub.f32 %v1132, %v1144
      %v1165 = vsub.f32 %v1133, %v1147
      %v1166 = vsub.f32 %v1134, %v1150
      %v1167 = vsub.f32 %v1135, %v1153
      %v1168 = vsub.f32 %v1136, %v1156
      %v1169 = vsub.f32 %v1137, %v1159
      %v1170 = vsub.f32 %v1138, %v1162
      %v1171 = vmul.f32 %v1163, 1.442695
      %v1172 = vpow.pop %v1171
      %v1173 = vmul.f32 %v1164, 1.442695
      %v1174 = vpow.pop %v1173
      %v1175 = vmul.f32 %v1165, 1.442695
      %v1176 = vpow.pop %v1175
      %v1177 = vmul.f32 %v1166, 1.442695
      %v1178 = vpow.pop %v1177
      %v1179 = vmul.f32 %v1167, 1.442695
      %v1180 = vpow.pop %v1179
      %v1181 = vmul.f32 %v1168, 1.442695
      %v1182 = vpow.pop %v1181
      %v1183 = vmul.f32 %v1169, 1.442695
      %v1184 = vpow.pop %v1183
      %v1185 = vmul.f32 %v1170, 1.442695
      %v1186 = vpow.pop %v1185
      %v1187 = vsel %vm594, %v1172, 0.0
      %1188 = vadd.xlane.f32.xlu0 %v1187
      %v1189 = vpop.xlane.xlu0 %1188
      %v1190 = vsel %vm594, %v1174, 0.0
      %1191 = vadd.xlane.f32.xlu0 %v1190
      %v1192 = vpop.xlane.xlu0 %1191
      %v1193 = vsel %vm594, %v1176, 0.0
      %1194 = vadd.xlane.f32.xlu0 %v1193
      %v1195 = vpop.xlane.xlu0 %1194
      %v1196 = vsel %vm594, %v1178, 0.0
      %1197 = vadd.xlane.f32.xlu0 %v1196
      %v1198 = vpop.xlane.xlu0 %1197
      %v1199 = vsel %vm594, %v1180, 0.0
      %1200 = vadd.xlane.f32.xlu0 %v1199
      %v1201 = vpop.xlane.xlu0 %1200
      %v1202 = vsel %vm594, %v1182, 0.0
      %1203 = vadd.xlane.f32.xlu0 %v1202
      %v1204 = vpop.xlane.xlu0 %1203
      %v1205 = vsel %vm594, %v1184, 0.0
      %1206 = vadd.xlane.f32.xlu0 %v1205
      %v1207 = vpop.xlane.xlu0 %1206
      %v1208 = vsel %vm594, %v1186, 0.0
      %1209 = vadd.xlane.f32.xlu0 %v1208
      %v1210 = vpop.xlane.xlu0 %1209
      %v1211 = vrcp.pop %v1189
      %v1212 = vrcp.pop %v1192
      %v1213 = vrcp.pop %v1195
      %v1214 = vrcp.pop %v1198
      %v1215 = vrcp.pop %v1201
      %v1216 = vrcp.pop %v1204
      %v1217 = vrcp.pop %v1207
      %v1218 = vrcp.pop %v1210
      %v1219 = vmul.f32 %v1172, %v1211
      %v1220 = vmul.f32 %v1174, %v1212
      %v1221 = vmul.f32 %v1176, %v1213
      %v1222 = vmul.f32 %v1178, %v1214
      %v1223 = vmul.f32 %v1180, %v1215
      %v1224 = vmul.f32 %v1182, %v1216
      %v1225 = vmul.f32 %v1184, %v1217
      %v1226 = vmul.f32 %v1186, %v1218
      %v1227 = vpack.c.bf16 %v1220, %v1219
      %v1228 = vpack.c.bf16 %v1222, %v1221
      %v1229 = vpack.c.bf16 %v1224, %v1223
      %v1230 = vpack.c.bf16 %v1226, %v1225
      %1231 = vrot.lane.b32.xlu0 %v516, 48
      %v1232 = vpop.permute.xlu0 %1231
      %1233 = vrot.lane.b32.xlu0 %v517, 48
      %v1234 = vpop.permute.xlu0 %1233
      %1235 = vrot.lane.b32.xlu0 %v518, 48
      %v1236 = vpop.permute.xlu0 %1235
      %1237 = vrot.lane.b32.xlu0 %v519, 48
      %v1238 = vpop.permute.xlu0 %1237
      %v1244 = vsel %vm594, %v1227, 0
      %v1247 = vsel %vm594, %v1228, 0
      %v1250 = vsel %vm594, %v1229, 0
      %v1253 = vsel %vm594, %v1230, 0
      %1255 = vmatpush.bf16.msra.mxu0 0
      %1256 = vmatpush.bf16.msra.mxu0 0
      %1257 = vmatpush.bf16.msra.mxu0 0
      %1258 = vmatpush.bf16.msra.mxu0 0
      %1259 = vmatpush.bf16.msra.mxu0 %v1238
      %1260 = vmatpush.bf16.msra.mxu0 %v1236
      %1261 = vmatpush.bf16.msra.mxu0 %v1234
      %1262 = vmatpush.bf16.msra.mxu0 %v1232
      %1263 = vmatmul.bf16.gmra.mxu0 %v1244
      %v1264 = vpop.f32.mrf.mxu0
      %v1265 = vadd.f32 0.0, %v1264
      %v1266 = vpop.f32.mrf.mxu0
      %v1267 = vadd.f32 0.0, %v1266
      %1268 = vmatmul.bf16.gmra.mxu0 %v1247
      %v1269 = vpop.f32.mrf.mxu0
      %v1270 = vadd.f32 0.0, %v1269
      %v1271 = vpop.f32.mrf.mxu0
      %v1272 = vadd.f32 0.0, %v1271
      %1273 = vmatmul.bf16.gmra.mxu0 %v1250
      %v1274 = vpop.f32.mrf.mxu0
      %v1275 = vadd.f32 0.0, %v1274
      %v1276 = vpop.f32.mrf.mxu0
      %v1277 = vadd.f32 0.0, %v1276
      %1278 = vmatmul.bf16.gmra.mxu0 %v1253
      %v1279 = vpop.f32.mrf.mxu0
      %v1280 = vadd.f32 0.0, %v1279
      %v1281 = vpop.f32.mrf.mxu0
      %v1282 = vadd.f32 0.0, %v1281
      %1283 = vdwg.mxu0
      %v1284 = vpack.c.bf16 %v1267, %v1265
      %v1285 = vpack.c.bf16 %v1272, %v1270
      %v1286 = vpack.c.bf16 %v1277, %v1275
      %v1287 = vpack.c.bf16 %v1282, %v1280
      %s1288 = scalar_lea.vmem %s3, 8
      %v1289 = vld [vmem:[%s1288] sm:$0xf]
      %v1291 = vsel %vm532, %v1284, 0
      %v1294 = vsel %vm532, %v1285, 0
      %v1297 = vsel %vm532, %v1286, 0
      %v1300 = vsel %vm532, %v1287, 0
      %v1303 = vsel %vm985, %v1289, 0
      %1305 = vmatpush.bf16.msra.mxu0 0
      %1306 = vmatpush.bf16.msra.mxu0 0
      %1307 = vmatpush.bf16.msra.mxu0 0
      %1308 = vmatpush.bf16.msra.mxu0 0
      %1309 = vmatpush.bf16.msra.mxu0 0
      %1310 = vmatpush.bf16.msra.mxu0 0
      %1311 = vmatpush.bf16.msra.mxu0 0
      %1312 = vmatpush.bf16.msra.mxu0 %v1303
      %1313 = vmatmul.bf16.gmra.mxu0 %v1291
      %v1314 = vpop.f32.mrf.mxu0
      %v1315 = vadd.f32 0.0, %v1314
      %v1316 = vpop.f32.mrf.mxu0
      %v1317 = vadd.f32 0.0, %v1316
      %1318 = vmatmul.bf16.gmra.mxu0 %v1294
      %v1319 = vpop.f32.mrf.mxu0
      %v1320 = vadd.f32 0.0, %v1319
      %v1321 = vpop.f32.mrf.mxu0
      %v1322 = vadd.f32 0.0, %v1321
      %1323 = vmatmul.bf16.gmra.mxu0 %v1297
      %v1324 = vpop.f32.mrf.mxu0
      %v1325 = vadd.f32 0.0, %v1324
      %v1326 = vpop.f32.mrf.mxu0
      %v1327 = vadd.f32 0.0, %v1326
      %1328 = vmatmul.bf16.gmra.mxu0 %v1300
      %v1329 = vpop.f32.mrf.mxu0
      %v1330 = vadd.f32 0.0, %v1329
      %v1331 = vpop.f32.mrf.mxu0
      %v1332 = vadd.f32 0.0, %v1331
      %1333 = vdwg.mxu0
      %v1334 = vadd.f32 %v1043, %v1315
      %v1335 = vadd.f32 %v1045, %v1317
      %v1336 = vadd.f32 %v1048, %v1320
      %v1337 = vadd.f32 %v1050, %v1322
      %v1338 = vadd.f32 %v1053, %v1325
      %v1339 = vadd.f32 %v1055, %v1327
      %v1340 = vadd.f32 %v1058, %v1330
      %v1341 = vadd.f32 %v1060, %v1332
      %1342 = vrot.lane.b32.xlu0 %v516, 104
      %v1343 = vpop.permute.xlu0 %1342
      %1344 = vrot.lane.b32.xlu0 %v517, 104
      %v1345 = vpop.permute.xlu0 %1344
      %1346 = vrot.lane.b32.xlu0 %v518, 104
      %v1347 = vpop.permute.xlu0 %1346
      %1348 = vrot.lane.b32.xlu0 %v519, 104
      %v1349 = vpop.permute.xlu0 %1348
      %1350 = vrot.lane.b32.xlu0 %v516, 72
      %v1351 = vpop.permute.xlu0 %1350
      %1352 = vrot.lane.b32.xlu0 %v517, 72
      %v1353 = vpop.permute.xlu0 %1352
      %1354 = vrot.lane.b32.xlu0 %v518, 72
      %v1355 = vpop.permute.xlu0 %1354
      %1356 = vrot.lane.b32.xlu0 %v519, 72
      %v1357 = vpop.permute.xlu0 %1356
      %v1359 = vsel %vm532, %v1343, 0
      %v1362 = vsel %vm532, %v1345, 0
      %v1365 = vsel %vm532, %v1347, 0
      %v1368 = vsel %vm532, %v1349, 0
      %v1371 = vsel %vm532, %v1351, 0
      %v1374 = vsel %vm532, %v1353, 0
      %v1377 = vsel %vm532, %v1355, 0
      %v1380 = vsel %vm532, %v1357, 0
      %1382 = vmatpush.bf16.xpose.msra.mxu0 0
      %1383 = vmatpush.bf16.xpose.msra.mxu0 0
      %1384 = vmatpush.bf16.xpose.msra.mxu0 0
      %1385 = vmatpush.bf16.xpose.msra.mxu0 0
      %1386 = vmatpush.bf16.xpose.msra.mxu0 %v1380
      %1387 = vmatpush.bf16.xpose.msra.mxu0 %v1377
      %1388 = vmatpush.bf16.xpose.msra.mxu0 %v1374
      %1389 = vmatpush.bf16.xpose.msra.mxu0 %v1371
      %1390 = vmatmul.bf16.gmra.mxu0 %v1359
      %v1391 = vpop.f32.mrf.mxu0
      %v1392 = vadd.f32 0.0, %v1391
      %v1393 = vpop.f32.mrf.mxu0
      %v1394 = vadd.f32 0.0, %v1393
      %1395 = vmatmul.bf16.gmra.mxu0 %v1362
      %v1396 = vpop.f32.mrf.mxu0
      %v1397 = vadd.f32 0.0, %v1396
      %v1398 = vpop.f32.mrf.mxu0
      %v1399 = vadd.f32 0.0, %v1398
      %1400 = vmatmul.bf16.gmra.mxu0 %v1365
      %v1401 = vpop.f32.mrf.mxu0
      %v1402 = vadd.f32 0.0, %v1401
      %v1403 = vpop.f32.mrf.mxu0
      %v1404 = vadd.f32 0.0, %v1403
      %1405 = vmatmul.bf16.gmra.mxu0 %v1368
      %v1406 = vpop.f32.mrf.mxu0
      %v1407 = vadd.f32 0.0, %v1406
      %v1408 = vpop.f32.mrf.mxu0
      %v1409 = vadd.f32 0.0, %v1408
      %1410 = vdwg.mxu0
      %v1411 = vmul.f32 %v1392, 0.35355338
      %v1412 = vmul.f32 %v1394, 0.35355338
      %v1413 = vmul.f32 %v1397, 0.35355338
      %v1414 = vmul.f32 %v1399, 0.35355338
      %v1415 = vmul.f32 %v1402, 0.35355338
      %v1416 = vmul.f32 %v1404, 0.35355338
      %v1417 = vmul.f32 %v1407, 0.35355338
      %v1418 = vmul.f32 %v1409, 0.35355338
      %v1419 = vsel %vm594, %v1411, -inf
      %1420 = vmax.xlane.f32.xlu0 %v1419
      %v1421 = vpop.xlane.xlu0 %1420
      %v1422 = vsel %vm594, %v1412, -inf
      %1423 = vmax.xlane.f32.xlu0 %v1422
      %v1424 = vpop.xlane.xlu0 %1423
      %v1425 = vsel %vm594, %v1413, -inf
      %1426 = vmax.xlane.f32.xlu0 %v1425
      %v1427 = vpop.xlane.xlu0 %1426
      %v1428 = vsel %vm594, %v1414, -inf
      %1429 = vmax.xlane.f32.xlu0 %v1428
      %v1430 = vpop.xlane.xlu0 %1429
      %v1431 = vsel %vm594, %v1415, -inf
      %1432 = vmax.xlane.f32.xlu0 %v1431
      %v1433 = vpop.xlane.xlu0 %1432
      %v1434 = vsel %vm594, %v1416, -inf
      %1435 = vmax.xlane.f32.xlu0 %v1434
      %v1436 = vpop.xlane.xlu0 %1435
      %v1437 = vsel %vm594, %v1417, -inf
      %1438 = vmax.xlane.f32.xlu0 %v1437
      %v1439 = vpop.xlane.xlu0 %1438
      %v1440 = vsel %vm594, %v1418, -inf
      %1441 = vmax.xlane.f32.xlu0 %v1440
      %v1442 = vpop.xlane.xlu0 %1441
      %v1443 = vsub.f32 %v1411, %v1421
      %v1444 = vsub.f32 %v1412, %v1424
      %v1445 = vsub.f32 %v1413, %v1427
      %v1446 = vsub.f32 %v1414, %v1430
      %v1447 = vsub.f32 %v1415, %v1433
      %v1448 = vsub.f32 %v1416, %v1436
      %v1449 = vsub.f32 %v1417, %v1439
      %v1450 = vsub.f32 %v1418, %v1442
      %v1451 = vmul.f32 %v1443, 1.442695
      %v1452 = vpow.pop %v1451
      %v1453 = vmul.f32 %v1444, 1.442695
      %v1454 = vpow.pop %v1453
      %v1455 = vmul.f32 %v1445, 1.442695
      %v1456 = vpow.pop %v1455
      %v1457 = vmul.f32 %v1446, 1.442695
      %v1458 = vpow.pop %v1457
      %v1459 = vmul.f32 %v1447, 1.442695
      %v1460 = vpow.pop %v1459
      %v1461 = vmul.f32 %v1448, 1.442695
      %v1462 = vpow.pop %v1461
      %v1463 = vmul.f32 %v1449, 1.442695
      %v1464 = vpow.pop %v1463
      %v1465 = vmul.f32 %v1450, 1.442695
      %v1466 = vpow.pop %v1465
      %v1467 = vsel %vm594, %v1452, 0.0
      %1468 = vadd.xlane.f32.xlu0 %v1467
      %v1469 = vpop.xlane.xlu0 %1468
      %v1470 = vsel %vm594, %v1454, 0.0
      %1471 = vadd.xlane.f32.xlu0 %v1470
      %v1472 = vpop.xlane.xlu0 %1471
      %v1473 = vsel %vm594, %v1456, 0.0
      %1474 = vadd.xlane.f32.xlu0 %v1473
      %v1475 = vpop.xlane.xlu0 %1474
      %v1476 = vsel %vm594, %v1458, 0.0
      %1477 = vadd.xlane.f32.xlu0 %v1476
      %v1478 = vpop.xlane.xlu0 %1477
      %v1479 = vsel %vm594, %v1460, 0.0
      %1480 = vadd.xlane.f32.xlu0 %v1479
      %v1481 = vpop.xlane.xlu0 %1480
      %v1482 = vsel %vm594, %v1462, 0.0
      %1483 = vadd.xlane.f32.xlu0 %v1482
      %v1484 = vpop.xlane.xlu0 %1483
      %v1485 = vsel %vm594, %v1464, 0.0
      %1486 = vadd.xlane.f32.xlu0 %v1485
      %v1487 = vpop.xlane.xlu0 %1486
      %v1488 = vsel %vm594, %v1466, 0.0
      %1489 = vadd.xlane.f32.xlu0 %v1488
      %v1490 = vpop.xlane.xlu0 %1489
      %v1491 = vrcp.pop %v1469
      %v1492 = vrcp.pop %v1472
      %v1493 = vrcp.pop %v1475
      %v1494 = vrcp.pop %v1478
      %v1495 = vrcp.pop %v1481
      %v1496 = vrcp.pop %v1484
      %v1497 = vrcp.pop %v1487
      %v1498 = vrcp.pop %v1490
      %v1499 = vmul.f32 %v1452, %v1491
      %v1500 = vmul.f32 %v1454, %v1492
      %v1501 = vmul.f32 %v1456, %v1493
      %v1502 = vmul.f32 %v1458, %v1494
      %v1503 = vmul.f32 %v1460, %v1495
      %v1504 = vmul.f32 %v1462, %v1496
      %v1505 = vmul.f32 %v1464, %v1497
      %v1506 = vmul.f32 %v1466, %v1498
      %v1507 = vpack.c.bf16 %v1500, %v1499
      %v1508 = vpack.c.bf16 %v1502, %v1501
      %v1509 = vpack.c.bf16 %v1504, %v1503
      %v1510 = vpack.c.bf16 %v1506, %v1505
      %1511 = vrot.lane.b32.xlu0 %v516, 40
      %v1512 = vpop.permute.xlu0 %1511
      %1513 = vrot.lane.b32.xlu0 %v517, 40
      %v1514 = vpop.permute.xlu0 %1513
      %1515 = vrot.lane.b32.xlu0 %v518, 40
      %v1516 = vpop.permute.xlu0 %1515
      %1517 = vrot.lane.b32.xlu0 %v519, 40
      %v1518 = vpop.permute.xlu0 %1517
      %v1524 = vsel %vm594, %v1507, 0
      %v1527 = vsel %vm594, %v1508, 0
      %v1530 = vsel %vm594, %v1509, 0
      %v1533 = vsel %vm594, %v1510, 0
      %1535 = vmatpush.bf16.msra.mxu0 0
      %1536 = vmatpush.bf16.msra.mxu0 0
      %1537 = vmatpush.bf16.msra.mxu0 0
      %1538 = vmatpush.bf16.msra.mxu0 0
      %1539 = vmatpush.bf16.msra.mxu0 %v1518
      %1540 = vmatpush.bf16.msra.mxu0 %v1516
      %1541 = vmatpush.bf16.msra.mxu0 %v1514
      %1542 = vmatpush.bf16.msra.mxu0 %v1512
      %1543 = vmatmul.bf16.gmra.mxu0 %v1524
      %v1544 = vpop.f32.mrf.mxu0
      %v1545 = vadd.f32 0.0, %v1544
      %v1546 = vpop.f32.mrf.mxu0
      %v1547 = vadd.f32 0.0, %v1546
      %1548 = vmatmul.bf16.gmra.mxu0 %v1527
      %v1549 = vpop.f32.mrf.mxu0
      %v1550 = vadd.f32 0.0, %v1549
      %v1551 = vpop.f32.mrf.mxu0
      %v1552 = vadd.f32 0.0, %v1551
      %1553 = vmatmul.bf16.gmra.mxu0 %v1530
      %v1554 = vpop.f32.mrf.mxu0
      %v1555 = vadd.f32 0.0, %v1554
      %v1556 = vpop.f32.mrf.mxu0
      %v1557 = vadd.f32 0.0, %v1556
      %1558 = vmatmul.bf16.gmra.mxu0 %v1533
      %v1559 = vpop.f32.mrf.mxu0
      %v1560 = vadd.f32 0.0, %v1559
      %v1561 = vpop.f32.mrf.mxu0
      %v1562 = vadd.f32 0.0, %v1561
      %1563 = vdwg.mxu0
      %v1564 = vpack.c.bf16 %v1547, %v1545
      %v1565 = vpack.c.bf16 %v1552, %v1550
      %v1566 = vpack.c.bf16 %v1557, %v1555
      %v1567 = vpack.c.bf16 %v1562, %v1560
      %s1568 = scalar_lea.vmem %s3, 12
      %v1569 = vld [vmem:[%s1568] sm:$0xf]
      %v1571 = vsel %vm532, %v1564, 0
      %v1574 = vsel %vm532, %v1565, 0
      %v1577 = vsel %vm532, %v1566, 0
      %v1580 = vsel %vm532, %v1567, 0
      %v1583 = vsel %vm985, %v1569, 0
      %1585 = vmatpush.bf16.msra.mxu0 0
      %1586 = vmatpush.bf16.msra.mxu0 0
      %1587 = vmatpush.bf16.msra.mxu0 0
      %1588 = vmatpush.bf16.msra.mxu0 0
      %1589 = vmatpush.bf16.msra.mxu0 0
      %1590 = vmatpush.bf16.msra.mxu0 0
      %1591 = vmatpush.bf16.msra.mxu0 0
      %1592 = vmatpush.bf16.msra.mxu0 %v1583
      %1593 = vmatmul.bf16.gmra.mxu0 %v1571
      %v1594 = vpop.f32.mrf.mxu0
      %v1595 = vadd.f32 0.0, %v1594
      %v1596 = vpop.f32.mrf.mxu0
      %v1597 = vadd.f32 0.0, %v1596
      %1598 = vmatmul.bf16.gmra.mxu0 %v1574
      %v1599 = vpop.f32.mrf.mxu0
      %v1600 = vadd.f32 0.0, %v1599
      %v1601 = vpop.f32.mrf.mxu0
      %v1602 = vadd.f32 0.0, %v1601
      %1603 = vmatmul.bf16.gmra.mxu0 %v1577
      %v1604 = vpop.f32.mrf.mxu0
      %v1605 = vadd.f32 0.0, %v1604
      %v1606 = vpop.f32.mrf.mxu0
      %v1607 = vadd.f32 0.0, %v1606
      %1608 = vmatmul.bf16.gmra.mxu0 %v1580
      %v1609 = vpop.f32.mrf.mxu0
      %v1610 = vadd.f32 0.0, %v1609
      %v1611 = vpop.f32.mrf.mxu0
      %v1612 = vadd.f32 0.0, %v1611
      %1613 = vdwg.mxu0
      %v1614 = vadd.f32 %v1334, %v1595
      %v1615 = vadd.f32 %v1335, %v1597
      %v1616 = vadd.f32 %v1336, %v1600
      %v1617 = vadd.f32 %v1337, %v1602
      %v1618 = vadd.f32 %v1338, %v1605
      %v1619 = vadd.f32 %v1339, %v1607
      %v1620 = vadd.f32 %v1340, %v1610
      %v1621 = vadd.f32 %v1341, %v1612
      %v1622 = vadd.f32 %v442, %v1614
      %v1623 = vadd.f32 %v443, %v1615
      %v1624 = vadd.f32 %v444, %v1616
      %v1625 = vadd.f32 %v445, %v1617
      %v1626 = vadd.f32 %v446, %v1618
      %v1627 = vadd.f32 %v447, %v1619
      %v1628 = vadd.f32 %v448, %v1620
      %v1629 = vadd.f32 %v449, %v1621
      %v1630 = vld [vmem:[%s4] sm:$0x1]
      %v1632 = vperm.slane %v1630, 0
      %v1634 = vadd.f32 %v1622, %v1632
      %v1635 = vadd.f32 %v1623, %v1632
      %v1636 = vadd.f32 %v1624, %v1632
      %v1637 = vadd.f32 %v1625, %v1632
      %v1638 = vadd.f32 %v1626, %v1632
      %v1639 = vadd.f32 %v1627, %v1632
      %v1640 = vadd.f32 %v1628, %v1632
      %v1641 = vadd.f32 %v1629, %v1632
      %v1642 = vsel %vm474, %v1634, 0.0
      %1643 = vadd.xlane.f32.xlu0 %v1642
      %v1644 = vpop.xlane.xlu0 %1643
      %v1645 = vsel %vm474, %v1635, 0.0
      %1646 = vadd.xlane.f32.xlu0 %v1645
      %v1647 = vpop.xlane.xlu0 %1646
      %v1648 = vsel %vm474, %v1636, 0.0
      %1649 = vadd.xlane.f32.xlu0 %v1648
      %v1650 = vpop.xlane.xlu0 %1649
      %v1651 = vsel %vm474, %v1637, 0.0
      %1652 = vadd.xlane.f32.xlu0 %v1651
      %v1653 = vpop.xlane.xlu0 %1652
      %v1654 = vsel %vm474, %v1638, 0.0
      %1655 = vadd.xlane.f32.xlu0 %v1654
      %v1656 = vpop.xlane.xlu0 %1655
      %v1657 = vsel %vm474, %v1639, 0.0
      %1658 = vadd.xlane.f32.xlu0 %v1657
      %v1659 = vpop.xlane.xlu0 %1658
      %v1660 = vsel %vm474, %v1640, 0.0
      %1661 = vadd.xlane.f32.xlu0 %v1660
      %v1662 = vpop.xlane.xlu0 %1661
      %v1663 = vsel %vm474, %v1641, 0.0
      %1664 = vadd.xlane.f32.xlu0 %v1663
      %v1665 = vpop.xlane.xlu0 %1664
      %v1666 = vrcp.pop 32.0
      %v1667 = vmul.f32 32.0, %v1666
      %v1668 = vsub.f32 1.0, %v1667
      %v1669 = vmul.f32 %v1666, %v1668
      %v1670 = vadd.f32 %v1666, %v1669
      %vm1671 = vweird.f32 %v1666
      %v1672 = vsel %vm1671, %v1666, %v1670
      %v1673 = vmul.f32 %v1644, %v1672
      %v1674 = vmul.f32 %v1647, %v1672
      %v1675 = vmul.f32 %v1650, %v1672
      %v1676 = vmul.f32 %v1653, %v1672
      %v1677 = vmul.f32 %v1656, %v1672
      %v1678 = vmul.f32 %v1659, %v1672
      %v1679 = vmul.f32 %v1662, %v1672
      %v1680 = vmul.f32 %v1665, %v1672
      %v1681 = vsub.f32 %v1634, %v1673
      %v1682 = vsub.f32 %v1635, %v1674
      %v1683 = vsub.f32 %v1636, %v1675
      %v1684 = vsub.f32 %v1637, %v1676
      %v1685 = vsub.f32 %v1638, %v1677
      %v1686 = vsub.f32 %v1639, %v1678
      %v1687 = vsub.f32 %v1640, %v1679
      %v1688 = vsub.f32 %v1641, %v1680
      %v1689 = vmul.f32 %v1681, %v1681
      %v1690 = vmul.f32 %v1682, %v1682
      %v1691 = vmul.f32 %v1683, %v1683
      %v1692 = vmul.f32 %v1684, %v1684
      %v1693 = vmul.f32 %v1685, %v1685
      %v1694 = vmul.f32 %v1686, %v1686
      %v1695 = vmul.f32 %v1687, %v1687
      %v1696 = vmul.f32 %v1688, %v1688
      %v1697 = vsel %vm474, %v1689, 0.0
      %1698 = vadd.xlane.f32.xlu0 %v1697
      %v1699 = vpop.xlane.xlu0 %1698
      %v1700 = vsel %vm474, %v1690, 0.0
      %1701 = vadd.xlane.f32.xlu0 %v1700
      %v1702 = vpop.xlane.xlu0 %1701
      %v1703 = vsel %vm474, %v1691, 0.0
      %1704 = vadd.xlane.f32.xlu0 %v1703
      %v1705 = vpop.xlane.xlu0 %1704
      %v1706 = vsel %vm474, %v1692, 0.0
      %1707 = vadd.xlane.f32.xlu0 %v1706
      %v1708 = vpop.xlane.xlu0 %1707
      %v1709 = vsel %vm474, %v1693, 0.0
      %1710 = vadd.xlane.f32.xlu0 %v1709
      %v1711 = vpop.xlane.xlu0 %1710
      %v1712 = vsel %vm474, %v1694, 0.0
      %1713 = vadd.xlane.f32.xlu0 %v1712
      %v1714 = vpop.xlane.xlu0 %1713
      %v1715 = vsel %vm474, %v1695, 0.0
      %1716 = vadd.xlane.f32.xlu0 %v1715
      %v1717 = vpop.xlane.xlu0 %1716
      %v1718 = vsel %vm474, %v1696, 0.0
      %1719 = vadd.xlane.f32.xlu0 %v1718
      %v1720 = vpop.xlane.xlu0 %1719
      %v1721 = vmul.f32 %v1699, %v1672
      %v1722 = vmul.f32 %v1702, %v1672
      %v1723 = vmul.f32 %v1705, %v1672
      %v1724 = vmul.f32 %v1708, %v1672
      %v1725 = vmul.f32 %v1711, %v1672
      %v1726 = vmul.f32 %v1714, %v1672
      %v1727 = vmul.f32 %v1717, %v1672
      %v1728 = vmul.f32 %v1720, %v1672
      %v1729 = vadd.f32 %v1721, 1e-05
      %v1730 = vadd.f32 %v1722, 1e-05
      %v1731 = vadd.f32 %v1723, 1e-05
      %v1732 = vadd.f32 %v1724, 1e-05
      %v1733 = vadd.f32 %v1725, 1e-05
      %v1734 = vadd.f32 %v1726, 1e-05
      %v1735 = vadd.f32 %v1727, 1e-05
      %v1736 = vadd.f32 %v1728, 1e-05
      %v1737 = vrsqrt.pop %v1729
      %v1738 = vmul.f32 %v1737, %v1729
      %v1739 = vmul.f32 %v1738, %v1737
      %v1740 = vmul.f32 0.5, %v1739
      %v1741 = vsub.f32 1.5, %v1740
      %v1742 = vmul.f32 %v1737, %v1741
      %vm1743 = vweird.f32 %v1729
      %vm1744 = vweird.f32 %v1737
      %vm1745 = vmor %vm1743, %vm1744
      %v1746 = vsel %vm1745, %v1737, %v1742
      %v1747 = vrsqrt.pop %v1730
      %v1748 = vmul.f32 %v1747, %v1730
      %v1749 = vmul.f32 %v1748, %v1747
      %v1750 = vmul.f32 0.5, %v1749
      %v1751 = vsub.f32 1.5, %v1750
      %v1752 = vmul.f32 %v1747, %v1751
      %vm1753 = vweird.f32 %v1730
      %vm1754 = vweird.f32 %v1747
      %vm1755 = vmor %vm1753, %vm1754
      %v1756 = vsel %vm1755, %v1747, %v1752
      %v1757 = vrsqrt.pop %v1731
      %v1758 = vmul.f32 %v1757, %v1731
      %v1759 = vmul.f32 %v1758, %v1757
      %v1760 = vmul.f32 0.5, %v1759
      %v1761 = vsub.f32 1.5, %v1760
      %v1762 = vmul.f32 %v1757, %v1761
      %vm1763 = vweird.f32 %v1731
      %vm1764 = vweird.f32 %v1757
      %vm1765 = vmor %vm1763, %vm1764
      %v1766 = vsel %vm1765, %v1757, %v1762
      %v1767 = vrsqrt.pop %v1732
      %v1768 = vmul.f32 %v1767, %v1732
      %v1769 = vmul.f32 %v1768, %v1767
      %v1770 = vmul.f32 0.5, %v1769
      %v1771 = vsub.f32 1.5, %v1770
      %v1772 = vmul.f32 %v1767, %v1771
      %vm1773 = vweird.f32 %v1732
      %vm1774 = vweird.f32 %v1767
      %vm1775 = vmor %vm1773, %vm1774
      %v1776 = vsel %vm1775, %v1767, %v1772
      %v1777 = vrsqrt.pop %v1733
      %v1778 = vmul.f32 %v1777, %v1733
      %v1779 = vmul.f32 %v1778, %v1777
      %v1780 = vmul.f32 0.5, %v1779
      %v1781 = vsub.f32 1.5, %v1780
      %v1782 = vmul.f32 %v1777, %v1781
      %vm1783 = vweird.f32 %v1733
      %vm1784 = vweird.f32 %v1777
      %vm1785 = vmor %vm1783, %vm1784
      %v1786 = vsel %vm1785, %v1777, %v1782
      %v1787 = vrsqrt.pop %v1734
      %v1788 = vmul.f32 %v1787, %v1734
      %v1789 = vmul.f32 %v1788, %v1787
      %v1790 = vmul.f32 0.5, %v1789
      %v1791 = vsub.f32 1.5, %v1790
      %v1792 = vmul.f32 %v1787, %v1791
      %vm1793 = vweird.f32 %v1734
      %vm1794 = vweird.f32 %v1787
      %vm1795 = vmor %vm1793, %vm1794
      %v1796 = vsel %vm1795, %v1787, %v1792
      %v1797 = vrsqrt.pop %v1735
      %v1798 = vmul.f32 %v1797, %v1735
      %v1799 = vmul.f32 %v1798, %v1797
      %v1800 = vmul.f32 0.5, %v1799
      %v1801 = vsub.f32 1.5, %v1800
      %v1802 = vmul.f32 %v1797, %v1801
      %vm1803 = vweird.f32 %v1735
      %vm1804 = vweird.f32 %v1797
      %vm1805 = vmor %vm1803, %vm1804
      %v1806 = vsel %vm1805, %v1797, %v1802
      %v1807 = vrsqrt.pop %v1736
      %v1808 = vmul.f32 %v1807, %v1736
      %v1809 = vmul.f32 %v1808, %v1807
      %v1810 = vmul.f32 0.5, %v1809
      %v1811 = vsub.f32 1.5, %v1810
      %v1812 = vmul.f32 %v1807, %v1811
      %vm1813 = vweird.f32 %v1736
      %vm1814 = vweird.f32 %v1807
      %vm1815 = vmor %vm1813, %vm1814
      %v1816 = vsel %vm1815, %v1807, %v1812
      %v1817 = vmul.f32 %v1681, %v1746
      %v1818 = vmul.f32 %v1682, %v1756
      %v1819 = vmul.f32 %v1683, %v1766
      %v1820 = vmul.f32 %v1684, %v1776
      %v1821 = vmul.f32 %v1685, %v1786
      %v1822 = vmul.f32 %v1686, %v1796
      %v1823 = vmul.f32 %v1687, %v1806
      %v1824 = vmul.f32 %v1688, %v1816
      %v1825 = vld [vmem:[%s5] sm:$0x1]
      %v1827 = vperm.slane %v1825, 0
      %v1829 = vmul.f32 %v1817, %v1827
      %v1830 = vmul.f32 %v1818, %v1827
      %v1831 = vmul.f32 %v1819, %v1827
      %v1832 = vmul.f32 %v1820, %v1827
      %v1833 = vmul.f32 %v1821, %v1827
      %v1834 = vmul.f32 %v1822, %v1827
      %v1835 = vmul.f32 %v1823, %v1827
      %v1836 = vmul.f32 %v1824, %v1827
      %v1837 = vld [vmem:[%s6] sm:$0x1]
      %v1839 = vperm.slane %v1837, 0
      %v1841 = vadd.f32 %v1829, %v1839
      %v1842 = vadd.f32 %v1830, %v1839
      %v1843 = vadd.f32 %v1831, %v1839
      %v1844 = vadd.f32 %v1832, %v1839
      %v1845 = vadd.f32 %v1833, %v1839
      %v1846 = vadd.f32 %v1834, %v1839
      %v1847 = vadd.f32 %v1835, %v1839
      %v1848 = vadd.f32 %v1836, %v1839
      %v1849 = vpack.c.bf16 %v1842, %v1841
      %v1850 = vpack.c.bf16 %v1844, %v1843
      %v1851 = vpack.c.bf16 %v1846, %v1845
      %v1852 = vpack.c.bf16 %v1848, %v1847
      %v1853 = vld [vmem:[%s7] sm:$0xf]
      %v1854 = vld [vmem:[%s7 + $0x4] sm:$0xf]
      %v1855 = vld [vmem:[%s7 + $0x8] sm:$0xf]
      %v1856 = vld [vmem:[%s7 + $0xc] sm:$0xf]
      %v1857 = vld [vmem:[%s8] sm:$0x1]
      %v1859 = vperm.slane %v1857, 0
      %v1865 = vunpack.c.l.b16 %v1853
      %v1866 = vunpack.c.l.b16 %v1854
      %v1867 = vunpack.c.l.b16 %v1855
      %v1868 = vunpack.c.l.b16 %v1856
      %v1869 = vpack.c.b16 %v1866, %v1865
      %v1870 = vpack.c.b16 %v1868, %v1867
      %v1874 = vsel %vm474, %v1849, 0
      %v1877 = vsel %vm474, %v1850, 0
      %v1880 = vsel %vm474, %v1851, 0
      %v1883 = vsel %vm474, %v1852, 0
      %1885 = vmatpush.bf16.msra.mxu0 0
      %1886 = vmatpush.bf16.msra.mxu0 0
      %1887 = vmatpush.bf16.msra.mxu0 0
      %1888 = vmatpush.bf16.msra.mxu0 0
      %1889 = vmatpush.bf16.msra.mxu0 0
      %1890 = vmatpush.bf16.msra.mxu0 0
      %1891 = vmatpush.bf16.msra.mxu0 %v1870
      %1892 = vmatpush.bf16.msra.mxu0 %v1869
      %1893 = vmatmul.bf16.gmra.mxu0 %v1874
      %v1894 = vpop.f32.mrf.mxu0
      %v1895 = vadd.f32 %v1859, %v1894
      %v1896 = vpop.f32.mrf.mxu0
      %v1897 = vadd.f32 %v1859, %v1896
      %1898 = vmatmul.bf16.gmra.mxu0 %v1877
      %v1899 = vpop.f32.mrf.mxu0
      %v1900 = vadd.f32 %v1859, %v1899
      %v1901 = vpop.f32.mrf.mxu0
      %v1902 = vadd.f32 %v1859, %v1901
      %1903 = vmatmul.bf16.gmra.mxu0 %v1880
      %v1904 = vpop.f32.mrf.mxu0
      %v1905 = vadd.f32 %v1859, %v1904
      %v1906 = vpop.f32.mrf.mxu0
      %v1907 = vadd.f32 %v1859, %v1906
      %1908 = vmatmul.bf16.gmra.mxu0 %v1883
      %v1909 = vpop.f32.mrf.mxu0
      %v1910 = vadd.f32 %v1859, %v1909
      %v1911 = vpop.f32.mrf.mxu0
      %v1912 = vadd.f32 %v1859, %v1911
      %1913 = vdwg.mxu0
      %v1914 = vmax.f32 %v1895, 0.0
      %v1915 = vmax.f32 %v1897, 0.0
      %v1916 = vmax.f32 %v1900, 0.0
      %v1917 = vmax.f32 %v1902, 0.0
      %v1918 = vmax.f32 %v1905, 0.0
      %v1919 = vmax.f32 %v1907, 0.0
      %v1920 = vmax.f32 %v1910, 0.0
      %v1921 = vmax.f32 %v1912, 0.0
      %v1922 = vpack.c.bf16 %v1915, %v1914
      %v1923 = vpack.c.bf16 %v1917, %v1916
      %v1924 = vpack.c.bf16 %v1919, %v1918
      %v1925 = vpack.c.bf16 %v1921, %v1920
      %v1926 = vld [vmem:[%s9] sm:$0xf]
      %v1927 = vld [vmem:[%s9 + $0x4] sm:$0xf]
      %v1928 = vld [vmem:[%s9 + $0x8] sm:$0xf]
      %v1929 = vld [vmem:[%s9 + $0xc] sm:$0xf]
      %v1930 = vld [vmem:[%s9 + $0x10] sm:$0xf]
      %v1931 = vld [vmem:[%s9 + $0x14] sm:$0xf]
      %v1932 = vld [vmem:[%s9 + $0x18] sm:$0xf]
      %v1933 = vld [vmem:[%s9 + $0x1c] sm:$0xf]
      %v1934 = vld [vmem:[%s10] sm:$0x1]
      %v1936 = vperm.slane %v1934, 0
      %v1946 = vunpack.c.l.b16 %v1926
      %v1947 = vunpack.c.l.b16 %v1927
      %v1948 = vunpack.c.l.b16 %v1928
      %v1949 = vunpack.c.l.b16 %v1929
      %v1950 = vunpack.c.l.b16 %v1930
      %v1951 = vunpack.c.l.b16 %v1931
      %v1952 = vunpack.c.l.b16 %v1932
      %v1953 = vunpack.c.l.b16 %v1933
      %v1954 = vpack.c.b16 %v1947, %v1946
      %v1955 = vpack.c.b16 %v1949, %v1948
      %v1956 = vpack.c.b16 %v1951, %v1950
      %v1957 = vpack.c.b16 %v1953, %v1952
      %v1963 = vsel %vm594, %v1922, 0
      %v1966 = vsel %vm594, %v1923, 0
      %v1969 = vsel %vm594, %v1924, 0
      %v1972 = vsel %vm594, %v1925, 0
      %1974 = vmatpush.bf16.msra.mxu0 0
      %1975 = vmatpush.bf16.msra.mxu0 0
      %1976 = vmatpush.bf16.msra.mxu0 0
      %1977 = vmatpush.bf16.msra.mxu0 0
      %1978 = vmatpush.bf16.msra.mxu0 %v1957
      %1979 = vmatpush.bf16.msra.mxu0 %v1956
      %1980 = vmatpush.bf16.msra.mxu0 %v1955
      %1981 = vmatpush.bf16.msra.mxu0 %v1954
      %1982 = vmatmul.bf16.gmra.mxu0 %v1963
      %v1983 = vpop.f32.mrf.mxu0
      %v1984 = vadd.f32 %v1936, %v1983
      %v1985 = vpop.f32.mrf.mxu0
      %v1986 = vadd.f32 %v1936, %v1985
      %1987 = vmatmul.bf16.gmra.mxu0 %v1966
      %v1988 = vpop.f32.mrf.mxu0
      %v1989 = vadd.f32 %v1936, %v1988
      %v1990 = vpop.f32.mrf.mxu0
      %v1991 = vadd.f32 %v1936, %v1990
      %1992 = vmatmul.bf16.gmra.mxu0 %v1969
      %v1993 = vpop.f32.mrf.mxu0
      %v1994 = vadd.f32 %v1936, %v1993
      %v1995 = vpop.f32.mrf.mxu0
      %v1996 = vadd.f32 %v1936, %v1995
      %1997 = vmatmul.bf16.gmra.mxu0 %v1972
      %v1998 = vpop.f32.mrf.mxu0
      %v1999 = vadd.f32 %v1936, %v1998
      %v2000 = vpop.f32.mrf.mxu0
      %v2001 = vadd.f32 %v1936, %v2000
      %2002 = vdwg.mxu0
      %v2003 = vadd.f32 %v1841, %v1984
      %v2004 = vadd.f32 %v1842, %v1986
      %v2005 = vadd.f32 %v1843, %v1989
      %v2006 = vadd.f32 %v1844, %v1991
      %v2007 = vadd.f32 %v1845, %v1994
      %v2008 = vadd.f32 %v1846, %v1996
      %v2009 = vadd.f32 %v1847, %v1999
      %v2010 = vadd.f32 %v1848, %v2001
      %v2011 = vsel %vm474, %v2003, 0.0
      %2012 = vadd.xlane.f32.xlu0 %v2011
      %v2013 = vpop.xlane.xlu0 %2012
      %v2014 = vsel %vm474, %v2004, 0.0
      %2015 = vadd.xlane.f32.xlu0 %v2014
      %v2016 = vpop.xlane.xlu0 %2015
      %v2017 = vsel %vm474, %v2005, 0.0
      %2018 = vadd.xlane.f32.xlu0 %v2017
      %v2019 = vpop.xlane.xlu0 %2018
      %v2020 = vsel %vm474, %v2006, 0.0
      %2021 = vadd.xlane.f32.xlu0 %v2020
      %v2022 = vpop.xlane.xlu0 %2021
      %v2023 = vsel %vm474, %v2007, 0.0
      %2024 = vadd.xlane.f32.xlu0 %v2023
      %v2025 = vpop.xlane.xlu0 %2024
      %v2026 = vsel %vm474, %v2008, 0.0
      %2027 = vadd.xlane.f32.xlu0 %v2026
      %v2028 = vpop.xlane.xlu0 %2027
      %v2029 = vsel %vm474, %v2009, 0.0
      %2030 = vadd.xlane.f32.xlu0 %v2029
      %v2031 = vpop.xlane.xlu0 %2030
      %v2032 = vsel %vm474, %v2010, 0.0
      %2033 = vadd.xlane.f32.xlu0 %v2032
      %v2034 = vpop.xlane.xlu0 %2033
      %v2035 = vmul.f32 %v2013, %v1672
      %v2036 = vmul.f32 %v2016, %v1672
      %v2037 = vmul.f32 %v2019, %v1672
      %v2038 = vmul.f32 %v2022, %v1672
      %v2039 = vmul.f32 %v2025, %v1672
      %v2040 = vmul.f32 %v2028, %v1672
      %v2041 = vmul.f32 %v2031, %v1672
      %v2042 = vmul.f32 %v2034, %v1672
      %v2043 = vsub.f32 %v2003, %v2035
      %v2044 = vsub.f32 %v2004, %v2036
      %v2045 = vsub.f32 %v2005, %v2037
      %v2046 = vsub.f32 %v2006, %v2038
      %v2047 = vsub.f32 %v2007, %v2039
      %v2048 = vsub.f32 %v2008, %v2040
      %v2049 = vsub.f32 %v2009, %v2041
      %v2050 = vsub.f32 %v2010, %v2042
      %v2051 = vmul.f32 %v2043, %v2043
      %v2052 = vmul.f32 %v2044, %v2044
      %v2053 = vmul.f32 %v2045, %v2045
      %v2054 = vmul.f32 %v2046, %v2046
      %v2055 = vmul.f32 %v2047, %v2047
      %v2056 = vmul.f32 %v2048, %v2048
      %v2057 = vmul.f32 %v2049, %v2049
      %v2058 = vmul.f32 %v2050, %v2050
      %v2059 = vsel %vm474, %v2051, 0.0
      %2060 = vadd.xlane.f32.xlu0 %v2059
      %v2061 = vpop.xlane.xlu0 %2060
      %v2062 = vsel %vm474, %v2052, 0.0
      %2063 = vadd.xlane.f32.xlu0 %v2062
      %v2064 = vpop.xlane.xlu0 %2063
      %v2065 = vsel %vm474, %v2053, 0.0
      %2066 = vadd.xlane.f32.xlu0 %v2065
      %v2067 = vpop.xlane.xlu0 %2066
      %v2068 = vsel %vm474, %v2054, 0.0
      %2069 = vadd.xlane.f32.xlu0 %v2068
      %v2070 = vpop.xlane.xlu0 %2069
      %v2071 = vsel %vm474, %v2055, 0.0
      %2072 = vadd.xlane.f32.xlu0 %v2071
      %v2073 = vpop.xlane.xlu0 %2072
      %v2074 = vsel %vm474, %v2056, 0.0
      %2075 = vadd.xlane.f32.xlu0 %v2074
      %v2076 = vpop.xlane.xlu0 %2075
      %v2077 = vsel %vm474, %v2057, 0.0
      %2078 = vadd.xlane.f32.xlu0 %v2077
      %v2079 = vpop.xlane.xlu0 %2078
      %v2080 = vsel %vm474, %v2058, 0.0
      %2081 = vadd.xlane.f32.xlu0 %v2080
      %v2082 = vpop.xlane.xlu0 %2081
      %v2083 = vmul.f32 %v2061, %v1672
      %v2084 = vmul.f32 %v2064, %v1672
      %v2085 = vmul.f32 %v2067, %v1672
      %v2086 = vmul.f32 %v2070, %v1672
      %v2087 = vmul.f32 %v2073, %v1672
      %v2088 = vmul.f32 %v2076, %v1672
      %v2089 = vmul.f32 %v2079, %v1672
      %v2090 = vmul.f32 %v2082, %v1672
      %v2091 = vadd.f32 %v2083, 1e-05
      %v2092 = vadd.f32 %v2084, 1e-05
      %v2093 = vadd.f32 %v2085, 1e-05
      %v2094 = vadd.f32 %v2086, 1e-05
      %v2095 = vadd.f32 %v2087, 1e-05
      %v2096 = vadd.f32 %v2088, 1e-05
      %v2097 = vadd.f32 %v2089, 1e-05
      %v2098 = vadd.f32 %v2090, 1e-05
      %v2099 = vrsqrt.pop %v2091
      %v2100 = vmul.f32 %v2099, %v2091
      %v2101 = vmul.f32 %v2100, %v2099
      %v2102 = vmul.f32 0.5, %v2101
      %v2103 = vsub.f32 1.5, %v2102
      %v2104 = vmul.f32 %v2099, %v2103
      %vm2105 = vweird.f32 %v2091
      %vm2106 = vweird.f32 %v2099
      %vm2107 = vmor %vm2105, %vm2106
      %v2108 = vsel %vm2107, %v2099, %v2104
      %v2109 = vrsqrt.pop %v2092
      %v2110 = vmul.f32 %v2109, %v2092
      %v2111 = vmul.f32 %v2110, %v2109
      %v2112 = vmul.f32 0.5, %v2111
      %v2113 = vsub.f32 1.5, %v2112
      %v2114 = vmul.f32 %v2109, %v2113
      %vm2115 = vweird.f32 %v2092
      %vm2116 = vweird.f32 %v2109
      %vm2117 = vmor %vm2115, %vm2116
      %v2118 = vsel %vm2117, %v2109, %v2114
      %v2119 = vrsqrt.pop %v2093
      %v2120 = vmul.f32 %v2119, %v2093
      %v2121 = vmul.f32 %v2120, %v2119
      %v2122 = vmul.f32 0.5, %v2121
      %v2123 = vsub.f32 1.5, %v2122
      %v2124 = vmul.f32 %v2119, %v2123
      %vm2125 = vweird.f32 %v2093
      %vm2126 = vweird.f32 %v2119
      %vm2127 = vmor %vm2125, %vm2126
      %v2128 = vsel %vm2127, %v2119, %v2124
      %v2129 = vrsqrt.pop %v2094
      %v2130 = vmul.f32 %v2129, %v2094
      %v2131 = vmul.f32 %v2130, %v2129
      %v2132 = vmul.f32 0.5, %v2131
      %v2133 = vsub.f32 1.5, %v2132
      %v2134 = vmul.f32 %v2129, %v2133
      %vm2135 = vweird.f32 %v2094
      %vm2136 = vweird.f32 %v2129
      %vm2137 = vmor %vm2135, %vm2136
      %v2138 = vsel %vm2137, %v2129, %v2134
      %v2139 = vrsqrt.pop %v2095
      %v2140 = vmul.f32 %v2139, %v2095
      %v2141 = vmul.f32 %v2140, %v2139
      %v2142 = vmul.f32 0.5, %v2141
      %v2143 = vsub.f32 1.5, %v2142
      %v2144 = vmul.f32 %v2139, %v2143
      %vm2145 = vweird.f32 %v2095
      %vm2146 = vweird.f32 %v2139
      %vm2147 = vmor %vm2145, %vm2146
      %v2148 = vsel %vm2147, %v2139, %v2144
      %v2149 = vrsqrt.pop %v2096
      %v2150 = vmul.f32 %v2149, %v2096
      %v2151 = vmul.f32 %v2150, %v2149
      %v2152 = vmul.f32 0.5, %v2151
      %v2153 = vsub.f32 1.5, %v2152
      %v2154 = vmul.f32 %v2149, %v2153
      %vm2155 = vweird.f32 %v2096
      %vm2156 = vweird.f32 %v2149
      %vm2157 = vmor %vm2155, %vm2156
      %v2158 = vsel %vm2157, %v2149, %v2154
      %v2159 = vrsqrt.pop %v2097
      %v2160 = vmul.f32 %v2159, %v2097
      %v2161 = vmul.f32 %v2160, %v2159
      %v2162 = vmul.f32 0.5, %v2161
      %v2163 = vsub.f32 1.5, %v2162
      %v2164 = vmul.f32 %v2159, %v2163
      %vm2165 = vweird.f32 %v2097
      %vm2166 = vweird.f32 %v2159
      %vm2167 = vmor %vm2165, %vm2166
      %v2168 = vsel %vm2167, %v2159, %v2164
      %v2169 = vrsqrt.pop %v2098
      %v2170 = vmul.f32 %v2169, %v2098
      %v2171 = vmul.f32 %v2170, %v2169
      %v2172 = vmul.f32 0.5, %v2171
      %v2173 = vsub.f32 1.5, %v2172
      %v2174 = vmul.f32 %v2169, %v2173
      %vm2175 = vweird.f32 %v2098
      %vm2176 = vweird.f32 %v2169
      %vm2177 = vmor %vm2175, %vm2176
      %v2178 = vsel %vm2177, %v2169, %v2174
      %v2179 = vmul.f32 %v2043, %v2108
      %v2180 = vmul.f32 %v2044, %v2118
      %v2181 = vmul.f32 %v2045, %v2128
      %v2182 = vmul.f32 %v2046, %v2138
      %v2183 = vmul.f32 %v2047, %v2148
      %v2184 = vmul.f32 %v2048, %v2158
      %v2185 = vmul.f32 %v2049, %v2168
      %v2186 = vmul.f32 %v2050, %v2178
      %v2187 = vld [vmem:[%s11] sm:$0x1]
      %v2189 = vperm.slane %v2187, 0
      %v2191 = vmul.f32 %v2179, %v2189
      %v2192 = vmul.f32 %v2180, %v2189
      %v2193 = vmul.f32 %v2181, %v2189
      %v2194 = vmul.f32 %v2182, %v2189
      %v2195 = vmul.f32 %v2183, %v2189
      %v2196 = vmul.f32 %v2184, %v2189
      %v2197 = vmul.f32 %v2185, %v2189
      %v2198 = vmul.f32 %v2186, %v2189
      %v2199 = vld [vmem:[%s12] sm:$0x1]
      %v2201 = vperm.slane %v2199, 0
      %v2203 = vadd.f32 %v2191, %v2201
      %v2204 = vadd.f32 %v2192, %v2201
      %v2205 = vadd.f32 %v2193, %v2201
      %v2206 = vadd.f32 %v2194, %v2201
      %v2207 = vadd.f32 %v2195, %v2201
      %v2208 = vadd.f32 %v2196, %v2201
      %v2209 = vadd.f32 %v2197, %v2201
      %v2210 = vadd.f32 %v2198, %v2201
      %2211 = vst.msk [vmem:[%s440] sm:$0xff] %vm474, %v2203
      %2212 = vst.msk [vmem:[%s440 + $0x8] sm:$0xff] %vm474, %v2204
      %2213 = vst.msk [vmem:[%s440 + $0x10] sm:$0xff] %vm474, %v2205
      %2214 = vst.msk [vmem:[%s440 + $0x18] sm:$0xff] %vm474, %v2206
      %2215 = vst.msk [vmem:[%s440 + $0x20] sm:$0xff] %vm474, %v2207
      %2216 = vst.msk [vmem:[%s440 + $0x28] sm:$0xff] %vm474, %v2208
      %2217 = vst.msk [vmem:[%s440 + $0x30] sm:$0xff] %vm474, %v2209
      %2218 = vst.msk [vmem:[%s440 + $0x38] sm:$0xff] %vm474, %v2210
      %p2219 = scmp.lt.s32.totalorder %s24, 1
      %s2220 = scalar_select %p2219, %s24, 1
      %s2221 = smul.addr %s2220, 8
      %s2222 = smul.addr %s2221, 8
      %s2223 = scalar_lea.vmem %s13, %s2222
      // Predicated region
      $region73: #{ocr_encoder_forward.9} parent=71 // pred_check
        %p2224 = pneg %p320
      $region74: #{ocr_encoder_forward.9} parent=71 // pred_check_branch
        %2226 = sbr.rel (%p2224) target = $region76
      $region75: #{ocr_encoder_forward.9} parent=71 // pred_region
        _
      $region76: #{ocr_encoder_forward.9} parent=71 // pred_fallthru
        _
    $region72: #{ocr_encoder_forward.9} parent=5 // pred_fallthru
      _
    %p2227 = scmp.le.s32.totalorder 2, %s19
    // Predicated region
    $region77: #{ocr_encoder_forward.9} parent=5 // pred_check
      %p2228 = pneg %p2227
    $region78: #{ocr_encoder_forward.9} parent=5 // pred_check_branch
      %2230 = sbr.rel (%p2228) target = $region80
    $region79: #{ocr_encoder_forward.9} parent=5 // pred_region
      %s2231 = ssub.s32 %s19, 2
      // Predicated region
      $region81: #{ocr_encoder_forward.9} parent=79 // pred_check
        %p2232 = pneg %p326
      $region82: #{ocr_encoder_forward.9} parent=79 // pred_check_branch
        %2234 = sbr.rel (%p2232) target = $region84
      $region83: #{ocr_encoder_forward.9} parent=79 // pred_region
        %p2235 = scmp.lt.s32.totalorder %s25, 1
        %s2236 = scalar_select %p2235, %s25, 1
        %s2237 = smul.addr %s2236, 8
        %s2238 = smul.addr %s2237, 8
        %s2239 = scalar_lea.vmem %s13, %s2238
      $region84: #{ocr_encoder_forward.9} parent=79 // pred_fallthru
        _
    $region80: #{ocr_encoder_forward.9} parent=5 // pred_fallthru
      _
  $region6: #{ocr_encoder_forward.9} parent=0 // loop_footer
    %s23 = sadd.s32 1, %s19
  $region7: #{ocr_encoder_forward.9} parent=0 // loop_footer_branch
    %18 = sbr.rel target = $region3
  $region8: #{ocr_encoder_forward.9} parent=0 // loop_exit
    _

</llo_original>
